<compile_context>
chip_gen: v7x
topology: tpu7x:2x2x1
jax: 0.10.0
libtpu: 0.0.40
codegen_flags: <defaults>
</compile_context>

<pallas_src>
from functools import partial

import jax
import jax.numpy as jnp
from jax import lax
from jax.experimental import pallas as pl
from jax.experimental.pallas import tpu as pltpu


def _round_up(a, m):
    return ((a + m - 1) // m) * m


# ---------------- fused Pallas kernel ----------------

def _fashionnet_kernel(x_ref, pick_ref, band1_ref, b1t_ref,
                       band2_ref, b2t_ref, wf_ref, bf_ref, o_ref):
    bt = o_ref.shape[0]          # images per grid step
    R = bt * 8                   # rows per stage (8-row block per image)
    f32, bf16 = jnp.float32, jnp.bfloat16

    def mm(a, b):                # bf16 MXU matmul, f32 accumulation
        return jnp.dot(a, b, preferred_element_type=f32)

    # ---- stage 1: conv1 (taps pre-concatenated host-side -> 4 matmuls)
    #      + bias + ReLU + 2x2 max-pool ----
    # x_ref[r] row (b*8+j) holds image rows 4j+r .. 4j+r+4 along lanes (tap, w);
    # band1 contracts (tap, w) -> (pool-W parity q, pooled ow, channel).
    y1 = [mm(x_ref[r], band1_ref[...]) for r in range(4)]       # 4 x (R, 768) f32

    b1t = b1t_ref[...]                                          # (1, 384)
    m_e = jnp.maximum(y1[0], y1[1])        # conv rows {4j,   4j+1} -> pooled 2j
    m_o = jnp.maximum(y1[2], y1[3])        # conv rows {4j+2, 4j+3} -> pooled 2j+1
    p1e = jnp.maximum(jnp.maximum(m_e[:, :384], m_e[:, 384:]) + b1t, 0.0)
    p1o = jnp.maximum(jnp.maximum(m_o[:, :384], m_o[:, 384:]) + b1t, 0.0)

    # ---- stage 2: conv2, 5 taps fused into one K=1920 matmul per parity ----
    # src2[s] row (b*8+j) = pooled-stage-1 row (2j + s); sublane roll replaces
    # the old shift matmuls.  Wrapped rows land only in j >= 6 (unconsumed).
    src2 = []
    for s in range(6):
        base = p1e if s % 2 == 0 else p1o
        c = s // 2
        v = base if c == 0 else pltpu.roll(base, shift=(R - c) % R, axis=0)
        src2.append(v.astype(bf16))                             # (R, 384) bf16
    cat_e = jnp.concatenate(src2[0:5], axis=1)                  # (R, 1920)
    cat_o = jnp.concatenate(src2[1:6], axis=1)                  # (R, 1920)
    y2e = mm(cat_e, band2_ref[...])                             # (R, 512) f32
    y2o = mm(cat_o, band2_ref[...])

    b2t = b2t_ref[...]                                          # (1, 256)
    m2 = jnp.maximum(y2e, y2o)
    p2v = jnp.maximum(jnp.maximum(m2[:, :256], m2[:, 256:]) + b2t, 0.0)  # (R,256)

    # ---- fc1: pick the 4 valid pooled-H rows per image, one K=1024 GEMM ----
    p2b = p2v.astype(bf16)
    vcat = jnp.concatenate(
        [mm(pick_ref[i], p2b).astype(bf16) for i in range(4)], axis=1)   # (bt,1024)
    o_ref[...] = mm(vcat, wf_ref[...]) + bf_ref[...]                     # (bt,128)


# ---------------- parameter repacking (once, outside the forward jit) ----------------

def prepare_params(params, dtype=jnp.bfloat16):
    """Repack PyTorch-shaped params into banded, lane-dense bf16 kernel operands."""
    f32 = jnp.float32
    w1, b1 = params["w1"].astype(f32), params["b1"].astype(f32)   # (32,1,5,5), (32,)
    w2, b2 = params["w2"].astype(f32), params["b2"].astype(f32)   # (64,32,5,5), (64,)
    wf, bf = params["wf"].astype(f32), params["bf"].astype(f32)   # (bits,1024), (bits,)
    bits = wf.shape[0]
    assert bits <= 128

    dj = jnp.arange(5)[None, None, :]

    # band1: (140, 768); row = di*28 + w_in, col = q*384 + m1*32 + c, ow = 2*m1 + q
    w_in = jnp.arange(28)[:, None, None]
    ow1 = jnp.arange(24)[None, :, None]
    tap1 = (w_in - ow1 == dj).astype(f32)                          # (28,24,5)
    band1 = []
    for di in range(5):
        t = jnp.einsum('wod,cd->woc', tap1, w1[:, 0, di, :])       # (28,24,32)
        t = t.reshape(28, 12, 2, 32).transpose(0, 2, 1, 3).reshape(28, 768)
        band1.append(t)
    band1c = jnp.concatenate(band1, axis=0)                        # (140,768)

    # band2: (1920, 512); row = di*384 + (pw*32 + ci), col = q2*256 + m2*64 + d
    j1 = jnp.arange(12)[:, None, None]
    ow2 = jnp.arange(8)[None, :, None]
    tap2 = (j1 - ow2 == dj).astype(f32)                            # (12,8,5)
    band2 = []
    for di in range(5):
        t = jnp.einsum('jok,dck->jcod', tap2, w2[:, :, di, :])     # (12,32,8,64)
        t = t.reshape(12, 32, 4, 2, 64).transpose(0, 1, 3, 2, 4).reshape(384, 512)
        band2.append(t)
    band2c = jnp.concatenate(band2, axis=0)                        # (1920,512)

    # fc1 weight reordered to the kernel's (h, w, c) lane layout, padded to 128 lanes.
    wfc = wf.reshape(bits, 64, 4, 4).transpose(2, 3, 1, 0).reshape(1024, bits)
    wfc = jnp.pad(wfc, ((0, 0), (0, 128 - bits)))                  # (1024,128)

    b1t = jnp.tile(b1, 12)[None, :]                                # (1,384)
    b2t = jnp.tile(b2, 4)[None, :]                                 # (1,256)
    bfp = jnp.pad(bf, (0, 128 - bits))[None, :]                    # (1,128)

    return dict(band1=band1c.astype(dtype), b1t=b1t,
                band2=band2c.astype(dtype), b2t=b2t,
                wf=wfc.astype(dtype), bf=bfp)


# ---------------- forward ----------------

@partial(jax.jit, static_argnames=("bt", "bits"))
def fashionnet_forward(x_nchw, prep, *, bt=32, bits=24):
    B = x_nchw.shape[0]
    assert x_nchw.shape[1:] == (1, 28, 28)

    # Cap the batch tile: no larger than needed, keep >= 2 grid steps when the
    # batch allows (both v7x TensorCores busy); bt=32 -> R=256 fills the MXU.
    bt = max(8, min(bt, _round_up(max(1, -(-B // 2)), 8)))
    R = bt * 8
    B_pad = _round_up(B, bt)
    n_blocks = B_pad // bt

    # Host-side repack (tiny): for conv1-output-row residue r, row b*8+j holds
    # image rows 4j+r .. 4j+r+4 concatenated along lanes as (tap, w).
    x = x_nchw.reshape(B, 28, 28).astype(jnp.float32)
    x = jnp.pad(x, ((0, B_pad - B), (0, 8), (0, 0)))               # (B_pad,36,28)
    jj, di, rr = jnp.arange(8), jnp.arange(5), jnp.arange(4)
    ridx = 4 * jj[None, :, None] + rr[:, None, None] + di[None, None, :]  # (4,8,5)
    xp = x[:, ridx, :]                                             # (B_pad,4,8,5,28)
    xp = xp.transpose(1, 0, 2, 3, 4).reshape(4, B_pad * 8, 140).astype(jnp.bfloat16)

    # One-hot fc row pickers (exact in bf16): pick[i][b, b*8+i] = 1.
    rows = lax.broadcasted_iota(jnp.int32, (4, bt, R), 1)
    cols = lax.broadcasted_iota(jnp.int32, (4, bt, R), 2)
    hsel = lax.broadcasted_iota(jnp.int32, (4, bt, R), 0)
    pick = (cols == rows * 8 + hsel).astype(jnp.bfloat16)

    out = pl.pallas_call(
        _fashionnet_kernel,
        out_shape=jax.ShapeDtypeStruct((B_pad, 128), jnp.float32),
        grid=(n_blocks,),
        in_specs=[
            pl.BlockSpec((4, R, 140), lambda b: (0, b, 0)),        # packed input
            pl.BlockSpec((4, bt, R), lambda b: (0, 0, 0)),         # fc row pickers
            pl.BlockSpec((140, 768), lambda b: (0, 0)),            # conv1 bands
            pl.BlockSpec((1, 384), lambda b: (0, 0)),              # b1 tiled
            pl.BlockSpec((1920, 512), lambda b: (0, 0)),           # conv2 bands
            pl.BlockSpec((1, 256), lambda b: (0, 0)),              # b2 tiled
            pl.BlockSpec((1024, 128), lambda b: (0, 0)),           # fc weight
            pl.BlockSpec((1, 128), lambda b: (0, 0)),              # fc bias
        ],
        out_specs=pl.BlockSpec((bt, 128), lambda b: (b, 0)),
        compiler_params=pltpu.CompilerParams(
            dimension_semantics=("parallel",),
            vmem_limit_bytes=32 * 1024 * 1024),
    )(xp, pick, prep["band1"], prep["b1t"], prep["band2"], prep["b2t"],
      prep["wf"], prep["bf"])
    return out[:B, :bits]


# ---------------- reference & synthetic params ----------------

def init_params(key, bits=24):
    k1, k2, k3, k4, k5, k6 = jax.random.split(key, 6)
    return dict(
        w1=jax.random.normal(k1, (32, 1, 5, 5), jnp.float32) * 0.1,
        b1=jax.random.normal(k2, (32,), jnp.float32) * 0.1,
        w2=jax.random.normal(k3, (64, 32, 5, 5), jnp.float32) * 0.05,
        b2=jax.random.normal(k4, (64,), jnp.float32) * 0.05,
        wf=jax.random.normal(k5, (bits, 1024), jnp.float32) * 0.03,
        bf=jax.random.normal(k6, (bits,), jnp.float32) * 0.03,
    )


def reference_forward(x_nchw, params):
    """Pure-JAX f32 reference mirroring the PyTorch forward, for verification."""
    dn = ("NCHW", "OIHW", "NCHW")
    y = lax.conv_general_dilated(x_nchw, params["w1"], (1, 1), "VALID",
                                 dimension_numbers=dn)
    y = y + params["b1"][None, :, None, None]
    y = lax.reduce_window(y, -jnp.inf, lax.max, (1, 1, 2, 2), (1, 1, 2, 2), "VALID")
    y = jnp.maximum(y, 0.0)
    y = lax.conv_general_dilated(y, params["w2"], (1, 1), "VALID",
                                 dimension_numbers=dn)
    y = y + params["b2"][None, :, None, None]
    y = lax.reduce_window(y, -jnp.inf, lax.max, (1, 1, 2, 2), (1, 1, 2, 2), "VALID")
    y = jnp.maximum(y, 0.0)
    flat = y.reshape(y.shape[0], -1)
    return flat @ params["wf"].T + params["bf"]


if __name__ == "__main__":
    key = jax.random.PRNGKey(0)
    kx, kp = jax.random.split(key)
    # fc1 expects 1024 = 64*4*4 features, which forces a 1x28x28 input.
    x = jax.random.normal(kx, (2, 1, 28, 28), jnp.float32)
    params = init_params(kp, bits=24)

    prep = prepare_params(params)                # one-time weight repack (bf16)
    out = fashionnet_forward(x, prep, bt=32, bits=24)
    out = jax.block_until_ready(out)

    ref = reference_forward(x, params)
    assert out.shape == (2, 24), out.shape
    err = float(jnp.max(jnp.abs(out - ref)))
    # bf16 MXU operands with f32 accumulation -> relaxed tolerance vs f32 ref.
    assert jnp.allclose(out, ref, atol=5e-2, rtol=5e-2), f"max abs err = {err}"
    print("KERNEL_OK")
</pallas_src>

<mosaic_0001>
module attributes {stable_mosaic.version = 11 : i64} {
  func.func @_fashionnet_kernel(%arg0: i32, %arg1: memref<4x64x140xbf16, #tpu.memory_space<vmem>>, %arg2: memref<4x8x64xbf16, #tpu.memory_space<vmem>>, %arg3: memref<140x768xbf16, #tpu.memory_space<vmem>>, %arg4: memref<1x384xf32, #tpu.memory_space<vmem>>, %arg5: memref<1920x512xbf16, #tpu.memory_space<vmem>>, %arg6: memref<1x256xf32, #tpu.memory_space<vmem>>, %arg7: memref<1024x128xbf16, #tpu.memory_space<vmem>>, %arg8: memref<1x128xf32, #tpu.memory_space<vmem>>, %arg9: memref<8x128xf32, #tpu.memory_space<vmem>>) attributes {dimension_semantics = [#tpu.dimension_semantics<parallel>], iteration_bounds = array<i64: 1>, scalar_prefetch = 0 : i64, scratch_operands = 0 : i64, tpu.core_type = #tpu.core_type<tc>, window_params = [{transform_indices = @transform_0, window_bounds = array<i64: 4, 64, 140>}, {pipeline_mode = #tpu.pipeline_mode<synchronous>, transform_indices = @transform_1, window_bounds = array<i64: 4, 8, 64>}, {pipeline_mode = #tpu.pipeline_mode<synchronous>, transform_indices = @transform_2, window_bounds = array<i64: 140, 768>}, {pipeline_mode = #tpu.pipeline_mode<synchronous>, transform_indices = @transform_3, window_bounds = array<i64: 1, 384>}, {pipeline_mode = #tpu.pipeline_mode<synchronous>, transform_indices = @transform_4, window_bounds = array<i64: 1920, 512>}, {pipeline_mode = #tpu.pipeline_mode<synchronous>, transform_indices = @transform_5, window_bounds = array<i64: 1, 256>}, {pipeline_mode = #tpu.pipeline_mode<synchronous>, transform_indices = @transform_6, window_bounds = array<i64: 1024, 128>}, {pipeline_mode = #tpu.pipeline_mode<synchronous>, transform_indices = @transform_7, window_bounds = array<i64: 1, 128>}, {transform_indices = @transform_8, window_bounds = array<i64: 8, 128>}]} {
    %c0 = arith.constant 0 : index
    %c0_0 = arith.constant 0 : index
    %c0_1 = arith.constant 0 : index
    %0 = vector.load %arg1[%c0, %c0_0, %c0_1] : memref<4x64x140xbf16, #tpu.memory_space<vmem>>, vector<1x64x140xbf16>
    %1 = vector.shape_cast %0 : vector<1x64x140xbf16> to vector<64x140xbf16>
    %c0_2 = arith.constant 0 : index
    %c0_3 = arith.constant 0 : index
    %2 = vector.load %arg3[%c0_2, %c0_3] : memref<140x768xbf16, #tpu.memory_space<vmem>>, vector<140x768xbf16>
    %cst = arith.constant dense<0.000000e+00> : vector<64x768xf32>
    %3 = tpu.matmul %1, %2, %cst {dimension_numbers = #tpu.dot_dimension_numbers<[1], [0], [0], [1], [0, 0, 1, 1], [], []>} : vector<64x140xbf16>, vector<140x768xbf16>, vector<64x768xf32> -> vector<64x768xf32>
    %c1 = arith.constant 1 : index
    %c0_4 = arith.constant 0 : index
    %c0_5 = arith.constant 0 : index
    %4 = vector.load %arg1[%c1, %c0_4, %c0_5] : memref<4x64x140xbf16, #tpu.memory_space<vmem>>, vector<1x64x140xbf16>
    %5 = vector.shape_cast %4 : vector<1x64x140xbf16> to vector<64x140xbf16>
    %c0_6 = arith.constant 0 : index
    %c0_7 = arith.constant 0 : index
    %6 = vector.load %arg3[%c0_6, %c0_7] : memref<140x768xbf16, #tpu.memory_space<vmem>>, vector<140x768xbf16>
    %cst_8 = arith.constant dense<0.000000e+00> : vector<64x768xf32>
    %7 = tpu.matmul %5, %6, %cst_8 {dimension_numbers = #tpu.dot_dimension_numbers<[1], [0], [0], [1], [0, 0, 1, 1], [], []>} : vector<64x140xbf16>, vector<140x768xbf16>, vector<64x768xf32> -> vector<64x768xf32>
    %c2 = arith.constant 2 : index
    %c0_9 = arith.constant 0 : index
    %c0_10 = arith.constant 0 : index
    %8 = vector.load %arg1[%c2, %c0_9, %c0_10] : memref<4x64x140xbf16, #tpu.memory_space<vmem>>, vector<1x64x140xbf16>
    %9 = vector.shape_cast %8 : vector<1x64x140xbf16> to vector<64x140xbf16>
    %c0_11 = arith.constant 0 : index
    %c0_12 = arith.constant 0 : index
    %10 = vector.load %arg3[%c0_11, %c0_12] : memref<140x768xbf16, #tpu.memory_space<vmem>>, vector<140x768xbf16>
    %cst_13 = arith.constant dense<0.000000e+00> : vector<64x768xf32>
    %11 = tpu.matmul %9, %10, %cst_13 {dimension_numbers = #tpu.dot_dimension_numbers<[1], [0], [0], [1], [0, 0, 1, 1], [], []>} : vector<64x140xbf16>, vector<140x768xbf16>, vector<64x768xf32> -> vector<64x768xf32>
    %c3 = arith.constant 3 : index
    %c0_14 = arith.constant 0 : index
    %c0_15 = arith.constant 0 : index
    %12 = vector.load %arg1[%c3, %c0_14, %c0_15] : memref<4x64x140xbf16, #tpu.memory_space<vmem>>, vector<1x64x140xbf16>
    %13 = vector.shape_cast %12 : vector<1x64x140xbf16> to vector<64x140xbf16>
    %c0_16 = arith.constant 0 : index
    %c0_17 = arith.constant 0 : index
    %14 = vector.load %arg3[%c0_16, %c0_17] : memref<140x768xbf16, #tpu.memory_space<vmem>>, vector<140x768xbf16>
    %cst_18 = arith.constant dense<0.000000e+00> : vector<64x768xf32>
    %15 = tpu.matmul %13, %14, %cst_18 {dimension_numbers = #tpu.dot_dimension_numbers<[1], [0], [0], [1], [0, 0, 1, 1], [], []>} : vector<64x140xbf16>, vector<140x768xbf16>, vector<64x768xf32> -> vector<64x768xf32>
    %c0_19 = arith.constant 0 : index
    %c0_20 = arith.constant 0 : index
    %16 = vector.load %arg4[%c0_19, %c0_20] : memref<1x384xf32, #tpu.memory_space<vmem>>, vector<1x384xf32>
    %17 = arith.maximumf %3, %7 : vector<64x768xf32>
    %18 = arith.maximumf %11, %15 : vector<64x768xf32>
    %19 = vector.extract_strided_slice %17 {offsets = [0, 0], sizes = [64, 384], strides = [1, 1]} : vector<64x768xf32> to vector<64x384xf32>
    %20 = vector.extract_strided_slice %17 {offsets = [0, 384], sizes = [64, 384], strides = [1, 1]} : vector<64x768xf32> to vector<64x384xf32>
    %21 = arith.maximumf %19, %20 : vector<64x384xf32>
    %22 = vector.broadcast %16 : vector<1x384xf32> to vector<64x384xf32>
    %23 = arith.addf %21, %22 : vector<64x384xf32>
    %cst_21 = arith.constant 0.000000e+00 : f32
    %24 = vector.broadcast %cst_21 : f32 to vector<64x384xf32>
    %25 = arith.maximumf %23, %24 : vector<64x384xf32>
    %26 = vector.extract_strided_slice %18 {offsets = [0, 0], sizes = [64, 384], strides = [1, 1]} : vector<64x768xf32> to vector<64x384xf32>
    %27 = vector.extract_strided_slice %18 {offsets = [0, 384], sizes = [64, 384], strides = [1, 1]} : vector<64x768xf32> to vector<64x384xf32>
    %28 = arith.maximumf %26, %27 : vector<64x384xf32>
    %29 = vector.broadcast %16 : vector<1x384xf32> to vector<64x384xf32>
    %30 = arith.addf %28, %29 : vector<64x384xf32>
    %cst_22 = arith.constant 0.000000e+00 : f32
    %31 = vector.broadcast %cst_22 : f32 to vector<64x384xf32>
    %32 = arith.maximumf %30, %31 : vector<64x384xf32>
    %33 = arith.truncf %25 : vector<64x384xf32> to vector<64x384xbf16>
    %34 = arith.truncf %32 : vector<64x384xf32> to vector<64x384xbf16>
    %c63_i32 = arith.constant 63 : i32
    %35 = tpu.dynamic_rotate %25 by %c63_i32 dim 0 : vector<64x384xf32>, i32 -> vector<64x384xf32>
    %36 = arith.truncf %35 : vector<64x384xf32> to vector<64x384xbf16>
    %c63_i32_23 = arith.constant 63 : i32
    %37 = tpu.dynamic_rotate %32 by %c63_i32_23 dim 0 : vector<64x384xf32>, i32 -> vector<64x384xf32>
    %38 = arith.truncf %37 : vector<64x384xf32> to vector<64x384xbf16>
    %c62_i32 = arith.constant 62 : i32
    %39 = tpu.dynamic_rotate %25 by %c62_i32 dim 0 : vector<64x384xf32>, i32 -> vector<64x384xf32>
    %40 = arith.truncf %39 : vector<64x384xf32> to vector<64x384xbf16>
    %c62_i32_24 = arith.constant 62 : i32
    %41 = tpu.dynamic_rotate %32 by %c62_i32_24 dim 0 : vector<64x384xf32>, i32 -> vector<64x384xf32>
    %42 = arith.truncf %41 : vector<64x384xf32> to vector<64x384xbf16>
    %43 = tpu.concatenate %33, %34, %36, %38, %40 in 1 : vector<64x384xbf16>, vector<64x384xbf16>, vector<64x384xbf16>, vector<64x384xbf16>, vector<64x384xbf16> -> vector<64x1920xbf16>
    %44 = tpu.concatenate %34, %36, %38, %40, %42 in 1 : vector<64x384xbf16>, vector<64x384xbf16>, vector<64x384xbf16>, vector<64x384xbf16>, vector<64x384xbf16> -> vector<64x1920xbf16>
    %c0_25 = arith.constant 0 : index
    %c0_26 = arith.constant 0 : index
    %45 = vector.load %arg5[%c0_25, %c0_26] : memref<1920x512xbf16, #tpu.memory_space<vmem>>, vector<1920x512xbf16>
    %cst_27 = arith.constant dense<0.000000e+00> : vector<64x512xf32>
    %46 = tpu.matmul %43, %45, %cst_27 {dimension_numbers = #tpu.dot_dimension_numbers<[1], [0], [0], [1], [0, 0, 1, 1], [], []>} : vector<64x1920xbf16>, vector<1920x512xbf16>, vector<64x512xf32> -> vector<64x512xf32>
    %c0_28 = arith.constant 0 : index
    %c0_29 = arith.constant 0 : index
    %47 = vector.load %arg5[%c0_28, %c0_29] : memref<1920x512xbf16, #tpu.memory_space<vmem>>, vector<1920x512xbf16>
    %cst_30 = arith.constant dense<0.000000e+00> : vector<64x512xf32>
    %48 = tpu.matmul %44, %47, %cst_30 {dimension_numbers = #tpu.dot_dimension_numbers<[1], [0], [0], [1], [0, 0, 1, 1], [], []>} : vector<64x1920xbf16>, vector<1920x512xbf16>, vector<64x512xf32> -> vector<64x512xf32>
    %c0_31 = arith.constant 0 : index
    %c0_32 = arith.constant 0 : index
    %49 = vector.load %arg6[%c0_31, %c0_32] : memref<1x256xf32, #tpu.memory_space<vmem>>, vector<1x256xf32>
    %50 = arith.maximumf %46, %48 : vector<64x512xf32>
    %51 = vector.extract_strided_slice %50 {offsets = [0, 0], sizes = [64, 256], strides = [1, 1]} : vector<64x512xf32> to vector<64x256xf32>
    %52 = vector.extract_strided_slice %50 {offsets = [0, 256], sizes = [64, 256], strides = [1, 1]} : vector<64x512xf32> to vector<64x256xf32>
    %53 = arith.maximumf %51, %52 : vector<64x256xf32>
    %54 = vector.broadcast %49 : vector<1x256xf32> to vector<64x256xf32>
    %55 = arith.addf %53, %54 : vector<64x256xf32>
    %cst_33 = arith.constant 0.000000e+00 : f32
    %56 = vector.broadcast %cst_33 : f32 to vector<64x256xf32>
    %57 = arith.maximumf %55, %56 : vector<64x256xf32>
    %58 = arith.truncf %57 : vector<64x256xf32> to vector<64x256xbf16>
    %c0_34 = arith.constant 0 : index
    %c0_35 = arith.constant 0 : index
    %c0_36 = arith.constant 0 : index
    %59 = vector.load %arg2[%c0_34, %c0_35, %c0_36] : memref<4x8x64xbf16, #tpu.memory_space<vmem>>, vector<1x8x64xbf16>
    %60 = vector.shape_cast %59 : vector<1x8x64xbf16> to vector<8x64xbf16>
    %cst_37 = arith.constant dense<0.000000e+00> : vector<8x256xf32>
    %61 = tpu.matmul %60, %58, %cst_37 {dimension_numbers = #tpu.dot_dimension_numbers<[1], [0], [0], [1], [0, 0, 1, 1], [], []>} : vector<8x64xbf16>, vector<64x256xbf16>, vector<8x256xf32> -> vector<8x256xf32>
    %62 = arith.truncf %61 : vector<8x256xf32> to vector<8x256xbf16>
    %c1_38 = arith.constant 1 : index
    %c0_39 = arith.constant 0 : index
    %c0_40 = arith.constant 0 : index
    %63 = vector.load %arg2[%c1_38, %c0_39, %c0_40] : memref<4x8x64xbf16, #tpu.memory_space<vmem>>, vector<1x8x64xbf16>
    %64 = vector.shape_cast %63 : vector<1x8x64xbf16> to vector<8x64xbf16>
    %cst_41 = arith.constant dense<0.000000e+00> : vector<8x256xf32>
    %65 = tpu.matmul %64, %58, %cst_41 {dimension_numbers = #tpu.dot_dimension_numbers<[1], [0], [0], [1], [0, 0, 1, 1], [], []>} : vector<8x64xbf16>, vector<64x256xbf16>, vector<8x256xf32> -> vector<8x256xf32>
    %66 = arith.truncf %65 : vector<8x256xf32> to vector<8x256xbf16>
    %c2_42 = arith.constant 2 : index
    %c0_43 = arith.constant 0 : index
    %c0_44 = arith.constant 0 : index
    %67 = vector.load %arg2[%c2_42, %c0_43, %c0_44] : memref<4x8x64xbf16, #tpu.memory_space<vmem>>, vector<1x8x64xbf16>
    %68 = vector.shape_cast %67 : vector<1x8x64xbf16> to vector<8x64xbf16>
    %cst_45 = arith.constant dense<0.000000e+00> : vector<8x256xf32>
    %69 = tpu.matmul %68, %58, %cst_45 {dimension_numbers = #tpu.dot_dimension_numbers<[1], [0], [0], [1], [0, 0, 1, 1], [], []>} : vector<8x64xbf16>, vector<64x256xbf16>, vector<8x256xf32> -> vector<8x256xf32>
    %70 = arith.truncf %69 : vector<8x256xf32> to vector<8x256xbf16>
    %c3_46 = arith.constant 3 : index
    %c0_47 = arith.constant 0 : index
    %c0_48 = arith.constant 0 : index
    %71 = vector.load %arg2[%c3_46, %c0_47, %c0_48] : memref<4x8x64xbf16, #tpu.memory_space<vmem>>, vector<1x8x64xbf16>
    %72 = vector.shape_cast %71 : vector<1x8x64xbf16> to vector<8x64xbf16>
    %cst_49 = arith.constant dense<0.000000e+00> : vector<8x256xf32>
    %73 = tpu.matmul %72, %58, %cst_49 {dimension_numbers = #tpu.dot_dimension_numbers<[1], [0], [0], [1], [0, 0, 1, 1], [], []>} : vector<8x64xbf16>, vector<64x256xbf16>, vector<8x256xf32> -> vector<8x256xf32>
    %74 = arith.truncf %73 : vector<8x256xf32> to vector<8x256xbf16>
    %75 = tpu.concatenate %62, %66, %70, %74 in 1 : vector<8x256xbf16>, vector<8x256xbf16>, vector<8x256xbf16>, vector<8x256xbf16> -> vector<8x1024xbf16>
    %c0_50 = arith.constant 0 : index
    %c0_51 = arith.constant 0 : index
    %76 = vector.load %arg7[%c0_50, %c0_51] : memref<1024x128xbf16, #tpu.memory_space<vmem>>, vector<1024x128xbf16>
    %cst_52 = arith.constant dense<0.000000e+00> : vector<8x128xf32>
    %77 = tpu.matmul %75, %76, %cst_52 {dimension_numbers = #tpu.dot_dimension_numbers<[1], [0], [0], [1], [0, 0, 1, 1], [], []>} : vector<8x1024xbf16>, vector<1024x128xbf16>, vector<8x128xf32> -> vector<8x128xf32>
    %c0_53 = arith.constant 0 : index
    %c0_54 = arith.constant 0 : index
    %78 = vector.load %arg8[%c0_53, %c0_54] : memref<1x128xf32, #tpu.memory_space<vmem>>, vector<1x128xf32>
    %79 = vector.broadcast %78 : vector<1x128xf32> to vector<8x128xf32>
    %80 = arith.addf %77, %79 : vector<8x128xf32>
    %c0_55 = arith.constant 0 : index
    %c0_56 = arith.constant 0 : index
    %81 = vector.load %arg9[%c0_55, %c0_56] : memref<8x128xf32, #tpu.memory_space<vmem>>, vector<8x128xf32>
    tpu.vector_store %arg9[%c0_55, %c0_56], %80 {strides = array<i32>} : memref<8x128xf32, #tpu.memory_space<vmem>>, vector<8x128xf32>,
    return
  }
  func.func @transform_0(%arg0: i32) -> (i32, i32, i32) {
    %c0_i32 = arith.constant 0 : i32
    %c0_i32_0 = arith.constant 0 : i32
    %c0_i32_1 = arith.constant 0 : i32
    return %c0_i32, %arg0, %c0_i32_0 : i32, i32, i32
  }
  func.func @transform_1(%arg0: i32) -> (i32, i32, i32) {
    %c0_i32 = arith.constant 0 : i32
    %c0_i32_0 = arith.constant 0 : i32
    %c0_i32_1 = arith.constant 0 : i32
    %c0_i32_2 = arith.constant 0 : i32
    return %c0_i32, %c0_i32_0, %c0_i32_1 : i32, i32, i32
  }
  func.func @transform_2(%arg0: i32) -> (i32, i32) {
    %c0_i32 = arith.constant 0 : i32
    %c0_i32_0 = arith.constant 0 : i32
    %c0_i32_1 = arith.constant 0 : i32
    return %c0_i32, %c0_i32_0 : i32, i32
  }
  func.func @transform_3(%arg0: i32) -> (i32, i32) {
    %c0_i32 = arith.constant 0 : i32
    %c0_i32_0 = arith.constant 0 : i32
    %c0_i32_1 = arith.constant 0 : i32
    return %c0_i32, %c0_i32_0 : i32, i32
  }
  func.func @transform_4(%arg0: i32) -> (i32, i32) {
    %c0_i32 = arith.constant 0 : i32
    %c0_i32_0 = arith.constant 0 : i32
    %c0_i32_1 = arith.constant 0 : i32
    return %c0_i32, %c0_i32_0 : i32, i32
  }
  func.func @transform_5(%arg0: i32) -> (i32, i32) {
    %c0_i32 = arith.constant 0 : i32
    %c0_i32_0 = arith.constant 0 : i32
    %c0_i32_1 = arith.constant 0 : i32
    return %c0_i32, %c0_i32_0 : i32, i32
  }
  func.func @transform_6(%arg0: i32) -> (i32, i32) {
    %c0_i32 = arith.constant 0 : i32
    %c0_i32_0 = arith.constant 0 : i32
    %c0_i32_1 = arith.constant 0 : i32
    return %c0_i32, %c0_i32_0 : i32, i32
  }
  func.func @transform_7(%arg0: i32) -> (i32, i32) {
    %c0_i32 = arith.constant 0 : i32
    %c0_i32_0 = arith.constant 0 : i32
    %c0_i32_1 = arith.constant 0 : i32
    return %c0_i32, %c0_i32_0 : i32, i32
  }
  func.func @transform_8(%arg0: i32) -> (i32, i32) {
    %c0_i32 = arith.constant 0 : i32
    %c0_i32_0 = arith.constant 0 : i32
    return %arg0, %c0_i32 : i32, i32
  }
}

</mosaic_0001>

<llo_original>
// kernel: fashionnet_forward.1
$region0: #{fashionnet_forward.1}
  #allocation0 [shape = 'u32[]', space=smem, size = 0x4, offset = 0x4, fixed_abs, tag = 'smem constant byte address 0x4 - core index']
  #allocation1 [shape = 'u32[144,128]{1,0:T(1,128)}', space=vmem, size = 0x12000, scoped, tag = 'internal scratch']
  %s0 = inlined_call_operand.vmem [shape: bf16[4,64,140], index: 0, kind: input, shape index: {}]
  %s1 = inlined_call_operand.vmem [shape: bf16[4,8,64], index: 1, kind: input, shape index: {}]
  %s2 = inlined_call_operand.vmem [shape: bf16[140,768], index: 2, kind: input, shape index: {}]
  %s3 = inlined_call_operand.vmem [shape: f32[1,384], index: 3, kind: input, shape index: {}]
  %s4 = inlined_call_operand.vmem [shape: bf16[1920,512], index: 4, kind: input, shape index: {}]
  %s5 = inlined_call_operand.vmem [shape: f32[1,256], index: 5, kind: input, shape index: {}]
  %s6 = inlined_call_operand.vmem [shape: bf16[1024,128], index: 6, kind: input, shape index: {}]
  %s7 = inlined_call_operand.vmem [shape: f32[1,128], index: 7, kind: input, shape index: {}]
  %s8 = inlined_call_operand.vmem [shape: f32[8,128], index: 8, kind: output, shape index: {}]
  %s9 = sld [smem:[#allocation0]]
  $region42: #{fashionnet_forward.1} parent=0
    _
  %s11 = ssub.s32 1, %s9
  %s12 = scalar_select 0, %s11, %s9
  // Predicated region
  $region2: #{fashionnet_forward.1} parent=0 // pred_check
    _
  $region3: #{fashionnet_forward.1} parent=0 // pred_check_branch
    %14 = sbr.rel (0) target = $region5
  $region4: #{fashionnet_forward.1} parent=0 // pred_region
    _
  $region5: #{fashionnet_forward.1} parent=0 // pred_fallthru
    _
  // Predicated region
  $region6: #{fashionnet_forward.1} parent=0 // pred_check
    _
  $region7: #{fashionnet_forward.1} parent=0 // pred_check_branch
    %16 = sbr.rel (0) target = $region9
  $region8: #{fashionnet_forward.1} parent=0 // pred_region
    _
  $region9: #{fashionnet_forward.1} parent=0 // pred_fallthru
    _
  // Predicated region
  $region10: #{fashionnet_forward.1} parent=0 // pred_check
    _
  $region11: #{fashionnet_forward.1} parent=0 // pred_check_branch
    %18 = sbr.rel (0) target = $region13
  $region12: #{fashionnet_forward.1} parent=0 // pred_region
    _
  $region13: #{fashionnet_forward.1} parent=0 // pred_fallthru
    _
  // Predicated region
  $region14: #{fashionnet_forward.1} parent=0 // pred_check
    _
  $region15: #{fashionnet_forward.1} parent=0 // pred_check_branch
    %20 = sbr.rel (0) target = $region17
  $region16: #{fashionnet_forward.1} parent=0 // pred_region
    _
  $region17: #{fashionnet_forward.1} parent=0 // pred_fallthru
    _
  // Predicated region
  $region18: #{fashionnet_forward.1} parent=0 // pred_check
    _
  $region19: #{fashionnet_forward.1} parent=0 // pred_check_branch
    %22 = sbr.rel (0) target = $region21
  $region20: #{fashionnet_forward.1} parent=0 // pred_region
    _
  $region21: #{fashionnet_forward.1} parent=0 // pred_fallthru
    _
  // Predicated region
  $region22: #{fashionnet_forward.1} parent=0 // pred_check
    _
  $region23: #{fashionnet_forward.1} parent=0 // pred_check_branch
    %24 = sbr.rel (0) target = $region25
  $region24: #{fashionnet_forward.1} parent=0 // pred_region
    _
  $region25: #{fashionnet_forward.1} parent=0 // pred_fallthru
    _
  // Predicated region
  $region26: #{fashionnet_forward.1} parent=0 // pred_check
    _
  $region27: #{fashionnet_forward.1} parent=0 // pred_check_branch
    %26 = sbr.rel (0) target = $region29
  $region28: #{fashionnet_forward.1} parent=0 // pred_region
    _
  $region29: #{fashionnet_forward.1} parent=0 // pred_fallthru
    _
  // Predicated region
  $region30: #{fashionnet_forward.1} parent=0 // pred_check
    _
  $region31: #{fashionnet_forward.1} parent=0 // pred_check_branch
    %28 = sbr.rel (0) target = $region33
  $region32: #{fashionnet_forward.1} parent=0 // pred_region
    _
  $region33: #{fashionnet_forward.1} parent=0 // pred_fallthru
    _
  %v30 = vld [vmem:[%s0] sm:$0xff]
  %v31 = vld [vmem:[%s0 + $0x8] sm:$0xff]
  %v32 = vld [vmem:[%s0 + $0x10] sm:$0xff]
  %v33 = vld [vmem:[%s0 + $0x18] sm:$0xff]
  %v34 = vld [vmem:[%s0 + $0x20] sm:$0xff]
  %v35 = vld [vmem:[%s0 + $0x28] sm:$0xff]
  %v36 = vld [vmem:[%s0 + $0x30] sm:$0xff]
  %v37 = vld [vmem:[%s0 + $0x38] sm:$0xff]
  %v38 = vld [vmem:[%s2] sm:$0xff]
  %v39 = vld [vmem:[%s2 + $0x8] sm:$0xff]
  %v40 = vld [vmem:[%s2 + $0x10] sm:$0xff]
  %v41 = vld [vmem:[%s2 + $0x18] sm:$0xff]
  %v42 = vld [vmem:[%s2 + $0x20] sm:$0xff]
  %v43 = vld [vmem:[%s2 + $0x28] sm:$0xff]
  %v44 = vld [vmem:[%s2 + $0x30] sm:$0xff]
  %v45 = vld [vmem:[%s2 + $0x38] sm:$0xff]
  %v46 = vld [vmem:[%s2 + $0x40] sm:$0xff]
  %v47 = vld [vmem:[%s2 + $0x48] sm:$0xff]
  %v48 = vld [vmem:[%s2 + $0x50] sm:$0xff]
  %v49 = vld [vmem:[%s2 + $0x58] sm:$0xff]
  %v50 = vld [vmem:[%s2 + $0x60] sm:$0xff]
  %v51 = vld [vmem:[%s2 + $0x68] sm:$0xff]
  %v52 = vld [vmem:[%s2 + $0x70] sm:$0xff]
  %v53 = vld [vmem:[%s2 + $0x78] sm:$0xff]
  %v54 = vld [vmem:[%s2 + $0x80] sm:$0xff]
  %v55 = vld [vmem:[%s2 + $0x88] sm:$0xff]
  %v56 = vld [vmem:[%s2 + $0x90] sm:$0xff]
  %v57 = vld [vmem:[%s2 + $0x98] sm:$0xff]
  %v58 = vld [vmem:[%s2 + $0xa0] sm:$0xff]
  %v59 = vld [vmem:[%s2 + $0xa8] sm:$0xff]
  %v60 = vld [vmem:[%s2 + $0xb0] sm:$0xff]
  %v61 = vld [vmem:[%s2 + $0xb8] sm:$0xff]
  %v62 = vld [vmem:[%s2 + $0xc0] sm:$0xff]
  %v63 = vld [vmem:[%s2 + $0xc8] sm:$0xff]
  %v64 = vld [vmem:[%s2 + $0xd0] sm:$0xff]
  %v65 = vld [vmem:[%s2 + $0xd8] sm:$0xff]
  %v66 = vld [vmem:[%s2 + $0xe0] sm:$0xff]
  %v67 = vld [vmem:[%s2 + $0xe8] sm:$0xff]
  %v68 = vld [vmem:[%s2 + $0xf0] sm:$0xff]
  %v69 = vld [vmem:[%s2 + $0xf8] sm:$0xff]
  %v70 = vld [vmem:[%s2 + $0x100] sm:$0xff]
  %v71 = vld [vmem:[%s2 + $0x108] sm:$0xff]
  %v72 = vld [vmem:[%s2 + $0x110] sm:$0xff]
  %v73 = vld [vmem:[%s2 + $0x118] sm:$0xff]
  %v74 = vld [vmem:[%s2 + $0x120] sm:$0xff]
  %v75 = vld [vmem:[%s2 + $0x128] sm:$0xff]
  %v76 = vld [vmem:[%s2 + $0x130] sm:$0xff]
  %v77 = vld [vmem:[%s2 + $0x138] sm:$0xff]
  %v78 = vld [vmem:[%s2 + $0x140] sm:$0xff]
  %v79 = vld [vmem:[%s2 + $0x148] sm:$0xff]
  %v80 = vld [vmem:[%s2 + $0x150] sm:$0xff]
  %v81 = vld [vmem:[%s2 + $0x158] sm:$0xff]
  %v82 = vld [vmem:[%s2 + $0x160] sm:$0xff]
  %v83 = vld [vmem:[%s2 + $0x168] sm:$0xff]
  %v84 = vld [vmem:[%s2 + $0x170] sm:$0xff]
  %v85 = vld [vmem:[%s2 + $0x178] sm:$0xff]
  %v86 = vld [vmem:[%s2 + $0x180] sm:$0xff]
  %v87 = vld [vmem:[%s2 + $0x188] sm:$0xff]
  %v88 = vld [vmem:[%s2 + $0x190] sm:$0xff]
  %v89 = vld [vmem:[%s2 + $0x198] sm:$0x33]
  %v90 = vld [vmem:[%s2 + $0x1a0] sm:$0x33]
  %v91 = vld [vmem:[%s2 + $0x1a8] sm:$0x33]
  %v100 = vunpack.c.l.b16 %v30
  %v101 = vunpack.c.h.b16 %v30
  %v102 = vunpack.c.l.b16 %v31
  %v103 = vunpack.c.h.b16 %v31
  %v104 = vunpack.c.l.b16 %v32
  %v105 = vunpack.c.h.b16 %v32
  %v106 = vunpack.c.l.b16 %v33
  %v107 = vunpack.c.h.b16 %v33
  %v108 = vunpack.c.l.b16 %v34
  %v109 = vunpack.c.h.b16 %v34
  %v110 = vunpack.c.l.b16 %v35
  %v111 = vunpack.c.h.b16 %v35
  %v112 = vunpack.c.l.b16 %v36
  %v113 = vunpack.c.h.b16 %v36
  %v114 = vunpack.c.l.b16 %v37
  %v115 = vunpack.c.h.b16 %v37
  %v116 = vpack.c.b16 %v102, %v100
  %v117 = vpack.c.b16 %v103, %v101
  %v118 = vpack.c.b16 %v106, %v104
  %v119 = vpack.c.b16 %v107, %v105
  %v120 = vpack.c.b16 %v110, %v108
  %v121 = vpack.c.b16 %v111, %v109
  %v122 = vpack.c.b16 %v114, %v112
  %v123 = vpack.c.b16 %v115, %v113
  %v182 = vunpack.c.l.b16 %v38
  %v183 = vunpack.c.h.b16 %v38
  %v184 = vunpack.c.l.b16 %v39
  %v185 = vunpack.c.h.b16 %v39
  %v186 = vunpack.c.l.b16 %v40
  %v187 = vunpack.c.h.b16 %v40
  %v188 = vunpack.c.l.b16 %v41
  %v189 = vunpack.c.h.b16 %v41
  %v190 = vunpack.c.l.b16 %v42
  %v191 = vunpack.c.h.b16 %v42
  %v192 = vunpack.c.l.b16 %v43
  %v193 = vunpack.c.h.b16 %v43
  %v194 = vunpack.c.l.b16 %v44
  %v195 = vunpack.c.h.b16 %v44
  %v196 = vunpack.c.l.b16 %v45
  %v197 = vunpack.c.h.b16 %v45
  %v198 = vunpack.c.l.b16 %v46
  %v199 = vunpack.c.h.b16 %v46
  %v200 = vunpack.c.l.b16 %v47
  %v201 = vunpack.c.h.b16 %v47
  %v202 = vunpack.c.l.b16 %v48
  %v203 = vunpack.c.h.b16 %v48
  %v204 = vunpack.c.l.b16 %v49
  %v205 = vunpack.c.h.b16 %v49
  %v206 = vunpack.c.l.b16 %v50
  %v207 = vunpack.c.h.b16 %v50
  %v208 = vunpack.c.l.b16 %v51
  %v209 = vunpack.c.h.b16 %v51
  %v210 = vunpack.c.l.b16 %v52
  %v211 = vunpack.c.h.b16 %v52
  %v212 = vunpack.c.l.b16 %v53
  %v213 = vunpack.c.h.b16 %v53
  %v214 = vunpack.c.l.b16 %v54
  %v215 = vunpack.c.h.b16 %v54
  %v216 = vunpack.c.l.b16 %v55
  %v217 = vunpack.c.h.b16 %v55
  %v218 = vunpack.c.l.b16 %v56
  %v219 = vunpack.c.h.b16 %v56
  %v220 = vunpack.c.l.b16 %v57
  %v221 = vunpack.c.h.b16 %v57
  %v222 = vunpack.c.l.b16 %v58
  %v223 = vunpack.c.h.b16 %v58
  %v224 = vunpack.c.l.b16 %v59
  %v225 = vunpack.c.h.b16 %v59
  %v226 = vunpack.c.l.b16 %v60
  %v227 = vunpack.c.h.b16 %v60
  %v228 = vunpack.c.l.b16 %v61
  %v229 = vunpack.c.h.b16 %v61
  %v230 = vunpack.c.l.b16 %v62
  %v231 = vunpack.c.h.b16 %v62
  %v232 = vunpack.c.l.b16 %v63
  %v233 = vunpack.c.h.b16 %v63
  %v234 = vunpack.c.l.b16 %v64
  %v235 = vunpack.c.h.b16 %v64
  %v236 = vunpack.c.l.b16 %v65
  %v237 = vunpack.c.h.b16 %v65
  %v238 = vunpack.c.l.b16 %v66
  %v239 = vunpack.c.h.b16 %v66
  %v240 = vunpack.c.l.b16 %v67
  %v241 = vunpack.c.h.b16 %v67
  %v242 = vunpack.c.l.b16 %v68
  %v243 = vunpack.c.h.b16 %v68
  %v244 = vunpack.c.l.b16 %v69
  %v245 = vunpack.c.h.b16 %v69
  %v246 = vunpack.c.l.b16 %v70
  %v247 = vunpack.c.h.b16 %v70
  %v248 = vunpack.c.l.b16 %v71
  %v249 = vunpack.c.h.b16 %v71
  %v250 = vunpack.c.l.b16 %v72
  %v251 = vunpack.c.h.b16 %v72
  %v252 = vunpack.c.l.b16 %v73
  %v253 = vunpack.c.h.b16 %v73
  %v254 = vunpack.c.l.b16 %v74
  %v255 = vunpack.c.h.b16 %v74
  %v256 = vunpack.c.l.b16 %v75
  %v257 = vunpack.c.h.b16 %v75
  %v258 = vunpack.c.l.b16 %v76
  %v259 = vunpack.c.h.b16 %v76
  %v260 = vunpack.c.l.b16 %v77
  %v261 = vunpack.c.h.b16 %v77
  %v262 = vunpack.c.l.b16 %v78
  %v263 = vunpack.c.h.b16 %v78
  %v264 = vunpack.c.l.b16 %v79
  %v265 = vunpack.c.h.b16 %v79
  %v266 = vunpack.c.l.b16 %v80
  %v267 = vunpack.c.h.b16 %v80
  %v268 = vunpack.c.l.b16 %v81
  %v269 = vunpack.c.h.b16 %v81
  %v270 = vunpack.c.l.b16 %v82
  %v271 = vunpack.c.h.b16 %v82
  %v272 = vunpack.c.l.b16 %v83
  %v273 = vunpack.c.h.b16 %v83
  %v274 = vunpack.c.l.b16 %v84
  %v275 = vunpack.c.h.b16 %v84
  %v276 = vunpack.c.l.b16 %v85
  %v277 = vunpack.c.h.b16 %v85
  %v278 = vunpack.c.l.b16 %v86
  %v279 = vunpack.c.h.b16 %v86
  %v280 = vunpack.c.l.b16 %v87
  %v281 = vunpack.c.h.b16 %v87
  %v282 = vunpack.c.l.b16 %v88
  %v283 = vunpack.c.h.b16 %v88
  %v284 = vunpack.c.l.b16 %v89
  %v285 = vunpack.c.h.b16 %v89
  %v286 = vunpack.c.l.b16 %v90
  %v287 = vunpack.c.h.b16 %v90
  %v288 = vunpack.c.l.b16 %v91
  %v289 = vunpack.c.h.b16 %v91
  %v290 = vpack.c.b16 %v188, %v182
  %v291 = vpack.c.b16 %v189, %v183
  %v292 = vpack.c.b16 %v190, %v184
  %v293 = vpack.c.b16 %v191, %v185
  %v294 = vpack.c.b16 %v192, %v186
  %v295 = vpack.c.b16 %v193, %v187
  %v296 = vpack.c.b16 %v200, %v194
  %v297 = vpack.c.b16 %v201, %v195
  %v298 = vpack.c.b16 %v202, %v196
  %v299 = vpack.c.b16 %v203, %v197
  %v300 = vpack.c.b16 %v204, %v198
  %v301 = vpack.c.b16 %v205, %v199
  %v302 = vpack.c.b16 %v212, %v206
  %v303 = vpack.c.b16 %v213, %v207
  %v304 = vpack.c.b16 %v214, %v208
  %v305 = vpack.c.b16 %v215, %v209
  %v306 = vpack.c.b16 %v216, %v210
  %v307 = vpack.c.b16 %v217, %v211
  %v308 = vpack.c.b16 %v224, %v218
  %v309 = vpack.c.b16 %v225, %v219
  %v310 = vpack.c.b16 %v226, %v220
  %v311 = vpack.c.b16 %v227, %v221
  %v312 = vpack.c.b16 %v228, %v222
  %v313 = vpack.c.b16 %v229, %v223
  %v314 = vpack.c.b16 %v236, %v230
  %v315 = vpack.c.b16 %v237, %v231
  %v316 = vpack.c.b16 %v238, %v232
  %v317 = vpack.c.b16 %v239, %v233
  %v318 = vpack.c.b16 %v240, %v234
  %v319 = vpack.c.b16 %v241, %v235
  %v320 = vpack.c.b16 %v248, %v242
  %v321 = vpack.c.b16 %v249, %v243
  %v322 = vpack.c.b16 %v250, %v244
  %v323 = vpack.c.b16 %v251, %v245
  %v324 = vpack.c.b16 %v252, %v246
  %v325 = vpack.c.b16 %v253, %v247
  %v326 = vpack.c.b16 %v260, %v254
  %v327 = vpack.c.b16 %v261, %v255
  %v328 = vpack.c.b16 %v262, %v256
  %v329 = vpack.c.b16 %v263, %v257
  %v330 = vpack.c.b16 %v264, %v258
  %v331 = vpack.c.b16 %v265, %v259
  %v332 = vpack.c.b16 %v272, %v266
  %v333 = vpack.c.b16 %v273, %v267
  %v334 = vpack.c.b16 %v274, %v268
  %v335 = vpack.c.b16 %v275, %v269
  %v336 = vpack.c.b16 %v276, %v270
  %v337 = vpack.c.b16 %v277, %v271
  %v338 = vpack.c.b16 %v284, %v278
  %v339 = vpack.c.b16 %v285, %v279
  %v340 = vpack.c.b16 %v286, %v280
  %v341 = vpack.c.b16 %v287, %v281
  %v342 = vpack.c.b16 %v288, %v282
  %v343 = vpack.c.b16 %v289, %v283
  %vm392 = vcmask 97280
  %v394 = vsel %vm392, %v117, 0
  %v397 = vsel %vm392, %v119, 0
  %v400 = vsel %vm392, %v121, 0
  %v403 = vsel %vm392, %v123, 0
  %vm405 = vcmask 1045504
  %v407 = vsel %vm405, %v338, 0
  %v410 = vsel %vm405, %v339, 0
  %v413 = vsel %vm405, %v340, 0
  %v416 = vsel %vm405, %v341, 0
  %v419 = vsel %vm405, %v342, 0
  %v422 = vsel %vm405, %v343, 0
  %424 = vmatprep.subr.bf16.mxu0 %v291
  %425 = vmatpush1.bf16.msra.mxu0 %v290
  %426 = vmatprep.subr.bf16.mxu0 %v297
  %427 = vmatpush1.bf16.msra.mxu0 %v296
  %428 = vmatprep.subr.bf16.mxu0 %v303
  %429 = vmatpush1.bf16.msra.mxu0 %v302
  %430 = vmatprep.subr.bf16.mxu0 %v309
  %431 = vmatpush1.bf16.msra.mxu0 %v308
  %432 = vmatprep.subr.bf16.mxu0 %v315
  %433 = vmatpush1.bf16.msra.mxu0 %v314
  %434 = vmatprep.subr.bf16.mxu0 %v321
  %435 = vmatpush1.bf16.msra.mxu0 %v320
  %436 = vmatprep.subr.bf16.mxu0 %v327
  %437 = vmatpush1.bf16.msra.mxu0 %v326
  %438 = vmatprep.subr.bf16.mxu0 %v333
  %439 = vmatpush1.bf16.msra.mxu0 %v332
  %440 = vmatprep.subr.bf16.mxu0 %v410
  %441 = vmatpush1.bf16.msra.mxu0 %v407
  %442 = vmatprep.subr.bf16.mxu0 0
  %443 = vmatpush1.bf16.msra.mxu0 0
  %444 = vmatprep.subr.bf16.mxu0 0
  %445 = vmatpush1.bf16.msra.mxu0 0
  %446 = vmatprep.subr.bf16.mxu0 0
  %447 = vmatpush1.bf16.msra.mxu0 0
  %448 = vmatprep.subr.bf16.mxu0 0
  %449 = vmatpush1.bf16.msra.mxu0 0
  %450 = vmatprep.subr.bf16.mxu0 0
  %451 = vmatpush1.bf16.msra.mxu0 0
  %452 = vmatprep.subr.bf16.mxu0 0
  %453 = vmatpush1.bf16.msra.mxu0 0
  %454 = vmatprep.subr.bf16.mxu0 0
  %455 = vmatpush1.bf16.msra.mxu0 0
  %456 = vmatprep.mubr.bf16.mxu0 %v394
  %457 = vmatmul.mubr.bf16.gmra.mrb[0].mxu0 %v116
  %v458 = vpop.f32.mrb[0].mxu0
  %v459 = vadd.f32 0.0, %v458
  %v460 = vpop.f32.mrb[0].mxu0
  %v461 = vadd.f32 0.0, %v460
  %v462 = vpop.f32.mrb[0].mxu0
  %v463 = vadd.f32 0.0, %v462
  %v464 = vpop.f32.mrb[0].mxu0
  %v465 = vadd.f32 0.0, %v464
  %466 = vmatprep.mubr.bf16.mxu0 %v397
  %467 = vmatmul.mubr.bf16.gmra.mrb[0].mxu0 %v118
  %v468 = vpop.f32.mrb[0].mxu0
  %v469 = vadd.f32 0.0, %v468
  %v470 = vpop.f32.mrb[0].mxu0
  %v471 = vadd.f32 0.0, %v470
  %v472 = vpop.f32.mrb[0].mxu0
  %v473 = vadd.f32 0.0, %v472
  %v474 = vpop.f32.mrb[0].mxu0
  %v475 = vadd.f32 0.0, %v474
  %476 = vmatprep.mubr.bf16.mxu0 %v400
  %477 = vmatmul.mubr.bf16.gmra.mrb[0].mxu0 %v120
  %v478 = vpop.f32.mrb[0].mxu0
  %v479 = vadd.f32 0.0, %v478
  %v480 = vpop.f32.mrb[0].mxu0
  %v481 = vadd.f32 0.0, %v480
  %v482 = vpop.f32.mrb[0].mxu0
  %v483 = vadd.f32 0.0, %v482
  %v484 = vpop.f32.mrb[0].mxu0
  %v485 = vadd.f32 0.0, %v484
  %486 = vmatprep.mubr.bf16.mxu0 %v403
  %487 = vmatmul.mubr.bf16.gmra.mrb[0].mxu0 %v122
  %v488 = vpop.f32.mrb[0].mxu0
  %v489 = vadd.f32 0.0, %v488
  %v490 = vpop.f32.mrb[0].mxu0
  %v491 = vadd.f32 0.0, %v490
  %v492 = vpop.f32.mrb[0].mxu0
  %v493 = vadd.f32 0.0, %v492
  %v494 = vpop.f32.mrb[0].mxu0
  %v495 = vadd.f32 0.0, %v494
  %496 = vdwg.mxu0
  %497 = vmatprep.subr.bf16.mxu0 %v293
  %498 = vmatpush1.bf16.msra.mxu0 %v292
  %499 = vmatprep.subr.bf16.mxu0 %v299
  %500 = vmatpush1.bf16.msra.mxu0 %v298
  %501 = vmatprep.subr.bf16.mxu0 %v305
  %502 = vmatpush1.bf16.msra.mxu0 %v304
  %503 = vmatprep.subr.bf16.mxu0 %v311
  %504 = vmatpush1.bf16.msra.mxu0 %v310
  %505 = vmatprep.subr.bf16.mxu0 %v317
  %506 = vmatpush1.bf16.msra.mxu0 %v316
  %507 = vmatprep.subr.bf16.mxu0 %v323
  %508 = vmatpush1.bf16.msra.mxu0 %v322
  %509 = vmatprep.subr.bf16.mxu0 %v329
  %510 = vmatpush1.bf16.msra.mxu0 %v328
  %511 = vmatprep.subr.bf16.mxu0 %v335
  %512 = vmatpush1.bf16.msra.mxu0 %v334
  %513 = vmatprep.subr.bf16.mxu0 %v416
  %514 = vmatpush1.bf16.msra.mxu0 %v413
  %515 = vmatprep.subr.bf16.mxu0 0
  %516 = vmatpush1.bf16.msra.mxu0 0
  %517 = vmatprep.subr.bf16.mxu0 0
  %518 = vmatpush1.bf16.msra.mxu0 0
  %519 = vmatprep.subr.bf16.mxu0 0
  %520 = vmatpush1.bf16.msra.mxu0 0
  %521 = vmatprep.subr.bf16.mxu0 0
  %522 = vmatpush1.bf16.msra.mxu0 0
  %523 = vmatprep.subr.bf16.mxu0 0
  %524 = vmatpush1.bf16.msra.mxu0 0
  %525 = vmatprep.subr.bf16.mxu0 0
  %526 = vmatpush1.bf16.msra.mxu0 0
  %527 = vmatprep.subr.bf16.mxu0 0
  %528 = vmatpush1.bf16.msra.mxu0 0
  %529 = vmatprep.mubr.bf16.mxu0 %v394
  %530 = vmatmul.mubr.bf16.gmra.mrb[0].mxu0 %v116
  %v531 = vpop.f32.mrb[0].mxu0
  %v532 = vadd.f32 0.0, %v531
  %v533 = vpop.f32.mrb[0].mxu0
  %v534 = vadd.f32 0.0, %v533
  %v535 = vpop.f32.mrb[0].mxu0
  %v536 = vadd.f32 0.0, %v535
  %v537 = vpop.f32.mrb[0].mxu0
  %v538 = vadd.f32 0.0, %v537
  %539 = vmatprep.mubr.bf16.mxu0 %v397
  %540 = vmatmul.mubr.bf16.gmra.mrb[0].mxu0 %v118
  %v541 = vpop.f32.mrb[0].mxu0
  %v542 = vadd.f32 0.0, %v541
  %v543 = vpop.f32.mrb[0].mxu0
  %v544 = vadd.f32 0.0, %v543
  %v545 = vpop.f32.mrb[0].mxu0
  %v546 = vadd.f32 0.0, %v545
  %v547 = vpop.f32.mrb[0].mxu0
  %v548 = vadd.f32 0.0, %v547
  %549 = vmatprep.mubr.bf16.mxu0 %v400
  %550 = vmatmul.mubr.bf16.gmra.mrb[0].mxu0 %v120
  %v551 = vpop.f32.mrb[0].mxu0
  %v552 = vadd.f32 0.0, %v551
  %v553 = vpop.f32.mrb[0].mxu0
  %v554 = vadd.f32 0.0, %v553
  %v555 = vpop.f32.mrb[0].mxu0
  %v556 = vadd.f32 0.0, %v555
  %v557 = vpop.f32.mrb[0].mxu0
  %v558 = vadd.f32 0.0, %v557
  %559 = vmatprep.mubr.bf16.mxu0 %v403
  %560 = vmatmul.mubr.bf16.gmra.mrb[0].mxu0 %v122
  %v561 = vpop.f32.mrb[0].mxu0
  %v562 = vadd.f32 0.0, %v561
  %v563 = vpop.f32.mrb[0].mxu0
  %v564 = vadd.f32 0.0, %v563
  %v565 = vpop.f32.mrb[0].mxu0
  %v566 = vadd.f32 0.0, %v565
  %v567 = vpop.f32.mrb[0].mxu0
  %v568 = vadd.f32 0.0, %v567
  %569 = vdwg.mxu0
  %570 = vmatprep.subr.bf16.mxu0 %v295
  %571 = vmatpush1.bf16.msra.mxu0 %v294
  %572 = vmatprep.subr.bf16.mxu0 %v301
  %573 = vmatpush1.bf16.msra.mxu0 %v300
  %574 = vmatprep.subr.bf16.mxu0 %v307
  %575 = vmatpush1.bf16.msra.mxu0 %v306
  %576 = vmatprep.subr.bf16.mxu0 %v313
  %577 = vmatpush1.bf16.msra.mxu0 %v312
  %578 = vmatprep.subr.bf16.mxu0 %v319
  %579 = vmatpush1.bf16.msra.mxu0 %v318
  %580 = vmatprep.subr.bf16.mxu0 %v325
  %581 = vmatpush1.bf16.msra.mxu0 %v324
  %582 = vmatprep.subr.bf16.mxu0 %v331
  %583 = vmatpush1.bf16.msra.mxu0 %v330
  %584 = vmatprep.subr.bf16.mxu0 %v337
  %585 = vmatpush1.bf16.msra.mxu0 %v336
  %586 = vmatprep.subr.bf16.mxu0 %v422
  %587 = vmatpush1.bf16.msra.mxu0 %v419
  %588 = vmatprep.subr.bf16.mxu0 0
  %589 = vmatpush1.bf16.msra.mxu0 0
  %590 = vmatprep.subr.bf16.mxu0 0
  %591 = vmatpush1.bf16.msra.mxu0 0
  %592 = vmatprep.subr.bf16.mxu0 0
  %593 = vmatpush1.bf16.msra.mxu0 0
  %594 = vmatprep.subr.bf16.mxu0 0
  %595 = vmatpush1.bf16.msra.mxu0 0
  %596 = vmatprep.subr.bf16.mxu0 0
  %597 = vmatpush1.bf16.msra.mxu0 0
  %598 = vmatprep.subr.bf16.mxu0 0
  %599 = vmatpush1.bf16.msra.mxu0 0
  %600 = vmatprep.subr.bf16.mxu0 0
  %601 = vmatpush1.bf16.msra.mxu0 0
  %602 = vmatprep.mubr.bf16.mxu0 %v394
  %603 = vmatmul.mubr.bf16.gmra.mrb[0].mxu0 %v116
  %v604 = vpop.f32.mrb[0].mxu0
  %v605 = vadd.f32 0.0, %v604
  %v606 = vpop.f32.mrb[0].mxu0
  %v607 = vadd.f32 0.0, %v606
  %v608 = vpop.f32.mrb[0].mxu0
  %v609 = vadd.f32 0.0, %v608
  %v610 = vpop.f32.mrb[0].mxu0
  %v611 = vadd.f32 0.0, %v610
  %612 = vmatprep.mubr.bf16.mxu0 %v397
  %613 = vmatmul.mubr.bf16.gmra.mrb[0].mxu0 %v118
  %v614 = vpop.f32.mrb[0].mxu0
  %v615 = vadd.f32 0.0, %v614
  %v616 = vpop.f32.mrb[0].mxu0
  %v617 = vadd.f32 0.0, %v616
  %v618 = vpop.f32.mrb[0].mxu0
  %v619 = vadd.f32 0.0, %v618
  %v620 = vpop.f32.mrb[0].mxu0
  %v621 = vadd.f32 0.0, %v620
  %622 = vmatprep.mubr.bf16.mxu0 %v400
  %623 = vmatmul.mubr.bf16.gmra.mrb[0].mxu0 %v120
  %v624 = vpop.f32.mrb[0].mxu0
  %v625 = vadd.f32 0.0, %v624
  %v626 = vpop.f32.mrb[0].mxu0
  %v627 = vadd.f32 0.0, %v626
  %v628 = vpop.f32.mrb[0].mxu0
  %v629 = vadd.f32 0.0, %v628
  %v630 = vpop.f32.mrb[0].mxu0
  %v631 = vadd.f32 0.0, %v630
  %632 = vmatprep.mubr.bf16.mxu0 %v403
  %633 = vmatmul.mubr.bf16.gmra.mrb[0].mxu0 %v122
  %v634 = vpop.f32.mrb[0].mxu0
  %v635 = vadd.f32 0.0, %v634
  %v636 = vpop.f32.mrb[0].mxu0
  %v637 = vadd.f32 0.0, %v636
  %v638 = vpop.f32.mrb[0].mxu0
  %v639 = vadd.f32 0.0, %v638
  %v640 = vpop.f32.mrb[0].mxu0
  %v641 = vadd.f32 0.0, %v640
  %642 = vdwg.mxu0
  %s643 = scalar_lea.vmem %s0, 64
  %v644 = vld [vmem:[%s643] sm:$0xff]
  %v645 = vld [vmem:[%s643 + $0x8] sm:$0xff]
  %v646 = vld [vmem:[%s643 + $0x10] sm:$0xff]
  %v647 = vld [vmem:[%s643 + $0x18] sm:$0xff]
  %v648 = vld [vmem:[%s643 + $0x20] sm:$0xff]
  %v649 = vld [vmem:[%s643 + $0x28] sm:$0xff]
  %v650 = vld [vmem:[%s643 + $0x30] sm:$0xff]
  %v651 = vld [vmem:[%s643 + $0x38] sm:$0xff]
  %v660 = vunpack.c.l.b16 %v644
  %v661 = vunpack.c.h.b16 %v644
  %v662 = vunpack.c.l.b16 %v645
  %v663 = vunpack.c.h.b16 %v645
  %v664 = vunpack.c.l.b16 %v646
  %v665 = vunpack.c.h.b16 %v646
  %v666 = vunpack.c.l.b16 %v647
  %v667 = vunpack.c.h.b16 %v647
  %v668 = vunpack.c.l.b16 %v648
  %v669 = vunpack.c.h.b16 %v648
  %v670 = vunpack.c.l.b16 %v649
  %v671 = vunpack.c.h.b16 %v649
  %v672 = vunpack.c.l.b16 %v650
  %v673 = vunpack.c.h.b16 %v650
  %v674 = vunpack.c.l.b16 %v651
  %v675 = vunpack.c.h.b16 %v651
  %v676 = vpack.c.b16 %v662, %v660
  %v677 = vpack.c.b16 %v663, %v661
  %v678 = vpack.c.b16 %v666, %v664
  %v679 = vpack.c.b16 %v667, %v665
  %v680 = vpack.c.b16 %v670, %v668
  %v681 = vpack.c.b16 %v671, %v669
  %v682 = vpack.c.b16 %v674, %v672
  %v683 = vpack.c.b16 %v675, %v673
  %v689 = vsel %vm392, %v677, 0
  %v692 = vsel %vm392, %v679, 0
  %v695 = vsel %vm392, %v681, 0
  %v698 = vsel %vm392, %v683, 0
  %700 = vmatprep.subr.bf16.mxu0 %v291
  %701 = vmatpush1.bf16.msra.mxu0 %v290
  %702 = vmatprep.subr.bf16.mxu0 %v297
  %703 = vmatpush1.bf16.msra.mxu0 %v296
  %704 = vmatprep.subr.bf16.mxu0 %v303
  %705 = vmatpush1.bf16.msra.mxu0 %v302
  %706 = vmatprep.subr.bf16.mxu0 %v309
  %707 = vmatpush1.bf16.msra.mxu0 %v308
  %708 = vmatprep.subr.bf16.mxu0 %v315
  %709 = vmatpush1.bf16.msra.mxu0 %v314
  %710 = vmatprep.subr.bf16.mxu0 %v321
  %711 = vmatpush1.bf16.msra.mxu0 %v320
  %712 = vmatprep.subr.bf16.mxu0 %v327
  %713 = vmatpush1.bf16.msra.mxu0 %v326
  %714 = vmatprep.subr.bf16.mxu0 %v333
  %715 = vmatpush1.bf16.msra.mxu0 %v332
  %716 = vmatprep.subr.bf16.mxu0 %v410
  %717 = vmatpush1.bf16.msra.mxu0 %v407
  %718 = vmatprep.subr.bf16.mxu0 0
  %719 = vmatpush1.bf16.msra.mxu0 0
  %720 = vmatprep.subr.bf16.mxu0 0
  %721 = vmatpush1.bf16.msra.mxu0 0
  %722 = vmatprep.subr.bf16.mxu0 0
  %723 = vmatpush1.bf16.msra.mxu0 0
  %724 = vmatprep.subr.bf16.mxu0 0
  %725 = vmatpush1.bf16.msra.mxu0 0
  %726 = vmatprep.subr.bf16.mxu0 0
  %727 = vmatpush1.bf16.msra.mxu0 0
  %728 = vmatprep.subr.bf16.mxu0 0
  %729 = vmatpush1.bf16.msra.mxu0 0
  %730 = vmatprep.subr.bf16.mxu0 0
  %731 = vmatpush1.bf16.msra.mxu0 0
  %732 = vmatprep.mubr.bf16.mxu0 %v689
  %733 = vmatmul.mubr.bf16.gmra.mrb[0].mxu0 %v676
  %v734 = vpop.f32.mrb[0].mxu0
  %v735 = vadd.f32 0.0, %v734
  %v736 = vpop.f32.mrb[0].mxu0
  %v737 = vadd.f32 0.0, %v736
  %v738 = vpop.f32.mrb[0].mxu0
  %v739 = vadd.f32 0.0, %v738
  %v740 = vpop.f32.mrb[0].mxu0
  %v741 = vadd.f32 0.0, %v740
  %742 = vmatprep.mubr.bf16.mxu0 %v692
  %743 = vmatmul.mubr.bf16.gmra.mrb[0].mxu0 %v678
  %v744 = vpop.f32.mrb[0].mxu0
  %v745 = vadd.f32 0.0, %v744
  %v746 = vpop.f32.mrb[0].mxu0
  %v747 = vadd.f32 0.0, %v746
  %v748 = vpop.f32.mrb[0].mxu0
  %v749 = vadd.f32 0.0, %v748
  %v750 = vpop.f32.mrb[0].mxu0
  %v751 = vadd.f32 0.0, %v750
  %752 = vmatprep.mubr.bf16.mxu0 %v695
  %753 = vmatmul.mubr.bf16.gmra.mrb[0].mxu0 %v680
  %v754 = vpop.f32.mrb[0].mxu0
  %v755 = vadd.f32 0.0, %v754
  %v756 = vpop.f32.mrb[0].mxu0
  %v757 = vadd.f32 0.0, %v756
  %v758 = vpop.f32.mrb[0].mxu0
  %v759 = vadd.f32 0.0, %v758
  %v760 = vpop.f32.mrb[0].mxu0
  %v761 = vadd.f32 0.0, %v760
  %762 = vmatprep.mubr.bf16.mxu0 %v698
  %763 = vmatmul.mubr.bf16.gmra.mrb[0].mxu0 %v682
  %v764 = vpop.f32.mrb[0].mxu0
  %v765 = vadd.f32 0.0, %v764
  %v766 = vpop.f32.mrb[0].mxu0
  %v767 = vadd.f32 0.0, %v766
  %v768 = vpop.f32.mrb[0].mxu0
  %v769 = vadd.f32 0.0, %v768
  %v770 = vpop.f32.mrb[0].mxu0
  %v771 = vadd.f32 0.0, %v770
  %772 = vdwg.mxu0
  %773 = vmatprep.subr.bf16.mxu0 %v293
  %774 = vmatpush1.bf16.msra.mxu0 %v292
  %775 = vmatprep.subr.bf16.mxu0 %v299
  %776 = vmatpush1.bf16.msra.mxu0 %v298
  %777 = vmatprep.subr.bf16.mxu0 %v305
  %778 = vmatpush1.bf16.msra.mxu0 %v304
  %779 = vmatprep.subr.bf16.mxu0 %v311
  %780 = vmatpush1.bf16.msra.mxu0 %v310
  %781 = vmatprep.subr.bf16.mxu0 %v317
  %782 = vmatpush1.bf16.msra.mxu0 %v316
  %783 = vmatprep.subr.bf16.mxu0 %v323
  %784 = vmatpush1.bf16.msra.mxu0 %v322
  %785 = vmatprep.subr.bf16.mxu0 %v329
  %786 = vmatpush1.bf16.msra.mxu0 %v328
  %787 = vmatprep.subr.bf16.mxu0 %v335
  %788 = vmatpush1.bf16.msra.mxu0 %v334
  %789 = vmatprep.subr.bf16.mxu0 %v416
  %790 = vmatpush1.bf16.msra.mxu0 %v413
  %791 = vmatprep.subr.bf16.mxu0 0
  %792 = vmatpush1.bf16.msra.mxu0 0
  %793 = vmatprep.subr.bf16.mxu0 0
  %794 = vmatpush1.bf16.msra.mxu0 0
  %795 = vmatprep.subr.bf16.mxu0 0
  %796 = vmatpush1.bf16.msra.mxu0 0
  %797 = vmatprep.subr.bf16.mxu0 0
  %798 = vmatpush1.bf16.msra.mxu0 0
  %799 = vmatprep.subr.bf16.mxu0 0
  %800 = vmatpush1.bf16.msra.mxu0 0
  %801 = vmatprep.subr.bf16.mxu0 0
  %802 = vmatpush1.bf16.msra.mxu0 0
  %803 = vmatprep.subr.bf16.mxu0 0
  %804 = vmatpush1.bf16.msra.mxu0 0
  %805 = vmatprep.mubr.bf16.mxu0 %v689
  %806 = vmatmul.mubr.bf16.gmra.mrb[0].mxu0 %v676
  %v807 = vpop.f32.mrb[0].mxu0
  %v808 = vadd.f32 0.0, %v807
  %v809 = vpop.f32.mrb[0].mxu0
  %v810 = vadd.f32 0.0, %v809
  %v811 = vpop.f32.mrb[0].mxu0
  %v812 = vadd.f32 0.0, %v811
  %v813 = vpop.f32.mrb[0].mxu0
  %v814 = vadd.f32 0.0, %v813
  %815 = vmatprep.mubr.bf16.mxu0 %v692
  %816 = vmatmul.mubr.bf16.gmra.mrb[0].mxu0 %v678
  %v817 = vpop.f32.mrb[0].mxu0
  %v818 = vadd.f32 0.0, %v817
  %v819 = vpop.f32.mrb[0].mxu0
  %v820 = vadd.f32 0.0, %v819
  %v821 = vpop.f32.mrb[0].mxu0
  %v822 = vadd.f32 0.0, %v821
  %v823 = vpop.f32.mrb[0].mxu0
  %v824 = vadd.f32 0.0, %v823
  %825 = vmatprep.mubr.bf16.mxu0 %v695
  %826 = vmatmul.mubr.bf16.gmra.mrb[0].mxu0 %v680
  %v827 = vpop.f32.mrb[0].mxu0
  %v828 = vadd.f32 0.0, %v827
  %v829 = vpop.f32.mrb[0].mxu0
  %v830 = vadd.f32 0.0, %v829
  %v831 = vpop.f32.mrb[0].mxu0
  %v832 = vadd.f32 0.0, %v831
  %v833 = vpop.f32.mrb[0].mxu0
  %v834 = vadd.f32 0.0, %v833
  %835 = vmatprep.mubr.bf16.mxu0 %v698
  %836 = vmatmul.mubr.bf16.gmra.mrb[0].mxu0 %v682
  %v837 = vpop.f32.mrb[0].mxu0
  %v838 = vadd.f32 0.0, %v837
  %v839 = vpop.f32.mrb[0].mxu0
  %v840 = vadd.f32 0.0, %v839
  %v841 = vpop.f32.mrb[0].mxu0
  %v842 = vadd.f32 0.0, %v841
  %v843 = vpop.f32.mrb[0].mxu0
  %v844 = vadd.f32 0.0, %v843
  %845 = vdwg.mxu0
  %846 = vmatprep.subr.bf16.mxu0 %v295
  %847 = vmatpush1.bf16.msra.mxu0 %v294
  %848 = vmatprep.subr.bf16.mxu0 %v301
  %849 = vmatpush1.bf16.msra.mxu0 %v300
  %850 = vmatprep.subr.bf16.mxu0 %v307
  %851 = vmatpush1.bf16.msra.mxu0 %v306
  %852 = vmatprep.subr.bf16.mxu0 %v313
  %853 = vmatpush1.bf16.msra.mxu0 %v312
  %854 = vmatprep.subr.bf16.mxu0 %v319
  %855 = vmatpush1.bf16.msra.mxu0 %v318
  %856 = vmatprep.subr.bf16.mxu0 %v325
  %857 = vmatpush1.bf16.msra.mxu0 %v324
  %858 = vmatprep.subr.bf16.mxu0 %v331
  %859 = vmatpush1.bf16.msra.mxu0 %v330
  %860 = vmatprep.subr.bf16.mxu0 %v337
  %861 = vmatpush1.bf16.msra.mxu0 %v336
  %862 = vmatprep.subr.bf16.mxu0 %v422
  %863 = vmatpush1.bf16.msra.mxu0 %v419
  %864 = vmatprep.subr.bf16.mxu0 0
  %865 = vmatpush1.bf16.msra.mxu0 0
  %866 = vmatprep.subr.bf16.mxu0 0
  %867 = vmatpush1.bf16.msra.mxu0 0
  %868 = vmatprep.subr.bf16.mxu0 0
  %869 = vmatpush1.bf16.msra.mxu0 0
  %870 = vmatprep.subr.bf16.mxu0 0
  %871 = vmatpush1.bf16.msra.mxu0 0
  %872 = vmatprep.subr.bf16.mxu0 0
  %873 = vmatpush1.bf16.msra.mxu0 0
  %874 = vmatprep.subr.bf16.mxu0 0
  %875 = vmatpush1.bf16.msra.mxu0 0
  %876 = vmatprep.subr.bf16.mxu0 0
  %877 = vmatpush1.bf16.msra.mxu0 0
  %878 = vmatprep.mubr.bf16.mxu0 %v689
  %879 = vmatmul.mubr.bf16.gmra.mrb[0].mxu0 %v676
  %v880 = vpop.f32.mrb[0].mxu0
  %v881 = vadd.f32 0.0, %v880
  %v882 = vpop.f32.mrb[0].mxu0
  %v883 = vadd.f32 0.0, %v882
  %v884 = vpop.f32.mrb[0].mxu0
  %v885 = vadd.f32 0.0, %v884
  %v886 = vpop.f32.mrb[0].mxu0
  %v887 = vadd.f32 0.0, %v886
  %888 = vmatprep.mubr.bf16.mxu0 %v692
  %889 = vmatmul.mubr.bf16.gmra.mrb[0].mxu0 %v678
  %v890 = vpop.f32.mrb[0].mxu0
  %v891 = vadd.f32 0.0, %v890
  %v892 = vpop.f32.mrb[0].mxu0
  %v893 = vadd.f32 0.0, %v892
  %v894 = vpop.f32.mrb[0].mxu0
  %v895 = vadd.f32 0.0, %v894
  %v896 = vpop.f32.mrb[0].mxu0
  %v897 = vadd.f32 0.0, %v896
  %898 = vmatprep.mubr.bf16.mxu0 %v695
  %899 = vmatmul.mubr.bf16.gmra.mrb[0].mxu0 %v680
  %v900 = vpop.f32.mrb[0].mxu0
  %v901 = vadd.f32 0.0, %v900
  %v902 = vpop.f32.mrb[0].mxu0
  %v903 = vadd.f32 0.0, %v902
  %v904 = vpop.f32.mrb[0].mxu0
  %v905 = vadd.f32 0.0, %v904
  %v906 = vpop.f32.mrb[0].mxu0
  %v907 = vadd.f32 0.0, %v906
  %908 = vmatprep.mubr.bf16.mxu0 %v698
  %909 = vmatmul.mubr.bf16.gmra.mrb[0].mxu0 %v682
  %v910 = vpop.f32.mrb[0].mxu0
  %v911 = vadd.f32 0.0, %v910
  %v912 = vpop.f32.mrb[0].mxu0
  %v913 = vadd.f32 0.0, %v912
  %v914 = vpop.f32.mrb[0].mxu0
  %v915 = vadd.f32 0.0, %v914
  %v916 = vpop.f32.mrb[0].mxu0
  %v917 = vadd.f32 0.0, %v916
  %918 = vdwg.mxu0
  %s919 = scalar_lea.vmem %s0, 128
  %v920 = vld [vmem:[%s919] sm:$0xff]
  %v921 = vld [vmem:[%s919 + $0x8] sm:$0xff]
  %v922 = vld [vmem:[%s919 + $0x10] sm:$0xff]
  %v923 = vld [vmem:[%s919 + $0x18] sm:$0xff]
  %v924 = vld [vmem:[%s919 + $0x20] sm:$0xff]
  %v925 = vld [vmem:[%s919 + $0x28] sm:$0xff]
  %v926 = vld [vmem:[%s919 + $0x30] sm:$0xff]
  %v927 = vld [vmem:[%s919 + $0x38] sm:$0xff]
  %v936 = vunpack.c.l.b16 %v920
  %v937 = vunpack.c.h.b16 %v920
  %v938 = vunpack.c.l.b16 %v921
  %v939 = vunpack.c.h.b16 %v921
  %v940 = vunpack.c.l.b16 %v922
  %v941 = vunpack.c.h.b16 %v922
  %v942 = vunpack.c.l.b16 %v923
  %v943 = vunpack.c.h.b16 %v923
  %v944 = vunpack.c.l.b16 %v924
  %v945 = vunpack.c.h.b16 %v924
  %v946 = vunpack.c.l.b16 %v925
  %v947 = vunpack.c.h.b16 %v925
  %v948 = vunpack.c.l.b16 %v926
  %v949 = vunpack.c.h.b16 %v926
  %v950 = vunpack.c.l.b16 %v927
  %v951 = vunpack.c.h.b16 %v927
  %v952 = vpack.c.b16 %v938, %v936
  %v953 = vpack.c.b16 %v939, %v937
  %v954 = vpack.c.b16 %v942, %v940
  %v955 = vpack.c.b16 %v943, %v941
  %v956 = vpack.c.b16 %v946, %v944
  %v957 = vpack.c.b16 %v947, %v945
  %v958 = vpack.c.b16 %v950, %v948
  %v959 = vpack.c.b16 %v951, %v949
  %v965 = vsel %vm392, %v953, 0
  %v968 = vsel %vm392, %v955, 0
  %v971 = vsel %vm392, %v957, 0
  %v974 = vsel %vm392, %v959, 0
  %976 = vmatprep.subr.bf16.mxu0 %v291
  %977 = vmatpush1.bf16.msra.mxu0 %v290
  %978 = vmatprep.subr.bf16.mxu0 %v297
  %979 = vmatpush1.bf16.msra.mxu0 %v296
  %980 = vmatprep.subr.bf16.mxu0 %v303
  %981 = vmatpush1.bf16.msra.mxu0 %v302
  %982 = vmatprep.subr.bf16.mxu0 %v309
  %983 = vmatpush1.bf16.msra.mxu0 %v308
  %984 = vmatprep.subr.bf16.mxu0 %v315
  %985 = vmatpush1.bf16.msra.mxu0 %v314
  %986 = vmatprep.subr.bf16.mxu0 %v321
  %987 = vmatpush1.bf16.msra.mxu0 %v320
  %988 = vmatprep.subr.bf16.mxu0 %v327
  %989 = vmatpush1.bf16.msra.mxu0 %v326
  %990 = vmatprep.subr.bf16.mxu0 %v333
  %991 = vmatpush1.bf16.msra.mxu0 %v332
  %992 = vmatprep.subr.bf16.mxu0 %v410
  %993 = vmatpush1.bf16.msra.mxu0 %v407
  %994 = vmatprep.subr.bf16.mxu0 0
  %995 = vmatpush1.bf16.msra.mxu0 0
  %996 = vmatprep.subr.bf16.mxu0 0
  %997 = vmatpush1.bf16.msra.mxu0 0
  %998 = vmatprep.subr.bf16.mxu0 0
  %999 = vmatpush1.bf16.msra.mxu0 0
  %1000 = vmatprep.subr.bf16.mxu0 0
  %1001 = vmatpush1.bf16.msra.mxu0 0
  %1002 = vmatprep.subr.bf16.mxu0 0
  %1003 = vmatpush1.bf16.msra.mxu0 0
  %1004 = vmatprep.subr.bf16.mxu0 0
  %1005 = vmatpush1.bf16.msra.mxu0 0
  %1006 = vmatprep.subr.bf16.mxu0 0
  %1007 = vmatpush1.bf16.msra.mxu0 0
  %1008 = vmatprep.mubr.bf16.mxu0 %v965
  %1009 = vmatmul.mubr.bf16.gmra.mrb[0].mxu0 %v952
  %v1010 = vpop.f32.mrb[0].mxu0
  %v1011 = vadd.f32 0.0, %v1010
  %v1012 = vpop.f32.mrb[0].mxu0
  %v1013 = vadd.f32 0.0, %v1012
  %v1014 = vpop.f32.mrb[0].mxu0
  %v1015 = vadd.f32 0.0, %v1014
  %v1016 = vpop.f32.mrb[0].mxu0
  %v1017 = vadd.f32 0.0, %v1016
  %1018 = vmatprep.mubr.bf16.mxu0 %v968
  %1019 = vmatmul.mubr.bf16.gmra.mrb[0].mxu0 %v954
  %v1020 = vpop.f32.mrb[0].mxu0
  %v1021 = vadd.f32 0.0, %v1020
  %v1022 = vpop.f32.mrb[0].mxu0
  %v1023 = vadd.f32 0.0, %v1022
  %v1024 = vpop.f32.mrb[0].mxu0
  %v1025 = vadd.f32 0.0, %v1024
  %v1026 = vpop.f32.mrb[0].mxu0
  %v1027 = vadd.f32 0.0, %v1026
  %1028 = vmatprep.mubr.bf16.mxu0 %v971
  %1029 = vmatmul.mubr.bf16.gmra.mrb[0].mxu0 %v956
  %v1030 = vpop.f32.mrb[0].mxu0
  %v1031 = vadd.f32 0.0, %v1030
  %v1032 = vpop.f32.mrb[0].mxu0
  %v1033 = vadd.f32 0.0, %v1032
  %v1034 = vpop.f32.mrb[0].mxu0
  %v1035 = vadd.f32 0.0, %v1034
  %v1036 = vpop.f32.mrb[0].mxu0
  %v1037 = vadd.f32 0.0, %v1036
  %1038 = vmatprep.mubr.bf16.mxu0 %v974
  %1039 = vmatmul.mubr.bf16.gmra.mrb[0].mxu0 %v958
  %v1040 = vpop.f32.mrb[0].mxu0
  %v1041 = vadd.f32 0.0, %v1040
  %v1042 = vpop.f32.mrb[0].mxu0
  %v1043 = vadd.f32 0.0, %v1042
  %v1044 = vpop.f32.mrb[0].mxu0
  %v1045 = vadd.f32 0.0, %v1044
  %v1046 = vpop.f32.mrb[0].mxu0
  %v1047 = vadd.f32 0.0, %v1046
  %1048 = vdwg.mxu0
  %1049 = vmatprep.subr.bf16.mxu0 %v293
  %1050 = vmatpush1.bf16.msra.mxu0 %v292
  %1051 = vmatprep.subr.bf16.mxu0 %v299
  %1052 = vmatpush1.bf16.msra.mxu0 %v298
  %1053 = vmatprep.subr.bf16.mxu0 %v305
  %1054 = vmatpush1.bf16.msra.mxu0 %v304
  %1055 = vmatprep.subr.bf16.mxu0 %v311
  %1056 = vmatpush1.bf16.msra.mxu0 %v310
  %1057 = vmatprep.subr.bf16.mxu0 %v317
  %1058 = vmatpush1.bf16.msra.mxu0 %v316
  %1059 = vmatprep.subr.bf16.mxu0 %v323
  %1060 = vmatpush1.bf16.msra.mxu0 %v322
  %1061 = vmatprep.subr.bf16.mxu0 %v329
  %1062 = vmatpush1.bf16.msra.mxu0 %v328
  %1063 = vmatprep.subr.bf16.mxu0 %v335
  %1064 = vmatpush1.bf16.msra.mxu0 %v334
  %1065 = vmatprep.subr.bf16.mxu0 %v416
  %1066 = vmatpush1.bf16.msra.mxu0 %v413
  %1067 = vmatprep.subr.bf16.mxu0 0
  %1068 = vmatpush1.bf16.msra.mxu0 0
  %1069 = vmatprep.subr.bf16.mxu0 0
  %1070 = vmatpush1.bf16.msra.mxu0 0
  %1071 = vmatprep.subr.bf16.mxu0 0
  %1072 = vmatpush1.bf16.msra.mxu0 0
  %1073 = vmatprep.subr.bf16.mxu0 0
  %1074 = vmatpush1.bf16.msra.mxu0 0
  %1075 = vmatprep.subr.bf16.mxu0 0
  %1076 = vmatpush1.bf16.msra.mxu0 0
  %1077 = vmatprep.subr.bf16.mxu0 0
  %1078 = vmatpush1.bf16.msra.mxu0 0
  %1079 = vmatprep.subr.bf16.mxu0 0
  %1080 = vmatpush1.bf16.msra.mxu0 0
  %1081 = vmatprep.mubr.bf16.mxu0 %v965
  %1082 = vmatmul.mubr.bf16.gmra.mrb[0].mxu0 %v952
  %v1083 = vpop.f32.mrb[0].mxu0
  %v1084 = vadd.f32 0.0, %v1083
  %v1085 = vpop.f32.mrb[0].mxu0
  %v1086 = vadd.f32 0.0, %v1085
  %v1087 = vpop.f32.mrb[0].mxu0
  %v1088 = vadd.f32 0.0, %v1087
  %v1089 = vpop.f32.mrb[0].mxu0
  %v1090 = vadd.f32 0.0, %v1089
  %1091 = vmatprep.mubr.bf16.mxu0 %v968
  %1092 = vmatmul.mubr.bf16.gmra.mrb[0].mxu0 %v954
  %v1093 = vpop.f32.mrb[0].mxu0
  %v1094 = vadd.f32 0.0, %v1093
  %v1095 = vpop.f32.mrb[0].mxu0
  %v1096 = vadd.f32 0.0, %v1095
  %v1097 = vpop.f32.mrb[0].mxu0
  %v1098 = vadd.f32 0.0, %v1097
  %v1099 = vpop.f32.mrb[0].mxu0
  %v1100 = vadd.f32 0.0, %v1099
  %1101 = vmatprep.mubr.bf16.mxu0 %v971
  %1102 = vmatmul.mubr.bf16.gmra.mrb[0].mxu0 %v956
  %v1103 = vpop.f32.mrb[0].mxu0
  %v1104 = vadd.f32 0.0, %v1103
  %v1105 = vpop.f32.mrb[0].mxu0
  %v1106 = vadd.f32 0.0, %v1105
  %v1107 = vpop.f32.mrb[0].mxu0
  %v1108 = vadd.f32 0.0, %v1107
  %v1109 = vpop.f32.mrb[0].mxu0
  %v1110 = vadd.f32 0.0, %v1109
  %1111 = vmatprep.mubr.bf16.mxu0 %v974
  %1112 = vmatmul.mubr.bf16.gmra.mrb[0].mxu0 %v958
  %v1113 = vpop.f32.mrb[0].mxu0
  %v1114 = vadd.f32 0.0, %v1113
  %v1115 = vpop.f32.mrb[0].mxu0
  %v1116 = vadd.f32 0.0, %v1115
  %v1117 = vpop.f32.mrb[0].mxu0
  %v1118 = vadd.f32 0.0, %v1117
  %v1119 = vpop.f32.mrb[0].mxu0
  %v1120 = vadd.f32 0.0, %v1119
  %1121 = vdwg.mxu0
  %1122 = vmatprep.subr.bf16.mxu0 %v295
  %1123 = vmatpush1.bf16.msra.mxu0 %v294
  %1124 = vmatprep.subr.bf16.mxu0 %v301
  %1125 = vmatpush1.bf16.msra.mxu0 %v300
  %1126 = vmatprep.subr.bf16.mxu0 %v307
  %1127 = vmatpush1.bf16.msra.mxu0 %v306
  %1128 = vmatprep.subr.bf16.mxu0 %v313
  %1129 = vmatpush1.bf16.msra.mxu0 %v312
  %1130 = vmatprep.subr.bf16.mxu0 %v319
  %1131 = vmatpush1.bf16.msra.mxu0 %v318
  %1132 = vmatprep.subr.bf16.mxu0 %v325
  %1133 = vmatpush1.bf16.msra.mxu0 %v324
  %1134 = vmatprep.subr.bf16.mxu0 %v331
  %1135 = vmatpush1.bf16.msra.mxu0 %v330
  %1136 = vmatprep.subr.bf16.mxu0 %v337
  %1137 = vmatpush1.bf16.msra.mxu0 %v336
  %1138 = vmatprep.subr.bf16.mxu0 %v422
  %1139 = vmatpush1.bf16.msra.mxu0 %v419
  %1140 = vmatprep.subr.bf16.mxu0 0
  %1141 = vmatpush1.bf16.msra.mxu0 0
  %1142 = vmatprep.subr.bf16.mxu0 0
  %1143 = vmatpush1.bf16.msra.mxu0 0
  %1144 = vmatprep.subr.bf16.mxu0 0
  %1145 = vmatpush1.bf16.msra.mxu0 0
  %1146 = vmatprep.subr.bf16.mxu0 0
  %1147 = vmatpush1.bf16.msra.mxu0 0
  %1148 = vmatprep.subr.bf16.mxu0 0
  %1149 = vmatpush1.bf16.msra.mxu0 0
  %1150 = vmatprep.subr.bf16.mxu0 0
  %1151 = vmatpush1.bf16.msra.mxu0 0
  %1152 = vmatprep.subr.bf16.mxu0 0
  %1153 = vmatpush1.bf16.msra.mxu0 0
  %1154 = vmatprep.mubr.bf16.mxu0 %v965
  %1155 = vmatmul.mubr.bf16.gmra.mrb[0].mxu0 %v952
  %v1156 = vpop.f32.mrb[0].mxu0
  %v1157 = vadd.f32 0.0, %v1156
  %v1158 = vpop.f32.mrb[0].mxu0
  %v1159 = vadd.f32 0.0, %v1158
  %v1160 = vpop.f32.mrb[0].mxu0
  %v1161 = vadd.f32 0.0, %v1160
  %v1162 = vpop.f32.mrb[0].mxu0
  %v1163 = vadd.f32 0.0, %v1162
  %1164 = vmatprep.mubr.bf16.mxu0 %v968
  %1165 = vmatmul.mubr.bf16.gmra.mrb[0].mxu0 %v954
  %v1166 = vpop.f32.mrb[0].mxu0
  %v1167 = vadd.f32 0.0, %v1166
  %v1168 = vpop.f32.mrb[0].mxu0
  %v1169 = vadd.f32 0.0, %v1168
  %v1170 = vpop.f32.mrb[0].mxu0
  %v1171 = vadd.f32 0.0, %v1170
  %v1172 = vpop.f32.mrb[0].mxu0
  %v1173 = vadd.f32 0.0, %v1172
  %1174 = vmatprep.mubr.bf16.mxu0 %v971
  %1175 = vmatmul.mubr.bf16.gmra.mrb[0].mxu0 %v956
  %v1176 = vpop.f32.mrb[0].mxu0
  %v1177 = vadd.f32 0.0, %v1176
  %v1178 = vpop.f32.mrb[0].mxu0
  %v1179 = vadd.f32 0.0, %v1178
  %v1180 = vpop.f32.mrb[0].mxu0
  %v1181 = vadd.f32 0.0, %v1180
  %v1182 = vpop.f32.mrb[0].mxu0
  %v1183 = vadd.f32 0.0, %v1182
  %1184 = vmatprep.mubr.bf16.mxu0 %v974
  %1185 = vmatmul.mubr.bf16.gmra.mrb[0].mxu0 %v958
  %v1186 = vpop.f32.mrb[0].mxu0
  %v1187 = vadd.f32 0.0, %v1186
  %v1188 = vpop.f32.mrb[0].mxu0
  %v1189 = vadd.f32 0.0, %v1188
  %v1190 = vpop.f32.mrb[0].mxu0
  %v1191 = vadd.f32 0.0, %v1190
  %v1192 = vpop.f32.mrb[0].mxu0
  %v1193 = vadd.f32 0.0, %v1192
  %1194 = vdwg.mxu0
  %s1195 = scalar_lea.vmem %s0, 192
  %v1196 = vld [vmem:[%s1195] sm:$0xff]
  %v1197 = vld [vmem:[%s1195 + $0x8] sm:$0xff]
  %v1198 = vld [vmem:[%s1195 + $0x10] sm:$0xff]
  %v1199 = vld [vmem:[%s1195 + $0x18] sm:$0xff]
  %v1200 = vld [vmem:[%s1195 + $0x20] sm:$0xff]
  %v1201 = vld [vmem:[%s1195 + $0x28] sm:$0xff]
  %v1202 = vld [vmem:[%s1195 + $0x30] sm:$0xff]
  %v1203 = vld [vmem:[%s1195 + $0x38] sm:$0xff]
  %v1212 = vunpack.c.l.b16 %v1196
  %v1213 = vunpack.c.h.b16 %v1196
  %v1214 = vunpack.c.l.b16 %v1197
  %v1215 = vunpack.c.h.b16 %v1197
  %v1216 = vunpack.c.l.b16 %v1198
  %v1217 = vunpack.c.h.b16 %v1198
  %v1218 = vunpack.c.l.b16 %v1199
  %v1219 = vunpack.c.h.b16 %v1199
  %v1220 = vunpack.c.l.b16 %v1200
  %v1221 = vunpack.c.h.b16 %v1200
  %v1222 = vunpack.c.l.b16 %v1201
  %v1223 = vunpack.c.h.b16 %v1201
  %v1224 = vunpack.c.l.b16 %v1202
  %v1225 = vunpack.c.h.b16 %v1202
  %v1226 = vunpack.c.l.b16 %v1203
  %v1227 = vunpack.c.h.b16 %v1203
  %v1228 = vpack.c.b16 %v1214, %v1212
  %v1229 = vpack.c.b16 %v1215, %v1213
  %v1230 = vpack.c.b16 %v1218, %v1216
  %v1231 = vpack.c.b16 %v1219, %v1217
  %v1232 = vpack.c.b16 %v1222, %v1220
  %v1233 = vpack.c.b16 %v1223, %v1221
  %v1234 = vpack.c.b16 %v1226, %v1224
  %v1235 = vpack.c.b16 %v1227, %v1225
  %v1241 = vsel %vm392, %v1229, 0
  %v1244 = vsel %vm392, %v1231, 0
  %v1247 = vsel %vm392, %v1233, 0
  %v1250 = vsel %vm392, %v1235, 0
  %1252 = vmatprep.subr.bf16.mxu0 %v291
  %1253 = vmatpush1.bf16.msra.mxu0 %v290
  %1254 = vmatprep.subr.bf16.mxu0 %v297
  %1255 = vmatpush1.bf16.msra.mxu0 %v296
  %1256 = vmatprep.subr.bf16.mxu0 %v303
  %1257 = vmatpush1.bf16.msra.mxu0 %v302
  %1258 = vmatprep.subr.bf16.mxu0 %v309
  %1259 = vmatpush1.bf16.msra.mxu0 %v308
  %1260 = vmatprep.subr.bf16.mxu0 %v315
  %1261 = vmatpush1.bf16.msra.mxu0 %v314
  %1262 = vmatprep.subr.bf16.mxu0 %v321
  %1263 = vmatpush1.bf16.msra.mxu0 %v320
  %1264 = vmatprep.subr.bf16.mxu0 %v327
  %1265 = vmatpush1.bf16.msra.mxu0 %v326
  %1266 = vmatprep.subr.bf16.mxu0 %v333
  %1267 = vmatpush1.bf16.msra.mxu0 %v332
  %1268 = vmatprep.subr.bf16.mxu0 %v410
  %1269 = vmatpush1.bf16.msra.mxu0 %v407
  %1270 = vmatprep.subr.bf16.mxu0 0
  %1271 = vmatpush1.bf16.msra.mxu0 0
  %1272 = vmatprep.subr.bf16.mxu0 0
  %1273 = vmatpush1.bf16.msra.mxu0 0
  %1274 = vmatprep.subr.bf16.mxu0 0
  %1275 = vmatpush1.bf16.msra.mxu0 0
  %1276 = vmatprep.subr.bf16.mxu0 0
  %1277 = vmatpush1.bf16.msra.mxu0 0
  %1278 = vmatprep.subr.bf16.mxu0 0
  %1279 = vmatpush1.bf16.msra.mxu0 0
  %1280 = vmatprep.subr.bf16.mxu0 0
  %1281 = vmatpush1.bf16.msra.mxu0 0
  %1282 = vmatprep.subr.bf16.mxu0 0
  %1283 = vmatpush1.bf16.msra.mxu0 0
  %1284 = vmatprep.mubr.bf16.mxu0 %v1241
  %1285 = vmatmul.mubr.bf16.gmra.mrb[0].mxu0 %v1228
  %v1286 = vpop.f32.mrb[0].mxu0
  %v1287 = vadd.f32 0.0, %v1286
  %v1288 = vpop.f32.mrb[0].mxu0
  %v1289 = vadd.f32 0.0, %v1288
  %v1290 = vpop.f32.mrb[0].mxu0
  %v1291 = vadd.f32 0.0, %v1290
  %v1292 = vpop.f32.mrb[0].mxu0
  %v1293 = vadd.f32 0.0, %v1292
  %1294 = vmatprep.mubr.bf16.mxu0 %v1244
  %1295 = vmatmul.mubr.bf16.gmra.mrb[0].mxu0 %v1230
  %v1296 = vpop.f32.mrb[0].mxu0
  %v1297 = vadd.f32 0.0, %v1296
  %v1298 = vpop.f32.mrb[0].mxu0
  %v1299 = vadd.f32 0.0, %v1298
  %v1300 = vpop.f32.mrb[0].mxu0
  %v1301 = vadd.f32 0.0, %v1300
  %v1302 = vpop.f32.mrb[0].mxu0
  %v1303 = vadd.f32 0.0, %v1302
  %1304 = vmatprep.mubr.bf16.mxu0 %v1247
  %1305 = vmatmul.mubr.bf16.gmra.mrb[0].mxu0 %v1232
  %v1306 = vpop.f32.mrb[0].mxu0
  %v1307 = vadd.f32 0.0, %v1306
  %v1308 = vpop.f32.mrb[0].mxu0
  %v1309 = vadd.f32 0.0, %v1308
  %v1310 = vpop.f32.mrb[0].mxu0
  %v1311 = vadd.f32 0.0, %v1310
  %v1312 = vpop.f32.mrb[0].mxu0
  %v1313 = vadd.f32 0.0, %v1312
  %1314 = vmatprep.mubr.bf16.mxu0 %v1250
  %1315 = vmatmul.mubr.bf16.gmra.mrb[0].mxu0 %v1234
  %v1316 = vpop.f32.mrb[0].mxu0
  %v1317 = vadd.f32 0.0, %v1316
  %v1318 = vpop.f32.mrb[0].mxu0
  %v1319 = vadd.f32 0.0, %v1318
  %v1320 = vpop.f32.mrb[0].mxu0
  %v1321 = vadd.f32 0.0, %v1320
  %v1322 = vpop.f32.mrb[0].mxu0
  %v1323 = vadd.f32 0.0, %v1322
  %1324 = vdwg.mxu0
  %1325 = vmatprep.subr.bf16.mxu0 %v293
  %1326 = vmatpush1.bf16.msra.mxu0 %v292
  %1327 = vmatprep.subr.bf16.mxu0 %v299
  %1328 = vmatpush1.bf16.msra.mxu0 %v298
  %1329 = vmatprep.subr.bf16.mxu0 %v305
  %1330 = vmatpush1.bf16.msra.mxu0 %v304
  %1331 = vmatprep.subr.bf16.mxu0 %v311
  %1332 = vmatpush1.bf16.msra.mxu0 %v310
  %1333 = vmatprep.subr.bf16.mxu0 %v317
  %1334 = vmatpush1.bf16.msra.mxu0 %v316
  %1335 = vmatprep.subr.bf16.mxu0 %v323
  %1336 = vmatpush1.bf16.msra.mxu0 %v322
  %1337 = vmatprep.subr.bf16.mxu0 %v329
  %1338 = vmatpush1.bf16.msra.mxu0 %v328
  %1339 = vmatprep.subr.bf16.mxu0 %v335
  %1340 = vmatpush1.bf16.msra.mxu0 %v334
  %1341 = vmatprep.subr.bf16.mxu0 %v416
  %1342 = vmatpush1.bf16.msra.mxu0 %v413
  %1343 = vmatprep.subr.bf16.mxu0 0
  %1344 = vmatpush1.bf16.msra.mxu0 0
  %1345 = vmatprep.subr.bf16.mxu0 0
  %1346 = vmatpush1.bf16.msra.mxu0 0
  %1347 = vmatprep.subr.bf16.mxu0 0
  %1348 = vmatpush1.bf16.msra.mxu0 0
  %1349 = vmatprep.subr.bf16.mxu0 0
  %1350 = vmatpush1.bf16.msra.mxu0 0
  %1351 = vmatprep.subr.bf16.mxu0 0
  %1352 = vmatpush1.bf16.msra.mxu0 0
  %1353 = vmatprep.subr.bf16.mxu0 0
  %1354 = vmatpush1.bf16.msra.mxu0 0
  %1355 = vmatprep.subr.bf16.mxu0 0
  %1356 = vmatpush1.bf16.msra.mxu0 0
  %1357 = vmatprep.mubr.bf16.mxu0 %v1241
  %1358 = vmatmul.mubr.bf16.gmra.mrb[0].mxu0 %v1228
  %v1359 = vpop.f32.mrb[0].mxu0
  %v1360 = vadd.f32 0.0, %v1359
  %v1361 = vpop.f32.mrb[0].mxu0
  %v1362 = vadd.f32 0.0, %v1361
  %v1363 = vpop.f32.mrb[0].mxu0
  %v1364 = vadd.f32 0.0, %v1363
  %v1365 = vpop.f32.mrb[0].mxu0
  %v1366 = vadd.f32 0.0, %v1365
  %1367 = vmatprep.mubr.bf16.mxu0 %v1244
  %1368 = vmatmul.mubr.bf16.gmra.mrb[0].mxu0 %v1230
  %v1369 = vpop.f32.mrb[0].mxu0
  %v1370 = vadd.f32 0.0, %v1369
  %v1371 = vpop.f32.mrb[0].mxu0
  %v1372 = vadd.f32 0.0, %v1371
  %v1373 = vpop.f32.mrb[0].mxu0
  %v1374 = vadd.f32 0.0, %v1373
  %v1375 = vpop.f32.mrb[0].mxu0
  %v1376 = vadd.f32 0.0, %v1375
  %1377 = vmatprep.mubr.bf16.mxu0 %v1247
  %1378 = vmatmul.mubr.bf16.gmra.mrb[0].mxu0 %v1232
  %v1379 = vpop.f32.mrb[0].mxu0
  %v1380 = vadd.f32 0.0, %v1379
  %v1381 = vpop.f32.mrb[0].mxu0
  %v1382 = vadd.f32 0.0, %v1381
  %v1383 = vpop.f32.mrb[0].mxu0
  %v1384 = vadd.f32 0.0, %v1383
  %v1385 = vpop.f32.mrb[0].mxu0
  %v1386 = vadd.f32 0.0, %v1385
  %1387 = vmatprep.mubr.bf16.mxu0 %v1250
  %1388 = vmatmul.mubr.bf16.gmra.mrb[0].mxu0 %v1234
  %v1389 = vpop.f32.mrb[0].mxu0
  %v1390 = vadd.f32 0.0, %v1389
  %v1391 = vpop.f32.mrb[0].mxu0
  %v1392 = vadd.f32 0.0, %v1391
  %v1393 = vpop.f32.mrb[0].mxu0
  %v1394 = vadd.f32 0.0, %v1393
  %v1395 = vpop.f32.mrb[0].mxu0
  %v1396 = vadd.f32 0.0, %v1395
  %1397 = vdwg.mxu0
  %1398 = vmatprep.subr.bf16.mxu0 %v295
  %1399 = vmatpush1.bf16.msra.mxu0 %v294
  %1400 = vmatprep.subr.bf16.mxu0 %v301
  %1401 = vmatpush1.bf16.msra.mxu0 %v300
  %1402 = vmatprep.subr.bf16.mxu0 %v307
  %1403 = vmatpush1.bf16.msra.mxu0 %v306
  %1404 = vmatprep.subr.bf16.mxu0 %v313
  %1405 = vmatpush1.bf16.msra.mxu0 %v312
  %1406 = vmatprep.subr.bf16.mxu0 %v319
  %1407 = vmatpush1.bf16.msra.mxu0 %v318
  %1408 = vmatprep.subr.bf16.mxu0 %v325
  %1409 = vmatpush1.bf16.msra.mxu0 %v324
  %1410 = vmatprep.subr.bf16.mxu0 %v331
  %1411 = vmatpush1.bf16.msra.mxu0 %v330
  %1412 = vmatprep.subr.bf16.mxu0 %v337
  %1413 = vmatpush1.bf16.msra.mxu0 %v336
  %1414 = vmatprep.subr.bf16.mxu0 %v422
  %1415 = vmatpush1.bf16.msra.mxu0 %v419
  %1416 = vmatprep.subr.bf16.mxu0 0
  %1417 = vmatpush1.bf16.msra.mxu0 0
  %1418 = vmatprep.subr.bf16.mxu0 0
  %1419 = vmatpush1.bf16.msra.mxu0 0
  %1420 = vmatprep.subr.bf16.mxu0 0
  %1421 = vmatpush1.bf16.msra.mxu0 0
  %1422 = vmatprep.subr.bf16.mxu0 0
  %1423 = vmatpush1.bf16.msra.mxu0 0
  %1424 = vmatprep.subr.bf16.mxu0 0
  %1425 = vmatpush1.bf16.msra.mxu0 0
  %1426 = vmatprep.subr.bf16.mxu0 0
  %1427 = vmatpush1.bf16.msra.mxu0 0
  %1428 = vmatprep.subr.bf16.mxu0 0
  %1429 = vmatpush1.bf16.msra.mxu0 0
  %1430 = vmatprep.mubr.bf16.mxu0 %v1241
  %1431 = vmatmul.mubr.bf16.gmra.mrb[0].mxu0 %v1228
  %v1432 = vpop.f32.mrb[0].mxu0
  %v1433 = vadd.f32 0.0, %v1432
  %v1434 = vpop.f32.mrb[0].mxu0
  %v1435 = vadd.f32 0.0, %v1434
  %v1436 = vpop.f32.mrb[0].mxu0
  %v1437 = vadd.f32 0.0, %v1436
  %v1438 = vpop.f32.mrb[0].mxu0
  %v1439 = vadd.f32 0.0, %v1438
  %1440 = vmatprep.mubr.bf16.mxu0 %v1244
  %1441 = vmatmul.mubr.bf16.gmra.mrb[0].mxu0 %v1230
  %v1442 = vpop.f32.mrb[0].mxu0
  %v1443 = vadd.f32 0.0, %v1442
  %v1444 = vpop.f32.mrb[0].mxu0
  %v1445 = vadd.f32 0.0, %v1444
  %v1446 = vpop.f32.mrb[0].mxu0
  %v1447 = vadd.f32 0.0, %v1446
  %v1448 = vpop.f32.mrb[0].mxu0
  %v1449 = vadd.f32 0.0, %v1448
  %1450 = vmatprep.mubr.bf16.mxu0 %v1247
  %1451 = vmatmul.mubr.bf16.gmra.mrb[0].mxu0 %v1232
  %v1452 = vpop.f32.mrb[0].mxu0
  %v1453 = vadd.f32 0.0, %v1452
  %v1454 = vpop.f32.mrb[0].mxu0
  %v1455 = vadd.f32 0.0, %v1454
  %v1456 = vpop.f32.mrb[0].mxu0
  %v1457 = vadd.f32 0.0, %v1456
  %v1458 = vpop.f32.mrb[0].mxu0
  %v1459 = vadd.f32 0.0, %v1458
  %1460 = vmatprep.mubr.bf16.mxu0 %v1250
  %1461 = vmatmul.mubr.bf16.gmra.mrb[0].mxu0 %v1234
  %v1462 = vpop.f32.mrb[0].mxu0
  %v1463 = vadd.f32 0.0, %v1462
  %v1464 = vpop.f32.mrb[0].mxu0
  %v1465 = vadd.f32 0.0, %v1464
  %v1466 = vpop.f32.mrb[0].mxu0
  %v1467 = vadd.f32 0.0, %v1466
  %v1468 = vpop.f32.mrb[0].mxu0
  %v1469 = vadd.f32 0.0, %v1468
  %1470 = vdwg.mxu0
  %v1471 = vld [vmem:[%s3] sm:$0x7]
  %v1472 = vmax.f32 %v459, %v735
  %v1473 = vmax.f32 %v461, %v737
  %v1474 = vmax.f32 %v532, %v808
  %v1475 = vmax.f32 %v534, %v810
  %v1476 = vmax.f32 %v605, %v881
  %v1477 = vmax.f32 %v607, %v883
  %v1478 = vmax.f32 %v463, %v739
  %v1479 = vmax.f32 %v465, %v741
  %v1480 = vmax.f32 %v536, %v812
  %v1481 = vmax.f32 %v538, %v814
  %v1482 = vmax.f32 %v609, %v885
  %v1483 = vmax.f32 %v611, %v887
  %v1484 = vmax.f32 %v469, %v745
  %v1485 = vmax.f32 %v471, %v747
  %v1486 = vmax.f32 %v542, %v818
  %v1487 = vmax.f32 %v544, %v820
  %v1488 = vmax.f32 %v615, %v891
  %v1489 = vmax.f32 %v617, %v893
  %v1490 = vmax.f32 %v473, %v749
  %v1491 = vmax.f32 %v475, %v751
  %v1492 = vmax.f32 %v546, %v822
  %v1493 = vmax.f32 %v548, %v824
  %v1494 = vmax.f32 %v619, %v895
  %v1495 = vmax.f32 %v621, %v897
  %v1496 = vmax.f32 %v479, %v755
  %v1497 = vmax.f32 %v481, %v757
  %v1498 = vmax.f32 %v552, %v828
  %v1499 = vmax.f32 %v554, %v830
  %v1500 = vmax.f32 %v625, %v901
  %v1501 = vmax.f32 %v627, %v903
  %v1502 = vmax.f32 %v483, %v759
  %v1503 = vmax.f32 %v485, %v761
  %v1504 = vmax.f32 %v556, %v832
  %v1505 = vmax.f32 %v558, %v834
  %v1506 = vmax.f32 %v629, %v905
  %v1507 = vmax.f32 %v631, %v907
  %v1508 = vmax.f32 %v489, %v765
  %v1509 = vmax.f32 %v491, %v767
  %v1510 = vmax.f32 %v562, %v838
  %v1511 = vmax.f32 %v564, %v840
  %v1512 = vmax.f32 %v635, %v911
  %v1513 = vmax.f32 %v637, %v913
  %v1514 = vmax.f32 %v493, %v769
  %v1515 = vmax.f32 %v495, %v771
  %v1516 = vmax.f32 %v566, %v842
  %v1517 = vmax.f32 %v568, %v844
  %v1518 = vmax.f32 %v639, %v915
  %v1519 = vmax.f32 %v641, %v917
  %v1520 = vmax.f32 %v1011, %v1287
  %v1521 = vmax.f32 %v1013, %v1289
  %v1522 = vmax.f32 %v1084, %v1360
  %v1523 = vmax.f32 %v1086, %v1362
  %v1524 = vmax.f32 %v1157, %v1433
  %v1525 = vmax.f32 %v1159, %v1435
  %v1526 = vmax.f32 %v1015, %v1291
  %v1527 = vmax.f32 %v1017, %v1293
  %v1528 = vmax.f32 %v1088, %v1364
  %v1529 = vmax.f32 %v1090, %v1366
  %v1530 = vmax.f32 %v1161, %v1437
  %v1531 = vmax.f32 %v1163, %v1439
  %v1532 = vmax.f32 %v1021, %v1297
  %v1533 = vmax.f32 %v1023, %v1299
  %v1534 = vmax.f32 %v1094, %v1370
  %v1535 = vmax.f32 %v1096, %v1372
  %v1536 = vmax.f32 %v1167, %v1443
  %v1537 = vmax.f32 %v1169, %v1445
  %v1538 = vmax.f32 %v1025, %v1301
  %v1539 = vmax.f32 %v1027, %v1303
  %v1540 = vmax.f32 %v1098, %v1374
  %v1541 = vmax.f32 %v1100, %v1376
  %v1542 = vmax.f32 %v1171, %v1447
  %v1543 = vmax.f32 %v1173, %v1449
  %v1544 = vmax.f32 %v1031, %v1307
  %v1545 = vmax.f32 %v1033, %v1309
  %v1546 = vmax.f32 %v1104, %v1380
  %v1547 = vmax.f32 %v1106, %v1382
  %v1548 = vmax.f32 %v1177, %v1453
  %v1549 = vmax.f32 %v1179, %v1455
  %v1550 = vmax.f32 %v1035, %v1311
  %v1551 = vmax.f32 %v1037, %v1313
  %v1552 = vmax.f32 %v1108, %v1384
  %v1553 = vmax.f32 %v1110, %v1386
  %v1554 = vmax.f32 %v1181, %v1457
  %v1555 = vmax.f32 %v1183, %v1459
  %v1556 = vmax.f32 %v1041, %v1317
  %v1557 = vmax.f32 %v1043, %v1319
  %v1558 = vmax.f32 %v1114, %v1390
  %v1559 = vmax.f32 %v1116, %v1392
  %v1560 = vmax.f32 %v1187, %v1463
  %v1561 = vmax.f32 %v1189, %v1465
  %v1562 = vmax.f32 %v1045, %v1321
  %v1563 = vmax.f32 %v1047, %v1323
  %v1564 = vmax.f32 %v1118, %v1394
  %v1565 = vmax.f32 %v1120, %v1396
  %v1566 = vmax.f32 %v1191, %v1467
  %v1567 = vmax.f32 %v1193, %v1469
  %v1568 = vmax.f32 %v1472, %v1475
  %v1569 = vmax.f32 %v1473, %v1476
  %v1570 = vmax.f32 %v1474, %v1477
  %v1571 = vmax.f32 %v1478, %v1481
  %v1572 = vmax.f32 %v1479, %v1482
  %v1573 = vmax.f32 %v1480, %v1483
  %v1574 = vmax.f32 %v1484, %v1487
  %v1575 = vmax.f32 %v1485, %v1488
  %v1576 = vmax.f32 %v1486, %v1489
  %v1577 = vmax.f32 %v1490, %v1493
  %v1578 = vmax.f32 %v1491, %v1494
  %v1579 = vmax.f32 %v1492, %v1495
  %v1580 = vmax.f32 %v1496, %v1499
  %v1581 = vmax.f32 %v1497, %v1500
  %v1582 = vmax.f32 %v1498, %v1501
  %v1583 = vmax.f32 %v1502, %v1505
  %v1584 = vmax.f32 %v1503, %v1506
  %v1585 = vmax.f32 %v1504, %v1507
  %v1586 = vmax.f32 %v1508, %v1511
  %v1587 = vmax.f32 %v1509, %v1512
  %v1588 = vmax.f32 %v1510, %v1513
  %v1589 = vmax.f32 %v1514, %v1517
  %v1590 = vmax.f32 %v1515, %v1518
  %v1591 = vmax.f32 %v1516, %v1519
  %v1593 = vlaneseq
  %v1594 = vshrl.u32 %v1593, 7
  %v1595 = vsub.s32 0, %v1594
  %v1596 = vrot.slane %v1471, %v1595
  %v1597 = vlaneseq
  %v1598 = vshrl.u32 %v1597, 7
  %v1599 = vsub.s32 1, %v1598
  %v1600 = vrot.slane %v1471, %v1599
  %v1601 = vlaneseq
  %v1602 = vshrl.u32 %v1601, 7
  %v1603 = vsub.s32 2, %v1602
  %v1604 = vrot.slane %v1471, %v1603
  %v1608 = vadd.f32 %v1568, %v1596
  %v1609 = vadd.f32 %v1569, %v1600
  %v1610 = vadd.f32 %v1570, %v1604
  %v1611 = vadd.f32 %v1571, %v1596
  %v1612 = vadd.f32 %v1572, %v1600
  %v1613 = vadd.f32 %v1573, %v1604
  %v1614 = vadd.f32 %v1574, %v1596
  %v1615 = vadd.f32 %v1575, %v1600
  %v1616 = vadd.f32 %v1576, %v1604
  %v1617 = vadd.f32 %v1577, %v1596
  %v1618 = vadd.f32 %v1578, %v1600
  %v1619 = vadd.f32 %v1579, %v1604
  %v1620 = vadd.f32 %v1580, %v1596
  %v1621 = vadd.f32 %v1581, %v1600
  %v1622 = vadd.f32 %v1582, %v1604
  %v1623 = vadd.f32 %v1583, %v1596
  %v1624 = vadd.f32 %v1584, %v1600
  %v1625 = vadd.f32 %v1585, %v1604
  %v1626 = vadd.f32 %v1586, %v1596
  %v1627 = vadd.f32 %v1587, %v1600
  %v1628 = vadd.f32 %v1588, %v1604
  %v1629 = vadd.f32 %v1589, %v1596
  %v1630 = vadd.f32 %v1590, %v1600
  %v1631 = vadd.f32 %v1591, %v1604
  %v1632 = vmax.f32 %v1608, 0.0
  %v1633 = vmax.f32 %v1609, 0.0
  %v1634 = vmax.f32 %v1610, 0.0
  %v1635 = vmax.f32 %v1611, 0.0
  %v1636 = vmax.f32 %v1612, 0.0
  %v1637 = vmax.f32 %v1613, 0.0
  %v1638 = vmax.f32 %v1614, 0.0
  %v1639 = vmax.f32 %v1615, 0.0
  %v1640 = vmax.f32 %v1616, 0.0
  %v1641 = vmax.f32 %v1617, 0.0
  %v1642 = vmax.f32 %v1618, 0.0
  %v1643 = vmax.f32 %v1619, 0.0
  %v1644 = vmax.f32 %v1620, 0.0
  %v1645 = vmax.f32 %v1621, 0.0
  %v1646 = vmax.f32 %v1622, 0.0
  %v1647 = vmax.f32 %v1623, 0.0
  %v1648 = vmax.f32 %v1624, 0.0
  %v1649 = vmax.f32 %v1625, 0.0
  %v1650 = vmax.f32 %v1626, 0.0
  %v1651 = vmax.f32 %v1627, 0.0
  %v1652 = vmax.f32 %v1628, 0.0
  %v1653 = vmax.f32 %v1629, 0.0
  %v1654 = vmax.f32 %v1630, 0.0
  %v1655 = vmax.f32 %v1631, 0.0
  %v1656 = vmax.f32 %v1520, %v1523
  %v1657 = vmax.f32 %v1521, %v1524
  %v1658 = vmax.f32 %v1522, %v1525
  %v1659 = vmax.f32 %v1526, %v1529
  %v1660 = vmax.f32 %v1527, %v1530
  %v1661 = vmax.f32 %v1528, %v1531
  %v1662 = vmax.f32 %v1532, %v1535
  %v1663 = vmax.f32 %v1533, %v1536
  %v1664 = vmax.f32 %v1534, %v1537
  %v1665 = vmax.f32 %v1538, %v1541
  %v1666 = vmax.f32 %v1539, %v1542
  %v1667 = vmax.f32 %v1540, %v1543
  %v1668 = vmax.f32 %v1544, %v1547
  %v1669 = vmax.f32 %v1545, %v1548
  %v1670 = vmax.f32 %v1546, %v1549
  %v1671 = vmax.f32 %v1550, %v1553
  %v1672 = vmax.f32 %v1551, %v1554
  %v1673 = vmax.f32 %v1552, %v1555
  %v1674 = vmax.f32 %v1556, %v1559
  %v1675 = vmax.f32 %v1557, %v1560
  %v1676 = vmax.f32 %v1558, %v1561
  %v1677 = vmax.f32 %v1562, %v1565
  %v1678 = vmax.f32 %v1563, %v1566
  %v1679 = vmax.f32 %v1564, %v1567
  %v1680 = vadd.f32 %v1656, %v1596
  %v1681 = vadd.f32 %v1657, %v1600
  %v1682 = vadd.f32 %v1658, %v1604
  %v1683 = vadd.f32 %v1659, %v1596
  %v1684 = vadd.f32 %v1660, %v1600
  %v1685 = vadd.f32 %v1661, %v1604
  %v1686 = vadd.f32 %v1662, %v1596
  %v1687 = vadd.f32 %v1663, %v1600
  %v1688 = vadd.f32 %v1664, %v1604
  %v1689 = vadd.f32 %v1665, %v1596
  %v1690 = vadd.f32 %v1666, %v1600
  %v1691 = vadd.f32 %v1667, %v1604
  %v1692 = vadd.f32 %v1668, %v1596
  %v1693 = vadd.f32 %v1669, %v1600
  %v1694 = vadd.f32 %v1670, %v1604
  %v1695 = vadd.f32 %v1671, %v1596
  %v1696 = vadd.f32 %v1672, %v1600
  %v1697 = vadd.f32 %v1673, %v1604
  %v1698 = vadd.f32 %v1674, %v1596
  %v1699 = vadd.f32 %v1675, %v1600
  %v1700 = vadd.f32 %v1676, %v1604
  %v1701 = vadd.f32 %v1677, %v1596
  %v1702 = vadd.f32 %v1678, %v1600
  %v1703 = vadd.f32 %v1679, %v1604
  %v1704 = vmax.f32 %v1680, 0.0
  %v1705 = vmax.f32 %v1681, 0.0
  %v1706 = vmax.f32 %v1682, 0.0
  %v1707 = vmax.f32 %v1683, 0.0
  %v1708 = vmax.f32 %v1684, 0.0
  %v1709 = vmax.f32 %v1685, 0.0
  %v1710 = vmax.f32 %v1686, 0.0
  %v1711 = vmax.f32 %v1687, 0.0
  %v1712 = vmax.f32 %v1688, 0.0
  %v1713 = vmax.f32 %v1689, 0.0
  %v1714 = vmax.f32 %v1690, 0.0
  %v1715 = vmax.f32 %v1691, 0.0
  %v1716 = vmax.f32 %v1692, 0.0
  %v1717 = vmax.f32 %v1693, 0.0
  %v1718 = vmax.f32 %v1694, 0.0
  %v1719 = vmax.f32 %v1695, 0.0
  %v1720 = vmax.f32 %v1696, 0.0
  %v1721 = vmax.f32 %v1697, 0.0
  %v1722 = vmax.f32 %v1698, 0.0
  %v1723 = vmax.f32 %v1699, 0.0
  %v1724 = vmax.f32 %v1700, 0.0
  %v1725 = vmax.f32 %v1701, 0.0
  %v1726 = vmax.f32 %v1702, 0.0
  %v1727 = vmax.f32 %v1703, 0.0
  %v1728 = vpack.c.bf16 %v1635, %v1632
  %v1729 = vpack.c.bf16 %v1636, %v1633
  %v1730 = vpack.c.bf16 %v1637, %v1634
  %v1731 = vpack.c.bf16 %v1641, %v1638
  %v1732 = vpack.c.bf16 %v1642, %v1639
  %v1733 = vpack.c.bf16 %v1643, %v1640
  %v1734 = vpack.c.bf16 %v1647, %v1644
  %v1735 = vpack.c.bf16 %v1648, %v1645
  %v1736 = vpack.c.bf16 %v1649, %v1646
  %v1737 = vpack.c.bf16 %v1653, %v1650
  %v1738 = vpack.c.bf16 %v1654, %v1651
  %v1739 = vpack.c.bf16 %v1655, %v1652
  %v1740 = vpack.c.bf16 %v1707, %v1704
  %v1741 = vpack.c.bf16 %v1708, %v1705
  %v1742 = vpack.c.bf16 %v1709, %v1706
  %v1743 = vpack.c.bf16 %v1713, %v1710
  %v1744 = vpack.c.bf16 %v1714, %v1711
  %v1745 = vpack.c.bf16 %v1715, %v1712
  %v1746 = vpack.c.bf16 %v1719, %v1716
  %v1747 = vpack.c.bf16 %v1720, %v1717
  %v1748 = vpack.c.bf16 %v1721, %v1718
  %v1749 = vpack.c.bf16 %v1725, %v1722
  %v1750 = vpack.c.bf16 %v1726, %v1723
  %v1751 = vpack.c.bf16 %v1727, %v1724
  %v1752 = vrot.slane %v1632, 1
  %v1753 = vrot.slane %v1633, 1
  %v1754 = vrot.slane %v1634, 1
  %v1755 = vrot.slane %v1635, 1
  %v1756 = vrot.slane %v1636, 1
  %v1757 = vrot.slane %v1637, 1
  %v1758 = vrot.slane %v1638, 1
  %v1759 = vrot.slane %v1639, 1
  %v1760 = vrot.slane %v1640, 1
  %v1761 = vrot.slane %v1641, 1
  %v1762 = vrot.slane %v1642, 1
  %v1763 = vrot.slane %v1643, 1
  %v1764 = vrot.slane %v1644, 1
  %v1765 = vrot.slane %v1645, 1
  %v1766 = vrot.slane %v1646, 1
  %v1767 = vrot.slane %v1647, 1
  %v1768 = vrot.slane %v1648, 1
  %v1769 = vrot.slane %v1649, 1
  %v1770 = vrot.slane %v1650, 1
  %v1771 = vrot.slane %v1651, 1
  %v1772 = vrot.slane %v1652, 1
  %v1773 = vrot.slane %v1653, 1
  %v1774 = vrot.slane %v1654, 1
  %v1775 = vrot.slane %v1655, 1
  %v1776 = vlaneseq
  %v1777 = vshrl.u32 %v1776, 7
  %vm1778 = vcmp.lt.s32.totalorder %v1777, 7
  %v1779 = vsel %vm1778, %v1770, %v1773
  %v1780 = vsel %vm1778, %v1771, %v1774
  %v1781 = vsel %vm1778, %v1772, %v1775
  %v1782 = vsel %vm1778, %v1767, %v1770
  %v1783 = vsel %vm1778, %v1768, %v1771
  %v1784 = vsel %vm1778, %v1769, %v1772
  %v1785 = vsel %vm1778, %v1764, %v1767
  %v1786 = vsel %vm1778, %v1765, %v1768
  %v1787 = vsel %vm1778, %v1766, %v1769
  %v1788 = vsel %vm1778, %v1761, %v1764
  %v1789 = vsel %vm1778, %v1762, %v1765
  %v1790 = vsel %vm1778, %v1763, %v1766
  %v1791 = vsel %vm1778, %v1758, %v1761
  %v1792 = vsel %vm1778, %v1759, %v1762
  %v1793 = vsel %vm1778, %v1760, %v1763
  %v1794 = vsel %vm1778, %v1755, %v1758
  %v1795 = vsel %vm1778, %v1756, %v1759
  %v1796 = vsel %vm1778, %v1757, %v1760
  %v1797 = vsel %vm1778, %v1752, %v1755
  %v1798 = vsel %vm1778, %v1753, %v1756
  %v1799 = vsel %vm1778, %v1754, %v1757
  %v1800 = vsel %vm1778, %v1773, %v1752
  %v1801 = vsel %vm1778, %v1774, %v1753
  %v1802 = vsel %vm1778, %v1775, %v1754
  %v1803 = vpack.c.bf16 %v1794, %v1797
  %v1804 = vpack.c.bf16 %v1795, %v1798
  %v1805 = vpack.c.bf16 %v1796, %v1799
  %v1806 = vpack.c.bf16 %v1788, %v1791
  %v1807 = vpack.c.bf16 %v1789, %v1792
  %v1808 = vpack.c.bf16 %v1790, %v1793
  %v1809 = vpack.c.bf16 %v1782, %v1785
  %v1810 = vpack.c.bf16 %v1783, %v1786
  %v1811 = vpack.c.bf16 %v1784, %v1787
  %v1812 = vpack.c.bf16 %v1800, %v1779
  %v1813 = vpack.c.bf16 %v1801, %v1780
  %v1814 = vpack.c.bf16 %v1802, %v1781
  %v1815 = vrot.slane %v1704, 1
  %v1816 = vrot.slane %v1705, 1
  %v1817 = vrot.slane %v1706, 1
  %v1818 = vrot.slane %v1707, 1
  %v1819 = vrot.slane %v1708, 1
  %v1820 = vrot.slane %v1709, 1
  %v1821 = vrot.slane %v1710, 1
  %v1822 = vrot.slane %v1711, 1
  %v1823 = vrot.slane %v1712, 1
  %v1824 = vrot.slane %v1713, 1
  %v1825 = vrot.slane %v1714, 1
  %v1826 = vrot.slane %v1715, 1
  %v1827 = vrot.slane %v1716, 1
  %v1828 = vrot.slane %v1717, 1
  %v1829 = vrot.slane %v1718, 1
  %v1830 = vrot.slane %v1719, 1
  %v1831 = vrot.slane %v1720, 1
  %v1832 = vrot.slane %v1721, 1
  %v1833 = vrot.slane %v1722, 1
  %v1834 = vrot.slane %v1723, 1
  %v1835 = vrot.slane %v1724, 1
  %v1836 = vrot.slane %v1725, 1
  %v1837 = vrot.slane %v1726, 1
  %v1838 = vrot.slane %v1727, 1
  %v1839 = vsel %vm1778, %v1833, %v1836
  %v1840 = vsel %vm1778, %v1834, %v1837
  %v1841 = vsel %vm1778, %v1835, %v1838
  %v1842 = vsel %vm1778, %v1830, %v1833
  %v1843 = vsel %vm1778, %v1831, %v1834
  %v1844 = vsel %vm1778, %v1832, %v1835
  %v1845 = vsel %vm1778, %v1827, %v1830
  %v1846 = vsel %vm1778, %v1828, %v1831
  %v1847 = vsel %vm1778, %v1829, %v1832
  %v1848 = vsel %vm1778, %v1824, %v1827
  %v1849 = vsel %vm1778, %v1825, %v1828
  %v1850 = vsel %vm1778, %v1826, %v1829
  %v1851 = vsel %vm1778, %v1821, %v1824
  %v1852 = vsel %vm1778, %v1822, %v1825
  %v1853 = vsel %vm1778, %v1823, %v1826
  %v1854 = vsel %vm1778, %v1818, %v1821
  %v1855 = vsel %vm1778, %v1819, %v1822
  %v1856 = vsel %vm1778, %v1820, %v1823
  %v1857 = vsel %vm1778, %v1815, %v1818
  %v1858 = vsel %vm1778, %v1816, %v1819
  %v1859 = vsel %vm1778, %v1817, %v1820
  %v1860 = vsel %vm1778, %v1836, %v1815
  %v1861 = vsel %vm1778, %v1837, %v1816
  %v1862 = vsel %vm1778, %v1838, %v1817
  %v1863 = vpack.c.bf16 %v1854, %v1857
  %v1864 = vpack.c.bf16 %v1855, %v1858
  %v1865 = vpack.c.bf16 %v1856, %v1859
  %v1866 = vpack.c.bf16 %v1848, %v1851
  %v1867 = vpack.c.bf16 %v1849, %v1852
  %v1868 = vpack.c.bf16 %v1850, %v1853
  %v1869 = vpack.c.bf16 %v1842, %v1845
  %v1870 = vpack.c.bf16 %v1843, %v1846
  %v1871 = vpack.c.bf16 %v1844, %v1847
  %v1872 = vpack.c.bf16 %v1860, %v1839
  %v1873 = vpack.c.bf16 %v1861, %v1840
  %v1874 = vpack.c.bf16 %v1862, %v1841
  %v1875 = vrot.slane %v1632, 2
  %v1876 = vrot.slane %v1633, 2
  %v1877 = vrot.slane %v1634, 2
  %v1878 = vrot.slane %v1635, 2
  %v1879 = vrot.slane %v1636, 2
  %v1880 = vrot.slane %v1637, 2
  %v1881 = vrot.slane %v1638, 2
  %v1882 = vrot.slane %v1639, 2
  %v1883 = vrot.slane %v1640, 2
  %v1884 = vrot.slane %v1641, 2
  %v1885 = vrot.slane %v1642, 2
  %v1886 = vrot.slane %v1643, 2
  %v1887 = vrot.slane %v1644, 2
  %v1888 = vrot.slane %v1645, 2
  %v1889 = vrot.slane %v1646, 2
  %v1890 = vrot.slane %v1647, 2
  %v1891 = vrot.slane %v1648, 2
  %v1892 = vrot.slane %v1649, 2
  %v1893 = vrot.slane %v1650, 2
  %v1894 = vrot.slane %v1651, 2
  %v1895 = vrot.slane %v1652, 2
  %v1896 = vrot.slane %v1653, 2
  %v1897 = vrot.slane %v1654, 2
  %v1898 = vrot.slane %v1655, 2
  %vm1899 = vcmp.lt.s32.totalorder %v1777, 6
  %v1900 = vsel %vm1899, %v1893, %v1896
  %v1901 = vsel %vm1899, %v1894, %v1897
  %v1902 = vsel %vm1899, %v1895, %v1898
  %v1903 = vsel %vm1899, %v1890, %v1893
  %v1904 = vsel %vm1899, %v1891, %v1894
  %v1905 = vsel %vm1899, %v1892, %v1895
  %v1906 = vsel %vm1899, %v1887, %v1890
  %v1907 = vsel %vm1899, %v1888, %v1891
  %v1908 = vsel %vm1899, %v1889, %v1892
  %v1909 = vsel %vm1899, %v1884, %v1887
  %v1910 = vsel %vm1899, %v1885, %v1888
  %v1911 = vsel %vm1899, %v1886, %v1889
  %v1912 = vsel %vm1899, %v1881, %v1884
  %v1913 = vsel %vm1899, %v1882, %v1885
  %v1914 = vsel %vm1899, %v1883, %v1886
  %v1915 = vsel %vm1899, %v1878, %v1881
  %v1916 = vsel %vm1899, %v1879, %v1882
  %v1917 = vsel %vm1899, %v1880, %v1883
  %v1918 = vsel %vm1899, %v1875, %v1878
  %v1919 = vsel %vm1899, %v1876, %v1879
  %v1920 = vsel %vm1899, %v1877, %v1880
  %v1921 = vsel %vm1899, %v1896, %v1875
  %v1922 = vsel %vm1899, %v1897, %v1876
  %v1923 = vsel %vm1899, %v1898, %v1877
  %v1924 = vpack.c.bf16 %v1915, %v1918
  %v1925 = vpack.c.bf16 %v1916, %v1919
  %v1926 = vpack.c.bf16 %v1917, %v1920
  %v1927 = vpack.c.bf16 %v1909, %v1912
  %v1928 = vpack.c.bf16 %v1910, %v1913
  %v1929 = vpack.c.bf16 %v1911, %v1914
  %v1930 = vpack.c.bf16 %v1903, %v1906
  %v1931 = vpack.c.bf16 %v1904, %v1907
  %v1932 = vpack.c.bf16 %v1905, %v1908
  %v1933 = vpack.c.bf16 %v1921, %v1900
  %v1934 = vpack.c.bf16 %v1922, %v1901
  %v1935 = vpack.c.bf16 %v1923, %v1902
  %v1936 = vrot.slane %v1704, 2
  %v1937 = vrot.slane %v1705, 2
  %v1938 = vrot.slane %v1706, 2
  %v1939 = vrot.slane %v1707, 2
  %v1940 = vrot.slane %v1708, 2
  %v1941 = vrot.slane %v1709, 2
  %v1942 = vrot.slane %v1710, 2
  %v1943 = vrot.slane %v1711, 2
  %v1944 = vrot.slane %v1712, 2
  %v1945 = vrot.slane %v1713, 2
  %v1946 = vrot.slane %v1714, 2
  %v1947 = vrot.slane %v1715, 2
  %v1948 = vrot.slane %v1716, 2
  %v1949 = vrot.slane %v1717, 2
  %v1950 = vrot.slane %v1718, 2
  %v1951 = vrot.slane %v1719, 2
  %v1952 = vrot.slane %v1720, 2
  %v1953 = vrot.slane %v1721, 2
  %v1954 = vrot.slane %v1722, 2
  %v1955 = vrot.slane %v1723, 2
  %v1956 = vrot.slane %v1724, 2
  %v1957 = vrot.slane %v1725, 2
  %v1958 = vrot.slane %v1726, 2
  %v1959 = vrot.slane %v1727, 2
  %v1960 = vsel %vm1899, %v1954, %v1957
  %v1961 = vsel %vm1899, %v1955, %v1958
  %v1962 = vsel %vm1899, %v1956, %v1959
  %v1963 = vsel %vm1899, %v1951, %v1954
  %v1964 = vsel %vm1899, %v1952, %v1955
  %v1965 = vsel %vm1899, %v1953, %v1956
  %v1966 = vsel %vm1899, %v1948, %v1951
  %v1967 = vsel %vm1899, %v1949, %v1952
  %v1968 = vsel %vm1899, %v1950, %v1953
  %v1969 = vsel %vm1899, %v1945, %v1948
  %v1970 = vsel %vm1899, %v1946, %v1949
  %v1971 = vsel %vm1899, %v1947, %v1950
  %v1972 = vsel %vm1899, %v1942, %v1945
  %v1973 = vsel %vm1899, %v1943, %v1946
  %v1974 = vsel %vm1899, %v1944, %v1947
  %v1975 = vsel %vm1899, %v1939, %v1942
  %v1976 = vsel %vm1899, %v1940, %v1943
  %v1977 = vsel %vm1899, %v1941, %v1944
  %v1978 = vsel %vm1899, %v1936, %v1939
  %v1979 = vsel %vm1899, %v1937, %v1940
  %v1980 = vsel %vm1899, %v1938, %v1941
  %v1981 = vsel %vm1899, %v1957, %v1936
  %v1982 = vsel %vm1899, %v1958, %v1937
  %v1983 = vsel %vm1899, %v1959, %v1938
  %v1984 = vpack.c.bf16 %v1975, %v1978
  %v1985 = vpack.c.bf16 %v1976, %v1979
  %v1986 = vpack.c.bf16 %v1977, %v1980
  %v1987 = vpack.c.bf16 %v1969, %v1972
  %v1988 = vpack.c.bf16 %v1970, %v1973
  %v1989 = vpack.c.bf16 %v1971, %v1974
  %v1990 = vpack.c.bf16 %v1963, %v1966
  %v1991 = vpack.c.bf16 %v1964, %v1967
  %v1992 = vpack.c.bf16 %v1965, %v1968
  %v1993 = vpack.c.bf16 %v1981, %v1960
  %v1994 = vpack.c.bf16 %v1982, %v1961
  %v1995 = vpack.c.bf16 %v1983, %v1962
  %v1996 = vld [vmem:[%s4] sm:$0xff]
  %v1997 = vld [vmem:[%s4 + $0x8] sm:$0xff]
  %v1998 = vld [vmem:[%s4 + $0x10] sm:$0xff]
  %v1999 = vld [vmem:[%s4 + $0x18] sm:$0xff]
  %v2000 = vld [vmem:[%s4 + $0x20] sm:$0xff]
  %v2001 = vld [vmem:[%s4 + $0x28] sm:$0xff]
  %v2002 = vld [vmem:[%s4 + $0x30] sm:$0xff]
  %v2003 = vld [vmem:[%s4 + $0x38] sm:$0xff]
  %v2004 = vld [vmem:[%s4 + $0x40] sm:$0xff]
  %v2005 = vld [vmem:[%s4 + $0x48] sm:$0xff]
  %v2006 = vld [vmem:[%s4 + $0x50] sm:$0xff]
  %v2007 = vld [vmem:[%s4 + $0x58] sm:$0xff]
  %v2008 = vld [vmem:[%s4 + $0x60] sm:$0xff]
  %v2009 = vld [vmem:[%s4 + $0x68] sm:$0xff]
  %v2010 = vld [vmem:[%s4 + $0x70] sm:$0xff]
  %v2011 = vld [vmem:[%s4 + $0x78] sm:$0xff]
  %v2012 = vld [vmem:[%s4 + $0x80] sm:$0xff]
  %v2013 = vld [vmem:[%s4 + $0x88] sm:$0xff]
  %v2014 = vld [vmem:[%s4 + $0x90] sm:$0xff]
  %v2015 = vld [vmem:[%s4 + $0x98] sm:$0xff]
  %v2016 = vld [vmem:[%s4 + $0xa0] sm:$0xff]
  %v2017 = vld [vmem:[%s4 + $0xa8] sm:$0xff]
  %v2018 = vld [vmem:[%s4 + $0xb0] sm:$0xff]
  %v2019 = vld [vmem:[%s4 + $0xb8] sm:$0xff]
  %v2020 = vld [vmem:[%s4 + $0xc0] sm:$0xff]
  %v2021 = vld [vmem:[%s4 + $0xc8] sm:$0xff]
  %v2022 = vld [vmem:[%s4 + $0xd0] sm:$0xff]
  %v2023 = vld [vmem:[%s4 + $0xd8] sm:$0xff]
  %v2024 = vld [vmem:[%s4 + $0xe0] sm:$0xff]
  %v2025 = vld [vmem:[%s4 + $0xe8] sm:$0xff]
  %v2026 = vld [vmem:[%s4 + $0xf0] sm:$0xff]
  %v2027 = vld [vmem:[%s4 + $0xf8] sm:$0xff]
  %v2028 = vld [vmem:[%s4 + $0x100] sm:$0xff]
  %v2029 = vld [vmem:[%s4 + $0x108] sm:$0xff]
  %v2030 = vld [vmem:[%s4 + $0x110] sm:$0xff]
  %v2031 = vld [vmem:[%s4 + $0x118] sm:$0xff]
  %v2032 = vld [vmem:[%s4 + $0x120] sm:$0xff]
  %v2033 = vld [vmem:[%s4 + $0x128] sm:$0xff]
  %v2034 = vld [vmem:[%s4 + $0x130] sm:$0xff]
  %v2035 = vld [vmem:[%s4 + $0x138] sm:$0xff]
  %v2036 = vld [vmem:[%s4 + $0x140] sm:$0xff]
  %v2037 = vld [vmem:[%s4 + $0x148] sm:$0xff]
  %v2038 = vld [vmem:[%s4 + $0x150] sm:$0xff]
  %v2039 = vld [vmem:[%s4 + $0x158] sm:$0xff]
  %v2040 = vld [vmem:[%s4 + $0x160] sm:$0xff]
  %v2041 = vld [vmem:[%s4 + $0x168] sm:$0xff]
  %v2042 = vld [vmem:[%s4 + $0x170] sm:$0xff]
  %v2043 = vld [vmem:[%s4 + $0x178] sm:$0xff]
  %v2044 = vld [vmem:[%s4 + $0x180] sm:$0xff]
  %v2045 = vld [vmem:[%s4 + $0x188] sm:$0xff]
  %v2046 = vld [vmem:[%s4 + $0x190] sm:$0xff]
  %v2047 = vld [vmem:[%s4 + $0x198] sm:$0xff]
  %v2048 = vld [vmem:[%s4 + $0x1a0] sm:$0xff]
  %v2049 = vld [vmem:[%s4 + $0x1a8] sm:$0xff]
  %v2050 = vld [vmem:[%s4 + $0x1b0] sm:$0xff]
  %v2051 = vld [vmem:[%s4 + $0x1b8] sm:$0xff]
  %v2052 = vld [vmem:[%s4 + $0x1c0] sm:$0xff]
  %v2053 = vld [vmem:[%s4 + $0x1c8] sm:$0xff]
  %v2054 = vld [vmem:[%s4 + $0x1d0] sm:$0xff]
  %v2055 = vld [vmem:[%s4 + $0x1d8] sm:$0xff]
  %v2056 = vld [vmem:[%s4 + $0x1e0] sm:$0xff]
  %v2057 = vld [vmem:[%s4 + $0x1e8] sm:$0xff]
  %v2058 = vld [vmem:[%s4 + $0x1f0] sm:$0xff]
  %v2059 = vld [vmem:[%s4 + $0x1f8] sm:$0xff]
  %v2060 = vld [vmem:[%s4 + $0x200] sm:$0xff]
  %v2061 = vld [vmem:[%s4 + $0x208] sm:$0xff]
  %v2062 = vld [vmem:[%s4 + $0x210] sm:$0xff]
  %v2063 = vld [vmem:[%s4 + $0x218] sm:$0xff]
  %v2064 = vld [vmem:[%s4 + $0x220] sm:$0xff]
  %v2065 = vld [vmem:[%s4 + $0x228] sm:$0xff]
  %v2066 = vld [vmem:[%s4 + $0x230] sm:$0xff]
  %v2067 = vld [vmem:[%s4 + $0x238] sm:$0xff]
  %v2068 = vld [vmem:[%s4 + $0x240] sm:$0xff]
  %v2069 = vld [vmem:[%s4 + $0x248] sm:$0xff]
  %v2070 = vld [vmem:[%s4 + $0x250] sm:$0xff]
  %v2071 = vld [vmem:[%s4 + $0x258] sm:$0xff]
  %v2072 = vld [vmem:[%s4 + $0x260] sm:$0xff]
  %v2073 = vld [vmem:[%s4 + $0x268] sm:$0xff]
  %v2074 = vld [vmem:[%s4 + $0x270] sm:$0xff]
  %v2075 = vld [vmem:[%s4 + $0x278] sm:$0xff]
  %v2076 = vld [vmem:[%s4 + $0x280] sm:$0xff]
  %v2077 = vld [vmem:[%s4 + $0x288] sm:$0xff]
  %v2078 = vld [vmem:[%s4 + $0x290] sm:$0xff]
  %v2079 = vld [vmem:[%s4 + $0x298] sm:$0xff]
  %v2080 = vld [vmem:[%s4 + $0x2a0] sm:$0xff]
  %v2081 = vld [vmem:[%s4 + $0x2a8] sm:$0xff]
  %v2082 = vld [vmem:[%s4 + $0x2b0] sm:$0xff]
  %v2083 = vld [vmem:[%s4 + $0x2b8] sm:$0xff]
  %v2084 = vld [vmem:[%s4 + $0x2c0] sm:$0xff]
  %v2085 = vld [vmem:[%s4 + $0x2c8] sm:$0xff]
  %v2086 = vld [vmem:[%s4 + $0x2d0] sm:$0xff]
  %v2087 = vld [vmem:[%s4 + $0x2d8] sm:$0xff]
  %v2088 = vld [vmem:[%s4 + $0x2e0] sm:$0xff]
  %v2089 = vld [vmem:[%s4 + $0x2e8] sm:$0xff]
  %v2090 = vld [vmem:[%s4 + $0x2f0] sm:$0xff]
  %v2091 = vld [vmem:[%s4 + $0x2f8] sm:$0xff]
  %v2092 = vld [vmem:[%s4 + $0x300] sm:$0xff]
  %v2093 = vld [vmem:[%s4 + $0x308] sm:$0xff]
  %v2094 = vld [vmem:[%s4 + $0x310] sm:$0xff]
  %v2095 = vld [vmem:[%s4 + $0x318] sm:$0xff]
  %v2096 = vld [vmem:[%s4 + $0x320] sm:$0xff]
  %v2097 = vld [vmem:[%s4 + $0x328] sm:$0xff]
  %v2098 = vld [vmem:[%s4 + $0x330] sm:$0xff]
  %v2099 = vld [vmem:[%s4 + $0x338] sm:$0xff]
  %v2100 = vld [vmem:[%s4 + $0x340] sm:$0xff]
  %v2101 = vld [vmem:[%s4 + $0x348] sm:$0xff]
  %v2102 = vld [vmem:[%s4 + $0x350] sm:$0xff]
  %v2103 = vld [vmem:[%s4 + $0x358] sm:$0xff]
  %v2104 = vld [vmem:[%s4 + $0x360] sm:$0xff]
  %v2105 = vld [vmem:[%s4 + $0x368] sm:$0xff]
  %v2106 = vld [vmem:[%s4 + $0x370] sm:$0xff]
  %v2107 = vld [vmem:[%s4 + $0x378] sm:$0xff]
  %v2108 = vld [vmem:[%s4 + $0x380] sm:$0xff]
  %v2109 = vld [vmem:[%s4 + $0x388] sm:$0xff]
  %v2110 = vld [vmem:[%s4 + $0x390] sm:$0xff]
  %v2111 = vld [vmem:[%s4 + $0x398] sm:$0xff]
  %v2112 = vld [vmem:[%s4 + $0x3a0] sm:$0xff]
  %v2113 = vld [vmem:[%s4 + $0x3a8] sm:$0xff]
  %v2114 = vld [vmem:[%s4 + $0x3b0] sm:$0xff]
  %v2115 = vld [vmem:[%s4 + $0x3b8] sm:$0xff]
  %v2116 = vld [vmem:[%s4 + $0x3c0] sm:$0xff]
  %v2117 = vld [vmem:[%s4 + $0x3c8] sm:$0xff]
  %v2118 = vld [vmem:[%s4 + $0x3d0] sm:$0xff]
  %v2119 = vld [vmem:[%s4 + $0x3d8] sm:$0xff]
  %v2120 = vld [vmem:[%s4 + $0x3e0] sm:$0xff]
  %v2121 = vld [vmem:[%s4 + $0x3e8] sm:$0xff]
  %v2122 = vld [vmem:[%s4 + $0x3f0] sm:$0xff]
  %v2123 = vld [vmem:[%s4 + $0x3f8] sm:$0xff]
  %v2124 = vld [vmem:[%s4 + $0x400] sm:$0xff]
  %v2125 = vld [vmem:[%s4 + $0x408] sm:$0xff]
  %v2126 = vld [vmem:[%s4 + $0x410] sm:$0xff]
  %v2127 = vld [vmem:[%s4 + $0x418] sm:$0xff]
  %v2128 = vld [vmem:[%s4 + $0x420] sm:$0xff]
  %v2129 = vld [vmem:[%s4 + $0x428] sm:$0xff]
  %v2130 = vld [vmem:[%s4 + $0x430] sm:$0xff]
  %v2131 = vld [vmem:[%s4 + $0x438] sm:$0xff]
  %v2132 = vld [vmem:[%s4 + $0x440] sm:$0xff]
  %v2133 = vld [vmem:[%s4 + $0x448] sm:$0xff]
  %v2134 = vld [vmem:[%s4 + $0x450] sm:$0xff]
  %v2135 = vld [vmem:[%s4 + $0x458] sm:$0xff]
  %v2136 = vld [vmem:[%s4 + $0x460] sm:$0xff]
  %v2137 = vld [vmem:[%s4 + $0x468] sm:$0xff]
  %v2138 = vld [vmem:[%s4 + $0x470] sm:$0xff]
  %v2139 = vld [vmem:[%s4 + $0x478] sm:$0xff]
  %v2140 = vld [vmem:[%s4 + $0x480] sm:$0xff]
  %v2141 = vld [vmem:[%s4 + $0x488] sm:$0xff]
  %v2142 = vld [vmem:[%s4 + $0x490] sm:$0xff]
  %v2143 = vld [vmem:[%s4 + $0x498] sm:$0xff]
  %v2144 = vld [vmem:[%s4 + $0x4a0] sm:$0xff]
  %v2145 = vld [vmem:[%s4 + $0x4a8] sm:$0xff]
  %v2146 = vld [vmem:[%s4 + $0x4b0] sm:$0xff]
  %v2147 = vld [vmem:[%s4 + $0x4b8] sm:$0xff]
  %v2148 = vld [vmem:[%s4 + $0x4c0] sm:$0xff]
  %v2149 = vld [vmem:[%s4 + $0x4c8] sm:$0xff]
  %v2150 = vld [vmem:[%s4 + $0x4d0] sm:$0xff]
  %v2151 = vld [vmem:[%s4 + $0x4d8] sm:$0xff]
  %v2152 = vld [vmem:[%s4 + $0x4e0] sm:$0xff]
  %v2153 = vld [vmem:[%s4 + $0x4e8] sm:$0xff]
  %v2154 = vld [vmem:[%s4 + $0x4f0] sm:$0xff]
  %v2155 = vld [vmem:[%s4 + $0x4f8] sm:$0xff]
  %v2156 = vld [vmem:[%s4 + $0x500] sm:$0xff]
  %v2157 = vld [vmem:[%s4 + $0x508] sm:$0xff]
  %v2158 = vld [vmem:[%s4 + $0x510] sm:$0xff]
  %v2159 = vld [vmem:[%s4 + $0x518] sm:$0xff]
  %v2160 = vld [vmem:[%s4 + $0x520] sm:$0xff]
  %v2161 = vld [vmem:[%s4 + $0x528] sm:$0xff]
  %v2162 = vld [vmem:[%s4 + $0x530] sm:$0xff]
  %v2163 = vld [vmem:[%s4 + $0x538] sm:$0xff]
  %v2164 = vld [vmem:[%s4 + $0x540] sm:$0xff]
  %v2165 = vld [vmem:[%s4 + $0x548] sm:$0xff]
  %v2166 = vld [vmem:[%s4 + $0x550] sm:$0xff]
  %v2167 = vld [vmem:[%s4 + $0x558] sm:$0xff]
  %v2168 = vld [vmem:[%s4 + $0x560] sm:$0xff]
  %v2169 = vld [vmem:[%s4 + $0x568] sm:$0xff]
  %v2170 = vld [vmem:[%s4 + $0x570] sm:$0xff]
  %v2171 = vld [vmem:[%s4 + $0x578] sm:$0xff]
  %v2172 = vld [vmem:[%s4 + $0x580] sm:$0xff]
  %v2173 = vld [vmem:[%s4 + $0x588] sm:$0xff]
  %v2174 = vld [vmem:[%s4 + $0x590] sm:$0xff]
  %v2175 = vld [vmem:[%s4 + $0x598] sm:$0xff]
  %v2176 = vld [vmem:[%s4 + $0x5a0] sm:$0xff]
  %v2177 = vld [vmem:[%s4 + $0x5a8] sm:$0xff]
  %v2178 = vld [vmem:[%s4 + $0x5b0] sm:$0xff]
  %v2179 = vld [vmem:[%s4 + $0x5b8] sm:$0xff]
  %v2180 = vld [vmem:[%s4 + $0x5c0] sm:$0xff]
  %v2181 = vld [vmem:[%s4 + $0x5c8] sm:$0xff]
  %v2182 = vld [vmem:[%s4 + $0x5d0] sm:$0xff]
  %v2183 = vld [vmem:[%s4 + $0x5d8] sm:$0xff]
  %v2184 = vld [vmem:[%s4 + $0x5e0] sm:$0xff]
  %v2185 = vld [vmem:[%s4 + $0x5e8] sm:$0xff]
  %v2186 = vld [vmem:[%s4 + $0x5f0] sm:$0xff]
  %v2187 = vld [vmem:[%s4 + $0x5f8] sm:$0xff]
  %v2188 = vld [vmem:[%s4 + $0x600] sm:$0xff]
  %v2189 = vld [vmem:[%s4 + $0x608] sm:$0xff]
  %v2190 = vld [vmem:[%s4 + $0x610] sm:$0xff]
  %v2191 = vld [vmem:[%s4 + $0x618] sm:$0xff]
  %v2192 = vld [vmem:[%s4 + $0x620] sm:$0xff]
  %v2193 = vld [vmem:[%s4 + $0x628] sm:$0xff]
  %v2194 = vld [vmem:[%s4 + $0x630] sm:$0xff]
  %v2195 = vld [vmem:[%s4 + $0x638] sm:$0xff]
  %v2196 = vld [vmem:[%s4 + $0x640] sm:$0xff]
  %v2197 = vld [vmem:[%s4 + $0x648] sm:$0xff]
  %v2198 = vld [vmem:[%s4 + $0x650] sm:$0xff]
  %v2199 = vld [vmem:[%s4 + $0x658] sm:$0xff]
  %v2200 = vld [vmem:[%s4 + $0x660] sm:$0xff]
  %v2201 = vld [vmem:[%s4 + $0x668] sm:$0xff]
  %v2202 = vld [vmem:[%s4 + $0x670] sm:$0xff]
  %v2203 = vld [vmem:[%s4 + $0x678] sm:$0xff]
  %v2204 = vld [vmem:[%s4 + $0x680] sm:$0xff]
  %v2205 = vld [vmem:[%s4 + $0x688] sm:$0xff]
  %v2206 = vld [vmem:[%s4 + $0x690] sm:$0xff]
  %v2207 = vld [vmem:[%s4 + $0x698] sm:$0xff]
  %v2208 = vld [vmem:[%s4 + $0x6a0] sm:$0xff]
  %v2209 = vld [vmem:[%s4 + $0x6a8] sm:$0xff]
  %v2210 = vld [vmem:[%s4 + $0x6b0] sm:$0xff]
  %v2211 = vld [vmem:[%s4 + $0x6b8] sm:$0xff]
  %v2212 = vld [vmem:[%s4 + $0x6c0] sm:$0xff]
  %v2213 = vld [vmem:[%s4 + $0x6c8] sm:$0xff]
  %v2214 = vld [vmem:[%s4 + $0x6d0] sm:$0xff]
  %v2215 = vld [vmem:[%s4 + $0x6d8] sm:$0xff]
  %v2216 = vld [vmem:[%s4 + $0x6e0] sm:$0xff]
  %v2217 = vld [vmem:[%s4 + $0x6e8] sm:$0xff]
  %v2218 = vld [vmem:[%s4 + $0x6f0] sm:$0xff]
  %v2219 = vld [vmem:[%s4 + $0x6f8] sm:$0xff]
  %v2220 = vld [vmem:[%s4 + $0x700] sm:$0xff]
  %v2221 = vld [vmem:[%s4 + $0x708] sm:$0xff]
  %v2222 = vld [vmem:[%s4 + $0x710] sm:$0xff]
  %v2223 = vld [vmem:[%s4 + $0x718] sm:$0xff]
  %v2224 = vld [vmem:[%s4 + $0x720] sm:$0xff]
  %v2225 = vld [vmem:[%s4 + $0x728] sm:$0xff]
  %v2226 = vld [vmem:[%s4 + $0x730] sm:$0xff]
  %v2227 = vld [vmem:[%s4 + $0x738] sm:$0xff]
  %v2228 = vld [vmem:[%s4 + $0x740] sm:$0xff]
  %v2229 = vld [vmem:[%s4 + $0x748] sm:$0xff]
  %v2230 = vld [vmem:[%s4 + $0x750] sm:$0xff]
  %v2231 = vld [vmem:[%s4 + $0x758] sm:$0xff]
  %v2232 = vld [vmem:[%s4 + $0x760] sm:$0xff]
  %v2233 = vld [vmem:[%s4 + $0x768] sm:$0xff]
  %v2234 = vld [vmem:[%s4 + $0x770] sm:$0xff]
  %v2235 = vld [vmem:[%s4 + $0x778] sm:$0xff]
  %v2236 = vld [vmem:[%s4 + $0x780] sm:$0xff]
  %v2237 = vld [vmem:[%s4 + $0x788] sm:$0xff]
  %v2238 = vld [vmem:[%s4 + $0x790] sm:$0xff]
  %v2239 = vld [vmem:[%s4 + $0x798] sm:$0xff]
  %v2240 = vld [vmem:[%s4 + $0x7a0] sm:$0xff]
  %v2241 = vld [vmem:[%s4 + $0x7a8] sm:$0xff]
  %v2242 = vld [vmem:[%s4 + $0x7b0] sm:$0xff]
  %v2243 = vld [vmem:[%s4 + $0x7b8] sm:$0xff]
  %v2244 = vld [vmem:[%s4 + $0x7c0] sm:$0xff]
  %v2245 = vld [vmem:[%s4 + $0x7c8] sm:$0xff]
  %v2246 = vld [vmem:[%s4 + $0x7d0] sm:$0xff]
  %v2247 = vld [vmem:[%s4 + $0x7d8] sm:$0xff]
  %v2248 = vld [vmem:[%s4 + $0x7e0] sm:$0xff]
  %v2249 = vld [vmem:[%s4 + $0x7e8] sm:$0xff]
  %v2250 = vld [vmem:[%s4 + $0x7f0] sm:$0xff]
  %v2251 = vld [vmem:[%s4 + $0x7f8] sm:$0xff]
  %v2252 = vld [vmem:[%s4 + $0x800] sm:$0xff]
  %v2253 = vld [vmem:[%s4 + $0x808] sm:$0xff]
  %v2254 = vld [vmem:[%s4 + $0x810] sm:$0xff]
  %v2255 = vld [vmem:[%s4 + $0x818] sm:$0xff]
  %v2256 = vld [vmem:[%s4 + $0x820] sm:$0xff]
  %v2257 = vld [vmem:[%s4 + $0x828] sm:$0xff]
  %v2258 = vld [vmem:[%s4 + $0x830] sm:$0xff]
  %v2259 = vld [vmem:[%s4 + $0x838] sm:$0xff]
  %v2260 = vld [vmem:[%s4 + $0x840] sm:$0xff]
  %v2261 = vld [vmem:[%s4 + $0x848] sm:$0xff]
  %v2262 = vld [vmem:[%s4 + $0x850] sm:$0xff]
  %v2263 = vld [vmem:[%s4 + $0x858] sm:$0xff]
  %v2264 = vld [vmem:[%s4 + $0x860] sm:$0xff]
  %v2265 = vld [vmem:[%s4 + $0x868] sm:$0xff]
  %v2266 = vld [vmem:[%s4 + $0x870] sm:$0xff]
  %v2267 = vld [vmem:[%s4 + $0x878] sm:$0xff]
  %v2268 = vld [vmem:[%s4 + $0x880] sm:$0xff]
  %v2269 = vld [vmem:[%s4 + $0x888] sm:$0xff]
  %v2270 = vld [vmem:[%s4 + $0x890] sm:$0xff]
  %v2271 = vld [vmem:[%s4 + $0x898] sm:$0xff]
  %v2272 = vld [vmem:[%s4 + $0x8a0] sm:$0xff]
  %v2273 = vld [vmem:[%s4 + $0x8a8] sm:$0xff]
  %v2274 = vld [vmem:[%s4 + $0x8b0] sm:$0xff]
  %v2275 = vld [vmem:[%s4 + $0x8b8] sm:$0xff]
  %v2276 = vld [vmem:[%s4 + $0x8c0] sm:$0xff]
  %v2277 = vld [vmem:[%s4 + $0x8c8] sm:$0xff]
  %v2278 = vld [vmem:[%s4 + $0x8d0] sm:$0xff]
  %v2279 = vld [vmem:[%s4 + $0x8d8] sm:$0xff]
  %v2280 = vld [vmem:[%s4 + $0x8e0] sm:$0xff]
  %v2281 = vld [vmem:[%s4 + $0x8e8] sm:$0xff]
  %v2282 = vld [vmem:[%s4 + $0x8f0] sm:$0xff]
  %v2283 = vld [vmem:[%s4 + $0x8f8] sm:$0xff]
  %v2284 = vld [vmem:[%s4 + $0x900] sm:$0xff]
  %v2285 = vld [vmem:[%s4 + $0x908] sm:$0xff]
  %v2286 = vld [vmem:[%s4 + $0x910] sm:$0xff]
  %v2287 = vld [vmem:[%s4 + $0x918] sm:$0xff]
  %v2288 = vld [vmem:[%s4 + $0x920] sm:$0xff]
  %v2289 = vld [vmem:[%s4 + $0x928] sm:$0xff]
  %v2290 = vld [vmem:[%s4 + $0x930] sm:$0xff]
  %v2291 = vld [vmem:[%s4 + $0x938] sm:$0xff]
  %v2292 = vld [vmem:[%s4 + $0x940] sm:$0xff]
  %v2293 = vld [vmem:[%s4 + $0x948] sm:$0xff]
  %v2294 = vld [vmem:[%s4 + $0x950] sm:$0xff]
  %v2295 = vld [vmem:[%s4 + $0x958] sm:$0xff]
  %v2296 = vld [vmem:[%s4 + $0x960] sm:$0xff]
  %v2297 = vld [vmem:[%s4 + $0x968] sm:$0xff]
  %v2298 = vld [vmem:[%s4 + $0x970] sm:$0xff]
  %v2299 = vld [vmem:[%s4 + $0x978] sm:$0xff]
  %v2300 = vld [vmem:[%s4 + $0x980] sm:$0xff]
  %v2301 = vld [vmem:[%s4 + $0x988] sm:$0xff]
  %v2302 = vld [vmem:[%s4 + $0x990] sm:$0xff]
  %v2303 = vld [vmem:[%s4 + $0x998] sm:$0xff]
  %v2304 = vld [vmem:[%s4 + $0x9a0] sm:$0xff]
  %v2305 = vld [vmem:[%s4 + $0x9a8] sm:$0xff]
  %v2306 = vld [vmem:[%s4 + $0x9b0] sm:$0xff]
  %v2307 = vld [vmem:[%s4 + $0x9b8] sm:$0xff]
  %v2308 = vld [vmem:[%s4 + $0x9c0] sm:$0xff]
  %v2309 = vld [vmem:[%s4 + $0x9c8] sm:$0xff]
  %v2310 = vld [vmem:[%s4 + $0x9d0] sm:$0xff]
  %v2311 = vld [vmem:[%s4 + $0x9d8] sm:$0xff]
  %v2312 = vld [vmem:[%s4 + $0x9e0] sm:$0xff]
  %v2313 = vld [vmem:[%s4 + $0x9e8] sm:$0xff]
  %v2314 = vld [vmem:[%s4 + $0x9f0] sm:$0xff]
  %v2315 = vld [vmem:[%s4 + $0x9f8] sm:$0xff]
  %v2316 = vld [vmem:[%s4 + $0xa00] sm:$0xff]
  %v2317 = vld [vmem:[%s4 + $0xa08] sm:$0xff]
  %v2318 = vld [vmem:[%s4 + $0xa10] sm:$0xff]
  %v2319 = vld [vmem:[%s4 + $0xa18] sm:$0xff]
  %v2320 = vld [vmem:[%s4 + $0xa20] sm:$0xff]
  %v2321 = vld [vmem:[%s4 + $0xa28] sm:$0xff]
  %v2322 = vld [vmem:[%s4 + $0xa30] sm:$0xff]
  %v2323 = vld [vmem:[%s4 + $0xa38] sm:$0xff]
  %v2324 = vld [vmem:[%s4 + $0xa40] sm:$0xff]
  %v2325 = vld [vmem:[%s4 + $0xa48] sm:$0xff]
  %v2326 = vld [vmem:[%s4 + $0xa50] sm:$0xff]
  %v2327 = vld [vmem:[%s4 + $0xa58] sm:$0xff]
  %v2328 = vld [vmem:[%s4 + $0xa60] sm:$0xff]
  %v2329 = vld [vmem:[%s4 + $0xa68] sm:$0xff]
  %v2330 = vld [vmem:[%s4 + $0xa70] sm:$0xff]
  %v2331 = vld [vmem:[%s4 + $0xa78] sm:$0xff]
  %v2332 = vld [vmem:[%s4 + $0xa80] sm:$0xff]
  %v2333 = vld [vmem:[%s4 + $0xa88] sm:$0xff]
  %v2334 = vld [vmem:[%s4 + $0xa90] sm:$0xff]
  %v2335 = vld [vmem:[%s4 + $0xa98] sm:$0xff]
  %v2336 = vld [vmem:[%s4 + $0xaa0] sm:$0xff]
  %v2337 = vld [vmem:[%s4 + $0xaa8] sm:$0xff]
  %v2338 = vld [vmem:[%s4 + $0xab0] sm:$0xff]
  %v2339 = vld [vmem:[%s4 + $0xab8] sm:$0xff]
  %v2340 = vld [vmem:[%s4 + $0xac0] sm:$0xff]
  %v2341 = vld [vmem:[%s4 + $0xac8] sm:$0xff]
  %v2342 = vld [vmem:[%s4 + $0xad0] sm:$0xff]
  %v2343 = vld [vmem:[%s4 + $0xad8] sm:$0xff]
  %v2344 = vld [vmem:[%s4 + $0xae0] sm:$0xff]
  %v2345 = vld [vmem:[%s4 + $0xae8] sm:$0xff]
  %v2346 = vld [vmem:[%s4 + $0xaf0] sm:$0xff]
  %v2347 = vld [vmem:[%s4 + $0xaf8] sm:$0xff]
  %v2348 = vld [vmem:[%s4 + $0xb00] sm:$0xff]
  %v2349 = vld [vmem:[%s4 + $0xb08] sm:$0xff]
  %v2350 = vld [vmem:[%s4 + $0xb10] sm:$0xff]
  %v2351 = vld [vmem:[%s4 + $0xb18] sm:$0xff]
  %v2352 = vld [vmem:[%s4 + $0xb20] sm:$0xff]
  %v2353 = vld [vmem:[%s4 + $0xb28] sm:$0xff]
  %v2354 = vld [vmem:[%s4 + $0xb30] sm:$0xff]
  %v2355 = vld [vmem:[%s4 + $0xb38] sm:$0xff]
  %v2356 = vld [vmem:[%s4 + $0xb40] sm:$0xff]
  %v2357 = vld [vmem:[%s4 + $0xb48] sm:$0xff]
  %v2358 = vld [vmem:[%s4 + $0xb50] sm:$0xff]
  %v2359 = vld [vmem:[%s4 + $0xb58] sm:$0xff]
  %v2360 = vld [vmem:[%s4 + $0xb60] sm:$0xff]
  %v2361 = vld [vmem:[%s4 + $0xb68] sm:$0xff]
  %v2362 = vld [vmem:[%s4 + $0xb70] sm:$0xff]
  %v2363 = vld [vmem:[%s4 + $0xb78] sm:$0xff]
  %v2364 = vld [vmem:[%s4 + $0xb80] sm:$0xff]
  %v2365 = vld [vmem:[%s4 + $0xb88] sm:$0xff]
  %v2366 = vld [vmem:[%s4 + $0xb90] sm:$0xff]
  %v2367 = vld [vmem:[%s4 + $0xb98] sm:$0xff]
  %v2368 = vld [vmem:[%s4 + $0xba0] sm:$0xff]
  %v2369 = vld [vmem:[%s4 + $0xba8] sm:$0xff]
  %v2370 = vld [vmem:[%s4 + $0xbb0] sm:$0xff]
  %v2371 = vld [vmem:[%s4 + $0xbb8] sm:$0xff]
  %v2372 = vld [vmem:[%s4 + $0xbc0] sm:$0xff]
  %v2373 = vld [vmem:[%s4 + $0xbc8] sm:$0xff]
  %v2374 = vld [vmem:[%s4 + $0xbd0] sm:$0xff]
  %v2375 = vld [vmem:[%s4 + $0xbd8] sm:$0xff]
  %v2376 = vld [vmem:[%s4 + $0xbe0] sm:$0xff]
  %v2377 = vld [vmem:[%s4 + $0xbe8] sm:$0xff]
  %v2378 = vld [vmem:[%s4 + $0xbf0] sm:$0xff]
  %v2379 = vld [vmem:[%s4 + $0xbf8] sm:$0xff]
  %v2380 = vld [vmem:[%s4 + $0xc00] sm:$0xff]
  %v2381 = vld [vmem:[%s4 + $0xc08] sm:$0xff]
  %v2382 = vld [vmem:[%s4 + $0xc10] sm:$0xff]
  %v2383 = vld [vmem:[%s4 + $0xc18] sm:$0xff]
  %v2384 = vld [vmem:[%s4 + $0xc20] sm:$0xff]
  %v2385 = vld [vmem:[%s4 + $0xc28] sm:$0xff]
  %v2386 = vld [vmem:[%s4 + $0xc30] sm:$0xff]
  %v2387 = vld [vmem:[%s4 + $0xc38] sm:$0xff]
  %v2388 = vld [vmem:[%s4 + $0xc40] sm:$0xff]
  %v2389 = vld [vmem:[%s4 + $0xc48] sm:$0xff]
  %v2390 = vld [vmem:[%s4 + $0xc50] sm:$0xff]
  %v2391 = vld [vmem:[%s4 + $0xc58] sm:$0xff]
  %v2392 = vld [vmem:[%s4 + $0xc60] sm:$0xff]
  %v2393 = vld [vmem:[%s4 + $0xc68] sm:$0xff]
  %v2394 = vld [vmem:[%s4 + $0xc70] sm:$0xff]
  %v2395 = vld [vmem:[%s4 + $0xc78] sm:$0xff]
  %v2396 = vld [vmem:[%s4 + $0xc80] sm:$0xff]
  %v2397 = vld [vmem:[%s4 + $0xc88] sm:$0xff]
  %v2398 = vld [vmem:[%s4 + $0xc90] sm:$0xff]
  %v2399 = vld [vmem:[%s4 + $0xc98] sm:$0xff]
  %v2400 = vld [vmem:[%s4 + $0xca0] sm:$0xff]
  %v2401 = vld [vmem:[%s4 + $0xca8] sm:$0xff]
  %v2402 = vld [vmem:[%s4 + $0xcb0] sm:$0xff]
  %v2403 = vld [vmem:[%s4 + $0xcb8] sm:$0xff]
  %v2404 = vld [vmem:[%s4 + $0xcc0] sm:$0xff]
  %v2405 = vld [vmem:[%s4 + $0xcc8] sm:$0xff]
  %v2406 = vld [vmem:[%s4 + $0xcd0] sm:$0xff]
  %v2407 = vld [vmem:[%s4 + $0xcd8] sm:$0xff]
  %v2408 = vld [vmem:[%s4 + $0xce0] sm:$0xff]
  %v2409 = vld [vmem:[%s4 + $0xce8] sm:$0xff]
  %v2410 = vld [vmem:[%s4 + $0xcf0] sm:$0xff]
  %v2411 = vld [vmem:[%s4 + $0xcf8] sm:$0xff]
  %v2412 = vld [vmem:[%s4 + $0xd00] sm:$0xff]
  %v2413 = vld [vmem:[%s4 + $0xd08] sm:$0xff]
  %v2414 = vld [vmem:[%s4 + $0xd10] sm:$0xff]
  %v2415 = vld [vmem:[%s4 + $0xd18] sm:$0xff]
  %v2416 = vld [vmem:[%s4 + $0xd20] sm:$0xff]
  %v2417 = vld [vmem:[%s4 + $0xd28] sm:$0xff]
  %v2418 = vld [vmem:[%s4 + $0xd30] sm:$0xff]
  %v2419 = vld [vmem:[%s4 + $0xd38] sm:$0xff]
  %v2420 = vld [vmem:[%s4 + $0xd40] sm:$0xff]
  %v2421 = vld [vmem:[%s4 + $0xd48] sm:$0xff]
  %v2422 = vld [vmem:[%s4 + $0xd50] sm:$0xff]
  %v2423 = vld [vmem:[%s4 + $0xd58] sm:$0xff]
  %v2424 = vld [vmem:[%s4 + $0xd60] sm:$0xff]
  %v2425 = vld [vmem:[%s4 + $0xd68] sm:$0xff]
  %v2426 = vld [vmem:[%s4 + $0xd70] sm:$0xff]
  %v2427 = vld [vmem:[%s4 + $0xd78] sm:$0xff]
  %v2428 = vld [vmem:[%s4 + $0xd80] sm:$0xff]
  %v2429 = vld [vmem:[%s4 + $0xd88] sm:$0xff]
  %v2430 = vld [vmem:[%s4 + $0xd90] sm:$0xff]
  %v2431 = vld [vmem:[%s4 + $0xd98] sm:$0xff]
  %v2432 = vld [vmem:[%s4 + $0xda0] sm:$0xff]
  %v2433 = vld [vmem:[%s4 + $0xda8] sm:$0xff]
  %v2434 = vld [vmem:[%s4 + $0xdb0] sm:$0xff]
  %v2435 = vld [vmem:[%s4 + $0xdb8] sm:$0xff]
  %v2436 = vld [vmem:[%s4 + $0xdc0] sm:$0xff]
  %v2437 = vld [vmem:[%s4 + $0xdc8] sm:$0xff]
  %v2438 = vld [vmem:[%s4 + $0xdd0] sm:$0xff]
  %v2439 = vld [vmem:[%s4 + $0xdd8] sm:$0xff]
  %v2440 = vld [vmem:[%s4 + $0xde0] sm:$0xff]
  %v2441 = vld [vmem:[%s4 + $0xde8] sm:$0xff]
  %v2442 = vld [vmem:[%s4 + $0xdf0] sm:$0xff]
  %v2443 = vld [vmem:[%s4 + $0xdf8] sm:$0xff]
  %v2444 = vld [vmem:[%s4 + $0xe00] sm:$0xff]
  %v2445 = vld [vmem:[%s4 + $0xe08] sm:$0xff]
  %v2446 = vld [vmem:[%s4 + $0xe10] sm:$0xff]
  %v2447 = vld [vmem:[%s4 + $0xe18] sm:$0xff]
  %v2448 = vld [vmem:[%s4 + $0xe20] sm:$0xff]
  %v2449 = vld [vmem:[%s4 + $0xe28] sm:$0xff]
  %v2450 = vld [vmem:[%s4 + $0xe30] sm:$0xff]
  %v2451 = vld [vmem:[%s4 + $0xe38] sm:$0xff]
  %v2452 = vld [vmem:[%s4 + $0xe40] sm:$0xff]
  %v2453 = vld [vmem:[%s4 + $0xe48] sm:$0xff]
  %v2454 = vld [vmem:[%s4 + $0xe50] sm:$0xff]
  %v2455 = vld [vmem:[%s4 + $0xe58] sm:$0xff]
  %v2456 = vld [vmem:[%s4 + $0xe60] sm:$0xff]
  %v2457 = vld [vmem:[%s4 + $0xe68] sm:$0xff]
  %v2458 = vld [vmem:[%s4 + $0xe70] sm:$0xff]
  %v2459 = vld [vmem:[%s4 + $0xe78] sm:$0xff]
  %v2460 = vld [vmem:[%s4 + $0xe80] sm:$0xff]
  %v2461 = vld [vmem:[%s4 + $0xe88] sm:$0xff]
  %v2462 = vld [vmem:[%s4 + $0xe90] sm:$0xff]
  %v2463 = vld [vmem:[%s4 + $0xe98] sm:$0xff]
  %v2464 = vld [vmem:[%s4 + $0xea0] sm:$0xff]
  %v2465 = vld [vmem:[%s4 + $0xea8] sm:$0xff]
  %v2466 = vld [vmem:[%s4 + $0xeb0] sm:$0xff]
  %v2467 = vld [vmem:[%s4 + $0xeb8] sm:$0xff]
  %v2468 = vld [vmem:[%s4 + $0xec0] sm:$0xff]
  %v2469 = vld [vmem:[%s4 + $0xec8] sm:$0xff]
  %v2470 = vld [vmem:[%s4 + $0xed0] sm:$0xff]
  %v2471 = vld [vmem:[%s4 + $0xed8] sm:$0xff]
  %v2472 = vld [vmem:[%s4 + $0xee0] sm:$0xff]
  %v2473 = vld [vmem:[%s4 + $0xee8] sm:$0xff]
  %v2474 = vld [vmem:[%s4 + $0xef0] sm:$0xff]
  %v2475 = vld [vmem:[%s4 + $0xef8] sm:$0xff]
  %v2956 = vunpack.c.l.b16 %v1996
  %v2957 = vunpack.c.h.b16 %v1996
  %v2958 = vunpack.c.l.b16 %v1997
  %v2959 = vunpack.c.h.b16 %v1997
  %v2960 = vunpack.c.l.b16 %v1998
  %v2961 = vunpack.c.h.b16 %v1998
  %v2962 = vunpack.c.l.b16 %v1999
  %v2963 = vunpack.c.h.b16 %v1999
  %v2964 = vunpack.c.l.b16 %v2000
  %v2965 = vunpack.c.h.b16 %v2000
  %v2966 = vunpack.c.l.b16 %v2001
  %v2967 = vunpack.c.h.b16 %v2001
  %v2968 = vunpack.c.l.b16 %v2002
  %v2969 = vunpack.c.h.b16 %v2002
  %v2970 = vunpack.c.l.b16 %v2003
  %v2971 = vunpack.c.h.b16 %v2003
  %v2972 = vunpack.c.l.b16 %v2004
  %v2973 = vunpack.c.h.b16 %v2004
  %v2974 = vunpack.c.l.b16 %v2005
  %v2975 = vunpack.c.h.b16 %v2005
  %v2976 = vunpack.c.l.b16 %v2006
  %v2977 = vunpack.c.h.b16 %v2006
  %v2978 = vunpack.c.l.b16 %v2007
  %v2979 = vunpack.c.h.b16 %v2007
  %v2980 = vunpack.c.l.b16 %v2008
  %v2981 = vunpack.c.h.b16 %v2008
  %v2982 = vunpack.c.l.b16 %v2009
  %v2983 = vunpack.c.h.b16 %v2009
  %v2984 = vunpack.c.l.b16 %v2010
  %v2985 = vunpack.c.h.b16 %v2010
  %v2986 = vunpack.c.l.b16 %v2011
  %v2987 = vunpack.c.h.b16 %v2011
  %v2988 = vunpack.c.l.b16 %v2012
  %v2989 = vunpack.c.h.b16 %v2012
  %v2990 = vunpack.c.l.b16 %v2013
  %v2991 = vunpack.c.h.b16 %v2013
  %v2992 = vunpack.c.l.b16 %v2014
  %v2993 = vunpack.c.h.b16 %v2014
  %v2994 = vunpack.c.l.b16 %v2015
  %v2995 = vunpack.c.h.b16 %v2015
  %v2996 = vunpack.c.l.b16 %v2016
  %v2997 = vunpack.c.h.b16 %v2016
  %v2998 = vunpack.c.l.b16 %v2017
  %v2999 = vunpack.c.h.b16 %v2017
  %v3000 = vunpack.c.l.b16 %v2018
  %v3001 = vunpack.c.h.b16 %v2018
  %v3002 = vunpack.c.l.b16 %v2019
  %v3003 = vunpack.c.h.b16 %v2019
  %v3004 = vunpack.c.l.b16 %v2020
  %v3005 = vunpack.c.h.b16 %v2020
  %v3006 = vunpack.c.l.b16 %v2021
  %v3007 = vunpack.c.h.b16 %v2021
  %v3008 = vunpack.c.l.b16 %v2022
  %v3009 = vunpack.c.h.b16 %v2022
  %v3010 = vunpack.c.l.b16 %v2023
  %v3011 = vunpack.c.h.b16 %v2023
  %v3012 = vunpack.c.l.b16 %v2024
  %v3013 = vunpack.c.h.b16 %v2024
  %v3014 = vunpack.c.l.b16 %v2025
  %v3015 = vunpack.c.h.b16 %v2025
  %v3016 = vunpack.c.l.b16 %v2026
  %v3017 = vunpack.c.h.b16 %v2026
  %v3018 = vunpack.c.l.b16 %v2027
  %v3019 = vunpack.c.h.b16 %v2027
  %v3020 = vunpack.c.l.b16 %v2028
  %v3021 = vunpack.c.h.b16 %v2028
  %v3022 = vunpack.c.l.b16 %v2029
  %v3023 = vunpack.c.h.b16 %v2029
  %v3024 = vunpack.c.l.b16 %v2030
  %v3025 = vunpack.c.h.b16 %v2030
  %v3026 = vunpack.c.l.b16 %v2031
  %v3027 = vunpack.c.h.b16 %v2031
  %v3028 = vunpack.c.l.b16 %v2032
  %v3029 = vunpack.c.h.b16 %v2032
  %v3030 = vunpack.c.l.b16 %v2033
  %v3031 = vunpack.c.h.b16 %v2033
  %v3032 = vunpack.c.l.b16 %v2034
  %v3033 = vunpack.c.h.b16 %v2034
  %v3034 = vunpack.c.l.b16 %v2035
  %v3035 = vunpack.c.h.b16 %v2035
  %v3036 = vunpack.c.l.b16 %v2036
  %v3037 = vunpack.c.h.b16 %v2036
  %v3038 = vunpack.c.l.b16 %v2037
  %v3039 = vunpack.c.h.b16 %v2037
  %v3040 = vunpack.c.l.b16 %v2038
  %v3041 = vunpack.c.h.b16 %v2038
  %v3042 = vunpack.c.l.b16 %v2039
  %v3043 = vunpack.c.h.b16 %v2039
  %v3044 = vunpack.c.l.b16 %v2040
  %v3045 = vunpack.c.h.b16 %v2040
  %v3046 = vunpack.c.l.b16 %v2041
  %v3047 = vunpack.c.h.b16 %v2041
  %v3048 = vunpack.c.l.b16 %v2042
  %v3049 = vunpack.c.h.b16 %v2042
  %v3050 = vunpack.c.l.b16 %v2043
  %v3051 = vunpack.c.h.b16 %v2043
  %v3052 = vunpack.c.l.b16 %v2044
  %v3053 = vunpack.c.h.b16 %v2044
  %v3054 = vunpack.c.l.b16 %v2045
  %v3055 = vunpack.c.h.b16 %v2045
  %v3056 = vunpack.c.l.b16 %v2046
  %v3057 = vunpack.c.h.b16 %v2046
  %v3058 = vunpack.c.l.b16 %v2047
  %v3059 = vunpack.c.h.b16 %v2047
  %v3060 = vunpack.c.l.b16 %v2048
  %v3061 = vunpack.c.h.b16 %v2048
  %v3062 = vunpack.c.l.b16 %v2049
  %v3063 = vunpack.c.h.b16 %v2049
  %v3064 = vunpack.c.l.b16 %v2050
  %v3065 = vunpack.c.h.b16 %v2050
  %v3066 = vunpack.c.l.b16 %v2051
  %v3067 = vunpack.c.h.b16 %v2051
  %v3068 = vunpack.c.l.b16 %v2052
  %v3069 = vunpack.c.h.b16 %v2052
  %v3070 = vunpack.c.l.b16 %v2053
  %v3071 = vunpack.c.h.b16 %v2053
  %v3072 = vunpack.c.l.b16 %v2054
  %v3073 = vunpack.c.h.b16 %v2054
  %v3074 = vunpack.c.l.b16 %v2055
  %v3075 = vunpack.c.h.b16 %v2055
  %v3076 = vunpack.c.l.b16 %v2056
  %v3077 = vunpack.c.h.b16 %v2056
  %v3078 = vunpack.c.l.b16 %v2057
  %v3079 = vunpack.c.h.b16 %v2057
  %v3080 = vunpack.c.l.b16 %v2058
  %v3081 = vunpack.c.h.b16 %v2058
  %v3082 = vunpack.c.l.b16 %v2059
  %v3083 = vunpack.c.h.b16 %v2059
  %v3084 = vunpack.c.l.b16 %v2060
  %v3085 = vunpack.c.h.b16 %v2060
  %v3086 = vunpack.c.l.b16 %v2061
  %v3087 = vunpack.c.h.b16 %v2061
  %v3088 = vunpack.c.l.b16 %v2062
  %v3089 = vunpack.c.h.b16 %v2062
  %v3090 = vunpack.c.l.b16 %v2063
  %v3091 = vunpack.c.h.b16 %v2063
  %v3092 = vunpack.c.l.b16 %v2064
  %v3093 = vunpack.c.h.b16 %v2064
  %v3094 = vunpack.c.l.b16 %v2065
  %v3095 = vunpack.c.h.b16 %v2065
  %v3096 = vunpack.c.l.b16 %v2066
  %v3097 = vunpack.c.h.b16 %v2066
  %v3098 = vunpack.c.l.b16 %v2067
  %v3099 = vunpack.c.h.b16 %v2067
  %v3100 = vunpack.c.l.b16 %v2068
  %v3101 = vunpack.c.h.b16 %v2068
  %v3102 = vunpack.c.l.b16 %v2069
  %v3103 = vunpack.c.h.b16 %v2069
  %v3104 = vunpack.c.l.b16 %v2070
  %v3105 = vunpack.c.h.b16 %v2070
  %v3106 = vunpack.c.l.b16 %v2071
  %v3107 = vunpack.c.h.b16 %v2071
  %v3108 = vunpack.c.l.b16 %v2072
  %v3109 = vunpack.c.h.b16 %v2072
  %v3110 = vunpack.c.l.b16 %v2073
  %v3111 = vunpack.c.h.b16 %v2073
  %v3112 = vunpack.c.l.b16 %v2074
  %v3113 = vunpack.c.h.b16 %v2074
  %v3114 = vunpack.c.l.b16 %v2075
  %v3115 = vunpack.c.h.b16 %v2075
  %v3116 = vunpack.c.l.b16 %v2076
  %v3117 = vunpack.c.h.b16 %v2076
  %v3118 = vunpack.c.l.b16 %v2077
  %v3119 = vunpack.c.h.b16 %v2077
  %v3120 = vunpack.c.l.b16 %v2078
  %v3121 = vunpack.c.h.b16 %v2078
  %v3122 = vunpack.c.l.b16 %v2079
  %v3123 = vunpack.c.h.b16 %v2079
  %v3124 = vunpack.c.l.b16 %v2080
  %v3125 = vunpack.c.h.b16 %v2080
  %v3126 = vunpack.c.l.b16 %v2081
  %v3127 = vunpack.c.h.b16 %v2081
  %v3128 = vunpack.c.l.b16 %v2082
  %v3129 = vunpack.c.h.b16 %v2082
  %v3130 = vunpack.c.l.b16 %v2083
  %v3131 = vunpack.c.h.b16 %v2083
  %v3132 = vunpack.c.l.b16 %v2084
  %v3133 = vunpack.c.h.b16 %v2084
  %v3134 = vunpack.c.l.b16 %v2085
  %v3135 = vunpack.c.h.b16 %v2085
  %v3136 = vunpack.c.l.b16 %v2086
  %v3137 = vunpack.c.h.b16 %v2086
  %v3138 = vunpack.c.l.b16 %v2087
  %v3139 = vunpack.c.h.b16 %v2087
  %v3140 = vunpack.c.l.b16 %v2088
  %v3141 = vunpack.c.h.b16 %v2088
  %v3142 = vunpack.c.l.b16 %v2089
  %v3143 = vunpack.c.h.b16 %v2089
  %v3144 = vunpack.c.l.b16 %v2090
  %v3145 = vunpack.c.h.b16 %v2090
  %v3146 = vunpack.c.l.b16 %v2091
  %v3147 = vunpack.c.h.b16 %v2091
  %v3148 = vunpack.c.l.b16 %v2092
  %v3149 = vunpack.c.h.b16 %v2092
  %v3150 = vunpack.c.l.b16 %v2093
  %v3151 = vunpack.c.h.b16 %v2093
  %v3152 = vunpack.c.l.b16 %v2094
  %v3153 = vunpack.c.h.b16 %v2094
  %v3154 = vunpack.c.l.b16 %v2095
  %v3155 = vunpack.c.h.b16 %v2095
  %v3156 = vunpack.c.l.b16 %v2096
  %v3157 = vunpack.c.h.b16 %v2096
  %v3158 = vunpack.c.l.b16 %v2097
  %v3159 = vunpack.c.h.b16 %v2097
  %v3160 = vunpack.c.l.b16 %v2098
  %v3161 = vunpack.c.h.b16 %v2098
  %v3162 = vunpack.c.l.b16 %v2099
  %v3163 = vunpack.c.h.b16 %v2099
  %v3164 = vunpack.c.l.b16 %v2100
  %v3165 = vunpack.c.h.b16 %v2100
  %v3166 = vunpack.c.l.b16 %v2101
  %v3167 = vunpack.c.h.b16 %v2101
  %v3168 = vunpack.c.l.b16 %v2102
  %v3169 = vunpack.c.h.b16 %v2102
  %v3170 = vunpack.c.l.b16 %v2103
  %v3171 = vunpack.c.h.b16 %v2103
  %v3172 = vunpack.c.l.b16 %v2104
  %v3173 = vunpack.c.h.b16 %v2104
  %v3174 = vunpack.c.l.b16 %v2105
  %v3175 = vunpack.c.h.b16 %v2105
  %v3176 = vunpack.c.l.b16 %v2106
  %v3177 = vunpack.c.h.b16 %v2106
  %v3178 = vunpack.c.l.b16 %v2107
  %v3179 = vunpack.c.h.b16 %v2107
  %v3180 = vunpack.c.l.b16 %v2108
  %v3181 = vunpack.c.h.b16 %v2108
  %v3182 = vunpack.c.l.b16 %v2109
  %v3183 = vunpack.c.h.b16 %v2109
  %v3184 = vunpack.c.l.b16 %v2110
  %v3185 = vunpack.c.h.b16 %v2110
  %v3186 = vunpack.c.l.b16 %v2111
  %v3187 = vunpack.c.h.b16 %v2111
  %v3188 = vunpack.c.l.b16 %v2112
  %v3189 = vunpack.c.h.b16 %v2112
  %v3190 = vunpack.c.l.b16 %v2113
  %v3191 = vunpack.c.h.b16 %v2113
  %v3192 = vunpack.c.l.b16 %v2114
  %v3193 = vunpack.c.h.b16 %v2114
  %v3194 = vunpack.c.l.b16 %v2115
  %v3195 = vunpack.c.h.b16 %v2115
  %v3196 = vunpack.c.l.b16 %v2116
  %v3197 = vunpack.c.h.b16 %v2116
  %v3198 = vunpack.c.l.b16 %v2117
  %v3199 = vunpack.c.h.b16 %v2117
  %v3200 = vunpack.c.l.b16 %v2118
  %v3201 = vunpack.c.h.b16 %v2118
  %v3202 = vunpack.c.l.b16 %v2119
  %v3203 = vunpack.c.h.b16 %v2119
  %v3204 = vunpack.c.l.b16 %v2120
  %v3205 = vunpack.c.h.b16 %v2120
  %v3206 = vunpack.c.l.b16 %v2121
  %v3207 = vunpack.c.h.b16 %v2121
  %v3208 = vunpack.c.l.b16 %v2122
  %v3209 = vunpack.c.h.b16 %v2122
  %v3210 = vunpack.c.l.b16 %v2123
  %v3211 = vunpack.c.h.b16 %v2123
  %v3212 = vunpack.c.l.b16 %v2124
  %v3213 = vunpack.c.h.b16 %v2124
  %v3214 = vunpack.c.l.b16 %v2125
  %v3215 = vunpack.c.h.b16 %v2125
  %v3216 = vunpack.c.l.b16 %v2126
  %v3217 = vunpack.c.h.b16 %v2126
  %v3218 = vunpack.c.l.b16 %v2127
  %v3219 = vunpack.c.h.b16 %v2127
  %v3220 = vunpack.c.l.b16 %v2128
  %v3221 = vunpack.c.h.b16 %v2128
  %v3222 = vunpack.c.l.b16 %v2129
  %v3223 = vunpack.c.h.b16 %v2129
  %v3224 = vunpack.c.l.b16 %v2130
  %v3225 = vunpack.c.h.b16 %v2130
  %v3226 = vunpack.c.l.b16 %v2131
  %v3227 = vunpack.c.h.b16 %v2131
  %v3228 = vunpack.c.l.b16 %v2132
  %v3229 = vunpack.c.h.b16 %v2132
  %v3230 = vunpack.c.l.b16 %v2133
  %v3231 = vunpack.c.h.b16 %v2133
  %v3232 = vunpack.c.l.b16 %v2134
  %v3233 = vunpack.c.h.b16 %v2134
  %v3234 = vunpack.c.l.b16 %v2135
  %v3235 = vunpack.c.h.b16 %v2135
  %v3236 = vunpack.c.l.b16 %v2136
  %v3237 = vunpack.c.h.b16 %v2136
  %v3238 = vunpack.c.l.b16 %v2137
  %v3239 = vunpack.c.h.b16 %v2137
  %v3240 = vunpack.c.l.b16 %v2138
  %v3241 = vunpack.c.h.b16 %v2138
  %v3242 = vunpack.c.l.b16 %v2139
  %v3243 = vunpack.c.h.b16 %v2139
  %v3244 = vunpack.c.l.b16 %v2140
  %v3245 = vunpack.c.h.b16 %v2140
  %v3246 = vunpack.c.l.b16 %v2141
  %v3247 = vunpack.c.h.b16 %v2141
  %v3248 = vunpack.c.l.b16 %v2142
  %v3249 = vunpack.c.h.b16 %v2142
  %v3250 = vunpack.c.l.b16 %v2143
  %v3251 = vunpack.c.h.b16 %v2143
  %v3252 = vunpack.c.l.b16 %v2144
  %v3253 = vunpack.c.h.b16 %v2144
  %v3254 = vunpack.c.l.b16 %v2145
  %v3255 = vunpack.c.h.b16 %v2145
  %v3256 = vunpack.c.l.b16 %v2146
  %v3257 = vunpack.c.h.b16 %v2146
  %v3258 = vunpack.c.l.b16 %v2147
  %v3259 = vunpack.c.h.b16 %v2147
  %v3260 = vunpack.c.l.b16 %v2148
  %v3261 = vunpack.c.h.b16 %v2148
  %v3262 = vunpack.c.l.b16 %v2149
  %v3263 = vunpack.c.h.b16 %v2149
  %v3264 = vunpack.c.l.b16 %v2150
  %v3265 = vunpack.c.h.b16 %v2150
  %v3266 = vunpack.c.l.b16 %v2151
  %v3267 = vunpack.c.h.b16 %v2151
  %v3268 = vunpack.c.l.b16 %v2152
  %v3269 = vunpack.c.h.b16 %v2152
  %v3270 = vunpack.c.l.b16 %v2153
  %v3271 = vunpack.c.h.b16 %v2153
  %v3272 = vunpack.c.l.b16 %v2154
  %v3273 = vunpack.c.h.b16 %v2154
  %v3274 = vunpack.c.l.b16 %v2155
  %v3275 = vunpack.c.h.b16 %v2155
  %v3276 = vunpack.c.l.b16 %v2156
  %v3277 = vunpack.c.h.b16 %v2156
  %v3278 = vunpack.c.l.b16 %v2157
  %v3279 = vunpack.c.h.b16 %v2157
  %v3280 = vunpack.c.l.b16 %v2158
  %v3281 = vunpack.c.h.b16 %v2158
  %v3282 = vunpack.c.l.b16 %v2159
  %v3283 = vunpack.c.h.b16 %v2159
  %v3284 = vunpack.c.l.b16 %v2160
  %v3285 = vunpack.c.h.b16 %v2160
  %v3286 = vunpack.c.l.b16 %v2161
  %v3287 = vunpack.c.h.b16 %v2161
  %v3288 = vunpack.c.l.b16 %v2162
  %v3289 = vunpack.c.h.b16 %v2162
  %v3290 = vunpack.c.l.b16 %v2163
  %v3291 = vunpack.c.h.b16 %v2163
  %v3292 = vunpack.c.l.b16 %v2164
  %v3293 = vunpack.c.h.b16 %v2164
  %v3294 = vunpack.c.l.b16 %v2165
  %v3295 = vunpack.c.h.b16 %v2165
  %v3296 = vunpack.c.l.b16 %v2166
  %v3297 = vunpack.c.h.b16 %v2166
  %v3298 = vunpack.c.l.b16 %v2167
  %v3299 = vunpack.c.h.b16 %v2167
  %v3300 = vunpack.c.l.b16 %v2168
  %v3301 = vunpack.c.h.b16 %v2168
  %v3302 = vunpack.c.l.b16 %v2169
  %v3303 = vunpack.c.h.b16 %v2169
  %v3304 = vunpack.c.l.b16 %v2170
  %v3305 = vunpack.c.h.b16 %v2170
  %v3306 = vunpack.c.l.b16 %v2171
  %v3307 = vunpack.c.h.b16 %v2171
  %v3308 = vunpack.c.l.b16 %v2172
  %v3309 = vunpack.c.h.b16 %v2172
  %v3310 = vunpack.c.l.b16 %v2173
  %v3311 = vunpack.c.h.b16 %v2173
  %v3312 = vunpack.c.l.b16 %v2174
  %v3313 = vunpack.c.h.b16 %v2174
  %v3314 = vunpack.c.l.b16 %v2175
  %v3315 = vunpack.c.h.b16 %v2175
  %v3316 = vunpack.c.l.b16 %v2176
  %v3317 = vunpack.c.h.b16 %v2176
  %v3318 = vunpack.c.l.b16 %v2177
  %v3319 = vunpack.c.h.b16 %v2177
  %v3320 = vunpack.c.l.b16 %v2178
  %v3321 = vunpack.c.h.b16 %v2178
  %v3322 = vunpack.c.l.b16 %v2179
  %v3323 = vunpack.c.h.b16 %v2179
  %v3324 = vunpack.c.l.b16 %v2180
  %v3325 = vunpack.c.h.b16 %v2180
  %v3326 = vunpack.c.l.b16 %v2181
  %v3327 = vunpack.c.h.b16 %v2181
  %v3328 = vunpack.c.l.b16 %v2182
  %v3329 = vunpack.c.h.b16 %v2182
  %v3330 = vunpack.c.l.b16 %v2183
  %v3331 = vunpack.c.h.b16 %v2183
  %v3332 = vunpack.c.l.b16 %v2184
  %v3333 = vunpack.c.h.b16 %v2184
  %v3334 = vunpack.c.l.b16 %v2185
  %v3335 = vunpack.c.h.b16 %v2185
  %v3336 = vunpack.c.l.b16 %v2186
  %v3337 = vunpack.c.h.b16 %v2186
  %v3338 = vunpack.c.l.b16 %v2187
  %v3339 = vunpack.c.h.b16 %v2187
  %v3340 = vunpack.c.l.b16 %v2188
  %v3341 = vunpack.c.h.b16 %v2188
  %v3342 = vunpack.c.l.b16 %v2189
  %v3343 = vunpack.c.h.b16 %v2189
  %v3344 = vunpack.c.l.b16 %v2190
  %v3345 = vunpack.c.h.b16 %v2190
  %v3346 = vunpack.c.l.b16 %v2191
  %v3347 = vunpack.c.h.b16 %v2191
  %v3348 = vunpack.c.l.b16 %v2192
  %v3349 = vunpack.c.h.b16 %v2192
  %v3350 = vunpack.c.l.b16 %v2193
  %v3351 = vunpack.c.h.b16 %v2193
  %v3352 = vunpack.c.l.b16 %v2194
  %v3353 = vunpack.c.h.b16 %v2194
  %v3354 = vunpack.c.l.b16 %v2195
  %v3355 = vunpack.c.h.b16 %v2195
  %v3356 = vunpack.c.l.b16 %v2196
  %v3357 = vunpack.c.h.b16 %v2196
  %v3358 = vunpack.c.l.b16 %v2197
  %v3359 = vunpack.c.h.b16 %v2197
  %v3360 = vunpack.c.l.b16 %v2198
  %v3361 = vunpack.c.h.b16 %v2198
  %v3362 = vunpack.c.l.b16 %v2199
  %v3363 = vunpack.c.h.b16 %v2199
  %v3364 = vunpack.c.l.b16 %v2200
  %v3365 = vunpack.c.h.b16 %v2200
  %v3366 = vunpack.c.l.b16 %v2201
  %v3367 = vunpack.c.h.b16 %v2201
  %v3368 = vunpack.c.l.b16 %v2202
  %v3369 = vunpack.c.h.b16 %v2202
  %v3370 = vunpack.c.l.b16 %v2203
  %v3371 = vunpack.c.h.b16 %v2203
  %v3372 = vunpack.c.l.b16 %v2204
  %v3373 = vunpack.c.h.b16 %v2204
  %v3374 = vunpack.c.l.b16 %v2205
  %v3375 = vunpack.c.h.b16 %v2205
  %v3376 = vunpack.c.l.b16 %v2206
  %v3377 = vunpack.c.h.b16 %v2206
  %v3378 = vunpack.c.l.b16 %v2207
  %v3379 = vunpack.c.h.b16 %v2207
  %v3380 = vunpack.c.l.b16 %v2208
  %v3381 = vunpack.c.h.b16 %v2208
  %v3382 = vunpack.c.l.b16 %v2209
  %v3383 = vunpack.c.h.b16 %v2209
  %v3384 = vunpack.c.l.b16 %v2210
  %v3385 = vunpack.c.h.b16 %v2210
  %v3386 = vunpack.c.l.b16 %v2211
  %v3387 = vunpack.c.h.b16 %v2211
  %v3388 = vunpack.c.l.b16 %v2212
  %v3389 = vunpack.c.h.b16 %v2212
  %v3390 = vunpack.c.l.b16 %v2213
  %v3391 = vunpack.c.h.b16 %v2213
  %v3392 = vunpack.c.l.b16 %v2214
  %v3393 = vunpack.c.h.b16 %v2214
  %v3394 = vunpack.c.l.b16 %v2215
  %v3395 = vunpack.c.h.b16 %v2215
  %v3396 = vunpack.c.l.b16 %v2216
  %v3397 = vunpack.c.h.b16 %v2216
  %v3398 = vunpack.c.l.b16 %v2217
  %v3399 = vunpack.c.h.b16 %v2217
  %v3400 = vunpack.c.l.b16 %v2218
  %v3401 = vunpack.c.h.b16 %v2218
  %v3402 = vunpack.c.l.b16 %v2219
  %v3403 = vunpack.c.h.b16 %v2219
  %v3404 = vunpack.c.l.b16 %v2220
  %v3405 = vunpack.c.h.b16 %v2220
  %v3406 = vunpack.c.l.b16 %v2221
  %v3407 = vunpack.c.h.b16 %v2221
  %v3408 = vunpack.c.l.b16 %v2222
  %v3409 = vunpack.c.h.b16 %v2222
  %v3410 = vunpack.c.l.b16 %v2223
  %v3411 = vunpack.c.h.b16 %v2223
  %v3412 = vunpack.c.l.b16 %v2224
  %v3413 = vunpack.c.h.b16 %v2224
  %v3414 = vunpack.c.l.b16 %v2225
  %v3415 = vunpack.c.h.b16 %v2225
  %v3416 = vunpack.c.l.b16 %v2226
  %v3417 = vunpack.c.h.b16 %v2226
  %v3418 = vunpack.c.l.b16 %v2227
  %v3419 = vunpack.c.h.b16 %v2227
  %v3420 = vunpack.c.l.b16 %v2228
  %v3421 = vunpack.c.h.b16 %v2228
  %v3422 = vunpack.c.l.b16 %v2229
  %v3423 = vunpack.c.h.b16 %v2229
  %v3424 = vunpack.c.l.b16 %v2230
  %v3425 = vunpack.c.h.b16 %v2230
  %v3426 = vunpack.c.l.b16 %v2231
  %v3427 = vunpack.c.h.b16 %v2231
  %v3428 = vunpack.c.l.b16 %v2232
  %v3429 = vunpack.c.h.b16 %v2232
  %v3430 = vunpack.c.l.b16 %v2233
  %v3431 = vunpack.c.h.b16 %v2233
  %v3432 = vunpack.c.l.b16 %v2234
  %v3433 = vunpack.c.h.b16 %v2234
  %v3434 = vunpack.c.l.b16 %v2235
  %v3435 = vunpack.c.h.b16 %v2235
  %v3436 = vunpack.c.l.b16 %v2236
  %v3437 = vunpack.c.h.b16 %v2236
  %v3438 = vunpack.c.l.b16 %v2237
  %v3439 = vunpack.c.h.b16 %v2237
  %v3440 = vunpack.c.l.b16 %v2238
  %v3441 = vunpack.c.h.b16 %v2238
  %v3442 = vunpack.c.l.b16 %v2239
  %v3443 = vunpack.c.h.b16 %v2239
  %v3444 = vunpack.c.l.b16 %v2240
  %v3445 = vunpack.c.h.b16 %v2240
  %v3446 = vunpack.c.l.b16 %v2241
  %v3447 = vunpack.c.h.b16 %v2241
  %v3448 = vunpack.c.l.b16 %v2242
  %v3449 = vunpack.c.h.b16 %v2242
  %v3450 = vunpack.c.l.b16 %v2243
  %v3451 = vunpack.c.h.b16 %v2243
  %v3452 = vunpack.c.l.b16 %v2244
  %v3453 = vunpack.c.h.b16 %v2244
  %v3454 = vunpack.c.l.b16 %v2245
  %v3455 = vunpack.c.h.b16 %v2245
  %v3456 = vunpack.c.l.b16 %v2246
  %v3457 = vunpack.c.h.b16 %v2246
  %v3458 = vunpack.c.l.b16 %v2247
  %v3459 = vunpack.c.h.b16 %v2247
  %v3460 = vunpack.c.l.b16 %v2248
  %v3461 = vunpack.c.h.b16 %v2248
  %v3462 = vunpack.c.l.b16 %v2249
  %v3463 = vunpack.c.h.b16 %v2249
  %v3464 = vunpack.c.l.b16 %v2250
  %v3465 = vunpack.c.h.b16 %v2250
  %v3466 = vunpack.c.l.b16 %v2251
  %v3467 = vunpack.c.h.b16 %v2251
  %v3468 = vunpack.c.l.b16 %v2252
  %v3469 = vunpack.c.h.b16 %v2252
  %v3470 = vunpack.c.l.b16 %v2253
  %v3471 = vunpack.c.h.b16 %v2253
  %v3472 = vunpack.c.l.b16 %v2254
  %v3473 = vunpack.c.h.b16 %v2254
  %v3474 = vunpack.c.l.b16 %v2255
  %v3475 = vunpack.c.h.b16 %v2255
  %v3476 = vunpack.c.l.b16 %v2256
  %v3477 = vunpack.c.h.b16 %v2256
  %v3478 = vunpack.c.l.b16 %v2257
  %v3479 = vunpack.c.h.b16 %v2257
  %v3480 = vunpack.c.l.b16 %v2258
  %v3481 = vunpack.c.h.b16 %v2258
  %v3482 = vunpack.c.l.b16 %v2259
  %v3483 = vunpack.c.h.b16 %v2259
  %v3484 = vunpack.c.l.b16 %v2260
  %v3485 = vunpack.c.h.b16 %v2260
  %v3486 = vunpack.c.l.b16 %v2261
  %v3487 = vunpack.c.h.b16 %v2261
  %v3488 = vunpack.c.l.b16 %v2262
  %v3489 = vunpack.c.h.b16 %v2262
  %v3490 = vunpack.c.l.b16 %v2263
  %v3491 = vunpack.c.h.b16 %v2263
  %v3492 = vunpack.c.l.b16 %v2264
  %v3493 = vunpack.c.h.b16 %v2264
  %v3494 = vunpack.c.l.b16 %v2265
  %v3495 = vunpack.c.h.b16 %v2265
  %v3496 = vunpack.c.l.b16 %v2266
  %v3497 = vunpack.c.h.b16 %v2266
  %v3498 = vunpack.c.l.b16 %v2267
  %v3499 = vunpack.c.h.b16 %v2267
  %v3500 = vunpack.c.l.b16 %v2268
  %v3501 = vunpack.c.h.b16 %v2268
  %v3502 = vunpack.c.l.b16 %v2269
  %v3503 = vunpack.c.h.b16 %v2269
  %v3504 = vunpack.c.l.b16 %v2270
  %v3505 = vunpack.c.h.b16 %v2270
  %v3506 = vunpack.c.l.b16 %v2271
  %v3507 = vunpack.c.h.b16 %v2271
  %v3508 = vunpack.c.l.b16 %v2272
  %v3509 = vunpack.c.h.b16 %v2272
  %v3510 = vunpack.c.l.b16 %v2273
  %v3511 = vunpack.c.h.b16 %v2273
  %v3512 = vunpack.c.l.b16 %v2274
  %v3513 = vunpack.c.h.b16 %v2274
  %v3514 = vunpack.c.l.b16 %v2275
  %v3515 = vunpack.c.h.b16 %v2275
  %v3516 = vunpack.c.l.b16 %v2276
  %v3517 = vunpack.c.h.b16 %v2276
  %v3518 = vunpack.c.l.b16 %v2277
  %v3519 = vunpack.c.h.b16 %v2277
  %v3520 = vunpack.c.l.b16 %v2278
  %v3521 = vunpack.c.h.b16 %v2278
  %v3522 = vunpack.c.l.b16 %v2279
  %v3523 = vunpack.c.h.b16 %v2279
  %v3524 = vunpack.c.l.b16 %v2280
  %v3525 = vunpack.c.h.b16 %v2280
  %v3526 = vunpack.c.l.b16 %v2281
  %v3527 = vunpack.c.h.b16 %v2281
  %v3528 = vunpack.c.l.b16 %v2282
  %v3529 = vunpack.c.h.b16 %v2282
  %v3530 = vunpack.c.l.b16 %v2283
  %v3531 = vunpack.c.h.b16 %v2283
  %v3532 = vunpack.c.l.b16 %v2284
  %v3533 = vunpack.c.h.b16 %v2284
  %v3534 = vunpack.c.l.b16 %v2285
  %v3535 = vunpack.c.h.b16 %v2285
  %v3536 = vunpack.c.l.b16 %v2286
  %v3537 = vunpack.c.h.b16 %v2286
  %v3538 = vunpack.c.l.b16 %v2287
  %v3539 = vunpack.c.h.b16 %v2287
  %v3540 = vunpack.c.l.b16 %v2288
  %v3541 = vunpack.c.h.b16 %v2288
  %v3542 = vunpack.c.l.b16 %v2289
  %v3543 = vunpack.c.h.b16 %v2289
  %v3544 = vunpack.c.l.b16 %v2290
  %v3545 = vunpack.c.h.b16 %v2290
  %v3546 = vunpack.c.l.b16 %v2291
  %v3547 = vunpack.c.h.b16 %v2291
  %v3548 = vunpack.c.l.b16 %v2292
  %v3549 = vunpack.c.h.b16 %v2292
  %v3550 = vunpack.c.l.b16 %v2293
  %v3551 = vunpack.c.h.b16 %v2293
  %v3552 = vunpack.c.l.b16 %v2294
  %v3553 = vunpack.c.h.b16 %v2294
  %v3554 = vunpack.c.l.b16 %v2295
  %v3555 = vunpack.c.h.b16 %v2295
  %v3556 = vunpack.c.l.b16 %v2296
  %v3557 = vunpack.c.h.b16 %v2296
  %v3558 = vunpack.c.l.b16 %v2297
  %v3559 = vunpack.c.h.b16 %v2297
  %v3560 = vunpack.c.l.b16 %v2298
  %v3561 = vunpack.c.h.b16 %v2298
  %v3562 = vunpack.c.l.b16 %v2299
  %v3563 = vunpack.c.h.b16 %v2299
  %v3564 = vunpack.c.l.b16 %v2300
  %v3565 = vunpack.c.h.b16 %v2300
  %v3566 = vunpack.c.l.b16 %v2301
  %v3567 = vunpack.c.h.b16 %v2301
  %v3568 = vunpack.c.l.b16 %v2302
  %v3569 = vunpack.c.h.b16 %v2302
  %v3570 = vunpack.c.l.b16 %v2303
  %v3571 = vunpack.c.h.b16 %v2303
  %v3572 = vunpack.c.l.b16 %v2304
  %v3573 = vunpack.c.h.b16 %v2304
  %v3574 = vunpack.c.l.b16 %v2305
  %v3575 = vunpack.c.h.b16 %v2305
  %v3576 = vunpack.c.l.b16 %v2306
  %v3577 = vunpack.c.h.b16 %v2306
  %v3578 = vunpack.c.l.b16 %v2307
  %v3579 = vunpack.c.h.b16 %v2307
  %v3580 = vunpack.c.l.b16 %v2308
  %v3581 = vunpack.c.h.b16 %v2308
  %v3582 = vunpack.c.l.b16 %v2309
  %v3583 = vunpack.c.h.b16 %v2309
  %v3584 = vunpack.c.l.b16 %v2310
  %v3585 = vunpack.c.h.b16 %v2310
  %v3586 = vunpack.c.l.b16 %v2311
  %v3587 = vunpack.c.h.b16 %v2311
  %v3588 = vunpack.c.l.b16 %v2312
  %v3589 = vunpack.c.h.b16 %v2312
  %v3590 = vunpack.c.l.b16 %v2313
  %v3591 = vunpack.c.h.b16 %v2313
  %v3592 = vunpack.c.l.b16 %v2314
  %v3593 = vunpack.c.h.b16 %v2314
  %v3594 = vunpack.c.l.b16 %v2315
  %v3595 = vunpack.c.h.b16 %v2315
  %v3596 = vunpack.c.l.b16 %v2316
  %v3597 = vunpack.c.h.b16 %v2316
  %v3598 = vunpack.c.l.b16 %v2317
  %v3599 = vunpack.c.h.b16 %v2317
  %v3600 = vunpack.c.l.b16 %v2318
  %v3601 = vunpack.c.h.b16 %v2318
  %v3602 = vunpack.c.l.b16 %v2319
  %v3603 = vunpack.c.h.b16 %v2319
  %v3604 = vunpack.c.l.b16 %v2320
  %v3605 = vunpack.c.h.b16 %v2320
  %v3606 = vunpack.c.l.b16 %v2321
  %v3607 = vunpack.c.h.b16 %v2321
  %v3608 = vunpack.c.l.b16 %v2322
  %v3609 = vunpack.c.h.b16 %v2322
  %v3610 = vunpack.c.l.b16 %v2323
  %v3611 = vunpack.c.h.b16 %v2323
  %v3612 = vunpack.c.l.b16 %v2324
  %v3613 = vunpack.c.h.b16 %v2324
  %v3614 = vunpack.c.l.b16 %v2325
  %v3615 = vunpack.c.h.b16 %v2325
  %v3616 = vunpack.c.l.b16 %v2326
  %v3617 = vunpack.c.h.b16 %v2326
  %v3618 = vunpack.c.l.b16 %v2327
  %v3619 = vunpack.c.h.b16 %v2327
  %v3620 = vunpack.c.l.b16 %v2328
  %v3621 = vunpack.c.h.b16 %v2328
  %v3622 = vunpack.c.l.b16 %v2329
  %v3623 = vunpack.c.h.b16 %v2329
  %v3624 = vunpack.c.l.b16 %v2330
  %v3625 = vunpack.c.h.b16 %v2330
  %v3626 = vunpack.c.l.b16 %v2331
  %v3627 = vunpack.c.h.b16 %v2331
  %v3628 = vunpack.c.l.b16 %v2332
  %v3629 = vunpack.c.h.b16 %v2332
  %v3630 = vunpack.c.l.b16 %v2333
  %v3631 = vunpack.c.h.b16 %v2333
  %v3632 = vunpack.c.l.b16 %v2334
  %v3633 = vunpack.c.h.b16 %v2334
  %v3634 = vunpack.c.l.b16 %v2335
  %v3635 = vunpack.c.h.b16 %v2335
  %v3636 = vunpack.c.l.b16 %v2336
  %v3637 = vunpack.c.h.b16 %v2336
  %v3638 = vunpack.c.l.b16 %v2337
  %v3639 = vunpack.c.h.b16 %v2337
  %v3640 = vunpack.c.l.b16 %v2338
  %v3641 = vunpack.c.h.b16 %v2338
  %v3642 = vunpack.c.l.b16 %v2339
  %v3643 = vunpack.c.h.b16 %v2339
  %v3644 = vunpack.c.l.b16 %v2340
  %v3645 = vunpack.c.h.b16 %v2340
  %v3646 = vunpack.c.l.b16 %v2341
  %v3647 = vunpack.c.h.b16 %v2341
  %v3648 = vunpack.c.l.b16 %v2342
  %v3649 = vunpack.c.h.b16 %v2342
  %v3650 = vunpack.c.l.b16 %v2343
  %v3651 = vunpack.c.h.b16 %v2343
  %v3652 = vunpack.c.l.b16 %v2344
  %v3653 = vunpack.c.h.b16 %v2344
  %v3654 = vunpack.c.l.b16 %v2345
  %v3655 = vunpack.c.h.b16 %v2345
  %v3656 = vunpack.c.l.b16 %v2346
  %v3657 = vunpack.c.h.b16 %v2346
  %v3658 = vunpack.c.l.b16 %v2347
  %v3659 = vunpack.c.h.b16 %v2347
  %v3660 = vunpack.c.l.b16 %v2348
  %v3661 = vunpack.c.h.b16 %v2348
  %v3662 = vunpack.c.l.b16 %v2349
  %v3663 = vunpack.c.h.b16 %v2349
  %v3664 = vunpack.c.l.b16 %v2350
  %v3665 = vunpack.c.h.b16 %v2350
  %v3666 = vunpack.c.l.b16 %v2351
  %v3667 = vunpack.c.h.b16 %v2351
  %v3668 = vunpack.c.l.b16 %v2352
  %v3669 = vunpack.c.h.b16 %v2352
  %v3670 = vunpack.c.l.b16 %v2353
  %v3671 = vunpack.c.h.b16 %v2353
  %v3672 = vunpack.c.l.b16 %v2354
  %v3673 = vunpack.c.h.b16 %v2354
  %v3674 = vunpack.c.l.b16 %v2355
  %v3675 = vunpack.c.h.b16 %v2355
  %v3676 = vunpack.c.l.b16 %v2356
  %v3677 = vunpack.c.h.b16 %v2356
  %v3678 = vunpack.c.l.b16 %v2357
  %v3679 = vunpack.c.h.b16 %v2357
  %v3680 = vunpack.c.l.b16 %v2358
  %v3681 = vunpack.c.h.b16 %v2358
  %v3682 = vunpack.c.l.b16 %v2359
  %v3683 = vunpack.c.h.b16 %v2359
  %v3684 = vunpack.c.l.b16 %v2360
  %v3685 = vunpack.c.h.b16 %v2360
  %v3686 = vunpack.c.l.b16 %v2361
  %v3687 = vunpack.c.h.b16 %v2361
  %v3688 = vunpack.c.l.b16 %v2362
  %v3689 = vunpack.c.h.b16 %v2362
  %v3690 = vunpack.c.l.b16 %v2363
  %v3691 = vunpack.c.h.b16 %v2363
  %v3692 = vunpack.c.l.b16 %v2364
  %v3693 = vunpack.c.h.b16 %v2364
  %v3694 = vunpack.c.l.b16 %v2365
  %v3695 = vunpack.c.h.b16 %v2365
  %v3696 = vunpack.c.l.b16 %v2366
  %v3697 = vunpack.c.h.b16 %v2366
  %v3698 = vunpack.c.l.b16 %v2367
  %v3699 = vunpack.c.h.b16 %v2367
  %v3700 = vunpack.c.l.b16 %v2368
  %v3701 = vunpack.c.h.b16 %v2368
  %v3702 = vunpack.c.l.b16 %v2369
  %v3703 = vunpack.c.h.b16 %v2369
  %v3704 = vunpack.c.l.b16 %v2370
  %v3705 = vunpack.c.h.b16 %v2370
  %v3706 = vunpack.c.l.b16 %v2371
  %v3707 = vunpack.c.h.b16 %v2371
  %v3708 = vunpack.c.l.b16 %v2372
  %v3709 = vunpack.c.h.b16 %v2372
  %v3710 = vunpack.c.l.b16 %v2373
  %v3711 = vunpack.c.h.b16 %v2373
  %v3712 = vunpack.c.l.b16 %v2374
  %v3713 = vunpack.c.h.b16 %v2374
  %v3714 = vunpack.c.l.b16 %v2375
  %v3715 = vunpack.c.h.b16 %v2375
  %v3716 = vunpack.c.l.b16 %v2376
  %v3717 = vunpack.c.h.b16 %v2376
  %v3718 = vunpack.c.l.b16 %v2377
  %v3719 = vunpack.c.h.b16 %v2377
  %v3720 = vunpack.c.l.b16 %v2378
  %v3721 = vunpack.c.h.b16 %v2378
  %v3722 = vunpack.c.l.b16 %v2379
  %v3723 = vunpack.c.h.b16 %v2379
  %v3724 = vunpack.c.l.b16 %v2380
  %v3725 = vunpack.c.h.b16 %v2380
  %v3726 = vunpack.c.l.b16 %v2381
  %v3727 = vunpack.c.h.b16 %v2381
  %v3728 = vunpack.c.l.b16 %v2382
  %v3729 = vunpack.c.h.b16 %v2382
  %v3730 = vunpack.c.l.b16 %v2383
  %v3731 = vunpack.c.h.b16 %v2383
  %v3732 = vunpack.c.l.b16 %v2384
  %v3733 = vunpack.c.h.b16 %v2384
  %v3734 = vunpack.c.l.b16 %v2385
  %v3735 = vunpack.c.h.b16 %v2385
  %v3736 = vunpack.c.l.b16 %v2386
  %v3737 = vunpack.c.h.b16 %v2386
  %v3738 = vunpack.c.l.b16 %v2387
  %v3739 = vunpack.c.h.b16 %v2387
  %v3740 = vunpack.c.l.b16 %v2388
  %v3741 = vunpack.c.h.b16 %v2388
  %v3742 = vunpack.c.l.b16 %v2389
  %v3743 = vunpack.c.h.b16 %v2389
  %v3744 = vunpack.c.l.b16 %v2390
  %v3745 = vunpack.c.h.b16 %v2390
  %v3746 = vunpack.c.l.b16 %v2391
  %v3747 = vunpack.c.h.b16 %v2391
  %v3748 = vunpack.c.l.b16 %v2392
  %v3749 = vunpack.c.h.b16 %v2392
  %v3750 = vunpack.c.l.b16 %v2393
  %v3751 = vunpack.c.h.b16 %v2393
  %v3752 = vunpack.c.l.b16 %v2394
  %v3753 = vunpack.c.h.b16 %v2394
  %v3754 = vunpack.c.l.b16 %v2395
  %v3755 = vunpack.c.h.b16 %v2395
  %v3756 = vunpack.c.l.b16 %v2396
  %v3757 = vunpack.c.h.b16 %v2396
  %v3758 = vunpack.c.l.b16 %v2397
  %v3759 = vunpack.c.h.b16 %v2397
  %v3760 = vunpack.c.l.b16 %v2398
  %v3761 = vunpack.c.h.b16 %v2398
  %v3762 = vunpack.c.l.b16 %v2399
  %v3763 = vunpack.c.h.b16 %v2399
  %v3764 = vunpack.c.l.b16 %v2400
  %v3765 = vunpack.c.h.b16 %v2400
  %v3766 = vunpack.c.l.b16 %v2401
  %v3767 = vunpack.c.h.b16 %v2401
  %v3768 = vunpack.c.l.b16 %v2402
  %v3769 = vunpack.c.h.b16 %v2402
  %v3770 = vunpack.c.l.b16 %v2403
  %v3771 = vunpack.c.h.b16 %v2403
  %v3772 = vunpack.c.l.b16 %v2404
  %v3773 = vunpack.c.h.b16 %v2404
  %v3774 = vunpack.c.l.b16 %v2405
  %v3775 = vunpack.c.h.b16 %v2405
  %v3776 = vunpack.c.l.b16 %v2406
  %v3777 = vunpack.c.h.b16 %v2406
  %v3778 = vunpack.c.l.b16 %v2407
  %v3779 = vunpack.c.h.b16 %v2407
  %v3780 = vunpack.c.l.b16 %v2408
  %v3781 = vunpack.c.h.b16 %v2408
  %v3782 = vunpack.c.l.b16 %v2409
  %v3783 = vunpack.c.h.b16 %v2409
  %v3784 = vunpack.c.l.b16 %v2410
  %v3785 = vunpack.c.h.b16 %v2410
  %v3786 = vunpack.c.l.b16 %v2411
  %v3787 = vunpack.c.h.b16 %v2411
  %v3788 = vunpack.c.l.b16 %v2412
  %v3789 = vunpack.c.h.b16 %v2412
  %v3790 = vunpack.c.l.b16 %v2413
  %v3791 = vunpack.c.h.b16 %v2413
  %v3792 = vunpack.c.l.b16 %v2414
  %v3793 = vunpack.c.h.b16 %v2414
  %v3794 = vunpack.c.l.b16 %v2415
  %v3795 = vunpack.c.h.b16 %v2415
  %v3796 = vunpack.c.l.b16 %v2416
  %v3797 = vunpack.c.h.b16 %v2416
  %v3798 = vunpack.c.l.b16 %v2417
  %v3799 = vunpack.c.h.b16 %v2417
  %v3800 = vunpack.c.l.b16 %v2418
  %v3801 = vunpack.c.h.b16 %v2418
  %v3802 = vunpack.c.l.b16 %v2419
  %v3803 = vunpack.c.h.b16 %v2419
  %v3804 = vunpack.c.l.b16 %v2420
  %v3805 = vunpack.c.h.b16 %v2420
  %v3806 = vunpack.c.l.b16 %v2421
  %v3807 = vunpack.c.h.b16 %v2421
  %v3808 = vunpack.c.l.b16 %v2422
  %v3809 = vunpack.c.h.b16 %v2422
  %v3810 = vunpack.c.l.b16 %v2423
  %v3811 = vunpack.c.h.b16 %v2423
  %v3812 = vunpack.c.l.b16 %v2424
  %v3813 = vunpack.c.h.b16 %v2424
  %v3814 = vunpack.c.l.b16 %v2425
  %v3815 = vunpack.c.h.b16 %v2425
  %v3816 = vunpack.c.l.b16 %v2426
  %v3817 = vunpack.c.h.b16 %v2426
  %v3818 = vunpack.c.l.b16 %v2427
  %v3819 = vunpack.c.h.b16 %v2427
  %v3820 = vunpack.c.l.b16 %v2428
  %v3821 = vunpack.c.h.b16 %v2428
  %v3822 = vunpack.c.l.b16 %v2429
  %v3823 = vunpack.c.h.b16 %v2429
  %v3824 = vunpack.c.l.b16 %v2430
  %v3825 = vunpack.c.h.b16 %v2430
  %v3826 = vunpack.c.l.b16 %v2431
  %v3827 = vunpack.c.h.b16 %v2431
  %v3828 = vunpack.c.l.b16 %v2432
  %v3829 = vunpack.c.h.b16 %v2432
  %v3830 = vunpack.c.l.b16 %v2433
  %v3831 = vunpack.c.h.b16 %v2433
  %v3832 = vunpack.c.l.b16 %v2434
  %v3833 = vunpack.c.h.b16 %v2434
  %v3834 = vunpack.c.l.b16 %v2435
  %v3835 = vunpack.c.h.b16 %v2435
  %v3836 = vunpack.c.l.b16 %v2436
  %v3837 = vunpack.c.h.b16 %v2436
  %v3838 = vunpack.c.l.b16 %v2437
  %v3839 = vunpack.c.h.b16 %v2437
  %v3840 = vunpack.c.l.b16 %v2438
  %v3841 = vunpack.c.h.b16 %v2438
  %v3842 = vunpack.c.l.b16 %v2439
  %v3843 = vunpack.c.h.b16 %v2439
  %v3844 = vunpack.c.l.b16 %v2440
  %v3845 = vunpack.c.h.b16 %v2440
  %v3846 = vunpack.c.l.b16 %v2441
  %v3847 = vunpack.c.h.b16 %v2441
  %v3848 = vunpack.c.l.b16 %v2442
  %v3849 = vunpack.c.h.b16 %v2442
  %v3850 = vunpack.c.l.b16 %v2443
  %v3851 = vunpack.c.h.b16 %v2443
  %v3852 = vunpack.c.l.b16 %v2444
  %v3853 = vunpack.c.h.b16 %v2444
  %v3854 = vunpack.c.l.b16 %v2445
  %v3855 = vunpack.c.h.b16 %v2445
  %v3856 = vunpack.c.l.b16 %v2446
  %v3857 = vunpack.c.h.b16 %v2446
  %v3858 = vunpack.c.l.b16 %v2447
  %v3859 = vunpack.c.h.b16 %v2447
  %v3860 = vunpack.c.l.b16 %v2448
  %v3861 = vunpack.c.h.b16 %v2448
  %v3862 = vunpack.c.l.b16 %v2449
  %v3863 = vunpack.c.h.b16 %v2449
  %v3864 = vunpack.c.l.b16 %v2450
  %v3865 = vunpack.c.h.b16 %v2450
  %v3866 = vunpack.c.l.b16 %v2451
  %v3867 = vunpack.c.h.b16 %v2451
  %v3868 = vunpack.c.l.b16 %v2452
  %v3869 = vunpack.c.h.b16 %v2452
  %v3870 = vunpack.c.l.b16 %v2453
  %v3871 = vunpack.c.h.b16 %v2453
  %v3872 = vunpack.c.l.b16 %v2454
  %v3873 = vunpack.c.h.b16 %v2454
  %v3874 = vunpack.c.l.b16 %v2455
  %v3875 = vunpack.c.h.b16 %v2455
  %v3876 = vunpack.c.l.b16 %v2456
  %v3877 = vunpack.c.h.b16 %v2456
  %v3878 = vunpack.c.l.b16 %v2457
  %v3879 = vunpack.c.h.b16 %v2457
  %v3880 = vunpack.c.l.b16 %v2458
  %v3881 = vunpack.c.h.b16 %v2458
  %v3882 = vunpack.c.l.b16 %v2459
  %v3883 = vunpack.c.h.b16 %v2459
  %v3884 = vunpack.c.l.b16 %v2460
  %v3885 = vunpack.c.h.b16 %v2460
  %v3886 = vunpack.c.l.b16 %v2461
  %v3887 = vunpack.c.h.b16 %v2461
  %v3888 = vunpack.c.l.b16 %v2462
  %v3889 = vunpack.c.h.b16 %v2462
  %v3890 = vunpack.c.l.b16 %v2463
  %v3891 = vunpack.c.h.b16 %v2463
  %v3892 = vunpack.c.l.b16 %v2464
  %v3893 = vunpack.c.h.b16 %v2464
  %v3894 = vunpack.c.l.b16 %v2465
  %v3895 = vunpack.c.h.b16 %v2465
  %v3896 = vunpack.c.l.b16 %v2466
  %v3897 = vunpack.c.h.b16 %v2466
  %v3898 = vunpack.c.l.b16 %v2467
  %v3899 = vunpack.c.h.b16 %v2467
  %v3900 = vunpack.c.l.b16 %v2468
  %v3901 = vunpack.c.h.b16 %v2468
  %v3902 = vunpack.c.l.b16 %v2469
  %v3903 = vunpack.c.h.b16 %v2469
  %v3904 = vunpack.c.l.b16 %v2470
  %v3905 = vunpack.c.h.b16 %v2470
  %v3906 = vunpack.c.l.b16 %v2471
  %v3907 = vunpack.c.h.b16 %v2471
  %v3908 = vunpack.c.l.b16 %v2472
  %v3909 = vunpack.c.h.b16 %v2472
  %v3910 = vunpack.c.l.b16 %v2473
  %v3911 = vunpack.c.h.b16 %v2473
  %v3912 = vunpack.c.l.b16 %v2474
  %v3913 = vunpack.c.h.b16 %v2474
  %v3914 = vunpack.c.l.b16 %v2475
  %v3915 = vunpack.c.h.b16 %v2475
  %v3916 = vpack.c.b16 %v2960, %v2956
  %v3917 = vpack.c.b16 %v2961, %v2957
  %v3918 = vpack.c.b16 %v2962, %v2958
  %v3919 = vpack.c.b16 %v2963, %v2959
  %v3920 = vpack.c.b16 %v2968, %v2964
  %v3921 = vpack.c.b16 %v2969, %v2965
  %v3922 = vpack.c.b16 %v2970, %v2966
  %v3923 = vpack.c.b16 %v2971, %v2967
  %v3924 = vpack.c.b16 %v2976, %v2972
  %v3925 = vpack.c.b16 %v2977, %v2973
  %v3926 = vpack.c.b16 %v2978, %v2974
  %v3927 = vpack.c.b16 %v2979, %v2975
  %v3928 = vpack.c.b16 %v2984, %v2980
  %v3929 = vpack.c.b16 %v2985, %v2981
  %v3930 = vpack.c.b16 %v2986, %v2982
  %v3931 = vpack.c.b16 %v2987, %v2983
  %v3932 = vpack.c.b16 %v2992, %v2988
  %v3933 = vpack.c.b16 %v2993, %v2989
  %v3934 = vpack.c.b16 %v2994, %v2990
  %v3935 = vpack.c.b16 %v2995, %v2991
  %v3936 = vpack.c.b16 %v3000, %v2996
  %v3937 = vpack.c.b16 %v3001, %v2997
  %v3938 = vpack.c.b16 %v3002, %v2998
  %v3939 = vpack.c.b16 %v3003, %v2999
  %v3940 = vpack.c.b16 %v3008, %v3004
  %v3941 = vpack.c.b16 %v3009, %v3005
  %v3942 = vpack.c.b16 %v3010, %v3006
  %v3943 = vpack.c.b16 %v3011, %v3007
  %v3944 = vpack.c.b16 %v3016, %v3012
  %v3945 = vpack.c.b16 %v3017, %v3013
  %v3946 = vpack.c.b16 %v3018, %v3014
  %v3947 = vpack.c.b16 %v3019, %v3015
  %v3948 = vpack.c.b16 %v3024, %v3020
  %v3949 = vpack.c.b16 %v3025, %v3021
  %v3950 = vpack.c.b16 %v3026, %v3022
  %v3951 = vpack.c.b16 %v3027, %v3023
  %v3952 = vpack.c.b16 %v3032, %v3028
  %v3953 = vpack.c.b16 %v3033, %v3029
  %v3954 = vpack.c.b16 %v3034, %v3030
  %v3955 = vpack.c.b16 %v3035, %v3031
  %v3956 = vpack.c.b16 %v3040, %v3036
  %v3957 = vpack.c.b16 %v3041, %v3037
  %v3958 = vpack.c.b16 %v3042, %v3038
  %v3959 = vpack.c.b16 %v3043, %v3039
  %v3960 = vpack.c.b16 %v3048, %v3044
  %v3961 = vpack.c.b16 %v3049, %v3045
  %v3962 = vpack.c.b16 %v3050, %v3046
  %v3963 = vpack.c.b16 %v3051, %v3047
  %v3964 = vpack.c.b16 %v3056, %v3052
  %v3965 = vpack.c.b16 %v3057, %v3053
  %v3966 = vpack.c.b16 %v3058, %v3054
  %v3967 = vpack.c.b16 %v3059, %v3055
  %v3968 = vpack.c.b16 %v3064, %v3060
  %v3969 = vpack.c.b16 %v3065, %v3061
  %v3970 = vpack.c.b16 %v3066, %v3062
  %v3971 = vpack.c.b16 %v3067, %v3063
  %v3972 = vpack.c.b16 %v3072, %v3068
  %v3973 = vpack.c.b16 %v3073, %v3069
  %v3974 = vpack.c.b16 %v3074, %v3070
  %v3975 = vpack.c.b16 %v3075, %v3071
  %v3976 = vpack.c.b16 %v3080, %v3076
  %v3977 = vpack.c.b16 %v3081, %v3077
  %v3978 = vpack.c.b16 %v3082, %v3078
  %v3979 = vpack.c.b16 %v3083, %v3079
  %v3980 = vpack.c.b16 %v3088, %v3084
  %v3981 = vpack.c.b16 %v3089, %v3085
  %v3982 = vpack.c.b16 %v3090, %v3086
  %v3983 = vpack.c.b16 %v3091, %v3087
  %v3984 = vpack.c.b16 %v3096, %v3092
  %v3985 = vpack.c.b16 %v3097, %v3093
  %v3986 = vpack.c.b16 %v3098, %v3094
  %v3987 = vpack.c.b16 %v3099, %v3095
  %v3988 = vpack.c.b16 %v3104, %v3100
  %v3989 = vpack.c.b16 %v3105, %v3101
  %v3990 = vpack.c.b16 %v3106, %v3102
  %v3991 = vpack.c.b16 %v3107, %v3103
  %v3992 = vpack.c.b16 %v3112, %v3108
  %v3993 = vpack.c.b16 %v3113, %v3109
  %v3994 = vpack.c.b16 %v3114, %v3110
  %v3995 = vpack.c.b16 %v3115, %v3111
  %v3996 = vpack.c.b16 %v3120, %v3116
  %v3997 = vpack.c.b16 %v3121, %v3117
  %v3998 = vpack.c.b16 %v3122, %v3118
  %v3999 = vpack.c.b16 %v3123, %v3119
  %v4000 = vpack.c.b16 %v3128, %v3124
  %v4001 = vpack.c.b16 %v3129, %v3125
  %v4002 = vpack.c.b16 %v3130, %v3126
  %v4003 = vpack.c.b16 %v3131, %v3127
  %v4004 = vpack.c.b16 %v3136, %v3132
  %v4005 = vpack.c.b16 %v3137, %v3133
  %v4006 = vpack.c.b16 %v3138, %v3134
  %v4007 = vpack.c.b16 %v3139, %v3135
  %v4008 = vpack.c.b16 %v3144, %v3140
  %v4009 = vpack.c.b16 %v3145, %v3141
  %v4010 = vpack.c.b16 %v3146, %v3142
  %v4011 = vpack.c.b16 %v3147, %v3143
  %v4012 = vpack.c.b16 %v3152, %v3148
  %v4013 = vpack.c.b16 %v3153, %v3149
  %v4014 = vpack.c.b16 %v3154, %v3150
  %v4015 = vpack.c.b16 %v3155, %v3151
  %v4016 = vpack.c.b16 %v3160, %v3156
  %v4017 = vpack.c.b16 %v3161, %v3157
  %v4018 = vpack.c.b16 %v3162, %v3158
  %v4019 = vpack.c.b16 %v3163, %v3159
  %v4020 = vpack.c.b16 %v3168, %v3164
  %v4021 = vpack.c.b16 %v3169, %v3165
  %v4022 = vpack.c.b16 %v3170, %v3166
  %v4023 = vpack.c.b16 %v3171, %v3167
  %v4024 = vpack.c.b16 %v3176, %v3172
  %v4025 = vpack.c.b16 %v3177, %v3173
  %v4026 = vpack.c.b16 %v3178, %v3174
  %v4027 = vpack.c.b16 %v3179, %v3175
  %v4028 = vpack.c.b16 %v3184, %v3180
  %v4029 = vpack.c.b16 %v3185, %v3181
  %v4030 = vpack.c.b16 %v3186, %v3182
  %v4031 = vpack.c.b16 %v3187, %v3183
  %v4032 = vpack.c.b16 %v3192, %v3188
  %v4033 = vpack.c.b16 %v3193, %v3189
  %v4034 = vpack.c.b16 %v3194, %v3190
  %v4035 = vpack.c.b16 %v3195, %v3191
  %v4036 = vpack.c.b16 %v3200, %v3196
  %v4037 = vpack.c.b16 %v3201, %v3197
  %v4038 = vpack.c.b16 %v3202, %v3198
  %v4039 = vpack.c.b16 %v3203, %v3199
  %v4040 = vpack.c.b16 %v3208, %v3204
  %v4041 = vpack.c.b16 %v3209, %v3205
  %v4042 = vpack.c.b16 %v3210, %v3206
  %v4043 = vpack.c.b16 %v3211, %v3207
  %v4044 = vpack.c.b16 %v3216, %v3212
  %v4045 = vpack.c.b16 %v3217, %v3213
  %v4046 = vpack.c.b16 %v3218, %v3214
  %v4047 = vpack.c.b16 %v3219, %v3215
  %v4048 = vpack.c.b16 %v3224, %v3220
  %v4049 = vpack.c.b16 %v3225, %v3221
  %v4050 = vpack.c.b16 %v3226, %v3222
  %v4051 = vpack.c.b16 %v3227, %v3223
  %v4052 = vpack.c.b16 %v3232, %v3228
  %v4053 = vpack.c.b16 %v3233, %v3229
  %v4054 = vpack.c.b16 %v3234, %v3230
  %v4055 = vpack.c.b16 %v3235, %v3231
  %v4056 = vpack.c.b16 %v3240, %v3236
  %v4057 = vpack.c.b16 %v3241, %v3237
  %v4058 = vpack.c.b16 %v3242, %v3238
  %v4059 = vpack.c.b16 %v3243, %v3239
  %v4060 = vpack.c.b16 %v3248, %v3244
  %v4061 = vpack.c.b16 %v3249, %v3245
  %v4062 = vpack.c.b16 %v3250, %v3246
  %v4063 = vpack.c.b16 %v3251, %v3247
  %v4064 = vpack.c.b16 %v3256, %v3252
  %v4065 = vpack.c.b16 %v3257, %v3253
  %v4066 = vpack.c.b16 %v3258, %v3254
  %v4067 = vpack.c.b16 %v3259, %v3255
  %v4068 = vpack.c.b16 %v3264, %v3260
  %v4069 = vpack.c.b16 %v3265, %v3261
  %v4070 = vpack.c.b16 %v3266, %v3262
  %v4071 = vpack.c.b16 %v3267, %v3263
  %v4072 = vpack.c.b16 %v3272, %v3268
  %v4073 = vpack.c.b16 %v3273, %v3269
  %v4074 = vpack.c.b16 %v3274, %v3270
  %v4075 = vpack.c.b16 %v3275, %v3271
  %v4076 = vpack.c.b16 %v3280, %v3276
  %v4077 = vpack.c.b16 %v3281, %v3277
  %v4078 = vpack.c.b16 %v3282, %v3278
  %v4079 = vpack.c.b16 %v3283, %v3279
  %v4080 = vpack.c.b16 %v3288, %v3284
  %v4081 = vpack.c.b16 %v3289, %v3285
  %v4082 = vpack.c.b16 %v3290, %v3286
  %v4083 = vpack.c.b16 %v3291, %v3287
  %v4084 = vpack.c.b16 %v3296, %v3292
  %v4085 = vpack.c.b16 %v3297, %v3293
  %v4086 = vpack.c.b16 %v3298, %v3294
  %v4087 = vpack.c.b16 %v3299, %v3295
  %v4088 = vpack.c.b16 %v3304, %v3300
  %v4089 = vpack.c.b16 %v3305, %v3301
  %v4090 = vpack.c.b16 %v3306, %v3302
  %v4091 = vpack.c.b16 %v3307, %v3303
  %v4092 = vpack.c.b16 %v3312, %v3308
  %v4093 = vpack.c.b16 %v3313, %v3309
  %v4094 = vpack.c.b16 %v3314, %v3310
  %v4095 = vpack.c.b16 %v3315, %v3311
  %v4096 = vpack.c.b16 %v3320, %v3316
  %v4097 = vpack.c.b16 %v3321, %v3317
  %v4098 = vpack.c.b16 %v3322, %v3318
  %v4099 = vpack.c.b16 %v3323, %v3319
  %v4100 = vpack.c.b16 %v3328, %v3324
  %v4101 = vpack.c.b16 %v3329, %v3325
  %v4102 = vpack.c.b16 %v3330, %v3326
  %v4103 = vpack.c.b16 %v3331, %v3327
  %v4104 = vpack.c.b16 %v3336, %v3332
  %v4105 = vpack.c.b16 %v3337, %v3333
  %v4106 = vpack.c.b16 %v3338, %v3334
  %v4107 = vpack.c.b16 %v3339, %v3335
  %v4108 = vpack.c.b16 %v3344, %v3340
  %v4109 = vpack.c.b16 %v3345, %v3341
  %v4110 = vpack.c.b16 %v3346, %v3342
  %v4111 = vpack.c.b16 %v3347, %v3343
  %v4112 = vpack.c.b16 %v3352, %v3348
  %v4113 = vpack.c.b16 %v3353, %v3349
  %v4114 = vpack.c.b16 %v3354, %v3350
  %v4115 = vpack.c.b16 %v3355, %v3351
  %v4116 = vpack.c.b16 %v3360, %v3356
  %v4117 = vpack.c.b16 %v3361, %v3357
  %v4118 = vpack.c.b16 %v3362, %v3358
  %v4119 = vpack.c.b16 %v3363, %v3359
  %v4120 = vpack.c.b16 %v3368, %v3364
  %v4121 = vpack.c.b16 %v3369, %v3365
  %v4122 = vpack.c.b16 %v3370, %v3366
  %v4123 = vpack.c.b16 %v3371, %v3367
  %v4124 = vpack.c.b16 %v3376, %v3372
  %v4125 = vpack.c.b16 %v3377, %v3373
  %v4126 = vpack.c.b16 %v3378, %v3374
  %v4127 = vpack.c.b16 %v3379, %v3375
  %v4128 = vpack.c.b16 %v3384, %v3380
  %v4129 = vpack.c.b16 %v3385, %v3381
  %v4130 = vpack.c.b16 %v3386, %v3382
  %v4131 = vpack.c.b16 %v3387, %v3383
  %v4132 = vpack.c.b16 %v3392, %v3388
  %v4133 = vpack.c.b16 %v3393, %v3389
  %v4134 = vpack.c.b16 %v3394, %v3390
  %v4135 = vpack.c.b16 %v3395, %v3391
  %v4136 = vpack.c.b16 %v3400, %v3396
  %v4137 = vpack.c.b16 %v3401, %v3397
  %v4138 = vpack.c.b16 %v3402, %v3398
  %v4139 = vpack.c.b16 %v3403, %v3399
  %v4140 = vpack.c.b16 %v3408, %v3404
  %v4141 = vpack.c.b16 %v3409, %v3405
  %v4142 = vpack.c.b16 %v3410, %v3406
  %v4143 = vpack.c.b16 %v3411, %v3407
  %v4144 = vpack.c.b16 %v3416, %v3412
  %v4145 = vpack.c.b16 %v3417, %v3413
  %v4146 = vpack.c.b16 %v3418, %v3414
  %v4147 = vpack.c.b16 %v3419, %v3415
  %v4148 = vpack.c.b16 %v3424, %v3420
  %v4149 = vpack.c.b16 %v3425, %v3421
  %v4150 = vpack.c.b16 %v3426, %v3422
  %v4151 = vpack.c.b16 %v3427, %v3423
  %v4152 = vpack.c.b16 %v3432, %v3428
  %v4153 = vpack.c.b16 %v3433, %v3429
  %v4154 = vpack.c.b16 %v3434, %v3430
  %v4155 = vpack.c.b16 %v3435, %v3431
  %v4156 = vpack.c.b16 %v3440, %v3436
  %v4157 = vpack.c.b16 %v3441, %v3437
  %v4158 = vpack.c.b16 %v3442, %v3438
  %v4159 = vpack.c.b16 %v3443, %v3439
  %v4160 = vpack.c.b16 %v3448, %v3444
  %v4161 = vpack.c.b16 %v3449, %v3445
  %v4162 = vpack.c.b16 %v3450, %v3446
  %v4163 = vpack.c.b16 %v3451, %v3447
  %v4164 = vpack.c.b16 %v3456, %v3452
  %v4165 = vpack.c.b16 %v3457, %v3453
  %v4166 = vpack.c.b16 %v3458, %v3454
  %v4167 = vpack.c.b16 %v3459, %v3455
  %v4168 = vpack.c.b16 %v3464, %v3460
  %v4169 = vpack.c.b16 %v3465, %v3461
  %v4170 = vpack.c.b16 %v3466, %v3462
  %v4171 = vpack.c.b16 %v3467, %v3463
  %v4172 = vpack.c.b16 %v3472, %v3468
  %v4173 = vpack.c.b16 %v3473, %v3469
  %v4174 = vpack.c.b16 %v3474, %v3470
  %v4175 = vpack.c.b16 %v3475, %v3471
  %v4176 = vpack.c.b16 %v3480, %v3476
  %v4177 = vpack.c.b16 %v3481, %v3477
  %v4178 = vpack.c.b16 %v3482, %v3478
  %v4179 = vpack.c.b16 %v3483, %v3479
  %v4180 = vpack.c.b16 %v3488, %v3484
  %v4181 = vpack.c.b16 %v3489, %v3485
  %v4182 = vpack.c.b16 %v3490, %v3486
  %v4183 = vpack.c.b16 %v3491, %v3487
  %v4184 = vpack.c.b16 %v3496, %v3492
  %v4185 = vpack.c.b16 %v3497, %v3493
  %v4186 = vpack.c.b16 %v3498, %v3494
  %v4187 = vpack.c.b16 %v3499, %v3495
  %v4188 = vpack.c.b16 %v3504, %v3500
  %v4189 = vpack.c.b16 %v3505, %v3501
  %v4190 = vpack.c.b16 %v3506, %v3502
  %v4191 = vpack.c.b16 %v3507, %v3503
  %v4192 = vpack.c.b16 %v3512, %v3508
  %v4193 = vpack.c.b16 %v3513, %v3509
  %v4194 = vpack.c.b16 %v3514, %v3510
  %v4195 = vpack.c.b16 %v3515, %v3511
  %v4196 = vpack.c.b16 %v3520, %v3516
  %v4197 = vpack.c.b16 %v3521, %v3517
  %v4198 = vpack.c.b16 %v3522, %v3518
  %v4199 = vpack.c.b16 %v3523, %v3519
  %v4200 = vpack.c.b16 %v3528, %v3524
  %v4201 = vpack.c.b16 %v3529, %v3525
  %v4202 = vpack.c.b16 %v3530, %v3526
  %v4203 = vpack.c.b16 %v3531, %v3527
  %v4204 = vpack.c.b16 %v3536, %v3532
  %v4205 = vpack.c.b16 %v3537, %v3533
  %v4206 = vpack.c.b16 %v3538, %v3534
  %v4207 = vpack.c.b16 %v3539, %v3535
  %v4208 = vpack.c.b16 %v3544, %v3540
  %v4209 = vpack.c.b16 %v3545, %v3541
  %v4210 = vpack.c.b16 %v3546, %v3542
  %v4211 = vpack.c.b16 %v3547, %v3543
  %v4212 = vpack.c.b16 %v3552, %v3548
  %v4213 = vpack.c.b16 %v3553, %v3549
  %v4214 = vpack.c.b16 %v3554, %v3550
  %v4215 = vpack.c.b16 %v3555, %v3551
  %v4216 = vpack.c.b16 %v3560, %v3556
  %v4217 = vpack.c.b16 %v3561, %v3557
  %v4218 = vpack.c.b16 %v3562, %v3558
  %v4219 = vpack.c.b16 %v3563, %v3559
  %v4220 = vpack.c.b16 %v3568, %v3564
  %v4221 = vpack.c.b16 %v3569, %v3565
  %v4222 = vpack.c.b16 %v3570, %v3566
  %v4223 = vpack.c.b16 %v3571, %v3567
  %v4224 = vpack.c.b16 %v3576, %v3572
  %v4225 = vpack.c.b16 %v3577, %v3573
  %v4226 = vpack.c.b16 %v3578, %v3574
  %v4227 = vpack.c.b16 %v3579, %v3575
  %v4228 = vpack.c.b16 %v3584, %v3580
  %v4229 = vpack.c.b16 %v3585, %v3581
  %v4230 = vpack.c.b16 %v3586, %v3582
  %v4231 = vpack.c.b16 %v3587, %v3583
  %v4232 = vpack.c.b16 %v3592, %v3588
  %v4233 = vpack.c.b16 %v3593, %v3589
  %v4234 = vpack.c.b16 %v3594, %v3590
  %v4235 = vpack.c.b16 %v3595, %v3591
  %v4236 = vpack.c.b16 %v3600, %v3596
  %v4237 = vpack.c.b16 %v3601, %v3597
  %v4238 = vpack.c.b16 %v3602, %v3598
  %v4239 = vpack.c.b16 %v3603, %v3599
  %v4240 = vpack.c.b16 %v3608, %v3604
  %v4241 = vpack.c.b16 %v3609, %v3605
  %v4242 = vpack.c.b16 %v3610, %v3606
  %v4243 = vpack.c.b16 %v3611, %v3607
  %v4244 = vpack.c.b16 %v3616, %v3612
  %v4245 = vpack.c.b16 %v3617, %v3613
  %v4246 = vpack.c.b16 %v3618, %v3614
  %v4247 = vpack.c.b16 %v3619, %v3615
  %v4248 = vpack.c.b16 %v3624, %v3620
  %v4249 = vpack.c.b16 %v3625, %v3621
  %v4250 = vpack.c.b16 %v3626, %v3622
  %v4251 = vpack.c.b16 %v3627, %v3623
  %v4252 = vpack.c.b16 %v3632, %v3628
  %v4253 = vpack.c.b16 %v3633, %v3629
  %v4254 = vpack.c.b16 %v3634, %v3630
  %v4255 = vpack.c.b16 %v3635, %v3631
  %v4256 = vpack.c.b16 %v3640, %v3636
  %v4257 = vpack.c.b16 %v3641, %v3637
  %v4258 = vpack.c.b16 %v3642, %v3638
  %v4259 = vpack.c.b16 %v3643, %v3639
  %v4260 = vpack.c.b16 %v3648, %v3644
  %v4261 = vpack.c.b16 %v3649, %v3645
  %v4262 = vpack.c.b16 %v3650, %v3646
  %v4263 = vpack.c.b16 %v3651, %v3647
  %v4264 = vpack.c.b16 %v3656, %v3652
  %v4265 = vpack.c.b16 %v3657, %v3653
  %v4266 = vpack.c.b16 %v3658, %v3654
  %v4267 = vpack.c.b16 %v3659, %v3655
  %v4268 = vpack.c.b16 %v3664, %v3660
  %v4269 = vpack.c.b16 %v3665, %v3661
  %v4270 = vpack.c.b16 %v3666, %v3662
  %v4271 = vpack.c.b16 %v3667, %v3663
  %v4272 = vpack.c.b16 %v3672, %v3668
  %v4273 = vpack.c.b16 %v3673, %v3669
  %v4274 = vpack.c.b16 %v3674, %v3670
  %v4275 = vpack.c.b16 %v3675, %v3671
  %v4276 = vpack.c.b16 %v3680, %v3676
  %v4277 = vpack.c.b16 %v3681, %v3677
  %v4278 = vpack.c.b16 %v3682, %v3678
  %v4279 = vpack.c.b16 %v3683, %v3679
  %v4280 = vpack.c.b16 %v3688, %v3684
  %v4281 = vpack.c.b16 %v3689, %v3685
  %v4282 = vpack.c.b16 %v3690, %v3686
  %v4283 = vpack.c.b16 %v3691, %v3687
  %v4284 = vpack.c.b16 %v3696, %v3692
  %v4285 = vpack.c.b16 %v3697, %v3693
  %v4286 = vpack.c.b16 %v3698, %v3694
  %v4287 = vpack.c.b16 %v3699, %v3695
  %v4288 = vpack.c.b16 %v3704, %v3700
  %v4289 = vpack.c.b16 %v3705, %v3701
  %v4290 = vpack.c.b16 %v3706, %v3702
  %v4291 = vpack.c.b16 %v3707, %v3703
  %v4292 = vpack.c.b16 %v3712, %v3708
  %v4293 = vpack.c.b16 %v3713, %v3709
  %v4294 = vpack.c.b16 %v3714, %v3710
  %v4295 = vpack.c.b16 %v3715, %v3711
  %v4296 = vpack.c.b16 %v3720, %v3716
  %v4297 = vpack.c.b16 %v3721, %v3717
  %v4298 = vpack.c.b16 %v3722, %v3718
  %v4299 = vpack.c.b16 %v3723, %v3719
  %v4300 = vpack.c.b16 %v3728, %v3724
  %v4301 = vpack.c.b16 %v3729, %v3725
  %v4302 = vpack.c.b16 %v3730, %v3726
  %v4303 = vpack.c.b16 %v3731, %v3727
  %v4304 = vpack.c.b16 %v3736, %v3732
  %v4305 = vpack.c.b16 %v3737, %v3733
  %v4306 = vpack.c.b16 %v3738, %v3734
  %v4307 = vpack.c.b16 %v3739, %v3735
  %v4308 = vpack.c.b16 %v3744, %v3740
  %v4309 = vpack.c.b16 %v3745, %v3741
  %v4310 = vpack.c.b16 %v3746, %v3742
  %v4311 = vpack.c.b16 %v3747, %v3743
  %v4312 = vpack.c.b16 %v3752, %v3748
  %v4313 = vpack.c.b16 %v3753, %v3749
  %v4314 = vpack.c.b16 %v3754, %v3750
  %v4315 = vpack.c.b16 %v3755, %v3751
  %v4316 = vpack.c.b16 %v3760, %v3756
  %v4317 = vpack.c.b16 %v3761, %v3757
  %v4318 = vpack.c.b16 %v3762, %v3758
  %v4319 = vpack.c.b16 %v3763, %v3759
  %v4320 = vpack.c.b16 %v3768, %v3764
  %v4321 = vpack.c.b16 %v3769, %v3765
  %v4322 = vpack.c.b16 %v3770, %v3766
  %v4323 = vpack.c.b16 %v3771, %v3767
  %v4324 = vpack.c.b16 %v3776, %v3772
  %v4325 = vpack.c.b16 %v3777, %v3773
  %v4326 = vpack.c.b16 %v3778, %v3774
  %v4327 = vpack.c.b16 %v3779, %v3775
  %v4328 = vpack.c.b16 %v3784, %v3780
  %v4329 = vpack.c.b16 %v3785, %v3781
  %v4330 = vpack.c.b16 %v3786, %v3782
  %v4331 = vpack.c.b16 %v3787, %v3783
  %v4332 = vpack.c.b16 %v3792, %v3788
  %v4333 = vpack.c.b16 %v3793, %v3789
  %v4334 = vpack.c.b16 %v3794, %v3790
  %v4335 = vpack.c.b16 %v3795, %v3791
  %v4336 = vpack.c.b16 %v3800, %v3796
  %v4337 = vpack.c.b16 %v3801, %v3797
  %v4338 = vpack.c.b16 %v3802, %v3798
  %v4339 = vpack.c.b16 %v3803, %v3799
  %v4340 = vpack.c.b16 %v3808, %v3804
  %v4341 = vpack.c.b16 %v3809, %v3805
  %v4342 = vpack.c.b16 %v3810, %v3806
  %v4343 = vpack.c.b16 %v3811, %v3807
  %v4344 = vpack.c.b16 %v3816, %v3812
  %v4345 = vpack.c.b16 %v3817, %v3813
  %v4346 = vpack.c.b16 %v3818, %v3814
  %v4347 = vpack.c.b16 %v3819, %v3815
  %v4348 = vpack.c.b16 %v3824, %v3820
  %v4349 = vpack.c.b16 %v3825, %v3821
  %v4350 = vpack.c.b16 %v3826, %v3822
  %v4351 = vpack.c.b16 %v3827, %v3823
  %v4352 = vpack.c.b16 %v3832, %v3828
  %v4353 = vpack.c.b16 %v3833, %v3829
  %v4354 = vpack.c.b16 %v3834, %v3830
  %v4355 = vpack.c.b16 %v3835, %v3831
  %v4356 = vpack.c.b16 %v3840, %v3836
  %v4357 = vpack.c.b16 %v3841, %v3837
  %v4358 = vpack.c.b16 %v3842, %v3838
  %v4359 = vpack.c.b16 %v3843, %v3839
  %v4360 = vpack.c.b16 %v3848, %v3844
  %v4361 = vpack.c.b16 %v3849, %v3845
  %v4362 = vpack.c.b16 %v3850, %v3846
  %v4363 = vpack.c.b16 %v3851, %v3847
  %v4364 = vpack.c.b16 %v3856, %v3852
  %v4365 = vpack.c.b16 %v3857, %v3853
  %v4366 = vpack.c.b16 %v3858, %v3854
  %v4367 = vpack.c.b16 %v3859, %v3855
  %v4368 = vpack.c.b16 %v3864, %v3860
  %v4369 = vpack.c.b16 %v3865, %v3861
  %v4370 = vpack.c.b16 %v3866, %v3862
  %v4371 = vpack.c.b16 %v3867, %v3863
  %v4372 = vpack.c.b16 %v3872, %v3868
  %v4373 = vpack.c.b16 %v3873, %v3869
  %v4374 = vpack.c.b16 %v3874, %v3870
  %v4375 = vpack.c.b16 %v3875, %v3871
  %v4376 = vpack.c.b16 %v3880, %v3876
  %v4377 = vpack.c.b16 %v3881, %v3877
  %v4378 = vpack.c.b16 %v3882, %v3878
  %v4379 = vpack.c.b16 %v3883, %v3879
  %v4380 = vpack.c.b16 %v3888, %v3884
  %v4381 = vpack.c.b16 %v3889, %v3885
  %v4382 = vpack.c.b16 %v3890, %v3886
  %v4383 = vpack.c.b16 %v3891, %v3887
  %v4384 = vpack.c.b16 %v3896, %v3892
  %v4385 = vpack.c.b16 %v3897, %v3893
  %v4386 = vpack.c.b16 %v3898, %v3894
  %v4387 = vpack.c.b16 %v3899, %v3895
  %v4388 = vpack.c.b16 %v3904, %v3900
  %v4389 = vpack.c.b16 %v3905, %v3901
  %v4390 = vpack.c.b16 %v3906, %v3902
  %v4391 = vpack.c.b16 %v3907, %v3903
  %v4392 = vpack.c.b16 %v3912, %v3908
  %v4393 = vpack.c.b16 %v3913, %v3909
  %v4394 = vpack.c.b16 %v3914, %v3910
  %v4395 = vpack.c.b16 %v3915, %v3911
  %4876 = vmatprep.subr.bf16.mxu0 %v3917
  %4877 = vmatpush1.bf16.msra.mxu0 %v3916
  %4878 = vmatprep.subr.bf16.mxu0 %v3921
  %4879 = vmatpush1.bf16.msra.mxu0 %v3920
  %4880 = vmatprep.subr.bf16.mxu0 %v3925
  %4881 = vmatpush1.bf16.msra.mxu0 %v3924
  %4882 = vmatprep.subr.bf16.mxu0 %v3929
  %4883 = vmatpush1.bf16.msra.mxu0 %v3928
  %4884 = vmatprep.subr.bf16.mxu0 %v3933
  %4885 = vmatpush1.bf16.msra.mxu0 %v3932
  %4886 = vmatprep.subr.bf16.mxu0 %v3937
  %4887 = vmatpush1.bf16.msra.mxu0 %v3936
  %4888 = vmatprep.subr.bf16.mxu0 %v3941
  %4889 = vmatpush1.bf16.msra.mxu0 %v3940
  %4890 = vmatprep.subr.bf16.mxu0 %v3945
  %4891 = vmatpush1.bf16.msra.mxu0 %v3944
  %4892 = vmatprep.subr.bf16.mxu0 %v3949
  %4893 = vmatpush1.bf16.msra.mxu0 %v3948
  %4894 = vmatprep.subr.bf16.mxu0 %v3953
  %4895 = vmatpush1.bf16.msra.mxu0 %v3952
  %4896 = vmatprep.subr.bf16.mxu0 %v3957
  %4897 = vmatpush1.bf16.msra.mxu0 %v3956
  %4898 = vmatprep.subr.bf16.mxu0 %v3961
  %4899 = vmatpush1.bf16.msra.mxu0 %v3960
  %4900 = vmatprep.subr.bf16.mxu0 %v3965
  %4901 = vmatpush1.bf16.msra.mxu0 %v3964
  %4902 = vmatprep.subr.bf16.mxu0 %v3969
  %4903 = vmatpush1.bf16.msra.mxu0 %v3968
  %4904 = vmatprep.subr.bf16.mxu0 %v3973
  %4905 = vmatpush1.bf16.msra.mxu0 %v3972
  %4906 = vmatprep.subr.bf16.mxu0 %v3977
  %4907 = vmatpush1.bf16.msra.mxu0 %v3976
  %4908 = vmatprep.mubr.bf16.mxu0 %v1729
  %4909 = vmatmul.mubr.bf16.gmra.mrb[0].mxu0 %v1728
  %v4910 = vpop.f32.mrb[0].mxu0
  %v4911 = vadd.f32 0.0, %v4910
  %v4912 = vpop.f32.mrb[0].mxu0
  %v4913 = vadd.f32 0.0, %v4912
  %v4914 = vpop.f32.mrb[0].mxu0
  %v4915 = vadd.f32 0.0, %v4914
  %v4916 = vpop.f32.mrb[0].mxu0
  %v4917 = vadd.f32 0.0, %v4916
  %4918 = vmatprep.mubr.bf16.mxu0 %v1732
  %4919 = vmatmul.mubr.bf16.gmra.mrb[0].mxu0 %v1731
  %v4920 = vpop.f32.mrb[0].mxu0
  %v4921 = vadd.f32 0.0, %v4920
  %v4922 = vpop.f32.mrb[0].mxu0
  %v4923 = vadd.f32 0.0, %v4922
  %v4924 = vpop.f32.mrb[0].mxu0
  %v4925 = vadd.f32 0.0, %v4924
  %v4926 = vpop.f32.mrb[0].mxu0
  %v4927 = vadd.f32 0.0, %v4926
  %4928 = vmatprep.mubr.bf16.mxu0 %v1735
  %4929 = vmatmul.mubr.bf16.gmra.mrb[0].mxu0 %v1734
  %v4930 = vpop.f32.mrb[0].mxu0
  %v4931 = vadd.f32 0.0, %v4930
  %v4932 = vpop.f32.mrb[0].mxu0
  %v4933 = vadd.f32 0.0, %v4932
  %v4934 = vpop.f32.mrb[0].mxu0
  %v4935 = vadd.f32 0.0, %v4934
  %v4936 = vpop.f32.mrb[0].mxu0
  %v4937 = vadd.f32 0.0, %v4936
  %4938 = vmatprep.mubr.bf16.mxu0 %v1738
  %4939 = vmatmul.mubr.bf16.gmra.mrb[0].mxu0 %v1737
  %v4940 = vpop.f32.mrb[0].mxu0
  %v4941 = vadd.f32 0.0, %v4940
  %v4942 = vpop.f32.mrb[0].mxu0
  %v4943 = vadd.f32 0.0, %v4942
  %v4944 = vpop.f32.mrb[0].mxu0
  %v4945 = vadd.f32 0.0, %v4944
  %v4946 = vpop.f32.mrb[0].mxu0
  %v4947 = vadd.f32 0.0, %v4946
  %4948 = vdwg.mxu0
  %4949 = vmatprep.subr.bf16.mxu0 %v3981
  %4950 = vmatpush1.bf16.msra.mxu0 %v3980
  %4951 = vmatprep.subr.bf16.mxu0 %v3985
  %4952 = vmatpush1.bf16.msra.mxu0 %v3984
  %4953 = vmatprep.subr.bf16.mxu0 %v3989
  %4954 = vmatpush1.bf16.msra.mxu0 %v3988
  %4955 = vmatprep.subr.bf16.mxu0 %v3993
  %4956 = vmatpush1.bf16.msra.mxu0 %v3992
  %4957 = vmatprep.subr.bf16.mxu0 %v3997
  %4958 = vmatpush1.bf16.msra.mxu0 %v3996
  %4959 = vmatprep.subr.bf16.mxu0 %v4001
  %4960 = vmatpush1.bf16.msra.mxu0 %v4000
  %4961 = vmatprep.subr.bf16.mxu0 %v4005
  %4962 = vmatpush1.bf16.msra.mxu0 %v4004
  %4963 = vmatprep.subr.bf16.mxu0 %v4009
  %4964 = vmatpush1.bf16.msra.mxu0 %v4008
  %4965 = vmatprep.subr.bf16.mxu0 %v4013
  %4966 = vmatpush1.bf16.msra.mxu0 %v4012
  %4967 = vmatprep.subr.bf16.mxu0 %v4017
  %4968 = vmatpush1.bf16.msra.mxu0 %v4016
  %4969 = vmatprep.subr.bf16.mxu0 %v4021
  %4970 = vmatpush1.bf16.msra.mxu0 %v4020
  %4971 = vmatprep.subr.bf16.mxu0 %v4025
  %4972 = vmatpush1.bf16.msra.mxu0 %v4024
  %4973 = vmatprep.subr.bf16.mxu0 %v4029
  %4974 = vmatpush1.bf16.msra.mxu0 %v4028
  %4975 = vmatprep.subr.bf16.mxu0 %v4033
  %4976 = vmatpush1.bf16.msra.mxu0 %v4032
  %4977 = vmatprep.subr.bf16.mxu0 %v4037
  %4978 = vmatpush1.bf16.msra.mxu0 %v4036
  %4979 = vmatprep.subr.bf16.mxu0 %v4041
  %4980 = vmatpush1.bf16.msra.mxu0 %v4040
  %4981 = vmatprep.mubr.bf16.mxu0 %v1740
  %4982 = vmatmul.mubr.bf16.gmra.mrb[0].mxu0 %v1730
  %v4983 = vpop.f32.mrb[0].mxu0
  %v4984 = vadd.f32 %v4911, %v4983
  %v4985 = vpop.f32.mrb[0].mxu0
  %v4986 = vadd.f32 %v4913, %v4985
  %v4987 = vpop.f32.mrb[0].mxu0
  %v4988 = vadd.f32 %v4915, %v4987
  %v4989 = vpop.f32.mrb[0].mxu0
  %v4990 = vadd.f32 %v4917, %v4989
  %4991 = vmatprep.mubr.bf16.mxu0 %v1743
  %4992 = vmatmul.mubr.bf16.gmra.mrb[0].mxu0 %v1733
  %v4993 = vpop.f32.mrb[0].mxu0
  %v4994 = vadd.f32 %v4921, %v4993
  %v4995 = vpop.f32.mrb[0].mxu0
  %v4996 = vadd.f32 %v4923, %v4995
  %v4997 = vpop.f32.mrb[0].mxu0
  %v4998 = vadd.f32 %v4925, %v4997
  %v4999 = vpop.f32.mrb[0].mxu0
  %v5000 = vadd.f32 %v4927, %v4999
  %5001 = vmatprep.mubr.bf16.mxu0 %v1746
  %5002 = vmatmul.mubr.bf16.gmra.mrb[0].mxu0 %v1736
  %v5003 = vpop.f32.mrb[0].mxu0
  %v5004 = vadd.f32 %v4931, %v5003
  %v5005 = vpop.f32.mrb[0].mxu0
  %v5006 = vadd.f32 %v4933, %v5005
  %v5007 = vpop.f32.mrb[0].mxu0
  %v5008 = vadd.f32 %v4935, %v5007
  %v5009 = vpop.f32.mrb[0].mxu0
  %v5010 = vadd.f32 %v4937, %v5009
  %5011 = vmatprep.mubr.bf16.mxu0 %v1749
  %5012 = vmatmul.mubr.bf16.gmra.mrb[0].mxu0 %v1739
  %v5013 = vpop.f32.mrb[0].mxu0
  %v5014 = vadd.f32 %v4941, %v5013
  %v5015 = vpop.f32.mrb[0].mxu0
  %v5016 = vadd.f32 %v4943, %v5015
  %v5017 = vpop.f32.mrb[0].mxu0
  %v5018 = vadd.f32 %v4945, %v5017
  %v5019 = vpop.f32.mrb[0].mxu0
  %v5020 = vadd.f32 %v4947, %v5019
  %5021 = vdwg.mxu0
  %5022 = vmatprep.subr.bf16.mxu0 %v4045
  %5023 = vmatpush1.bf16.msra.mxu0 %v4044
  %5024 = vmatprep.subr.bf16.mxu0 %v4049
  %5025 = vmatpush1.bf16.msra.mxu0 %v4048
  %5026 = vmatprep.subr.bf16.mxu0 %v4053
  %5027 = vmatpush1.bf16.msra.mxu0 %v4052
  %5028 = vmatprep.subr.bf16.mxu0 %v4057
  %5029 = vmatpush1.bf16.msra.mxu0 %v4056
  %5030 = vmatprep.subr.bf16.mxu0 %v4061
  %5031 = vmatpush1.bf16.msra.mxu0 %v4060
  %5032 = vmatprep.subr.bf16.mxu0 %v4065
  %5033 = vmatpush1.bf16.msra.mxu0 %v4064
  %5034 = vmatprep.subr.bf16.mxu0 %v4069
  %5035 = vmatpush1.bf16.msra.mxu0 %v4068
  %5036 = vmatprep.subr.bf16.mxu0 %v4073
  %5037 = vmatpush1.bf16.msra.mxu0 %v4072
  %5038 = vmatprep.subr.bf16.mxu0 %v4077
  %5039 = vmatpush1.bf16.msra.mxu0 %v4076
  %5040 = vmatprep.subr.bf16.mxu0 %v4081
  %5041 = vmatpush1.bf16.msra.mxu0 %v4080
  %5042 = vmatprep.subr.bf16.mxu0 %v4085
  %5043 = vmatpush1.bf16.msra.mxu0 %v4084
  %5044 = vmatprep.subr.bf16.mxu0 %v4089
  %5045 = vmatpush1.bf16.msra.mxu0 %v4088
  %5046 = vmatprep.subr.bf16.mxu0 %v4093
  %5047 = vmatpush1.bf16.msra.mxu0 %v4092
  %5048 = vmatprep.subr.bf16.mxu0 %v4097
  %5049 = vmatpush1.bf16.msra.mxu0 %v4096
  %5050 = vmatprep.subr.bf16.mxu0 %v4101
  %5051 = vmatpush1.bf16.msra.mxu0 %v4100
  %5052 = vmatprep.subr.bf16.mxu0 %v4105
  %5053 = vmatpush1.bf16.msra.mxu0 %v4104
  %5054 = vmatprep.mubr.bf16.mxu0 %v1742
  %5055 = vmatmul.mubr.bf16.gmra.mrb[0].mxu0 %v1741
  %v5056 = vpop.f32.mrb[0].mxu0
  %v5057 = vadd.f32 %v4984, %v5056
  %v5058 = vpop.f32.mrb[0].mxu0
  %v5059 = vadd.f32 %v4986, %v5058
  %v5060 = vpop.f32.mrb[0].mxu0
  %v5061 = vadd.f32 %v4988, %v5060
  %v5062 = vpop.f32.mrb[0].mxu0
  %v5063 = vadd.f32 %v4990, %v5062
  %5064 = vmatprep.mubr.bf16.mxu0 %v1745
  %5065 = vmatmul.mubr.bf16.gmra.mrb[0].mxu0 %v1744
  %v5066 = vpop.f32.mrb[0].mxu0
  %v5067 = vadd.f32 %v4994, %v5066
  %v5068 = vpop.f32.mrb[0].mxu0
  %v5069 = vadd.f32 %v4996, %v5068
  %v5070 = vpop.f32.mrb[0].mxu0
  %v5071 = vadd.f32 %v4998, %v5070
  %v5072 = vpop.f32.mrb[0].mxu0
  %v5073 = vadd.f32 %v5000, %v5072
  %5074 = vmatprep.mubr.bf16.mxu0 %v1748
  %5075 = vmatmul.mubr.bf16.gmra.mrb[0].mxu0 %v1747
  %v5076 = vpop.f32.mrb[0].mxu0
  %v5077 = vadd.f32 %v5004, %v5076
  %v5078 = vpop.f32.mrb[0].mxu0
  %v5079 = vadd.f32 %v5006, %v5078
  %v5080 = vpop.f32.mrb[0].mxu0
  %v5081 = vadd.f32 %v5008, %v5080
  %v5082 = vpop.f32.mrb[0].mxu0
  %v5083 = vadd.f32 %v5010, %v5082
  %5084 = vmatprep.mubr.bf16.mxu0 %v1751
  %5085 = vmatmul.mubr.bf16.gmra.mrb[0].mxu0 %v1750
  %v5086 = vpop.f32.mrb[0].mxu0
  %v5087 = vadd.f32 %v5014, %v5086
  %v5088 = vpop.f32.mrb[0].mxu0
  %v5089 = vadd.f32 %v5016, %v5088
  %v5090 = vpop.f32.mrb[0].mxu0
  %v5091 = vadd.f32 %v5018, %v5090
  %v5092 = vpop.f32.mrb[0].mxu0
  %v5093 = vadd.f32 %v5020, %v5092
  %5094 = vdwg.mxu0
  %5095 = vmatprep.subr.bf16.mxu0 %v4109
  %5096 = vmatpush1.bf16.msra.mxu0 %v4108
  %5097 = vmatprep.subr.bf16.mxu0 %v4113
  %5098 = vmatpush1.bf16.msra.mxu0 %v4112
  %5099 = vmatprep.subr.bf16.mxu0 %v4117
  %5100 = vmatpush1.bf16.msra.mxu0 %v4116
  %5101 = vmatprep.subr.bf16.mxu0 %v4121
  %5102 = vmatpush1.bf16.msra.mxu0 %v4120
  %5103 = vmatprep.subr.bf16.mxu0 %v4125
  %5104 = vmatpush1.bf16.msra.mxu0 %v4124
  %5105 = vmatprep.subr.bf16.mxu0 %v4129
  %5106 = vmatpush1.bf16.msra.mxu0 %v4128
  %5107 = vmatprep.subr.bf16.mxu0 %v4133
  %5108 = vmatpush1.bf16.msra.mxu0 %v4132
  %5109 = vmatprep.subr.bf16.mxu0 %v4137
  %5110 = vmatpush1.bf16.msra.mxu0 %v4136
  %5111 = vmatprep.subr.bf16.mxu0 %v4141
  %5112 = vmatpush1.bf16.msra.mxu0 %v4140
  %5113 = vmatprep.subr.bf16.mxu0 %v4145
  %5114 = vmatpush1.bf16.msra.mxu0 %v4144
  %5115 = vmatprep.subr.bf16.mxu0 %v4149
  %5116 = vmatpush1.bf16.msra.mxu0 %v4148
  %5117 = vmatprep.subr.bf16.mxu0 %v4153
  %5118 = vmatpush1.bf16.msra.mxu0 %v4152
  %5119 = vmatprep.subr.bf16.mxu0 %v4157
  %5120 = vmatpush1.bf16.msra.mxu0 %v4156
  %5121 = vmatprep.subr.bf16.mxu0 %v4161
  %5122 = vmatpush1.bf16.msra.mxu0 %v4160
  %5123 = vmatprep.subr.bf16.mxu0 %v4165
  %5124 = vmatpush1.bf16.msra.mxu0 %v4164
  %5125 = vmatprep.subr.bf16.mxu0 %v4169
  %5126 = vmatpush1.bf16.msra.mxu0 %v4168
  %5127 = vmatprep.mubr.bf16.mxu0 %v1804
  %5128 = vmatmul.mubr.bf16.gmra.mrb[0].mxu0 %v1803
  %v5129 = vpop.f32.mrb[0].mxu0
  %v5130 = vadd.f32 %v5057, %v5129
  %v5131 = vpop.f32.mrb[0].mxu0
  %v5132 = vadd.f32 %v5059, %v5131
  %v5133 = vpop.f32.mrb[0].mxu0
  %v5134 = vadd.f32 %v5061, %v5133
  %v5135 = vpop.f32.mrb[0].mxu0
  %v5136 = vadd.f32 %v5063, %v5135
  %5137 = vmatprep.mubr.bf16.mxu0 %v1807
  %5138 = vmatmul.mubr.bf16.gmra.mrb[0].mxu0 %v1806
  %v5139 = vpop.f32.mrb[0].mxu0
  %v5140 = vadd.f32 %v5067, %v5139
  %v5141 = vpop.f32.mrb[0].mxu0
  %v5142 = vadd.f32 %v5069, %v5141
  %v5143 = vpop.f32.mrb[0].mxu0
  %v5144 = vadd.f32 %v5071, %v5143
  %v5145 = vpop.f32.mrb[0].mxu0
  %v5146 = vadd.f32 %v5073, %v5145
  %5147 = vmatprep.mubr.bf16.mxu0 %v1810
  %5148 = vmatmul.mubr.bf16.gmra.mrb[0].mxu0 %v1809
  %v5149 = vpop.f32.mrb[0].mxu0
  %v5150 = vadd.f32 %v5077, %v5149
  %v5151 = vpop.f32.mrb[0].mxu0
  %v5152 = vadd.f32 %v5079, %v5151
  %v5153 = vpop.f32.mrb[0].mxu0
  %v5154 = vadd.f32 %v5081, %v5153
  %v5155 = vpop.f32.mrb[0].mxu0
  %v5156 = vadd.f32 %v5083, %v5155
  %5157 = vmatprep.mubr.bf16.mxu0 %v1813
  %5158 = vmatmul.mubr.bf16.gmra.mrb[0].mxu0 %v1812
  %v5159 = vpop.f32.mrb[0].mxu0
  %v5160 = vadd.f32 %v5087, %v5159
  %v5161 = vpop.f32.mrb[0].mxu0
  %v5162 = vadd.f32 %v5089, %v5161
  %v5163 = vpop.f32.mrb[0].mxu0
  %v5164 = vadd.f32 %v5091, %v5163
  %v5165 = vpop.f32.mrb[0].mxu0
  %v5166 = vadd.f32 %v5093, %v5165
  %5167 = vdwg.mxu0
  %5168 = vmatprep.subr.bf16.mxu0 %v4173
  %5169 = vmatpush1.bf16.msra.mxu0 %v4172
  %5170 = vmatprep.subr.bf16.mxu0 %v4177
  %5171 = vmatpush1.bf16.msra.mxu0 %v4176
  %5172 = vmatprep.subr.bf16.mxu0 %v4181
  %5173 = vmatpush1.bf16.msra.mxu0 %v4180
  %5174 = vmatprep.subr.bf16.mxu0 %v4185
  %5175 = vmatpush1.bf16.msra.mxu0 %v4184
  %5176 = vmatprep.subr.bf16.mxu0 %v4189
  %5177 = vmatpush1.bf16.msra.mxu0 %v4188
  %5178 = vmatprep.subr.bf16.mxu0 %v4193
  %5179 = vmatpush1.bf16.msra.mxu0 %v4192
  %5180 = vmatprep.subr.bf16.mxu0 %v4197
  %5181 = vmatpush1.bf16.msra.mxu0 %v4196
  %5182 = vmatprep.subr.bf16.mxu0 %v4201
  %5183 = vmatpush1.bf16.msra.mxu0 %v4200
  %5184 = vmatprep.subr.bf16.mxu0 %v4205
  %5185 = vmatpush1.bf16.msra.mxu0 %v4204
  %5186 = vmatprep.subr.bf16.mxu0 %v4209
  %5187 = vmatpush1.bf16.msra.mxu0 %v4208
  %5188 = vmatprep.subr.bf16.mxu0 %v4213
  %5189 = vmatpush1.bf16.msra.mxu0 %v4212
  %5190 = vmatprep.subr.bf16.mxu0 %v4217
  %5191 = vmatpush1.bf16.msra.mxu0 %v4216
  %5192 = vmatprep.subr.bf16.mxu0 %v4221
  %5193 = vmatpush1.bf16.msra.mxu0 %v4220
  %5194 = vmatprep.subr.bf16.mxu0 %v4225
  %5195 = vmatpush1.bf16.msra.mxu0 %v4224
  %5196 = vmatprep.subr.bf16.mxu0 %v4229
  %5197 = vmatpush1.bf16.msra.mxu0 %v4228
  %5198 = vmatprep.subr.bf16.mxu0 %v4233
  %5199 = vmatpush1.bf16.msra.mxu0 %v4232
  %5200 = vmatprep.mubr.bf16.mxu0 %v1863
  %5201 = vmatmul.mubr.bf16.gmra.mrb[0].mxu0 %v1805
  %v5202 = vpop.f32.mrb[0].mxu0
  %v5203 = vadd.f32 %v5130, %v5202
  %v5204 = vpop.f32.mrb[0].mxu0
  %v5205 = vadd.f32 %v5132, %v5204
  %v5206 = vpop.f32.mrb[0].mxu0
  %v5207 = vadd.f32 %v5134, %v5206
  %v5208 = vpop.f32.mrb[0].mxu0
  %v5209 = vadd.f32 %v5136, %v5208
  %5210 = vmatprep.mubr.bf16.mxu0 %v1866
  %5211 = vmatmul.mubr.bf16.gmra.mrb[0].mxu0 %v1808
  %v5212 = vpop.f32.mrb[0].mxu0
  %v5213 = vadd.f32 %v5140, %v5212
  %v5214 = vpop.f32.mrb[0].mxu0
  %v5215 = vadd.f32 %v5142, %v5214
  %v5216 = vpop.f32.mrb[0].mxu0
  %v5217 = vadd.f32 %v5144, %v5216
  %v5218 = vpop.f32.mrb[0].mxu0
  %v5219 = vadd.f32 %v5146, %v5218
  %5220 = vmatprep.mubr.bf16.mxu0 %v1869
  %5221 = vmatmul.mubr.bf16.gmra.mrb[0].mxu0 %v1811
  %v5222 = vpop.f32.mrb[0].mxu0
  %v5223 = vadd.f32 %v5150, %v5222
  %v5224 = vpop.f32.mrb[0].mxu0
  %v5225 = vadd.f32 %v5152, %v5224
  %v5226 = vpop.f32.mrb[0].mxu0
  %v5227 = vadd.f32 %v5154, %v5226
  %v5228 = vpop.f32.mrb[0].mxu0
  %v5229 = vadd.f32 %v5156, %v5228
  %5230 = vmatprep.mubr.bf16.mxu0 %v1872
  %5231 = vmatmul.mubr.bf16.gmra.mrb[0].mxu0 %v1814
  %v5232 = vpop.f32.mrb[0].mxu0
  %v5233 = vadd.f32 %v5160, %v5232
  %v5234 = vpop.f32.mrb[0].mxu0
  %v5235 = vadd.f32 %v5162, %v5234
  %v5236 = vpop.f32.mrb[0].mxu0
  %v5237 = vadd.f32 %v5164, %v5236
  %v5238 = vpop.f32.mrb[0].mxu0
  %v5239 = vadd.f32 %v5166, %v5238
  %5240 = vdwg.mxu0
  %5241 = vmatprep.subr.bf16.mxu0 %v4237
  %5242 = vmatpush1.bf16.msra.mxu0 %v4236
  %5243 = vmatprep.subr.bf16.mxu0 %v4241
  %5244 = vmatpush1.bf16.msra.mxu0 %v4240
  %5245 = vmatprep.subr.bf16.mxu0 %v4245
  %5246 = vmatpush1.bf16.msra.mxu0 %v4244
  %5247 = vmatprep.subr.bf16.mxu0 %v4249
  %5248 = vmatpush1.bf16.msra.mxu0 %v4248
  %5249 = vmatprep.subr.bf16.mxu0 %v4253
  %5250 = vmatpush1.bf16.msra.mxu0 %v4252
  %5251 = vmatprep.subr.bf16.mxu0 %v4257
  %5252 = vmatpush1.bf16.msra.mxu0 %v4256
  %5253 = vmatprep.subr.bf16.mxu0 %v4261
  %5254 = vmatpush1.bf16.msra.mxu0 %v4260
  %5255 = vmatprep.subr.bf16.mxu0 %v4265
  %5256 = vmatpush1.bf16.msra.mxu0 %v4264
  %5257 = vmatprep.subr.bf16.mxu0 %v4269
  %5258 = vmatpush1.bf16.msra.mxu0 %v4268
  %5259 = vmatprep.subr.bf16.mxu0 %v4273
  %5260 = vmatpush1.bf16.msra.mxu0 %v4272
  %5261 = vmatprep.subr.bf16.mxu0 %v4277
  %5262 = vmatpush1.bf16.msra.mxu0 %v4276
  %5263 = vmatprep.subr.bf16.mxu0 %v4281
  %5264 = vmatpush1.bf16.msra.mxu0 %v4280
  %5265 = vmatprep.subr.bf16.mxu0 %v4285
  %5266 = vmatpush1.bf16.msra.mxu0 %v4284
  %5267 = vmatprep.subr.bf16.mxu0 %v4289
  %5268 = vmatpush1.bf16.msra.mxu0 %v4288
  %5269 = vmatprep.subr.bf16.mxu0 %v4293
  %5270 = vmatpush1.bf16.msra.mxu0 %v4292
  %5271 = vmatprep.subr.bf16.mxu0 %v4297
  %5272 = vmatpush1.bf16.msra.mxu0 %v4296
  %5273 = vmatprep.mubr.bf16.mxu0 %v1865
  %5274 = vmatmul.mubr.bf16.gmra.mrb[0].mxu0 %v1864
  %v5275 = vpop.f32.mrb[0].mxu0
  %v5276 = vadd.f32 %v5203, %v5275
  %v5277 = vpop.f32.mrb[0].mxu0
  %v5278 = vadd.f32 %v5205, %v5277
  %v5279 = vpop.f32.mrb[0].mxu0
  %v5280 = vadd.f32 %v5207, %v5279
  %v5281 = vpop.f32.mrb[0].mxu0
  %v5282 = vadd.f32 %v5209, %v5281
  %5283 = vmatprep.mubr.bf16.mxu0 %v1868
  %5284 = vmatmul.mubr.bf16.gmra.mrb[0].mxu0 %v1867
  %v5285 = vpop.f32.mrb[0].mxu0
  %v5286 = vadd.f32 %v5213, %v5285
  %v5287 = vpop.f32.mrb[0].mxu0
  %v5288 = vadd.f32 %v5215, %v5287
  %v5289 = vpop.f32.mrb[0].mxu0
  %v5290 = vadd.f32 %v5217, %v5289
  %v5291 = vpop.f32.mrb[0].mxu0
  %v5292 = vadd.f32 %v5219, %v5291
  %5293 = vmatprep.mubr.bf16.mxu0 %v1871
  %5294 = vmatmul.mubr.bf16.gmra.mrb[0].mxu0 %v1870
  %v5295 = vpop.f32.mrb[0].mxu0
  %v5296 = vadd.f32 %v5223, %v5295
  %v5297 = vpop.f32.mrb[0].mxu0
  %v5298 = vadd.f32 %v5225, %v5297
  %v5299 = vpop.f32.mrb[0].mxu0
  %v5300 = vadd.f32 %v5227, %v5299
  %v5301 = vpop.f32.mrb[0].mxu0
  %v5302 = vadd.f32 %v5229, %v5301
  %5303 = vmatprep.mubr.bf16.mxu0 %v1874
  %5304 = vmatmul.mubr.bf16.gmra.mrb[0].mxu0 %v1873
  %v5305 = vpop.f32.mrb[0].mxu0
  %v5306 = vadd.f32 %v5233, %v5305
  %v5307 = vpop.f32.mrb[0].mxu0
  %v5308 = vadd.f32 %v5235, %v5307
  %v5309 = vpop.f32.mrb[0].mxu0
  %v5310 = vadd.f32 %v5237, %v5309
  %v5311 = vpop.f32.mrb[0].mxu0
  %v5312 = vadd.f32 %v5239, %v5311
  %5313 = vdwg.mxu0
  %5314 = vmatprep.subr.bf16.mxu0 %v4301
  %5315 = vmatpush1.bf16.msra.mxu0 %v4300
  %5316 = vmatprep.subr.bf16.mxu0 %v4305
  %5317 = vmatpush1.bf16.msra.mxu0 %v4304
  %5318 = vmatprep.subr.bf16.mxu0 %v4309
  %5319 = vmatpush1.bf16.msra.mxu0 %v4308
  %5320 = vmatprep.subr.bf16.mxu0 %v4313
  %5321 = vmatpush1.bf16.msra.mxu0 %v4312
  %5322 = vmatprep.subr.bf16.mxu0 %v4317
  %5323 = vmatpush1.bf16.msra.mxu0 %v4316
  %5324 = vmatprep.subr.bf16.mxu0 %v4321
  %5325 = vmatpush1.bf16.msra.mxu0 %v4320
  %5326 = vmatprep.subr.bf16.mxu0 %v4325
  %5327 = vmatpush1.bf16.msra.mxu0 %v4324
  %5328 = vmatprep.subr.bf16.mxu0 %v4329
  %5329 = vmatpush1.bf16.msra.mxu0 %v4328
  %5330 = vmatprep.subr.bf16.mxu0 %v4333
  %5331 = vmatpush1.bf16.msra.mxu0 %v4332
  %5332 = vmatprep.subr.bf16.mxu0 %v4337
  %5333 = vmatpush1.bf16.msra.mxu0 %v4336
  %5334 = vmatprep.subr.bf16.mxu0 %v4341
  %5335 = vmatpush1.bf16.msra.mxu0 %v4340
  %5336 = vmatprep.subr.bf16.mxu0 %v4345
  %5337 = vmatpush1.bf16.msra.mxu0 %v4344
  %5338 = vmatprep.subr.bf16.mxu0 %v4349
  %5339 = vmatpush1.bf16.msra.mxu0 %v4348
  %5340 = vmatprep.subr.bf16.mxu0 %v4353
  %5341 = vmatpush1.bf16.msra.mxu0 %v4352
  %5342 = vmatprep.subr.bf16.mxu0 %v4357
  %5343 = vmatpush1.bf16.msra.mxu0 %v4356
  %5344 = vmatprep.subr.bf16.mxu0 %v4361
  %5345 = vmatpush1.bf16.msra.mxu0 %v4360
  %5346 = vmatprep.mubr.bf16.mxu0 %v1925
  %5347 = vmatmul.mubr.bf16.gmra.mrb[0].mxu0 %v1924
  %v5348 = vpop.f32.mrb[0].mxu0
  %v5349 = vadd.f32 %v5276, %v5348
  %v5350 = vpop.f32.mrb[0].mxu0
  %v5351 = vadd.f32 %v5278, %v5350
  %v5352 = vpop.f32.mrb[0].mxu0
  %v5353 = vadd.f32 %v5280, %v5352
  %v5354 = vpop.f32.mrb[0].mxu0
  %v5355 = vadd.f32 %v5282, %v5354
  %5356 = vmatprep.mubr.bf16.mxu0 %v1928
  %5357 = vmatmul.mubr.bf16.gmra.mrb[0].mxu0 %v1927
  %v5358 = vpop.f32.mrb[0].mxu0
  %v5359 = vadd.f32 %v5286, %v5358
  %v5360 = vpop.f32.mrb[0].mxu0
  %v5361 = vadd.f32 %v5288, %v5360
  %v5362 = vpop.f32.mrb[0].mxu0
  %v5363 = vadd.f32 %v5290, %v5362
  %v5364 = vpop.f32.mrb[0].mxu0
  %v5365 = vadd.f32 %v5292, %v5364
  %5366 = vmatprep.mubr.bf16.mxu0 %v1931
  %5367 = vmatmul.mubr.bf16.gmra.mrb[0].mxu0 %v1930
  %v5368 = vpop.f32.mrb[0].mxu0
  %v5369 = vadd.f32 %v5296, %v5368
  %v5370 = vpop.f32.mrb[0].mxu0
  %v5371 = vadd.f32 %v5298, %v5370
  %v5372 = vpop.f32.mrb[0].mxu0
  %v5373 = vadd.f32 %v5300, %v5372
  %v5374 = vpop.f32.mrb[0].mxu0
  %v5375 = vadd.f32 %v5302, %v5374
  %5376 = vmatprep.mubr.bf16.mxu0 %v1934
  %5377 = vmatmul.mubr.bf16.gmra.mrb[0].mxu0 %v1933
  %v5378 = vpop.f32.mrb[0].mxu0
  %v5379 = vadd.f32 %v5306, %v5378
  %v5380 = vpop.f32.mrb[0].mxu0
  %v5381 = vadd.f32 %v5308, %v5380
  %v5382 = vpop.f32.mrb[0].mxu0
  %v5383 = vadd.f32 %v5310, %v5382
  %v5384 = vpop.f32.mrb[0].mxu0
  %v5385 = vadd.f32 %v5312, %v5384
  %5386 = vdwg.mxu0
  %5387 = vmatprep.subr.bf16.mxu0 %v4365
  %5388 = vmatpush1.bf16.msra.mxu0 %v4364
  %5389 = vmatprep.subr.bf16.mxu0 %v4369
  %5390 = vmatpush1.bf16.msra.mxu0 %v4368
  %5391 = vmatprep.subr.bf16.mxu0 %v4373
  %5392 = vmatpush1.bf16.msra.mxu0 %v4372
  %5393 = vmatprep.subr.bf16.mxu0 %v4377
  %5394 = vmatpush1.bf16.msra.mxu0 %v4376
  %5395 = vmatprep.subr.bf16.mxu0 %v4381
  %5396 = vmatpush1.bf16.msra.mxu0 %v4380
  %5397 = vmatprep.subr.bf16.mxu0 %v4385
  %5398 = vmatpush1.bf16.msra.mxu0 %v4384
  %5399 = vmatprep.subr.bf16.mxu0 %v4389
  %5400 = vmatpush1.bf16.msra.mxu0 %v4388
  %5401 = vmatprep.subr.bf16.mxu0 %v4393
  %5402 = vmatpush1.bf16.msra.mxu0 %v4392
  %5403 = vmatprep.subr.bf16.mxu0 0
  %5404 = vmatpush1.bf16.msra.mxu0 0
  %5405 = vmatprep.subr.bf16.mxu0 0
  %5406 = vmatpush1.bf16.msra.mxu0 0
  %5407 = vmatprep.subr.bf16.mxu0 0
  %5408 = vmatpush1.bf16.msra.mxu0 0
  %5409 = vmatprep.subr.bf16.mxu0 0
  %5410 = vmatpush1.bf16.msra.mxu0 0
  %5411 = vmatprep.subr.bf16.mxu0 0
  %5412 = vmatpush1.bf16.msra.mxu0 0
  %5413 = vmatprep.subr.bf16.mxu0 0
  %5414 = vmatpush1.bf16.msra.mxu0 0
  %5415 = vmatprep.subr.bf16.mxu0 0
  %5416 = vmatpush1.bf16.msra.mxu0 0
  %5417 = vmatprep.subr.bf16.mxu0 0
  %5418 = vmatpush1.bf16.msra.mxu0 0
  %5419 = vmatprep.mubr.bf16.mxu0 0
  %5420 = vmatmul.mubr.bf16.gmra.mrb[0].mxu0 %v1926
  %v5421 = vpop.f32.mrb[0].mxu0
  %v5422 = vadd.f32 %v5349, %v5421
  %v5423 = vpop.f32.mrb[0].mxu0
  %v5424 = vadd.f32 %v5351, %v5423
  %v5425 = vpop.f32.mrb[0].mxu0
  %v5426 = vadd.f32 %v5353, %v5425
  %v5427 = vpop.f32.mrb[0].mxu0
  %v5428 = vadd.f32 %v5355, %v5427
  %5429 = vmatprep.mubr.bf16.mxu0 0
  %5430 = vmatmul.mubr.bf16.gmra.mrb[0].mxu0 %v1929
  %v5431 = vpop.f32.mrb[0].mxu0
  %v5432 = vadd.f32 %v5359, %v5431
  %v5433 = vpop.f32.mrb[0].mxu0
  %v5434 = vadd.f32 %v5361, %v5433
  %v5435 = vpop.f32.mrb[0].mxu0
  %v5436 = vadd.f32 %v5363, %v5435
  %v5437 = vpop.f32.mrb[0].mxu0
  %v5438 = vadd.f32 %v5365, %v5437
  %5439 = vmatprep.mubr.bf16.mxu0 0
  %5440 = vmatmul.mubr.bf16.gmra.mrb[0].mxu0 %v1932
  %v5441 = vpop.f32.mrb[0].mxu0
  %v5442 = vadd.f32 %v5369, %v5441
  %v5443 = vpop.f32.mrb[0].mxu0
  %v5444 = vadd.f32 %v5371, %v5443
  %v5445 = vpop.f32.mrb[0].mxu0
  %v5446 = vadd.f32 %v5373, %v5445
  %v5447 = vpop.f32.mrb[0].mxu0
  %v5448 = vadd.f32 %v5375, %v5447
  %5449 = vmatprep.mubr.bf16.mxu0 0
  %5450 = vmatmul.mubr.bf16.gmra.mrb[0].mxu0 %v1935
  %v5451 = vpop.f32.mrb[0].mxu0
  %v5452 = vadd.f32 %v5379, %v5451
  %v5453 = vpop.f32.mrb[0].mxu0
  %v5454 = vadd.f32 %v5381, %v5453
  %v5455 = vpop.f32.mrb[0].mxu0
  %v5456 = vadd.f32 %v5383, %v5455
  %v5457 = vpop.f32.mrb[0].mxu0
  %v5458 = vadd.f32 %v5385, %v5457
  %5459 = vdwg.mxu0
  %5460 = vmatprep.subr.bf16.mxu0 %v3919
  %5461 = vmatpush1.bf16.msra.mxu0 %v3918
  %5462 = vmatprep.subr.bf16.mxu0 %v3923
  %5463 = vmatpush1.bf16.msra.mxu0 %v3922
  %5464 = vmatprep.subr.bf16.mxu0 %v3927
  %5465 = vmatpush1.bf16.msra.mxu0 %v3926
  %5466 = vmatprep.subr.bf16.mxu0 %v3931
  %5467 = vmatpush1.bf16.msra.mxu0 %v3930
  %5468 = vmatprep.subr.bf16.mxu0 %v3935
  %5469 = vmatpush1.bf16.msra.mxu0 %v3934
  %5470 = vmatprep.subr.bf16.mxu0 %v3939
  %5471 = vmatpush1.bf16.msra.mxu0 %v3938
  %5472 = vmatprep.subr.bf16.mxu0 %v3943
  %5473 = vmatpush1.bf16.msra.mxu0 %v3942
  %5474 = vmatprep.subr.bf16.mxu0 %v3947
  %5475 = vmatpush1.bf16.msra.mxu0 %v3946
  %5476 = vmatprep.subr.bf16.mxu0 %v3951
  %5477 = vmatpush1.bf16.msra.mxu0 %v3950
  %5478 = vmatprep.subr.bf16.mxu0 %v3955
  %5479 = vmatpush1.bf16.msra.mxu0 %v3954
  %5480 = vmatprep.subr.bf16.mxu0 %v3959
  %5481 = vmatpush1.bf16.msra.mxu0 %v3958
  %5482 = vmatprep.subr.bf16.mxu0 %v3963
  %5483 = vmatpush1.bf16.msra.mxu0 %v3962
  %5484 = vmatprep.subr.bf16.mxu0 %v3967
  %5485 = vmatpush1.bf16.msra.mxu0 %v3966
  %5486 = vmatprep.subr.bf16.mxu0 %v3971
  %5487 = vmatpush1.bf16.msra.mxu0 %v3970
  %5488 = vmatprep.subr.bf16.mxu0 %v3975
  %5489 = vmatpush1.bf16.msra.mxu0 %v3974
  %5490 = vmatprep.subr.bf16.mxu0 %v3979
  %5491 = vmatpush1.bf16.msra.mxu0 %v3978
  %5492 = vmatprep.mubr.bf16.mxu0 %v1729
  %5493 = vmatmul.mubr.bf16.gmra.mrb[0].mxu0 %v1728
  %v5494 = vpop.f32.mrb[0].mxu0
  %v5495 = vadd.f32 0.0, %v5494
  %v5496 = vpop.f32.mrb[0].mxu0
  %v5497 = vadd.f32 0.0, %v5496
  %v5498 = vpop.f32.mrb[0].mxu0
  %v5499 = vadd.f32 0.0, %v5498
  %v5500 = vpop.f32.mrb[0].mxu0
  %v5501 = vadd.f32 0.0, %v5500
  %5502 = vmatprep.mubr.bf16.mxu0 %v1732
  %5503 = vmatmul.mubr.bf16.gmra.mrb[0].mxu0 %v1731
  %v5504 = vpop.f32.mrb[0].mxu0
  %v5505 = vadd.f32 0.0, %v5504
  %v5506 = vpop.f32.mrb[0].mxu0
  %v5507 = vadd.f32 0.0, %v5506
  %v5508 = vpop.f32.mrb[0].mxu0
  %v5509 = vadd.f32 0.0, %v5508
  %v5510 = vpop.f32.mrb[0].mxu0
  %v5511 = vadd.f32 0.0, %v5510
  %5512 = vmatprep.mubr.bf16.mxu0 %v1735
  %5513 = vmatmul.mubr.bf16.gmra.mrb[0].mxu0 %v1734
  %v5514 = vpop.f32.mrb[0].mxu0
  %v5515 = vadd.f32 0.0, %v5514
  %v5516 = vpop.f32.mrb[0].mxu0
  %v5517 = vadd.f32 0.0, %v5516
  %v5518 = vpop.f32.mrb[0].mxu0
  %v5519 = vadd.f32 0.0, %v5518
  %v5520 = vpop.f32.mrb[0].mxu0
  %v5521 = vadd.f32 0.0, %v5520
  %5522 = vmatprep.mubr.bf16.mxu0 %v1738
  %5523 = vmatmul.mubr.bf16.gmra.mrb[0].mxu0 %v1737
  %v5524 = vpop.f32.mrb[0].mxu0
  %v5525 = vadd.f32 0.0, %v5524
  %v5526 = vpop.f32.mrb[0].mxu0
  %v5527 = vadd.f32 0.0, %v5526
  %v5528 = vpop.f32.mrb[0].mxu0
  %v5529 = vadd.f32 0.0, %v5528
  %v5530 = vpop.f32.mrb[0].mxu0
  %v5531 = vadd.f32 0.0, %v5530
  %5532 = vdwg.mxu0
  %5533 = vmatprep.subr.bf16.mxu0 %v3983
  %5534 = vmatpush1.bf16.msra.mxu0 %v3982
  %5535 = vmatprep.subr.bf16.mxu0 %v3987
  %5536 = vmatpush1.bf16.msra.mxu0 %v3986
  %5537 = vmatprep.subr.bf16.mxu0 %v3991
  %5538 = vmatpush1.bf16.msra.mxu0 %v3990
  %5539 = vmatprep.subr.bf16.mxu0 %v3995
  %5540 = vmatpush1.bf16.msra.mxu0 %v3994
  %5541 = vmatprep.subr.bf16.mxu0 %v3999
  %5542 = vmatpush1.bf16.msra.mxu0 %v3998
  %5543 = vmatprep.subr.bf16.mxu0 %v4003
  %5544 = vmatpush1.bf16.msra.mxu0 %v4002
  %5545 = vmatprep.subr.bf16.mxu0 %v4007
  %5546 = vmatpush1.bf16.msra.mxu0 %v4006
  %5547 = vmatprep.subr.bf16.mxu0 %v4011
  %5548 = vmatpush1.bf16.msra.mxu0 %v4010
  %5549 = vmatprep.subr.bf16.mxu0 %v4015
  %5550 = vmatpush1.bf16.msra.mxu0 %v4014
  %5551 = vmatprep.subr.bf16.mxu0 %v4019
  %5552 = vmatpush1.bf16.msra.mxu0 %v4018
  %5553 = vmatprep.subr.bf16.mxu0 %v4023
  %5554 = vmatpush1.bf16.msra.mxu0 %v4022
  %5555 = vmatprep.subr.bf16.mxu0 %v4027
  %5556 = vmatpush1.bf16.msra.mxu0 %v4026
  %5557 = vmatprep.subr.bf16.mxu0 %v4031
  %5558 = vmatpush1.bf16.msra.mxu0 %v4030
  %5559 = vmatprep.subr.bf16.mxu0 %v4035
  %5560 = vmatpush1.bf16.msra.mxu0 %v4034
  %5561 = vmatprep.subr.bf16.mxu0 %v4039
  %5562 = vmatpush1.bf16.msra.mxu0 %v4038
  %5563 = vmatprep.subr.bf16.mxu0 %v4043
  %5564 = vmatpush1.bf16.msra.mxu0 %v4042
  %5565 = vmatprep.mubr.bf16.mxu0 %v1740
  %5566 = vmatmul.mubr.bf16.gmra.mrb[0].mxu0 %v1730
  %v5567 = vpop.f32.mrb[0].mxu0
  %v5568 = vadd.f32 %v5495, %v5567
  %v5569 = vpop.f32.mrb[0].mxu0
  %v5570 = vadd.f32 %v5497, %v5569
  %v5571 = vpop.f32.mrb[0].mxu0
  %v5572 = vadd.f32 %v5499, %v5571
  %v5573 = vpop.f32.mrb[0].mxu0
  %v5574 = vadd.f32 %v5501, %v5573
  %5575 = vmatprep.mubr.bf16.mxu0 %v1743
  %5576 = vmatmul.mubr.bf16.gmra.mrb[0].mxu0 %v1733
  %v5577 = vpop.f32.mrb[0].mxu0
  %v5578 = vadd.f32 %v5505, %v5577
  %v5579 = vpop.f32.mrb[0].mxu0
  %v5580 = vadd.f32 %v5507, %v5579
  %v5581 = vpop.f32.mrb[0].mxu0
  %v5582 = vadd.f32 %v5509, %v5581
  %v5583 = vpop.f32.mrb[0].mxu0
  %v5584 = vadd.f32 %v5511, %v5583
  %5585 = vmatprep.mubr.bf16.mxu0 %v1746
  %5586 = vmatmul.mubr.bf16.gmra.mrb[0].mxu0 %v1736
  %v5587 = vpop.f32.mrb[0].mxu0
  %v5588 = vadd.f32 %v5515, %v5587
  %v5589 = vpop.f32.mrb[0].mxu0
  %v5590 = vadd.f32 %v5517, %v5589
  %v5591 = vpop.f32.mrb[0].mxu0
  %v5592 = vadd.f32 %v5519, %v5591
  %v5593 = vpop.f32.mrb[0].mxu0
  %v5594 = vadd.f32 %v5521, %v5593
  %5595 = vmatprep.mubr.bf16.mxu0 %v1749
  %5596 = vmatmul.mubr.bf16.gmra.mrb[0].mxu0 %v1739
  %v5597 = vpop.f32.mrb[0].mxu0
  %v5598 = vadd.f32 %v5525, %v5597
  %v5599 = vpop.f32.mrb[0].mxu0
  %v5600 = vadd.f32 %v5527, %v5599
  %v5601 = vpop.f32.mrb[0].mxu0
  %v5602 = vadd.f32 %v5529, %v5601
  %v5603 = vpop.f32.mrb[0].mxu0
  %v5604 = vadd.f32 %v5531, %v5603
  %5605 = vdwg.mxu0
  %5606 = vmatprep.subr.bf16.mxu0 %v4047
  %5607 = vmatpush1.bf16.msra.mxu0 %v4046
  %5608 = vmatprep.subr.bf16.mxu0 %v4051
  %5609 = vmatpush1.bf16.msra.mxu0 %v4050
  %5610 = vmatprep.subr.bf16.mxu0 %v4055
  %5611 = vmatpush1.bf16.msra.mxu0 %v4054
  %5612 = vmatprep.subr.bf16.mxu0 %v4059
  %5613 = vmatpush1.bf16.msra.mxu0 %v4058
  %5614 = vmatprep.subr.bf16.mxu0 %v4063
  %5615 = vmatpush1.bf16.msra.mxu0 %v4062
  %5616 = vmatprep.subr.bf16.mxu0 %v4067
  %5617 = vmatpush1.bf16.msra.mxu0 %v4066
  %5618 = vmatprep.subr.bf16.mxu0 %v4071
  %5619 = vmatpush1.bf16.msra.mxu0 %v4070
  %5620 = vmatprep.subr.bf16.mxu0 %v4075
  %5621 = vmatpush1.bf16.msra.mxu0 %v4074
  %5622 = vmatprep.subr.bf16.mxu0 %v4079
  %5623 = vmatpush1.bf16.msra.mxu0 %v4078
  %5624 = vmatprep.subr.bf16.mxu0 %v4083
  %5625 = vmatpush1.bf16.msra.mxu0 %v4082
  %5626 = vmatprep.subr.bf16.mxu0 %v4087
  %5627 = vmatpush1.bf16.msra.mxu0 %v4086
  %5628 = vmatprep.subr.bf16.mxu0 %v4091
  %5629 = vmatpush1.bf16.msra.mxu0 %v4090
  %5630 = vmatprep.subr.bf16.mxu0 %v4095
  %5631 = vmatpush1.bf16.msra.mxu0 %v4094
  %5632 = vmatprep.subr.bf16.mxu0 %v4099
  %5633 = vmatpush1.bf16.msra.mxu0 %v4098
  %5634 = vmatprep.subr.bf16.mxu0 %v4103
  %5635 = vmatpush1.bf16.msra.mxu0 %v4102
  %5636 = vmatprep.subr.bf16.mxu0 %v4107
  %5637 = vmatpush1.bf16.msra.mxu0 %v4106
  %5638 = vmatprep.mubr.bf16.mxu0 %v1742
  %5639 = vmatmul.mubr.bf16.gmra.mrb[0].mxu0 %v1741
  %v5640 = vpop.f32.mrb[0].mxu0
  %v5641 = vadd.f32 %v5568, %v5640
  %v5642 = vpop.f32.mrb[0].mxu0
  %v5643 = vadd.f32 %v5570, %v5642
  %v5644 = vpop.f32.mrb[0].mxu0
  %v5645 = vadd.f32 %v5572, %v5644
  %v5646 = vpop.f32.mrb[0].mxu0
  %v5647 = vadd.f32 %v5574, %v5646
  %5648 = vmatprep.mubr.bf16.mxu0 %v1745
  %5649 = vmatmul.mubr.bf16.gmra.mrb[0].mxu0 %v1744
  %v5650 = vpop.f32.mrb[0].mxu0
  %v5651 = vadd.f32 %v5578, %v5650
  %v5652 = vpop.f32.mrb[0].mxu0
  %v5653 = vadd.f32 %v5580, %v5652
  %v5654 = vpop.f32.mrb[0].mxu0
  %v5655 = vadd.f32 %v5582, %v5654
  %v5656 = vpop.f32.mrb[0].mxu0
  %v5657 = vadd.f32 %v5584, %v5656
  %5658 = vmatprep.mubr.bf16.mxu0 %v1748
  %5659 = vmatmul.mubr.bf16.gmra.mrb[0].mxu0 %v1747
  %v5660 = vpop.f32.mrb[0].mxu0
  %v5661 = vadd.f32 %v5588, %v5660
  %v5662 = vpop.f32.mrb[0].mxu0
  %v5663 = vadd.f32 %v5590, %v5662
  %v5664 = vpop.f32.mrb[0].mxu0
  %v5665 = vadd.f32 %v5592, %v5664
  %v5666 = vpop.f32.mrb[0].mxu0
  %v5667 = vadd.f32 %v5594, %v5666
  %5668 = vmatprep.mubr.bf16.mxu0 %v1751
  %5669 = vmatmul.mubr.bf16.gmra.mrb[0].mxu0 %v1750
  %v5670 = vpop.f32.mrb[0].mxu0
  %v5671 = vadd.f32 %v5598, %v5670
  %v5672 = vpop.f32.mrb[0].mxu0
  %v5673 = vadd.f32 %v5600, %v5672
  %v5674 = vpop.f32.mrb[0].mxu0
  %v5675 = vadd.f32 %v5602, %v5674
  %v5676 = vpop.f32.mrb[0].mxu0
  %v5677 = vadd.f32 %v5604, %v5676
  %5678 = vdwg.mxu0
  %5679 = vmatprep.subr.bf16.mxu0 %v4111
  %5680 = vmatpush1.bf16.msra.mxu0 %v4110
  %5681 = vmatprep.subr.bf16.mxu0 %v4115
  %5682 = vmatpush1.bf16.msra.mxu0 %v4114
  %5683 = vmatprep.subr.bf16.mxu0 %v4119
  %5684 = vmatpush1.bf16.msra.mxu0 %v4118
  %5685 = vmatprep.subr.bf16.mxu0 %v4123
  %5686 = vmatpush1.bf16.msra.mxu0 %v4122
  %5687 = vmatprep.subr.bf16.mxu0 %v4127
  %5688 = vmatpush1.bf16.msra.mxu0 %v4126
  %5689 = vmatprep.subr.bf16.mxu0 %v4131
  %5690 = vmatpush1.bf16.msra.mxu0 %v4130
  %5691 = vmatprep.subr.bf16.mxu0 %v4135
  %5692 = vmatpush1.bf16.msra.mxu0 %v4134
  %5693 = vmatprep.subr.bf16.mxu0 %v4139
  %5694 = vmatpush1.bf16.msra.mxu0 %v4138
  %5695 = vmatprep.subr.bf16.mxu0 %v4143
  %5696 = vmatpush1.bf16.msra.mxu0 %v4142
  %5697 = vmatprep.subr.bf16.mxu0 %v4147
  %5698 = vmatpush1.bf16.msra.mxu0 %v4146
  %5699 = vmatprep.subr.bf16.mxu0 %v4151
  %5700 = vmatpush1.bf16.msra.mxu0 %v4150
  %5701 = vmatprep.subr.bf16.mxu0 %v4155
  %5702 = vmatpush1.bf16.msra.mxu0 %v4154
  %5703 = vmatprep.subr.bf16.mxu0 %v4159
  %5704 = vmatpush1.bf16.msra.mxu0 %v4158
  %5705 = vmatprep.subr.bf16.mxu0 %v4163
  %5706 = vmatpush1.bf16.msra.mxu0 %v4162
  %5707 = vmatprep.subr.bf16.mxu0 %v4167
  %5708 = vmatpush1.bf16.msra.mxu0 %v4166
  %5709 = vmatprep.subr.bf16.mxu0 %v4171
  %5710 = vmatpush1.bf16.msra.mxu0 %v4170
  %5711 = vmatprep.mubr.bf16.mxu0 %v1804
  %5712 = vmatmul.mubr.bf16.gmra.mrb[0].mxu0 %v1803
  %v5713 = vpop.f32.mrb[0].mxu0
  %v5714 = vadd.f32 %v5641, %v5713
  %v5715 = vpop.f32.mrb[0].mxu0
  %v5716 = vadd.f32 %v5643, %v5715
  %v5717 = vpop.f32.mrb[0].mxu0
  %v5718 = vadd.f32 %v5645, %v5717
  %v5719 = vpop.f32.mrb[0].mxu0
  %v5720 = vadd.f32 %v5647, %v5719
  %5721 = vmatprep.mubr.bf16.mxu0 %v1807
  %5722 = vmatmul.mubr.bf16.gmra.mrb[0].mxu0 %v1806
  %v5723 = vpop.f32.mrb[0].mxu0
  %v5724 = vadd.f32 %v5651, %v5723
  %v5725 = vpop.f32.mrb[0].mxu0
  %v5726 = vadd.f32 %v5653, %v5725
  %v5727 = vpop.f32.mrb[0].mxu0
  %v5728 = vadd.f32 %v5655, %v5727
  %v5729 = vpop.f32.mrb[0].mxu0
  %v5730 = vadd.f32 %v5657, %v5729
  %5731 = vmatprep.mubr.bf16.mxu0 %v1810
  %5732 = vmatmul.mubr.bf16.gmra.mrb[0].mxu0 %v1809
  %v5733 = vpop.f32.mrb[0].mxu0
  %v5734 = vadd.f32 %v5661, %v5733
  %v5735 = vpop.f32.mrb[0].mxu0
  %v5736 = vadd.f32 %v5663, %v5735
  %v5737 = vpop.f32.mrb[0].mxu0
  %v5738 = vadd.f32 %v5665, %v5737
  %v5739 = vpop.f32.mrb[0].mxu0
  %v5740 = vadd.f32 %v5667, %v5739
  %5741 = vmatprep.mubr.bf16.mxu0 %v1813
  %5742 = vmatmul.mubr.bf16.gmra.mrb[0].mxu0 %v1812
  %v5743 = vpop.f32.mrb[0].mxu0
  %v5744 = vadd.f32 %v5671, %v5743
  %v5745 = vpop.f32.mrb[0].mxu0
  %v5746 = vadd.f32 %v5673, %v5745
  %v5747 = vpop.f32.mrb[0].mxu0
  %v5748 = vadd.f32 %v5675, %v5747
  %v5749 = vpop.f32.mrb[0].mxu0
  %v5750 = vadd.f32 %v5677, %v5749
  %5751 = vdwg.mxu0
  %5752 = vmatprep.subr.bf16.mxu0 %v4175
  %5753 = vmatpush1.bf16.msra.mxu0 %v4174
  %5754 = vmatprep.subr.bf16.mxu0 %v4179
  %5755 = vmatpush1.bf16.msra.mxu0 %v4178
  %5756 = vmatprep.subr.bf16.mxu0 %v4183
  %5757 = vmatpush1.bf16.msra.mxu0 %v4182
  %5758 = vmatprep.subr.bf16.mxu0 %v4187
  %5759 = vmatpush1.bf16.msra.mxu0 %v4186
  %5760 = vmatprep.subr.bf16.mxu0 %v4191
  %5761 = vmatpush1.bf16.msra.mxu0 %v4190
  %5762 = vmatprep.subr.bf16.mxu0 %v4195
  %5763 = vmatpush1.bf16.msra.mxu0 %v4194
  %5764 = vmatprep.subr.bf16.mxu0 %v4199
  %5765 = vmatpush1.bf16.msra.mxu0 %v4198
  %5766 = vmatprep.subr.bf16.mxu0 %v4203
  %5767 = vmatpush1.bf16.msra.mxu0 %v4202
  %5768 = vmatprep.subr.bf16.mxu0 %v4207
  %5769 = vmatpush1.bf16.msra.mxu0 %v4206
  %5770 = vmatprep.subr.bf16.mxu0 %v4211
  %5771 = vmatpush1.bf16.msra.mxu0 %v4210
  %5772 = vmatprep.subr.bf16.mxu0 %v4215
  %5773 = vmatpush1.bf16.msra.mxu0 %v4214
  %5774 = vmatprep.subr.bf16.mxu0 %v4219
  %5775 = vmatpush1.bf16.msra.mxu0 %v4218
  %5776 = vmatprep.subr.bf16.mxu0 %v4223
  %5777 = vmatpush1.bf16.msra.mxu0 %v4222
  %5778 = vmatprep.subr.bf16.mxu0 %v4227
  %5779 = vmatpush1.bf16.msra.mxu0 %v4226
  %5780 = vmatprep.subr.bf16.mxu0 %v4231
  %5781 = vmatpush1.bf16.msra.mxu0 %v4230
  %5782 = vmatprep.subr.bf16.mxu0 %v4235
  %5783 = vmatpush1.bf16.msra.mxu0 %v4234
  %5784 = vmatprep.mubr.bf16.mxu0 %v1863
  %5785 = vmatmul.mubr.bf16.gmra.mrb[0].mxu0 %v1805
  %v5786 = vpop.f32.mrb[0].mxu0
  %v5787 = vadd.f32 %v5714, %v5786
  %v5788 = vpop.f32.mrb[0].mxu0
  %v5789 = vadd.f32 %v5716, %v5788
  %v5790 = vpop.f32.mrb[0].mxu0
  %v5791 = vadd.f32 %v5718, %v5790
  %v5792 = vpop.f32.mrb[0].mxu0
  %v5793 = vadd.f32 %v5720, %v5792
  %5794 = vmatprep.mubr.bf16.mxu0 %v1866
  %5795 = vmatmul.mubr.bf16.gmra.mrb[0].mxu0 %v1808
  %v5796 = vpop.f32.mrb[0].mxu0
  %v5797 = vadd.f32 %v5724, %v5796
  %v5798 = vpop.f32.mrb[0].mxu0
  %v5799 = vadd.f32 %v5726, %v5798
  %v5800 = vpop.f32.mrb[0].mxu0
  %v5801 = vadd.f32 %v5728, %v5800
  %v5802 = vpop.f32.mrb[0].mxu0
  %v5803 = vadd.f32 %v5730, %v5802
  %5804 = vmatprep.mubr.bf16.mxu0 %v1869
  %5805 = vmatmul.mubr.bf16.gmra.mrb[0].mxu0 %v1811
  %v5806 = vpop.f32.mrb[0].mxu0
  %v5807 = vadd.f32 %v5734, %v5806
  %v5808 = vpop.f32.mrb[0].mxu0
  %v5809 = vadd.f32 %v5736, %v5808
  %v5810 = vpop.f32.mrb[0].mxu0
  %v5811 = vadd.f32 %v5738, %v5810
  %v5812 = vpop.f32.mrb[0].mxu0
  %v5813 = vadd.f32 %v5740, %v5812
  %5814 = vmatprep.mubr.bf16.mxu0 %v1872
  %5815 = vmatmul.mubr.bf16.gmra.mrb[0].mxu0 %v1814
  %v5816 = vpop.f32.mrb[0].mxu0
  %v5817 = vadd.f32 %v5744, %v5816
  %v5818 = vpop.f32.mrb[0].mxu0
  %v5819 = vadd.f32 %v5746, %v5818
  %v5820 = vpop.f32.mrb[0].mxu0
  %v5821 = vadd.f32 %v5748, %v5820
  %v5822 = vpop.f32.mrb[0].mxu0
  %v5823 = vadd.f32 %v5750, %v5822
  %5824 = vdwg.mxu0
  %5825 = vmatprep.subr.bf16.mxu0 %v4239
  %5826 = vmatpush1.bf16.msra.mxu0 %v4238
  %5827 = vmatprep.subr.bf16.mxu0 %v4243
  %5828 = vmatpush1.bf16.msra.mxu0 %v4242
  %5829 = vmatprep.subr.bf16.mxu0 %v4247
  %5830 = vmatpush1.bf16.msra.mxu0 %v4246
  %5831 = vmatprep.subr.bf16.mxu0 %v4251
  %5832 = vmatpush1.bf16.msra.mxu0 %v4250
  %5833 = vmatprep.subr.bf16.mxu0 %v4255
  %5834 = vmatpush1.bf16.msra.mxu0 %v4254
  %5835 = vmatprep.subr.bf16.mxu0 %v4259
  %5836 = vmatpush1.bf16.msra.mxu0 %v4258
  %5837 = vmatprep.subr.bf16.mxu0 %v4263
  %5838 = vmatpush1.bf16.msra.mxu0 %v4262
  %5839 = vmatprep.subr.bf16.mxu0 %v4267
  %5840 = vmatpush1.bf16.msra.mxu0 %v4266
  %5841 = vmatprep.subr.bf16.mxu0 %v4271
  %5842 = vmatpush1.bf16.msra.mxu0 %v4270
  %5843 = vmatprep.subr.bf16.mxu0 %v4275
  %5844 = vmatpush1.bf16.msra.mxu0 %v4274
  %5845 = vmatprep.subr.bf16.mxu0 %v4279
  %5846 = vmatpush1.bf16.msra.mxu0 %v4278
  %5847 = vmatprep.subr.bf16.mxu0 %v4283
  %5848 = vmatpush1.bf16.msra.mxu0 %v4282
  %5849 = vmatprep.subr.bf16.mxu0 %v4287
  %5850 = vmatpush1.bf16.msra.mxu0 %v4286
  %5851 = vmatprep.subr.bf16.mxu0 %v4291
  %5852 = vmatpush1.bf16.msra.mxu0 %v4290
  %5853 = vmatprep.subr.bf16.mxu0 %v4295
  %5854 = vmatpush1.bf16.msra.mxu0 %v4294
  %5855 = vmatprep.subr.bf16.mxu0 %v4299
  %5856 = vmatpush1.bf16.msra.mxu0 %v4298
  %5857 = vmatprep.mubr.bf16.mxu0 %v1865
  %5858 = vmatmul.mubr.bf16.gmra.mrb[0].mxu0 %v1864
  %v5859 = vpop.f32.mrb[0].mxu0
  %v5860 = vadd.f32 %v5787, %v5859
  %v5861 = vpop.f32.mrb[0].mxu0
  %v5862 = vadd.f32 %v5789, %v5861
  %v5863 = vpop.f32.mrb[0].mxu0
  %v5864 = vadd.f32 %v5791, %v5863
  %v5865 = vpop.f32.mrb[0].mxu0
  %v5866 = vadd.f32 %v5793, %v5865
  %5867 = vmatprep.mubr.bf16.mxu0 %v1868
  %5868 = vmatmul.mubr.bf16.gmra.mrb[0].mxu0 %v1867
  %v5869 = vpop.f32.mrb[0].mxu0
  %v5870 = vadd.f32 %v5797, %v5869
  %v5871 = vpop.f32.mrb[0].mxu0
  %v5872 = vadd.f32 %v5799, %v5871
  %v5873 = vpop.f32.mrb[0].mxu0
  %v5874 = vadd.f32 %v5801, %v5873
  %v5875 = vpop.f32.mrb[0].mxu0
  %v5876 = vadd.f32 %v5803, %v5875
  %5877 = vmatprep.mubr.bf16.mxu0 %v1871
  %5878 = vmatmul.mubr.bf16.gmra.mrb[0].mxu0 %v1870
  %v5879 = vpop.f32.mrb[0].mxu0
  %v5880 = vadd.f32 %v5807, %v5879
  %v5881 = vpop.f32.mrb[0].mxu0
  %v5882 = vadd.f32 %v5809, %v5881
  %v5883 = vpop.f32.mrb[0].mxu0
  %v5884 = vadd.f32 %v5811, %v5883
  %v5885 = vpop.f32.mrb[0].mxu0
  %v5886 = vadd.f32 %v5813, %v5885
  %5887 = vmatprep.mubr.bf16.mxu0 %v1874
  %5888 = vmatmul.mubr.bf16.gmra.mrb[0].mxu0 %v1873
  %v5889 = vpop.f32.mrb[0].mxu0
  %v5890 = vadd.f32 %v5817, %v5889
  %v5891 = vpop.f32.mrb[0].mxu0
  %v5892 = vadd.f32 %v5819, %v5891
  %v5893 = vpop.f32.mrb[0].mxu0
  %v5894 = vadd.f32 %v5821, %v5893
  %v5895 = vpop.f32.mrb[0].mxu0
  %v5896 = vadd.f32 %v5823, %v5895
  %5897 = vdwg.mxu0
  %5898 = vmatprep.subr.bf16.mxu0 %v4303
  %5899 = vmatpush1.bf16.msra.mxu0 %v4302
  %5900 = vmatprep.subr.bf16.mxu0 %v4307
  %5901 = vmatpush1.bf16.msra.mxu0 %v4306
  %5902 = vmatprep.subr.bf16.mxu0 %v4311
  %5903 = vmatpush1.bf16.msra.mxu0 %v4310
  %5904 = vmatprep.subr.bf16.mxu0 %v4315
  %5905 = vmatpush1.bf16.msra.mxu0 %v4314
  %5906 = vmatprep.subr.bf16.mxu0 %v4319
  %5907 = vmatpush1.bf16.msra.mxu0 %v4318
  %5908 = vmatprep.subr.bf16.mxu0 %v4323
  %5909 = vmatpush1.bf16.msra.mxu0 %v4322
  %5910 = vmatprep.subr.bf16.mxu0 %v4327
  %5911 = vmatpush1.bf16.msra.mxu0 %v4326
  %5912 = vmatprep.subr.bf16.mxu0 %v4331
  %5913 = vmatpush1.bf16.msra.mxu0 %v4330
  %5914 = vmatprep.subr.bf16.mxu0 %v4335
  %5915 = vmatpush1.bf16.msra.mxu0 %v4334
  %5916 = vmatprep.subr.bf16.mxu0 %v4339
  %5917 = vmatpush1.bf16.msra.mxu0 %v4338
  %5918 = vmatprep.subr.bf16.mxu0 %v4343
  %5919 = vmatpush1.bf16.msra.mxu0 %v4342
  %5920 = vmatprep.subr.bf16.mxu0 %v4347
  %5921 = vmatpush1.bf16.msra.mxu0 %v4346
  %5922 = vmatprep.subr.bf16.mxu0 %v4351
  %5923 = vmatpush1.bf16.msra.mxu0 %v4350
  %5924 = vmatprep.subr.bf16.mxu0 %v4355
  %5925 = vmatpush1.bf16.msra.mxu0 %v4354
  %5926 = vmatprep.subr.bf16.mxu0 %v4359
  %5927 = vmatpush1.bf16.msra.mxu0 %v4358
  %5928 = vmatprep.subr.bf16.mxu0 %v4363
  %5929 = vmatpush1.bf16.msra.mxu0 %v4362
  %5930 = vmatprep.mubr.bf16.mxu0 %v1925
  %5931 = vmatmul.mubr.bf16.gmra.mrb[0].mxu0 %v1924
  %v5932 = vpop.f32.mrb[0].mxu0
  %v5933 = vadd.f32 %v5860, %v5932
  %v5934 = vpop.f32.mrb[0].mxu0
  %v5935 = vadd.f32 %v5862, %v5934
  %v5936 = vpop.f32.mrb[0].mxu0
  %v5937 = vadd.f32 %v5864, %v5936
  %v5938 = vpop.f32.mrb[0].mxu0
  %v5939 = vadd.f32 %v5866, %v5938
  %5940 = vmatprep.mubr.bf16.mxu0 %v1928
  %5941 = vmatmul.mubr.bf16.gmra.mrb[0].mxu0 %v1927
  %v5942 = vpop.f32.mrb[0].mxu0
  %v5943 = vadd.f32 %v5870, %v5942
  %v5944 = vpop.f32.mrb[0].mxu0
  %v5945 = vadd.f32 %v5872, %v5944
  %v5946 = vpop.f32.mrb[0].mxu0
  %v5947 = vadd.f32 %v5874, %v5946
  %v5948 = vpop.f32.mrb[0].mxu0
  %v5949 = vadd.f32 %v5876, %v5948
  %5950 = vmatprep.mubr.bf16.mxu0 %v1931
  %5951 = vmatmul.mubr.bf16.gmra.mrb[0].mxu0 %v1930
  %v5952 = vpop.f32.mrb[0].mxu0
  %v5953 = vadd.f32 %v5880, %v5952
  %v5954 = vpop.f32.mrb[0].mxu0
  %v5955 = vadd.f32 %v5882, %v5954
  %v5956 = vpop.f32.mrb[0].mxu0
  %v5957 = vadd.f32 %v5884, %v5956
  %v5958 = vpop.f32.mrb[0].mxu0
  %v5959 = vadd.f32 %v5886, %v5958
  %5960 = vmatprep.mubr.bf16.mxu0 %v1934
  %5961 = vmatmul.mubr.bf16.gmra.mrb[0].mxu0 %v1933
  %v5962 = vpop.f32.mrb[0].mxu0
  %v5963 = vadd.f32 %v5890, %v5962
  %v5964 = vpop.f32.mrb[0].mxu0
  %v5965 = vadd.f32 %v5892, %v5964
  %v5966 = vpop.f32.mrb[0].mxu0
  %v5967 = vadd.f32 %v5894, %v5966
  %v5968 = vpop.f32.mrb[0].mxu0
  %v5969 = vadd.f32 %v5896, %v5968
  %5970 = vdwg.mxu0
  %5971 = vmatprep.subr.bf16.mxu0 %v4367
  %5972 = vmatpush1.bf16.msra.mxu0 %v4366
  %5973 = vmatprep.subr.bf16.mxu0 %v4371
  %5974 = vmatpush1.bf16.msra.mxu0 %v4370
  %5975 = vmatprep.subr.bf16.mxu0 %v4375
  %5976 = vmatpush1.bf16.msra.mxu0 %v4374
  %5977 = vmatprep.subr.bf16.mxu0 %v4379
  %5978 = vmatpush1.bf16.msra.mxu0 %v4378
  %5979 = vmatprep.subr.bf16.mxu0 %v4383
  %5980 = vmatpush1.bf16.msra.mxu0 %v4382
  %5981 = vmatprep.subr.bf16.mxu0 %v4387
  %5982 = vmatpush1.bf16.msra.mxu0 %v4386
  %5983 = vmatprep.subr.bf16.mxu0 %v4391
  %5984 = vmatpush1.bf16.msra.mxu0 %v4390
  %5985 = vmatprep.subr.bf16.mxu0 %v4395
  %5986 = vmatpush1.bf16.msra.mxu0 %v4394
  %5987 = vmatprep.subr.bf16.mxu0 0
  %5988 = vmatpush1.bf16.msra.mxu0 0
  %5989 = vmatprep.subr.bf16.mxu0 0
  %5990 = vmatpush1.bf16.msra.mxu0 0
  %5991 = vmatprep.subr.bf16.mxu0 0
  %5992 = vmatpush1.bf16.msra.mxu0 0
  %5993 = vmatprep.subr.bf16.mxu0 0
  %5994 = vmatpush1.bf16.msra.mxu0 0
  %5995 = vmatprep.subr.bf16.mxu0 0
  %5996 = vmatpush1.bf16.msra.mxu0 0
  %5997 = vmatprep.subr.bf16.mxu0 0
  %5998 = vmatpush1.bf16.msra.mxu0 0
  %5999 = vmatprep.subr.bf16.mxu0 0
  %6000 = vmatpush1.bf16.msra.mxu0 0
  %6001 = vmatprep.subr.bf16.mxu0 0
  %6002 = vmatpush1.bf16.msra.mxu0 0
  %6003 = vmatprep.mubr.bf16.mxu0 0
  %6004 = vmatmul.mubr.bf16.gmra.mrb[0].mxu0 %v1926
  %v6005 = vpop.f32.mrb[0].mxu0
  %v6006 = vadd.f32 %v5933, %v6005
  %v6007 = vpop.f32.mrb[0].mxu0
  %v6008 = vadd.f32 %v5935, %v6007
  %v6009 = vpop.f32.mrb[0].mxu0
  %v6010 = vadd.f32 %v5937, %v6009
  %v6011 = vpop.f32.mrb[0].mxu0
  %v6012 = vadd.f32 %v5939, %v6011
  %6013 = vmatprep.mubr.bf16.mxu0 0
  %6014 = vmatmul.mubr.bf16.gmra.mrb[0].mxu0 %v1929
  %v6015 = vpop.f32.mrb[0].mxu0
  %v6016 = vadd.f32 %v5943, %v6015
  %v6017 = vpop.f32.mrb[0].mxu0
  %v6018 = vadd.f32 %v5945, %v6017
  %v6019 = vpop.f32.mrb[0].mxu0
  %v6020 = vadd.f32 %v5947, %v6019
  %v6021 = vpop.f32.mrb[0].mxu0
  %v6022 = vadd.f32 %v5949, %v6021
  %6023 = vmatprep.mubr.bf16.mxu0 0
  %6024 = vmatmul.mubr.bf16.gmra.mrb[0].mxu0 %v1932
  %v6025 = vpop.f32.mrb[0].mxu0
  %v6026 = vadd.f32 %v5953, %v6025
  %v6027 = vpop.f32.mrb[0].mxu0
  %v6028 = vadd.f32 %v5955, %v6027
  %v6029 = vpop.f32.mrb[0].mxu0
  %v6030 = vadd.f32 %v5957, %v6029
  %v6031 = vpop.f32.mrb[0].mxu0
  %v6032 = vadd.f32 %v5959, %v6031
  %6033 = vmatprep.mubr.bf16.mxu0 0
  %6034 = vmatmul.mubr.bf16.gmra.mrb[0].mxu0 %v1935
  %v6035 = vpop.f32.mrb[0].mxu0
  %v6036 = vadd.f32 %v5963, %v6035
  %v6037 = vpop.f32.mrb[0].mxu0
  %v6038 = vadd.f32 %v5965, %v6037
  %v6039 = vpop.f32.mrb[0].mxu0
  %v6040 = vadd.f32 %v5967, %v6039
  %v6041 = vpop.f32.mrb[0].mxu0
  %v6042 = vadd.f32 %v5969, %v6041
  %6043 = vdwg.mxu0
  %6044 = vmatprep.subr.bf16.mxu0 %v3917
  %6045 = vmatpush1.bf16.msra.mxu0 %v3916
  %6046 = vmatprep.subr.bf16.mxu0 %v3921
  %6047 = vmatpush1.bf16.msra.mxu0 %v3920
  %6048 = vmatprep.subr.bf16.mxu0 %v3925
  %6049 = vmatpush1.bf16.msra.mxu0 %v3924
  %6050 = vmatprep.subr.bf16.mxu0 %v3929
  %6051 = vmatpush1.bf16.msra.mxu0 %v3928
  %6052 = vmatprep.subr.bf16.mxu0 %v3933
  %6053 = vmatpush1.bf16.msra.mxu0 %v3932
  %6054 = vmatprep.subr.bf16.mxu0 %v3937
  %6055 = vmatpush1.bf16.msra.mxu0 %v3936
  %6056 = vmatprep.subr.bf16.mxu0 %v3941
  %6057 = vmatpush1.bf16.msra.mxu0 %v3940
  %6058 = vmatprep.subr.bf16.mxu0 %v3945
  %6059 = vmatpush1.bf16.msra.mxu0 %v3944
  %6060 = vmatprep.subr.bf16.mxu0 %v3949
  %6061 = vmatpush1.bf16.msra.mxu0 %v3948
  %6062 = vmatprep.subr.bf16.mxu0 %v3953
  %6063 = vmatpush1.bf16.msra.mxu0 %v3952
  %6064 = vmatprep.subr.bf16.mxu0 %v3957
  %6065 = vmatpush1.bf16.msra.mxu0 %v3956
  %6066 = vmatprep.subr.bf16.mxu0 %v3961
  %6067 = vmatpush1.bf16.msra.mxu0 %v3960
  %6068 = vmatprep.subr.bf16.mxu0 %v3965
  %6069 = vmatpush1.bf16.msra.mxu0 %v3964
  %6070 = vmatprep.subr.bf16.mxu0 %v3969
  %6071 = vmatpush1.bf16.msra.mxu0 %v3968
  %6072 = vmatprep.subr.bf16.mxu0 %v3973
  %6073 = vmatpush1.bf16.msra.mxu0 %v3972
  %6074 = vmatprep.subr.bf16.mxu0 %v3977
  %6075 = vmatpush1.bf16.msra.mxu0 %v3976
  %6076 = vmatprep.mubr.bf16.mxu0 %v1741
  %6077 = vmatmul.mubr.bf16.gmra.mrb[0].mxu0 %v1740
  %v6078 = vpop.f32.mrb[0].mxu0
  %v6079 = vadd.f32 0.0, %v6078
  %v6080 = vpop.f32.mrb[0].mxu0
  %v6081 = vadd.f32 0.0, %v6080
  %v6082 = vpop.f32.mrb[0].mxu0
  %v6083 = vadd.f32 0.0, %v6082
  %v6084 = vpop.f32.mrb[0].mxu0
  %v6085 = vadd.f32 0.0, %v6084
  %6086 = vmatprep.mubr.bf16.mxu0 %v1744
  %6087 = vmatmul.mubr.bf16.gmra.mrb[0].mxu0 %v1743
  %v6088 = vpop.f32.mrb[0].mxu0
  %v6089 = vadd.f32 0.0, %v6088
  %v6090 = vpop.f32.mrb[0].mxu0
  %v6091 = vadd.f32 0.0, %v6090
  %v6092 = vpop.f32.mrb[0].mxu0
  %v6093 = vadd.f32 0.0, %v6092
  %v6094 = vpop.f32.mrb[0].mxu0
  %v6095 = vadd.f32 0.0, %v6094
  %6096 = vmatprep.mubr.bf16.mxu0 %v1747
  %6097 = vmatmul.mubr.bf16.gmra.mrb[0].mxu0 %v1746
  %v6098 = vpop.f32.mrb[0].mxu0
  %v6099 = vadd.f32 0.0, %v6098
  %v6100 = vpop.f32.mrb[0].mxu0
  %v6101 = vadd.f32 0.0, %v6100
  %v6102 = vpop.f32.mrb[0].mxu0
  %v6103 = vadd.f32 0.0, %v6102
  %v6104 = vpop.f32.mrb[0].mxu0
  %v6105 = vadd.f32 0.0, %v6104
  %6106 = vmatprep.mubr.bf16.mxu0 %v1750
  %6107 = vmatmul.mubr.bf16.gmra.mrb[0].mxu0 %v1749
  %v6108 = vpop.f32.mrb[0].mxu0
  %v6109 = vadd.f32 0.0, %v6108
  %v6110 = vpop.f32.mrb[0].mxu0
  %v6111 = vadd.f32 0.0, %v6110
  %v6112 = vpop.f32.mrb[0].mxu0
  %v6113 = vadd.f32 0.0, %v6112
  %v6114 = vpop.f32.mrb[0].mxu0
  %v6115 = vadd.f32 0.0, %v6114
  %6116 = vdwg.mxu0
  %6117 = vmatprep.subr.bf16.mxu0 %v3981
  %6118 = vmatpush1.bf16.msra.mxu0 %v3980
  %6119 = vmatprep.subr.bf16.mxu0 %v3985
  %6120 = vmatpush1.bf16.msra.mxu0 %v3984
  %6121 = vmatprep.subr.bf16.mxu0 %v3989
  %6122 = vmatpush1.bf16.msra.mxu0 %v3988
  %6123 = vmatprep.subr.bf16.mxu0 %v3993
  %6124 = vmatpush1.bf16.msra.mxu0 %v3992
  %6125 = vmatprep.subr.bf16.mxu0 %v3997
  %6126 = vmatpush1.bf16.msra.mxu0 %v3996
  %6127 = vmatprep.subr.bf16.mxu0 %v4001
  %6128 = vmatpush1.bf16.msra.mxu0 %v4000
  %6129 = vmatprep.subr.bf16.mxu0 %v4005
  %6130 = vmatpush1.bf16.msra.mxu0 %v4004
  %6131 = vmatprep.subr.bf16.mxu0 %v4009
  %6132 = vmatpush1.bf16.msra.mxu0 %v4008
  %6133 = vmatprep.subr.bf16.mxu0 %v4013
  %6134 = vmatpush1.bf16.msra.mxu0 %v4012
  %6135 = vmatprep.subr.bf16.mxu0 %v4017
  %6136 = vmatpush1.bf16.msra.mxu0 %v4016
  %6137 = vmatprep.subr.bf16.mxu0 %v4021
  %6138 = vmatpush1.bf16.msra.mxu0 %v4020
  %6139 = vmatprep.subr.bf16.mxu0 %v4025
  %6140 = vmatpush1.bf16.msra.mxu0 %v4024
  %6141 = vmatprep.subr.bf16.mxu0 %v4029
  %6142 = vmatpush1.bf16.msra.mxu0 %v4028
  %6143 = vmatprep.subr.bf16.mxu0 %v4033
  %6144 = vmatpush1.bf16.msra.mxu0 %v4032
  %6145 = vmatprep.subr.bf16.mxu0 %v4037
  %6146 = vmatpush1.bf16.msra.mxu0 %v4036
  %6147 = vmatprep.subr.bf16.mxu0 %v4041
  %6148 = vmatpush1.bf16.msra.mxu0 %v4040
  %6149 = vmatprep.mubr.bf16.mxu0 %v1803
  %6150 = vmatmul.mubr.bf16.gmra.mrb[0].mxu0 %v1742
  %v6151 = vpop.f32.mrb[0].mxu0
  %v6152 = vadd.f32 %v6079, %v6151
  %v6153 = vpop.f32.mrb[0].mxu0
  %v6154 = vadd.f32 %v6081, %v6153
  %v6155 = vpop.f32.mrb[0].mxu0
  %v6156 = vadd.f32 %v6083, %v6155
  %v6157 = vpop.f32.mrb[0].mxu0
  %v6158 = vadd.f32 %v6085, %v6157
  %6159 = vmatprep.mubr.bf16.mxu0 %v1806
  %6160 = vmatmul.mubr.bf16.gmra.mrb[0].mxu0 %v1745
  %v6161 = vpop.f32.mrb[0].mxu0
  %v6162 = vadd.f32 %v6089, %v6161
  %v6163 = vpop.f32.mrb[0].mxu0
  %v6164 = vadd.f32 %v6091, %v6163
  %v6165 = vpop.f32.mrb[0].mxu0
  %v6166 = vadd.f32 %v6093, %v6165
  %v6167 = vpop.f32.mrb[0].mxu0
  %v6168 = vadd.f32 %v6095, %v6167
  %6169 = vmatprep.mubr.bf16.mxu0 %v1809
  %6170 = vmatmul.mubr.bf16.gmra.mrb[0].mxu0 %v1748
  %v6171 = vpop.f32.mrb[0].mxu0
  %v6172 = vadd.f32 %v6099, %v6171
  %v6173 = vpop.f32.mrb[0].mxu0
  %v6174 = vadd.f32 %v6101, %v6173
  %v6175 = vpop.f32.mrb[0].mxu0
  %v6176 = vadd.f32 %v6103, %v6175
  %v6177 = vpop.f32.mrb[0].mxu0
  %v6178 = vadd.f32 %v6105, %v6177
  %6179 = vmatprep.mubr.bf16.mxu0 %v1812
  %6180 = vmatmul.mubr.bf16.gmra.mrb[0].mxu0 %v1751
  %v6181 = vpop.f32.mrb[0].mxu0
  %v6182 = vadd.f32 %v6109, %v6181
  %v6183 = vpop.f32.mrb[0].mxu0
  %v6184 = vadd.f32 %v6111, %v6183
  %v6185 = vpop.f32.mrb[0].mxu0
  %v6186 = vadd.f32 %v6113, %v6185
  %v6187 = vpop.f32.mrb[0].mxu0
  %v6188 = vadd.f32 %v6115, %v6187
  %6189 = vdwg.mxu0
  %6190 = vmatprep.subr.bf16.mxu0 %v4045
  %6191 = vmatpush1.bf16.msra.mxu0 %v4044
  %6192 = vmatprep.subr.bf16.mxu0 %v4049
  %6193 = vmatpush1.bf16.msra.mxu0 %v4048
  %6194 = vmatprep.subr.bf16.mxu0 %v4053
  %6195 = vmatpush1.bf16.msra.mxu0 %v4052
  %6196 = vmatprep.subr.bf16.mxu0 %v4057
  %6197 = vmatpush1.bf16.msra.mxu0 %v4056
  %6198 = vmatprep.subr.bf16.mxu0 %v4061
  %6199 = vmatpush1.bf16.msra.mxu0 %v4060
  %6200 = vmatprep.subr.bf16.mxu0 %v4065
  %6201 = vmatpush1.bf16.msra.mxu0 %v4064
  %6202 = vmatprep.subr.bf16.mxu0 %v4069
  %6203 = vmatpush1.bf16.msra.mxu0 %v4068
  %6204 = vmatprep.subr.bf16.mxu0 %v4073
  %6205 = vmatpush1.bf16.msra.mxu0 %v4072
  %6206 = vmatprep.subr.bf16.mxu0 %v4077
  %6207 = vmatpush1.bf16.msra.mxu0 %v4076
  %6208 = vmatprep.subr.bf16.mxu0 %v4081
  %6209 = vmatpush1.bf16.msra.mxu0 %v4080
  %6210 = vmatprep.subr.bf16.mxu0 %v4085
  %6211 = vmatpush1.bf16.msra.mxu0 %v4084
  %6212 = vmatprep.subr.bf16.mxu0 %v4089
  %6213 = vmatpush1.bf16.msra.mxu0 %v4088
  %6214 = vmatprep.subr.bf16.mxu0 %v4093
  %6215 = vmatpush1.bf16.msra.mxu0 %v4092
  %6216 = vmatprep.subr.bf16.mxu0 %v4097
  %6217 = vmatpush1.bf16.msra.mxu0 %v4096
  %6218 = vmatprep.subr.bf16.mxu0 %v4101
  %6219 = vmatpush1.bf16.msra.mxu0 %v4100
  %6220 = vmatprep.subr.bf16.mxu0 %v4105
  %6221 = vmatpush1.bf16.msra.mxu0 %v4104
  %6222 = vmatprep.mubr.bf16.mxu0 %v1805
  %6223 = vmatmul.mubr.bf16.gmra.mrb[0].mxu0 %v1804
  %v6224 = vpop.f32.mrb[0].mxu0
  %v6225 = vadd.f32 %v6152, %v6224
  %v6226 = vpop.f32.mrb[0].mxu0
  %v6227 = vadd.f32 %v6154, %v6226
  %v6228 = vpop.f32.mrb[0].mxu0
  %v6229 = vadd.f32 %v6156, %v6228
  %v6230 = vpop.f32.mrb[0].mxu0
  %v6231 = vadd.f32 %v6158, %v6230
  %6232 = vmatprep.mubr.bf16.mxu0 %v1808
  %6233 = vmatmul.mubr.bf16.gmra.mrb[0].mxu0 %v1807
  %v6234 = vpop.f32.mrb[0].mxu0
  %v6235 = vadd.f32 %v6162, %v6234
  %v6236 = vpop.f32.mrb[0].mxu0
  %v6237 = vadd.f32 %v6164, %v6236
  %v6238 = vpop.f32.mrb[0].mxu0
  %v6239 = vadd.f32 %v6166, %v6238
  %v6240 = vpop.f32.mrb[0].mxu0
  %v6241 = vadd.f32 %v6168, %v6240
  %6242 = vmatprep.mubr.bf16.mxu0 %v1811
  %6243 = vmatmul.mubr.bf16.gmra.mrb[0].mxu0 %v1810
  %v6244 = vpop.f32.mrb[0].mxu0
  %v6245 = vadd.f32 %v6172, %v6244
  %v6246 = vpop.f32.mrb[0].mxu0
  %v6247 = vadd.f32 %v6174, %v6246
  %v6248 = vpop.f32.mrb[0].mxu0
  %v6249 = vadd.f32 %v6176, %v6248
  %v6250 = vpop.f32.mrb[0].mxu0
  %v6251 = vadd.f32 %v6178, %v6250
  %6252 = vmatprep.mubr.bf16.mxu0 %v1814
  %6253 = vmatmul.mubr.bf16.gmra.mrb[0].mxu0 %v1813
  %v6254 = vpop.f32.mrb[0].mxu0
  %v6255 = vadd.f32 %v6182, %v6254
  %v6256 = vpop.f32.mrb[0].mxu0
  %v6257 = vadd.f32 %v6184, %v6256
  %v6258 = vpop.f32.mrb[0].mxu0
  %v6259 = vadd.f32 %v6186, %v6258
  %v6260 = vpop.f32.mrb[0].mxu0
  %v6261 = vadd.f32 %v6188, %v6260
  %6262 = vdwg.mxu0
  %6263 = vmatprep.subr.bf16.mxu0 %v4109
  %6264 = vmatpush1.bf16.msra.mxu0 %v4108
  %6265 = vmatprep.subr.bf16.mxu0 %v4113
  %6266 = vmatpush1.bf16.msra.mxu0 %v4112
  %6267 = vmatprep.subr.bf16.mxu0 %v4117
  %6268 = vmatpush1.bf16.msra.mxu0 %v4116
  %6269 = vmatprep.subr.bf16.mxu0 %v4121
  %6270 = vmatpush1.bf16.msra.mxu0 %v4120
  %6271 = vmatprep.subr.bf16.mxu0 %v4125
  %6272 = vmatpush1.bf16.msra.mxu0 %v4124
  %6273 = vmatprep.subr.bf16.mxu0 %v4129
  %6274 = vmatpush1.bf16.msra.mxu0 %v4128
  %6275 = vmatprep.subr.bf16.mxu0 %v4133
  %6276 = vmatpush1.bf16.msra.mxu0 %v4132
  %6277 = vmatprep.subr.bf16.mxu0 %v4137
  %6278 = vmatpush1.bf16.msra.mxu0 %v4136
  %6279 = vmatprep.subr.bf16.mxu0 %v4141
  %6280 = vmatpush1.bf16.msra.mxu0 %v4140
  %6281 = vmatprep.subr.bf16.mxu0 %v4145
  %6282 = vmatpush1.bf16.msra.mxu0 %v4144
  %6283 = vmatprep.subr.bf16.mxu0 %v4149
  %6284 = vmatpush1.bf16.msra.mxu0 %v4148
  %6285 = vmatprep.subr.bf16.mxu0 %v4153
  %6286 = vmatpush1.bf16.msra.mxu0 %v4152
  %6287 = vmatprep.subr.bf16.mxu0 %v4157
  %6288 = vmatpush1.bf16.msra.mxu0 %v4156
  %6289 = vmatprep.subr.bf16.mxu0 %v4161
  %6290 = vmatpush1.bf16.msra.mxu0 %v4160
  %6291 = vmatprep.subr.bf16.mxu0 %v4165
  %6292 = vmatpush1.bf16.msra.mxu0 %v4164
  %6293 = vmatprep.subr.bf16.mxu0 %v4169
  %6294 = vmatpush1.bf16.msra.mxu0 %v4168
  %6295 = vmatprep.mubr.bf16.mxu0 %v1864
  %6296 = vmatmul.mubr.bf16.gmra.mrb[0].mxu0 %v1863
  %v6297 = vpop.f32.mrb[0].mxu0
  %v6298 = vadd.f32 %v6225, %v6297
  %v6299 = vpop.f32.mrb[0].mxu0
  %v6300 = vadd.f32 %v6227, %v6299
  %v6301 = vpop.f32.mrb[0].mxu0
  %v6302 = vadd.f32 %v6229, %v6301
  %v6303 = vpop.f32.mrb[0].mxu0
  %v6304 = vadd.f32 %v6231, %v6303
  %6305 = vmatprep.mubr.bf16.mxu0 %v1867
  %6306 = vmatmul.mubr.bf16.gmra.mrb[0].mxu0 %v1866
  %v6307 = vpop.f32.mrb[0].mxu0
  %v6308 = vadd.f32 %v6235, %v6307
  %v6309 = vpop.f32.mrb[0].mxu0
  %v6310 = vadd.f32 %v6237, %v6309
  %v6311 = vpop.f32.mrb[0].mxu0
  %v6312 = vadd.f32 %v6239, %v6311
  %v6313 = vpop.f32.mrb[0].mxu0
  %v6314 = vadd.f32 %v6241, %v6313
  %6315 = vmatprep.mubr.bf16.mxu0 %v1870
  %6316 = vmatmul.mubr.bf16.gmra.mrb[0].mxu0 %v1869
  %v6317 = vpop.f32.mrb[0].mxu0
  %v6318 = vadd.f32 %v6245, %v6317
  %v6319 = vpop.f32.mrb[0].mxu0
  %v6320 = vadd.f32 %v6247, %v6319
  %v6321 = vpop.f32.mrb[0].mxu0
  %v6322 = vadd.f32 %v6249, %v6321
  %v6323 = vpop.f32.mrb[0].mxu0
  %v6324 = vadd.f32 %v6251, %v6323
  %6325 = vmatprep.mubr.bf16.mxu0 %v1873
  %6326 = vmatmul.mubr.bf16.gmra.mrb[0].mxu0 %v1872
  %v6327 = vpop.f32.mrb[0].mxu0
  %v6328 = vadd.f32 %v6255, %v6327
  %v6329 = vpop.f32.mrb[0].mxu0
  %v6330 = vadd.f32 %v6257, %v6329
  %v6331 = vpop.f32.mrb[0].mxu0
  %v6332 = vadd.f32 %v6259, %v6331
  %v6333 = vpop.f32.mrb[0].mxu0
  %v6334 = vadd.f32 %v6261, %v6333
  %6335 = vdwg.mxu0
  %6336 = vmatprep.subr.bf16.mxu0 %v4173
  %6337 = vmatpush1.bf16.msra.mxu0 %v4172
  %6338 = vmatprep.subr.bf16.mxu0 %v4177
  %6339 = vmatpush1.bf16.msra.mxu0 %v4176
  %6340 = vmatprep.subr.bf16.mxu0 %v4181
  %6341 = vmatpush1.bf16.msra.mxu0 %v4180
  %6342 = vmatprep.subr.bf16.mxu0 %v4185
  %6343 = vmatpush1.bf16.msra.mxu0 %v4184
  %6344 = vmatprep.subr.bf16.mxu0 %v4189
  %6345 = vmatpush1.bf16.msra.mxu0 %v4188
  %6346 = vmatprep.subr.bf16.mxu0 %v4193
  %6347 = vmatpush1.bf16.msra.mxu0 %v4192
  %6348 = vmatprep.subr.bf16.mxu0 %v4197
  %6349 = vmatpush1.bf16.msra.mxu0 %v4196
  %6350 = vmatprep.subr.bf16.mxu0 %v4201
  %6351 = vmatpush1.bf16.msra.mxu0 %v4200
  %6352 = vmatprep.subr.bf16.mxu0 %v4205
  %6353 = vmatpush1.bf16.msra.mxu0 %v4204
  %6354 = vmatprep.subr.bf16.mxu0 %v4209
  %6355 = vmatpush1.bf16.msra.mxu0 %v4208
  %6356 = vmatprep.subr.bf16.mxu0 %v4213
  %6357 = vmatpush1.bf16.msra.mxu0 %v4212
  %6358 = vmatprep.subr.bf16.mxu0 %v4217
  %6359 = vmatpush1.bf16.msra.mxu0 %v4216
  %6360 = vmatprep.subr.bf16.mxu0 %v4221
  %6361 = vmatpush1.bf16.msra.mxu0 %v4220
  %6362 = vmatprep.subr.bf16.mxu0 %v4225
  %6363 = vmatpush1.bf16.msra.mxu0 %v4224
  %6364 = vmatprep.subr.bf16.mxu0 %v4229
  %6365 = vmatpush1.bf16.msra.mxu0 %v4228
  %6366 = vmatprep.subr.bf16.mxu0 %v4233
  %6367 = vmatpush1.bf16.msra.mxu0 %v4232
  %6368 = vmatprep.mubr.bf16.mxu0 %v1924
  %6369 = vmatmul.mubr.bf16.gmra.mrb[0].mxu0 %v1865
  %v6370 = vpop.f32.mrb[0].mxu0
  %v6371 = vadd.f32 %v6298, %v6370
  %v6372 = vpop.f32.mrb[0].mxu0
  %v6373 = vadd.f32 %v6300, %v6372
  %v6374 = vpop.f32.mrb[0].mxu0
  %v6375 = vadd.f32 %v6302, %v6374
  %v6376 = vpop.f32.mrb[0].mxu0
  %v6377 = vadd.f32 %v6304, %v6376
  %6378 = vmatprep.mubr.bf16.mxu0 %v1927
  %6379 = vmatmul.mubr.bf16.gmra.mrb[0].mxu0 %v1868
  %v6380 = vpop.f32.mrb[0].mxu0
  %v6381 = vadd.f32 %v6308, %v6380
  %v6382 = vpop.f32.mrb[0].mxu0
  %v6383 = vadd.f32 %v6310, %v6382
  %v6384 = vpop.f32.mrb[0].mxu0
  %v6385 = vadd.f32 %v6312, %v6384
  %v6386 = vpop.f32.mrb[0].mxu0
  %v6387 = vadd.f32 %v6314, %v6386
  %6388 = vmatprep.mubr.bf16.mxu0 %v1930
  %6389 = vmatmul.mubr.bf16.gmra.mrb[0].mxu0 %v1871
  %v6390 = vpop.f32.mrb[0].mxu0
  %v6391 = vadd.f32 %v6318, %v6390
  %v6392 = vpop.f32.mrb[0].mxu0
  %v6393 = vadd.f32 %v6320, %v6392
  %v6394 = vpop.f32.mrb[0].mxu0
  %v6395 = vadd.f32 %v6322, %v6394
  %v6396 = vpop.f32.mrb[0].mxu0
  %v6397 = vadd.f32 %v6324, %v6396
  %6398 = vmatprep.mubr.bf16.mxu0 %v1933
  %6399 = vmatmul.mubr.bf16.gmra.mrb[0].mxu0 %v1874
  %v6400 = vpop.f32.mrb[0].mxu0
  %v6401 = vadd.f32 %v6328, %v6400
  %v6402 = vpop.f32.mrb[0].mxu0
  %v6403 = vadd.f32 %v6330, %v6402
  %v6404 = vpop.f32.mrb[0].mxu0
  %v6405 = vadd.f32 %v6332, %v6404
  %v6406 = vpop.f32.mrb[0].mxu0
  %v6407 = vadd.f32 %v6334, %v6406
  %6408 = vdwg.mxu0
  %6409 = vmatprep.subr.bf16.mxu0 %v4237
  %6410 = vmatpush1.bf16.msra.mxu0 %v4236
  %6411 = vmatprep.subr.bf16.mxu0 %v4241
  %6412 = vmatpush1.bf16.msra.mxu0 %v4240
  %6413 = vmatprep.subr.bf16.mxu0 %v4245
  %6414 = vmatpush1.bf16.msra.mxu0 %v4244
  %6415 = vmatprep.subr.bf16.mxu0 %v4249
  %6416 = vmatpush1.bf16.msra.mxu0 %v4248
  %6417 = vmatprep.subr.bf16.mxu0 %v4253
  %6418 = vmatpush1.bf16.msra.mxu0 %v4252
  %6419 = vmatprep.subr.bf16.mxu0 %v4257
  %6420 = vmatpush1.bf16.msra.mxu0 %v4256
  %6421 = vmatprep.subr.bf16.mxu0 %v4261
  %6422 = vmatpush1.bf16.msra.mxu0 %v4260
  %6423 = vmatprep.subr.bf16.mxu0 %v4265
  %6424 = vmatpush1.bf16.msra.mxu0 %v4264
  %6425 = vmatprep.subr.bf16.mxu0 %v4269
  %6426 = vmatpush1.bf16.msra.mxu0 %v4268
  %6427 = vmatprep.subr.bf16.mxu0 %v4273
  %6428 = vmatpush1.bf16.msra.mxu0 %v4272
  %6429 = vmatprep.subr.bf16.mxu0 %v4277
  %6430 = vmatpush1.bf16.msra.mxu0 %v4276
  %6431 = vmatprep.subr.bf16.mxu0 %v4281
  %6432 = vmatpush1.bf16.msra.mxu0 %v4280
  %6433 = vmatprep.subr.bf16.mxu0 %v4285
  %6434 = vmatpush1.bf16.msra.mxu0 %v4284
  %6435 = vmatprep.subr.bf16.mxu0 %v4289
  %6436 = vmatpush1.bf16.msra.mxu0 %v4288
  %6437 = vmatprep.subr.bf16.mxu0 %v4293
  %6438 = vmatpush1.bf16.msra.mxu0 %v4292
  %6439 = vmatprep.subr.bf16.mxu0 %v4297
  %6440 = vmatpush1.bf16.msra.mxu0 %v4296
  %6441 = vmatprep.mubr.bf16.mxu0 %v1926
  %6442 = vmatmul.mubr.bf16.gmra.mrb[0].mxu0 %v1925
  %v6443 = vpop.f32.mrb[0].mxu0
  %v6444 = vadd.f32 %v6371, %v6443
  %v6445 = vpop.f32.mrb[0].mxu0
  %v6446 = vadd.f32 %v6373, %v6445
  %v6447 = vpop.f32.mrb[0].mxu0
  %v6448 = vadd.f32 %v6375, %v6447
  %v6449 = vpop.f32.mrb[0].mxu0
  %v6450 = vadd.f32 %v6377, %v6449
  %6451 = vmatprep.mubr.bf16.mxu0 %v1929
  %6452 = vmatmul.mubr.bf16.gmra.mrb[0].mxu0 %v1928
  %v6453 = vpop.f32.mrb[0].mxu0
  %v6454 = vadd.f32 %v6381, %v6453
  %v6455 = vpop.f32.mrb[0].mxu0
  %v6456 = vadd.f32 %v6383, %v6455
  %v6457 = vpop.f32.mrb[0].mxu0
  %v6458 = vadd.f32 %v6385, %v6457
  %v6459 = vpop.f32.mrb[0].mxu0
  %v6460 = vadd.f32 %v6387, %v6459
  %6461 = vmatprep.mubr.bf16.mxu0 %v1932
  %6462 = vmatmul.mubr.bf16.gmra.mrb[0].mxu0 %v1931
  %v6463 = vpop.f32.mrb[0].mxu0
  %v6464 = vadd.f32 %v6391, %v6463
  %v6465 = vpop.f32.mrb[0].mxu0
  %v6466 = vadd.f32 %v6393, %v6465
  %v6467 = vpop.f32.mrb[0].mxu0
  %v6468 = vadd.f32 %v6395, %v6467
  %v6469 = vpop.f32.mrb[0].mxu0
  %v6470 = vadd.f32 %v6397, %v6469
  %6471 = vmatprep.mubr.bf16.mxu0 %v1935
  %6472 = vmatmul.mubr.bf16.gmra.mrb[0].mxu0 %v1934
  %v6473 = vpop.f32.mrb[0].mxu0
  %v6474 = vadd.f32 %v6401, %v6473
  %v6475 = vpop.f32.mrb[0].mxu0
  %v6476 = vadd.f32 %v6403, %v6475
  %v6477 = vpop.f32.mrb[0].mxu0
  %v6478 = vadd.f32 %v6405, %v6477
  %v6479 = vpop.f32.mrb[0].mxu0
  %v6480 = vadd.f32 %v6407, %v6479
  %6481 = vdwg.mxu0
  %6482 = vmatprep.subr.bf16.mxu0 %v4301
  %6483 = vmatpush1.bf16.msra.mxu0 %v4300
  %6484 = vmatprep.subr.bf16.mxu0 %v4305
  %6485 = vmatpush1.bf16.msra.mxu0 %v4304
  %6486 = vmatprep.subr.bf16.mxu0 %v4309
  %6487 = vmatpush1.bf16.msra.mxu0 %v4308
  %6488 = vmatprep.subr.bf16.mxu0 %v4313
  %6489 = vmatpush1.bf16.msra.mxu0 %v4312
  %6490 = vmatprep.subr.bf16.mxu0 %v4317
  %6491 = vmatpush1.bf16.msra.mxu0 %v4316
  %6492 = vmatprep.subr.bf16.mxu0 %v4321
  %6493 = vmatpush1.bf16.msra.mxu0 %v4320
  %6494 = vmatprep.subr.bf16.mxu0 %v4325
  %6495 = vmatpush1.bf16.msra.mxu0 %v4324
  %6496 = vmatprep.subr.bf16.mxu0 %v4329
  %6497 = vmatpush1.bf16.msra.mxu0 %v4328
  %6498 = vmatprep.subr.bf16.mxu0 %v4333
  %6499 = vmatpush1.bf16.msra.mxu0 %v4332
  %6500 = vmatprep.subr.bf16.mxu0 %v4337
  %6501 = vmatpush1.bf16.msra.mxu0 %v4336
  %6502 = vmatprep.subr.bf16.mxu0 %v4341
  %6503 = vmatpush1.bf16.msra.mxu0 %v4340
  %6504 = vmatprep.subr.bf16.mxu0 %v4345
  %6505 = vmatpush1.bf16.msra.mxu0 %v4344
  %6506 = vmatprep.subr.bf16.mxu0 %v4349
  %6507 = vmatpush1.bf16.msra.mxu0 %v4348
  %6508 = vmatprep.subr.bf16.mxu0 %v4353
  %6509 = vmatpush1.bf16.msra.mxu0 %v4352
  %6510 = vmatprep.subr.bf16.mxu0 %v4357
  %6511 = vmatpush1.bf16.msra.mxu0 %v4356
  %6512 = vmatprep.subr.bf16.mxu0 %v4361
  %6513 = vmatpush1.bf16.msra.mxu0 %v4360
  %6514 = vmatprep.mubr.bf16.mxu0 %v1985
  %6515 = vmatmul.mubr.bf16.gmra.mrb[0].mxu0 %v1984
  %v6516 = vpop.f32.mrb[0].mxu0
  %v6517 = vadd.f32 %v6444, %v6516
  %v6518 = vpop.f32.mrb[0].mxu0
  %v6519 = vadd.f32 %v6446, %v6518
  %v6520 = vpop.f32.mrb[0].mxu0
  %v6521 = vadd.f32 %v6448, %v6520
  %v6522 = vpop.f32.mrb[0].mxu0
  %v6523 = vadd.f32 %v6450, %v6522
  %6524 = vmatprep.mubr.bf16.mxu0 %v1988
  %6525 = vmatmul.mubr.bf16.gmra.mrb[0].mxu0 %v1987
  %v6526 = vpop.f32.mrb[0].mxu0
  %v6527 = vadd.f32 %v6454, %v6526
  %v6528 = vpop.f32.mrb[0].mxu0
  %v6529 = vadd.f32 %v6456, %v6528
  %v6530 = vpop.f32.mrb[0].mxu0
  %v6531 = vadd.f32 %v6458, %v6530
  %v6532 = vpop.f32.mrb[0].mxu0
  %v6533 = vadd.f32 %v6460, %v6532
  %6534 = vmatprep.mubr.bf16.mxu0 %v1991
  %6535 = vmatmul.mubr.bf16.gmra.mrb[0].mxu0 %v1990
  %v6536 = vpop.f32.mrb[0].mxu0
  %v6537 = vadd.f32 %v6464, %v6536
  %v6538 = vpop.f32.mrb[0].mxu0
  %v6539 = vadd.f32 %v6466, %v6538
  %v6540 = vpop.f32.mrb[0].mxu0
  %v6541 = vadd.f32 %v6468, %v6540
  %v6542 = vpop.f32.mrb[0].mxu0
  %v6543 = vadd.f32 %v6470, %v6542
  %6544 = vmatprep.mubr.bf16.mxu0 %v1994
  %6545 = vmatmul.mubr.bf16.gmra.mrb[0].mxu0 %v1993
  %v6546 = vpop.f32.mrb[0].mxu0
  %v6547 = vadd.f32 %v6474, %v6546
  %v6548 = vpop.f32.mrb[0].mxu0
  %v6549 = vadd.f32 %v6476, %v6548
  %v6550 = vpop.f32.mrb[0].mxu0
  %v6551 = vadd.f32 %v6478, %v6550
  %v6552 = vpop.f32.mrb[0].mxu0
  %v6553 = vadd.f32 %v6480, %v6552
  %6554 = vdwg.mxu0
  %6555 = vmatprep.subr.bf16.mxu0 %v4365
  %6556 = vmatpush1.bf16.msra.mxu0 %v4364
  %6557 = vmatprep.subr.bf16.mxu0 %v4369
  %6558 = vmatpush1.bf16.msra.mxu0 %v4368
  %6559 = vmatprep.subr.bf16.mxu0 %v4373
  %6560 = vmatpush1.bf16.msra.mxu0 %v4372
  %6561 = vmatprep.subr.bf16.mxu0 %v4377
  %6562 = vmatpush1.bf16.msra.mxu0 %v4376
  %6563 = vmatprep.subr.bf16.mxu0 %v4381
  %6564 = vmatpush1.bf16.msra.mxu0 %v4380
  %6565 = vmatprep.subr.bf16.mxu0 %v4385
  %6566 = vmatpush1.bf16.msra.mxu0 %v4384
  %6567 = vmatprep.subr.bf16.mxu0 %v4389
  %6568 = vmatpush1.bf16.msra.mxu0 %v4388
  %6569 = vmatprep.subr.bf16.mxu0 %v4393
  %6570 = vmatpush1.bf16.msra.mxu0 %v4392
  %6571 = vmatprep.subr.bf16.mxu0 0
  %6572 = vmatpush1.bf16.msra.mxu0 0
  %6573 = vmatprep.subr.bf16.mxu0 0
  %6574 = vmatpush1.bf16.msra.mxu0 0
  %6575 = vmatprep.subr.bf16.mxu0 0
  %6576 = vmatpush1.bf16.msra.mxu0 0
  %6577 = vmatprep.subr.bf16.mxu0 0
  %6578 = vmatpush1.bf16.msra.mxu0 0
  %6579 = vmatprep.subr.bf16.mxu0 0
  %6580 = vmatpush1.bf16.msra.mxu0 0
  %6581 = vmatprep.subr.bf16.mxu0 0
  %6582 = vmatpush1.bf16.msra.mxu0 0
  %6583 = vmatprep.subr.bf16.mxu0 0
  %6584 = vmatpush1.bf16.msra.mxu0 0
  %6585 = vmatprep.subr.bf16.mxu0 0
  %6586 = vmatpush1.bf16.msra.mxu0 0
  %6587 = vmatprep.mubr.bf16.mxu0 0
  %6588 = vmatmul.mubr.bf16.gmra.mrb[0].mxu0 %v1986
  %v6589 = vpop.f32.mrb[0].mxu0
  %v6590 = vadd.f32 %v6517, %v6589
  %v6591 = vpop.f32.mrb[0].mxu0
  %v6592 = vadd.f32 %v6519, %v6591
  %v6593 = vpop.f32.mrb[0].mxu0
  %v6594 = vadd.f32 %v6521, %v6593
  %v6595 = vpop.f32.mrb[0].mxu0
  %v6596 = vadd.f32 %v6523, %v6595
  %6597 = vmatprep.mubr.bf16.mxu0 0
  %6598 = vmatmul.mubr.bf16.gmra.mrb[0].mxu0 %v1989
  %v6599 = vpop.f32.mrb[0].mxu0
  %v6600 = vadd.f32 %v6527, %v6599
  %v6601 = vpop.f32.mrb[0].mxu0
  %v6602 = vadd.f32 %v6529, %v6601
  %v6603 = vpop.f32.mrb[0].mxu0
  %v6604 = vadd.f32 %v6531, %v6603
  %v6605 = vpop.f32.mrb[0].mxu0
  %v6606 = vadd.f32 %v6533, %v6605
  %6607 = vmatprep.mubr.bf16.mxu0 0
  %6608 = vmatmul.mubr.bf16.gmra.mrb[0].mxu0 %v1992
  %v6609 = vpop.f32.mrb[0].mxu0
  %v6610 = vadd.f32 %v6537, %v6609
  %v6611 = vpop.f32.mrb[0].mxu0
  %v6612 = vadd.f32 %v6539, %v6611
  %v6613 = vpop.f32.mrb[0].mxu0
  %v6614 = vadd.f32 %v6541, %v6613
  %v6615 = vpop.f32.mrb[0].mxu0
  %v6616 = vadd.f32 %v6543, %v6615
  %6617 = vmatprep.mubr.bf16.mxu0 0
  %6618 = vmatmul.mubr.bf16.gmra.mrb[0].mxu0 %v1995
  %v6619 = vpop.f32.mrb[0].mxu0
  %v6620 = vadd.f32 %v6547, %v6619
  %v6621 = vpop.f32.mrb[0].mxu0
  %v6622 = vadd.f32 %v6549, %v6621
  %v6623 = vpop.f32.mrb[0].mxu0
  %v6624 = vadd.f32 %v6551, %v6623
  %v6625 = vpop.f32.mrb[0].mxu0
  %v6626 = vadd.f32 %v6553, %v6625
  %6627 = vdwg.mxu0
  %6628 = vmatprep.subr.bf16.mxu0 %v3919
  %6629 = vmatpush1.bf16.msra.mxu0 %v3918
  %6630 = vmatprep.subr.bf16.mxu0 %v3923
  %6631 = vmatpush1.bf16.msra.mxu0 %v3922
  %6632 = vmatprep.subr.bf16.mxu0 %v3927
  %6633 = vmatpush1.bf16.msra.mxu0 %v3926
  %6634 = vmatprep.subr.bf16.mxu0 %v3931
  %6635 = vmatpush1.bf16.msra.mxu0 %v3930
  %6636 = vmatprep.subr.bf16.mxu0 %v3935
  %6637 = vmatpush1.bf16.msra.mxu0 %v3934
  %6638 = vmatprep.subr.bf16.mxu0 %v3939
  %6639 = vmatpush1.bf16.msra.mxu0 %v3938
  %6640 = vmatprep.subr.bf16.mxu0 %v3943
  %6641 = vmatpush1.bf16.msra.mxu0 %v3942
  %6642 = vmatprep.subr.bf16.mxu0 %v3947
  %6643 = vmatpush1.bf16.msra.mxu0 %v3946
  %6644 = vmatprep.subr.bf16.mxu0 %v3951
  %6645 = vmatpush1.bf16.msra.mxu0 %v3950
  %6646 = vmatprep.subr.bf16.mxu0 %v3955
  %6647 = vmatpush1.bf16.msra.mxu0 %v3954
  %6648 = vmatprep.subr.bf16.mxu0 %v3959
  %6649 = vmatpush1.bf16.msra.mxu0 %v3958
  %6650 = vmatprep.subr.bf16.mxu0 %v3963
  %6651 = vmatpush1.bf16.msra.mxu0 %v3962
  %6652 = vmatprep.subr.bf16.mxu0 %v3967
  %6653 = vmatpush1.bf16.msra.mxu0 %v3966
  %6654 = vmatprep.subr.bf16.mxu0 %v3971
  %6655 = vmatpush1.bf16.msra.mxu0 %v3970
  %6656 = vmatprep.subr.bf16.mxu0 %v3975
  %6657 = vmatpush1.bf16.msra.mxu0 %v3974
  %6658 = vmatprep.subr.bf16.mxu0 %v3979
  %6659 = vmatpush1.bf16.msra.mxu0 %v3978
  %6660 = vmatprep.mubr.bf16.mxu0 %v1741
  %6661 = vmatmul.mubr.bf16.gmra.mrb[0].mxu0 %v1740
  %v6662 = vpop.f32.mrb[0].mxu0
  %v6663 = vadd.f32 0.0, %v6662
  %v6664 = vpop.f32.mrb[0].mxu0
  %v6665 = vadd.f32 0.0, %v6664
  %v6666 = vpop.f32.mrb[0].mxu0
  %v6667 = vadd.f32 0.0, %v6666
  %v6668 = vpop.f32.mrb[0].mxu0
  %v6669 = vadd.f32 0.0, %v6668
  %6670 = vmatprep.mubr.bf16.mxu0 %v1744
  %6671 = vmatmul.mubr.bf16.gmra.mrb[0].mxu0 %v1743
  %v6672 = vpop.f32.mrb[0].mxu0
  %v6673 = vadd.f32 0.0, %v6672
  %v6674 = vpop.f32.mrb[0].mxu0
  %v6675 = vadd.f32 0.0, %v6674
  %v6676 = vpop.f32.mrb[0].mxu0
  %v6677 = vadd.f32 0.0, %v6676
  %v6678 = vpop.f32.mrb[0].mxu0
  %v6679 = vadd.f32 0.0, %v6678
  %6680 = vmatprep.mubr.bf16.mxu0 %v1747
  %6681 = vmatmul.mubr.bf16.gmra.mrb[0].mxu0 %v1746
  %v6682 = vpop.f32.mrb[0].mxu0
  %v6683 = vadd.f32 0.0, %v6682
  %v6684 = vpop.f32.mrb[0].mxu0
  %v6685 = vadd.f32 0.0, %v6684
  %v6686 = vpop.f32.mrb[0].mxu0
  %v6687 = vadd.f32 0.0, %v6686
  %v6688 = vpop.f32.mrb[0].mxu0
  %v6689 = vadd.f32 0.0, %v6688
  %6690 = vmatprep.mubr.bf16.mxu0 %v1750
  %6691 = vmatmul.mubr.bf16.gmra.mrb[0].mxu0 %v1749
  %v6692 = vpop.f32.mrb[0].mxu0
  %v6693 = vadd.f32 0.0, %v6692
  %v6694 = vpop.f32.mrb[0].mxu0
  %v6695 = vadd.f32 0.0, %v6694
  %v6696 = vpop.f32.mrb[0].mxu0
  %v6697 = vadd.f32 0.0, %v6696
  %v6698 = vpop.f32.mrb[0].mxu0
  %v6699 = vadd.f32 0.0, %v6698
  %6700 = vdwg.mxu0
  %6701 = vmatprep.subr.bf16.mxu0 %v3983
  %6702 = vmatpush1.bf16.msra.mxu0 %v3982
  %6703 = vmatprep.subr.bf16.mxu0 %v3987
  %6704 = vmatpush1.bf16.msra.mxu0 %v3986
  %6705 = vmatprep.subr.bf16.mxu0 %v3991
  %6706 = vmatpush1.bf16.msra.mxu0 %v3990
  %6707 = vmatprep.subr.bf16.mxu0 %v3995
  %6708 = vmatpush1.bf16.msra.mxu0 %v3994
  %6709 = vmatprep.subr.bf16.mxu0 %v3999
  %6710 = vmatpush1.bf16.msra.mxu0 %v3998
  %6711 = vmatprep.subr.bf16.mxu0 %v4003
  %6712 = vmatpush1.bf16.msra.mxu0 %v4002
  %6713 = vmatprep.subr.bf16.mxu0 %v4007
  %6714 = vmatpush1.bf16.msra.mxu0 %v4006
  %6715 = vmatprep.subr.bf16.mxu0 %v4011
  %6716 = vmatpush1.bf16.msra.mxu0 %v4010
  %6717 = vmatprep.subr.bf16.mxu0 %v4015
  %6718 = vmatpush1.bf16.msra.mxu0 %v4014
  %6719 = vmatprep.subr.bf16.mxu0 %v4019
  %6720 = vmatpush1.bf16.msra.mxu0 %v4018
  %6721 = vmatprep.subr.bf16.mxu0 %v4023
  %6722 = vmatpush1.bf16.msra.mxu0 %v4022
  %6723 = vmatprep.subr.bf16.mxu0 %v4027
  %6724 = vmatpush1.bf16.msra.mxu0 %v4026
  %6725 = vmatprep.subr.bf16.mxu0 %v4031
  %6726 = vmatpush1.bf16.msra.mxu0 %v4030
  %6727 = vmatprep.subr.bf16.mxu0 %v4035
  %6728 = vmatpush1.bf16.msra.mxu0 %v4034
  %6729 = vmatprep.subr.bf16.mxu0 %v4039
  %6730 = vmatpush1.bf16.msra.mxu0 %v4038
  %6731 = vmatprep.subr.bf16.mxu0 %v4043
  %6732 = vmatpush1.bf16.msra.mxu0 %v4042
  %6733 = vmatprep.mubr.bf16.mxu0 %v1803
  %6734 = vmatmul.mubr.bf16.gmra.mrb[0].mxu0 %v1742
  %v6735 = vpop.f32.mrb[0].mxu0
  %v6736 = vadd.f32 %v6663, %v6735
  %v6737 = vpop.f32.mrb[0].mxu0
  %v6738 = vadd.f32 %v6665, %v6737
  %v6739 = vpop.f32.mrb[0].mxu0
  %v6740 = vadd.f32 %v6667, %v6739
  %v6741 = vpop.f32.mrb[0].mxu0
  %v6742 = vadd.f32 %v6669, %v6741
  %6743 = vmatprep.mubr.bf16.mxu0 %v1806
  %6744 = vmatmul.mubr.bf16.gmra.mrb[0].mxu0 %v1745
  %v6745 = vpop.f32.mrb[0].mxu0
  %v6746 = vadd.f32 %v6673, %v6745
  %v6747 = vpop.f32.mrb[0].mxu0
  %v6748 = vadd.f32 %v6675, %v6747
  %v6749 = vpop.f32.mrb[0].mxu0
  %v6750 = vadd.f32 %v6677, %v6749
  %v6751 = vpop.f32.mrb[0].mxu0
  %v6752 = vadd.f32 %v6679, %v6751
  %6753 = vmatprep.mubr.bf16.mxu0 %v1809
  %6754 = vmatmul.mubr.bf16.gmra.mrb[0].mxu0 %v1748
  %v6755 = vpop.f32.mrb[0].mxu0
  %v6756 = vadd.f32 %v6683, %v6755
  %v6757 = vpop.f32.mrb[0].mxu0
  %v6758 = vadd.f32 %v6685, %v6757
  %v6759 = vpop.f32.mrb[0].mxu0
  %v6760 = vadd.f32 %v6687, %v6759
  %v6761 = vpop.f32.mrb[0].mxu0
  %v6762 = vadd.f32 %v6689, %v6761
  %6763 = vmatprep.mubr.bf16.mxu0 %v1812
  %6764 = vmatmul.mubr.bf16.gmra.mrb[0].mxu0 %v1751
  %v6765 = vpop.f32.mrb[0].mxu0
  %v6766 = vadd.f32 %v6693, %v6765
  %v6767 = vpop.f32.mrb[0].mxu0
  %v6768 = vadd.f32 %v6695, %v6767
  %v6769 = vpop.f32.mrb[0].mxu0
  %v6770 = vadd.f32 %v6697, %v6769
  %v6771 = vpop.f32.mrb[0].mxu0
  %v6772 = vadd.f32 %v6699, %v6771
  %6773 = vdwg.mxu0
  %6774 = vmatprep.subr.bf16.mxu0 %v4047
  %6775 = vmatpush1.bf16.msra.mxu0 %v4046
  %6776 = vmatprep.subr.bf16.mxu0 %v4051
  %6777 = vmatpush1.bf16.msra.mxu0 %v4050
  %6778 = vmatprep.subr.bf16.mxu0 %v4055
  %6779 = vmatpush1.bf16.msra.mxu0 %v4054
  %6780 = vmatprep.subr.bf16.mxu0 %v4059
  %6781 = vmatpush1.bf16.msra.mxu0 %v4058
  %6782 = vmatprep.subr.bf16.mxu0 %v4063
  %6783 = vmatpush1.bf16.msra.mxu0 %v4062
  %6784 = vmatprep.subr.bf16.mxu0 %v4067
  %6785 = vmatpush1.bf16.msra.mxu0 %v4066
  %6786 = vmatprep.subr.bf16.mxu0 %v4071
  %6787 = vmatpush1.bf16.msra.mxu0 %v4070
  %6788 = vmatprep.subr.bf16.mxu0 %v4075
  %6789 = vmatpush1.bf16.msra.mxu0 %v4074
  %6790 = vmatprep.subr.bf16.mxu0 %v4079
  %6791 = vmatpush1.bf16.msra.mxu0 %v4078
  %6792 = vmatprep.subr.bf16.mxu0 %v4083
  %6793 = vmatpush1.bf16.msra.mxu0 %v4082
  %6794 = vmatprep.subr.bf16.mxu0 %v4087
  %6795 = vmatpush1.bf16.msra.mxu0 %v4086
  %6796 = vmatprep.subr.bf16.mxu0 %v4091
  %6797 = vmatpush1.bf16.msra.mxu0 %v4090
  %6798 = vmatprep.subr.bf16.mxu0 %v4095
  %6799 = vmatpush1.bf16.msra.mxu0 %v4094
  %6800 = vmatprep.subr.bf16.mxu0 %v4099
  %6801 = vmatpush1.bf16.msra.mxu0 %v4098
  %6802 = vmatprep.subr.bf16.mxu0 %v4103
  %6803 = vmatpush1.bf16.msra.mxu0 %v4102
  %6804 = vmatprep.subr.bf16.mxu0 %v4107
  %6805 = vmatpush1.bf16.msra.mxu0 %v4106
  %6806 = vmatprep.mubr.bf16.mxu0 %v1805
  %6807 = vmatmul.mubr.bf16.gmra.mrb[0].mxu0 %v1804
  %v6808 = vpop.f32.mrb[0].mxu0
  %v6809 = vadd.f32 %v6736, %v6808
  %v6810 = vpop.f32.mrb[0].mxu0
  %v6811 = vadd.f32 %v6738, %v6810
  %v6812 = vpop.f32.mrb[0].mxu0
  %v6813 = vadd.f32 %v6740, %v6812
  %v6814 = vpop.f32.mrb[0].mxu0
  %v6815 = vadd.f32 %v6742, %v6814
  %6816 = vmatprep.mubr.bf16.mxu0 %v1808
  %6817 = vmatmul.mubr.bf16.gmra.mrb[0].mxu0 %v1807
  %v6818 = vpop.f32.mrb[0].mxu0
  %v6819 = vadd.f32 %v6746, %v6818
  %v6820 = vpop.f32.mrb[0].mxu0
  %v6821 = vadd.f32 %v6748, %v6820
  %v6822 = vpop.f32.mrb[0].mxu0
  %v6823 = vadd.f32 %v6750, %v6822
  %v6824 = vpop.f32.mrb[0].mxu0
  %v6825 = vadd.f32 %v6752, %v6824
  %6826 = vmatprep.mubr.bf16.mxu0 %v1811
  %6827 = vmatmul.mubr.bf16.gmra.mrb[0].mxu0 %v1810
  %v6828 = vpop.f32.mrb[0].mxu0
  %v6829 = vadd.f32 %v6756, %v6828
  %v6830 = vpop.f32.mrb[0].mxu0
  %v6831 = vadd.f32 %v6758, %v6830
  %v6832 = vpop.f32.mrb[0].mxu0
  %v6833 = vadd.f32 %v6760, %v6832
  %v6834 = vpop.f32.mrb[0].mxu0
  %v6835 = vadd.f32 %v6762, %v6834
  %6836 = vmatprep.mubr.bf16.mxu0 %v1814
  %6837 = vmatmul.mubr.bf16.gmra.mrb[0].mxu0 %v1813
  %v6838 = vpop.f32.mrb[0].mxu0
  %v6839 = vadd.f32 %v6766, %v6838
  %v6840 = vpop.f32.mrb[0].mxu0
  %v6841 = vadd.f32 %v6768, %v6840
  %v6842 = vpop.f32.mrb[0].mxu0
  %v6843 = vadd.f32 %v6770, %v6842
  %v6844 = vpop.f32.mrb[0].mxu0
  %v6845 = vadd.f32 %v6772, %v6844
  %6846 = vdwg.mxu0
  %6847 = vmatprep.subr.bf16.mxu0 %v4111
  %6848 = vmatpush1.bf16.msra.mxu0 %v4110
  %6849 = vmatprep.subr.bf16.mxu0 %v4115
  %6850 = vmatpush1.bf16.msra.mxu0 %v4114
  %6851 = vmatprep.subr.bf16.mxu0 %v4119
  %6852 = vmatpush1.bf16.msra.mxu0 %v4118
  %6853 = vmatprep.subr.bf16.mxu0 %v4123
  %6854 = vmatpush1.bf16.msra.mxu0 %v4122
  %6855 = vmatprep.subr.bf16.mxu0 %v4127
  %6856 = vmatpush1.bf16.msra.mxu0 %v4126
  %6857 = vmatprep.subr.bf16.mxu0 %v4131
  %6858 = vmatpush1.bf16.msra.mxu0 %v4130
  %6859 = vmatprep.subr.bf16.mxu0 %v4135
  %6860 = vmatpush1.bf16.msra.mxu0 %v4134
  %6861 = vmatprep.subr.bf16.mxu0 %v4139
  %6862 = vmatpush1.bf16.msra.mxu0 %v4138
  %6863 = vmatprep.subr.bf16.mxu0 %v4143
  %6864 = vmatpush1.bf16.msra.mxu0 %v4142
  %6865 = vmatprep.subr.bf16.mxu0 %v4147
  %6866 = vmatpush1.bf16.msra.mxu0 %v4146
  %6867 = vmatprep.subr.bf16.mxu0 %v4151
  %6868 = vmatpush1.bf16.msra.mxu0 %v4150
  %6869 = vmatprep.subr.bf16.mxu0 %v4155
  %6870 = vmatpush1.bf16.msra.mxu0 %v4154
  %6871 = vmatprep.subr.bf16.mxu0 %v4159
  %6872 = vmatpush1.bf16.msra.mxu0 %v4158
  %6873 = vmatprep.subr.bf16.mxu0 %v4163
  %6874 = vmatpush1.bf16.msra.mxu0 %v4162
  %6875 = vmatprep.subr.bf16.mxu0 %v4167
  %6876 = vmatpush1.bf16.msra.mxu0 %v4166
  %6877 = vmatprep.subr.bf16.mxu0 %v4171
  %6878 = vmatpush1.bf16.msra.mxu0 %v4170
  %6879 = vmatprep.mubr.bf16.mxu0 %v1864
  %6880 = vmatmul.mubr.bf16.gmra.mrb[0].mxu0 %v1863
  %v6881 = vpop.f32.mrb[0].mxu0
  %v6882 = vadd.f32 %v6809, %v6881
  %v6883 = vpop.f32.mrb[0].mxu0
  %v6884 = vadd.f32 %v6811, %v6883
  %v6885 = vpop.f32.mrb[0].mxu0
  %v6886 = vadd.f32 %v6813, %v6885
  %v6887 = vpop.f32.mrb[0].mxu0
  %v6888 = vadd.f32 %v6815, %v6887
  %6889 = vmatprep.mubr.bf16.mxu0 %v1867
  %6890 = vmatmul.mubr.bf16.gmra.mrb[0].mxu0 %v1866
  %v6891 = vpop.f32.mrb[0].mxu0
  %v6892 = vadd.f32 %v6819, %v6891
  %v6893 = vpop.f32.mrb[0].mxu0
  %v6894 = vadd.f32 %v6821, %v6893
  %v6895 = vpop.f32.mrb[0].mxu0
  %v6896 = vadd.f32 %v6823, %v6895
  %v6897 = vpop.f32.mrb[0].mxu0
  %v6898 = vadd.f32 %v6825, %v6897
  %6899 = vmatprep.mubr.bf16.mxu0 %v1870
  %6900 = vmatmul.mubr.bf16.gmra.mrb[0].mxu0 %v1869
  %v6901 = vpop.f32.mrb[0].mxu0
  %v6902 = vadd.f32 %v6829, %v6901
  %v6903 = vpop.f32.mrb[0].mxu0
  %v6904 = vadd.f32 %v6831, %v6903
  %v6905 = vpop.f32.mrb[0].mxu0
  %v6906 = vadd.f32 %v6833, %v6905
  %v6907 = vpop.f32.mrb[0].mxu0
  %v6908 = vadd.f32 %v6835, %v6907
  %6909 = vmatprep.mubr.bf16.mxu0 %v1873
  %6910 = vmatmul.mubr.bf16.gmra.mrb[0].mxu0 %v1872
  %v6911 = vpop.f32.mrb[0].mxu0
  %v6912 = vadd.f32 %v6839, %v6911
  %v6913 = vpop.f32.mrb[0].mxu0
  %v6914 = vadd.f32 %v6841, %v6913
  %v6915 = vpop.f32.mrb[0].mxu0
  %v6916 = vadd.f32 %v6843, %v6915
  %v6917 = vpop.f32.mrb[0].mxu0
  %v6918 = vadd.f32 %v6845, %v6917
  %6919 = vdwg.mxu0
  %6920 = vmatprep.subr.bf16.mxu0 %v4175
  %6921 = vmatpush1.bf16.msra.mxu0 %v4174
  %6922 = vmatprep.subr.bf16.mxu0 %v4179
  %6923 = vmatpush1.bf16.msra.mxu0 %v4178
  %6924 = vmatprep.subr.bf16.mxu0 %v4183
  %6925 = vmatpush1.bf16.msra.mxu0 %v4182
  %6926 = vmatprep.subr.bf16.mxu0 %v4187
  %6927 = vmatpush1.bf16.msra.mxu0 %v4186
  %6928 = vmatprep.subr.bf16.mxu0 %v4191
  %6929 = vmatpush1.bf16.msra.mxu0 %v4190
  %6930 = vmatprep.subr.bf16.mxu0 %v4195
  %6931 = vmatpush1.bf16.msra.mxu0 %v4194
  %6932 = vmatprep.subr.bf16.mxu0 %v4199
  %6933 = vmatpush1.bf16.msra.mxu0 %v4198
  %6934 = vmatprep.subr.bf16.mxu0 %v4203
  %6935 = vmatpush1.bf16.msra.mxu0 %v4202
  %6936 = vmatprep.subr.bf16.mxu0 %v4207
  %6937 = vmatpush1.bf16.msra.mxu0 %v4206
  %6938 = vmatprep.subr.bf16.mxu0 %v4211
  %6939 = vmatpush1.bf16.msra.mxu0 %v4210
  %6940 = vmatprep.subr.bf16.mxu0 %v4215
  %6941 = vmatpush1.bf16.msra.mxu0 %v4214
  %6942 = vmatprep.subr.bf16.mxu0 %v4219
  %6943 = vmatpush1.bf16.msra.mxu0 %v4218
  %6944 = vmatprep.subr.bf16.mxu0 %v4223
  %6945 = vmatpush1.bf16.msra.mxu0 %v4222
  %6946 = vmatprep.subr.bf16.mxu0 %v4227
  %6947 = vmatpush1.bf16.msra.mxu0 %v4226
  %6948 = vmatprep.subr.bf16.mxu0 %v4231
  %6949 = vmatpush1.bf16.msra.mxu0 %v4230
  %6950 = vmatprep.subr.bf16.mxu0 %v4235
  %6951 = vmatpush1.bf16.msra.mxu0 %v4234
  %6952 = vmatprep.mubr.bf16.mxu0 %v1924
  %6953 = vmatmul.mubr.bf16.gmra.mrb[0].mxu0 %v1865
  %v6954 = vpop.f32.mrb[0].mxu0
  %v6955 = vadd.f32 %v6882, %v6954
  %v6956 = vpop.f32.mrb[0].mxu0
  %v6957 = vadd.f32 %v6884, %v6956
  %v6958 = vpop.f32.mrb[0].mxu0
  %v6959 = vadd.f32 %v6886, %v6958
  %v6960 = vpop.f32.mrb[0].mxu0
  %v6961 = vadd.f32 %v6888, %v6960
  %6962 = vmatprep.mubr.bf16.mxu0 %v1927
  %6963 = vmatmul.mubr.bf16.gmra.mrb[0].mxu0 %v1868
  %v6964 = vpop.f32.mrb[0].mxu0
  %v6965 = vadd.f32 %v6892, %v6964
  %v6966 = vpop.f32.mrb[0].mxu0
  %v6967 = vadd.f32 %v6894, %v6966
  %v6968 = vpop.f32.mrb[0].mxu0
  %v6969 = vadd.f32 %v6896, %v6968
  %v6970 = vpop.f32.mrb[0].mxu0
  %v6971 = vadd.f32 %v6898, %v6970
  %6972 = vmatprep.mubr.bf16.mxu0 %v1930
  %6973 = vmatmul.mubr.bf16.gmra.mrb[0].mxu0 %v1871
  %v6974 = vpop.f32.mrb[0].mxu0
  %v6975 = vadd.f32 %v6902, %v6974
  %v6976 = vpop.f32.mrb[0].mxu0
  %v6977 = vadd.f32 %v6904, %v6976
  %v6978 = vpop.f32.mrb[0].mxu0
  %v6979 = vadd.f32 %v6906, %v6978
  %v6980 = vpop.f32.mrb[0].mxu0
  %v6981 = vadd.f32 %v6908, %v6980
  %6982 = vmatprep.mubr.bf16.mxu0 %v1933
  %6983 = vmatmul.mubr.bf16.gmra.mrb[0].mxu0 %v1874
  %v6984 = vpop.f32.mrb[0].mxu0
  %v6985 = vadd.f32 %v6912, %v6984
  %v6986 = vpop.f32.mrb[0].mxu0
  %v6987 = vadd.f32 %v6914, %v6986
  %v6988 = vpop.f32.mrb[0].mxu0
  %v6989 = vadd.f32 %v6916, %v6988
  %v6990 = vpop.f32.mrb[0].mxu0
  %v6991 = vadd.f32 %v6918, %v6990
  %6992 = vdwg.mxu0
  %6993 = vmatprep.subr.bf16.mxu0 %v4239
  %6994 = vmatpush1.bf16.msra.mxu0 %v4238
  %6995 = vmatprep.subr.bf16.mxu0 %v4243
  %6996 = vmatpush1.bf16.msra.mxu0 %v4242
  %6997 = vmatprep.subr.bf16.mxu0 %v4247
  %6998 = vmatpush1.bf16.msra.mxu0 %v4246
  %6999 = vmatprep.subr.bf16.mxu0 %v4251
  %7000 = vmatpush1.bf16.msra.mxu0 %v4250
  %7001 = vmatprep.subr.bf16.mxu0 %v4255
  %7002 = vmatpush1.bf16.msra.mxu0 %v4254
  %7003 = vmatprep.subr.bf16.mxu0 %v4259
  %7004 = vmatpush1.bf16.msra.mxu0 %v4258
  %7005 = vmatprep.subr.bf16.mxu0 %v4263
  %7006 = vmatpush1.bf16.msra.mxu0 %v4262
  %7007 = vmatprep.subr.bf16.mxu0 %v4267
  %7008 = vmatpush1.bf16.msra.mxu0 %v4266
  %7009 = vmatprep.subr.bf16.mxu0 %v4271
  %7010 = vmatpush1.bf16.msra.mxu0 %v4270
  %7011 = vmatprep.subr.bf16.mxu0 %v4275
  %7012 = vmatpush1.bf16.msra.mxu0 %v4274
  %7013 = vmatprep.subr.bf16.mxu0 %v4279
  %7014 = vmatpush1.bf16.msra.mxu0 %v4278
  %7015 = vmatprep.subr.bf16.mxu0 %v4283
  %7016 = vmatpush1.bf16.msra.mxu0 %v4282
  %7017 = vmatprep.subr.bf16.mxu0 %v4287
  %7018 = vmatpush1.bf16.msra.mxu0 %v4286
  %7019 = vmatprep.subr.bf16.mxu0 %v4291
  %7020 = vmatpush1.bf16.msra.mxu0 %v4290
  %7021 = vmatprep.subr.bf16.mxu0 %v4295
  %7022 = vmatpush1.bf16.msra.mxu0 %v4294
  %7023 = vmatprep.subr.bf16.mxu0 %v4299
  %7024 = vmatpush1.bf16.msra.mxu0 %v4298
  %7025 = vmatprep.mubr.bf16.mxu0 %v1926
  %7026 = vmatmul.mubr.bf16.gmra.mrb[0].mxu0 %v1925
  %v7027 = vpop.f32.mrb[0].mxu0
  %v7028 = vadd.f32 %v6955, %v7027
  %v7029 = vpop.f32.mrb[0].mxu0
  %v7030 = vadd.f32 %v6957, %v7029
  %v7031 = vpop.f32.mrb[0].mxu0
  %v7032 = vadd.f32 %v6959, %v7031
  %v7033 = vpop.f32.mrb[0].mxu0
  %v7034 = vadd.f32 %v6961, %v7033
  %7035 = vmatprep.mubr.bf16.mxu0 %v1929
  %7036 = vmatmul.mubr.bf16.gmra.mrb[0].mxu0 %v1928
  %v7037 = vpop.f32.mrb[0].mxu0
  %v7038 = vadd.f32 %v6965, %v7037
  %v7039 = vpop.f32.mrb[0].mxu0
  %v7040 = vadd.f32 %v6967, %v7039
  %v7041 = vpop.f32.mrb[0].mxu0
  %v7042 = vadd.f32 %v6969, %v7041
  %v7043 = vpop.f32.mrb[0].mxu0
  %v7044 = vadd.f32 %v6971, %v7043
  %7045 = vmatprep.mubr.bf16.mxu0 %v1932
  %7046 = vmatmul.mubr.bf16.gmra.mrb[0].mxu0 %v1931
  %v7047 = vpop.f32.mrb[0].mxu0
  %v7048 = vadd.f32 %v6975, %v7047
  %v7049 = vpop.f32.mrb[0].mxu0
  %v7050 = vadd.f32 %v6977, %v7049
  %v7051 = vpop.f32.mrb[0].mxu0
  %v7052 = vadd.f32 %v6979, %v7051
  %v7053 = vpop.f32.mrb[0].mxu0
  %v7054 = vadd.f32 %v6981, %v7053
  %7055 = vmatprep.mubr.bf16.mxu0 %v1935
  %7056 = vmatmul.mubr.bf16.gmra.mrb[0].mxu0 %v1934
  %v7057 = vpop.f32.mrb[0].mxu0
  %v7058 = vadd.f32 %v6985, %v7057
  %v7059 = vpop.f32.mrb[0].mxu0
  %v7060 = vadd.f32 %v6987, %v7059
  %v7061 = vpop.f32.mrb[0].mxu0
  %v7062 = vadd.f32 %v6989, %v7061
  %v7063 = vpop.f32.mrb[0].mxu0
  %v7064 = vadd.f32 %v6991, %v7063
  %7065 = vdwg.mxu0
  %7066 = vmatprep.subr.bf16.mxu0 %v4303
  %7067 = vmatpush1.bf16.msra.mxu0 %v4302
  %7068 = vmatprep.subr.bf16.mxu0 %v4307
  %7069 = vmatpush1.bf16.msra.mxu0 %v4306
  %7070 = vmatprep.subr.bf16.mxu0 %v4311
  %7071 = vmatpush1.bf16.msra.mxu0 %v4310
  %7072 = vmatprep.subr.bf16.mxu0 %v4315
  %7073 = vmatpush1.bf16.msra.mxu0 %v4314
  %7074 = vmatprep.subr.bf16.mxu0 %v4319
  %7075 = vmatpush1.bf16.msra.mxu0 %v4318
  %7076 = vmatprep.subr.bf16.mxu0 %v4323
  %7077 = vmatpush1.bf16.msra.mxu0 %v4322
  %7078 = vmatprep.subr.bf16.mxu0 %v4327
  %7079 = vmatpush1.bf16.msra.mxu0 %v4326
  %7080 = vmatprep.subr.bf16.mxu0 %v4331
  %7081 = vmatpush1.bf16.msra.mxu0 %v4330
  %7082 = vmatprep.subr.bf16.mxu0 %v4335
  %7083 = vmatpush1.bf16.msra.mxu0 %v4334
  %7084 = vmatprep.subr.bf16.mxu0 %v4339
  %7085 = vmatpush1.bf16.msra.mxu0 %v4338
  %7086 = vmatprep.subr.bf16.mxu0 %v4343
  %7087 = vmatpush1.bf16.msra.mxu0 %v4342
  %7088 = vmatprep.subr.bf16.mxu0 %v4347
  %7089 = vmatpush1.bf16.msra.mxu0 %v4346
  %7090 = vmatprep.subr.bf16.mxu0 %v4351
  %7091 = vmatpush1.bf16.msra.mxu0 %v4350
  %7092 = vmatprep.subr.bf16.mxu0 %v4355
  %7093 = vmatpush1.bf16.msra.mxu0 %v4354
  %7094 = vmatprep.subr.bf16.mxu0 %v4359
  %7095 = vmatpush1.bf16.msra.mxu0 %v4358
  %7096 = vmatprep.subr.bf16.mxu0 %v4363
  %7097 = vmatpush1.bf16.msra.mxu0 %v4362
  %7098 = vmatprep.mubr.bf16.mxu0 %v1985
  %7099 = vmatmul.mubr.bf16.gmra.mrb[0].mxu0 %v1984
  %v7100 = vpop.f32.mrb[0].mxu0
  %v7101 = vadd.f32 %v7028, %v7100
  %v7102 = vpop.f32.mrb[0].mxu0
  %v7103 = vadd.f32 %v7030, %v7102
  %v7104 = vpop.f32.mrb[0].mxu0
  %v7105 = vadd.f32 %v7032, %v7104
  %v7106 = vpop.f32.mrb[0].mxu0
  %v7107 = vadd.f32 %v7034, %v7106
  %7108 = vmatprep.mubr.bf16.mxu0 %v1988
  %7109 = vmatmul.mubr.bf16.gmra.mrb[0].mxu0 %v1987
  %v7110 = vpop.f32.mrb[0].mxu0
  %v7111 = vadd.f32 %v7038, %v7110
  %v7112 = vpop.f32.mrb[0].mxu0
  %v7113 = vadd.f32 %v7040, %v7112
  %v7114 = vpop.f32.mrb[0].mxu0
  %v7115 = vadd.f32 %v7042, %v7114
  %v7116 = vpop.f32.mrb[0].mxu0
  %v7117 = vadd.f32 %v7044, %v7116
  %7118 = vmatprep.mubr.bf16.mxu0 %v1991
  %7119 = vmatmul.mubr.bf16.gmra.mrb[0].mxu0 %v1990
  %v7120 = vpop.f32.mrb[0].mxu0
  %v7121 = vadd.f32 %v7048, %v7120
  %v7122 = vpop.f32.mrb[0].mxu0
  %v7123 = vadd.f32 %v7050, %v7122
  %v7124 = vpop.f32.mrb[0].mxu0
  %v7125 = vadd.f32 %v7052, %v7124
  %v7126 = vpop.f32.mrb[0].mxu0
  %v7127 = vadd.f32 %v7054, %v7126
  %7128 = vmatprep.mubr.bf16.mxu0 %v1994
  %7129 = vmatmul.mubr.bf16.gmra.mrb[0].mxu0 %v1993
  %v7130 = vpop.f32.mrb[0].mxu0
  %v7131 = vadd.f32 %v7058, %v7130
  %v7132 = vpop.f32.mrb[0].mxu0
  %v7133 = vadd.f32 %v7060, %v7132
  %v7134 = vpop.f32.mrb[0].mxu0
  %v7135 = vadd.f32 %v7062, %v7134
  %v7136 = vpop.f32.mrb[0].mxu0
  %v7137 = vadd.f32 %v7064, %v7136
  %7138 = vdwg.mxu0
  %7139 = vmatprep.subr.bf16.mxu0 %v4367
  %7140 = vmatpush1.bf16.msra.mxu0 %v4366
  %7141 = vmatprep.subr.bf16.mxu0 %v4371
  %7142 = vmatpush1.bf16.msra.mxu0 %v4370
  %7143 = vmatprep.subr.bf16.mxu0 %v4375
  %7144 = vmatpush1.bf16.msra.mxu0 %v4374
  %7145 = vmatprep.subr.bf16.mxu0 %v4379
  %7146 = vmatpush1.bf16.msra.mxu0 %v4378
  %7147 = vmatprep.subr.bf16.mxu0 %v4383
  %7148 = vmatpush1.bf16.msra.mxu0 %v4382
  %7149 = vmatprep.subr.bf16.mxu0 %v4387
  %7150 = vmatpush1.bf16.msra.mxu0 %v4386
  %7151 = vmatprep.subr.bf16.mxu0 %v4391
  %7152 = vmatpush1.bf16.msra.mxu0 %v4390
  %7153 = vmatprep.subr.bf16.mxu0 %v4395
  %7154 = vmatpush1.bf16.msra.mxu0 %v4394
  %7155 = vmatprep.subr.bf16.mxu0 0
  %7156 = vmatpush1.bf16.msra.mxu0 0
  %7157 = vmatprep.subr.bf16.mxu0 0
  %7158 = vmatpush1.bf16.msra.mxu0 0
  %7159 = vmatprep.subr.bf16.mxu0 0
  %7160 = vmatpush1.bf16.msra.mxu0 0
  %7161 = vmatprep.subr.bf16.mxu0 0
  %7162 = vmatpush1.bf16.msra.mxu0 0
  %7163 = vmatprep.subr.bf16.mxu0 0
  %7164 = vmatpush1.bf16.msra.mxu0 0
  %7165 = vmatprep.subr.bf16.mxu0 0
  %7166 = vmatpush1.bf16.msra.mxu0 0
  %7167 = vmatprep.subr.bf16.mxu0 0
  %7168 = vmatpush1.bf16.msra.mxu0 0
  %7169 = vmatprep.subr.bf16.mxu0 0
  %7170 = vmatpush1.bf16.msra.mxu0 0
  %7171 = vmatprep.mubr.bf16.mxu0 0
  %7172 = vmatmul.mubr.bf16.gmra.mrb[0].mxu0 %v1986
  %v7173 = vpop.f32.mrb[0].mxu0
  %v7174 = vadd.f32 %v7101, %v7173
  %v7175 = vpop.f32.mrb[0].mxu0
  %v7176 = vadd.f32 %v7103, %v7175
  %v7177 = vpop.f32.mrb[0].mxu0
  %v7178 = vadd.f32 %v7105, %v7177
  %v7179 = vpop.f32.mrb[0].mxu0
  %v7180 = vadd.f32 %v7107, %v7179
  %7181 = vmatprep.mubr.bf16.mxu0 0
  %7182 = vmatmul.mubr.bf16.gmra.mrb[0].mxu0 %v1989
  %v7183 = vpop.f32.mrb[0].mxu0
  %v7184 = vadd.f32 %v7111, %v7183
  %v7185 = vpop.f32.mrb[0].mxu0
  %v7186 = vadd.f32 %v7113, %v7185
  %v7187 = vpop.f32.mrb[0].mxu0
  %v7188 = vadd.f32 %v7115, %v7187
  %v7189 = vpop.f32.mrb[0].mxu0
  %v7190 = vadd.f32 %v7117, %v7189
  %7191 = vmatprep.mubr.bf16.mxu0 0
  %7192 = vmatmul.mubr.bf16.gmra.mrb[0].mxu0 %v1992
  %v7193 = vpop.f32.mrb[0].mxu0
  %v7194 = vadd.f32 %v7121, %v7193
  %v7195 = vpop.f32.mrb[0].mxu0
  %v7196 = vadd.f32 %v7123, %v7195
  %v7197 = vpop.f32.mrb[0].mxu0
  %v7198 = vadd.f32 %v7125, %v7197
  %v7199 = vpop.f32.mrb[0].mxu0
  %v7200 = vadd.f32 %v7127, %v7199
  %7201 = vmatprep.mubr.bf16.mxu0 0
  %7202 = vmatmul.mubr.bf16.gmra.mrb[0].mxu0 %v1995
  %v7203 = vpop.f32.mrb[0].mxu0
  %v7204 = vadd.f32 %v7131, %v7203
  %v7205 = vpop.f32.mrb[0].mxu0
  %v7206 = vadd.f32 %v7133, %v7205
  %v7207 = vpop.f32.mrb[0].mxu0
  %v7208 = vadd.f32 %v7135, %v7207
  %v7209 = vpop.f32.mrb[0].mxu0
  %v7210 = vadd.f32 %v7137, %v7209
  %7211 = vdwg.mxu0
  %v7212 = vld [vmem:[%s5] sm:$0x3]
  %v7213 = vmax.f32 %v5422, %v6590
  %v7214 = vmax.f32 %v5424, %v6592
  %v7215 = vmax.f32 %v6006, %v7174
  %v7216 = vmax.f32 %v6008, %v7176
  %v7217 = vmax.f32 %v5426, %v6594
  %v7218 = vmax.f32 %v5428, %v6596
  %v7219 = vmax.f32 %v6010, %v7178
  %v7220 = vmax.f32 %v6012, %v7180
  %v7221 = vmax.f32 %v5432, %v6600
  %v7222 = vmax.f32 %v5434, %v6602
  %v7223 = vmax.f32 %v6016, %v7184
  %v7224 = vmax.f32 %v6018, %v7186
  %v7225 = vmax.f32 %v5436, %v6604
  %v7226 = vmax.f32 %v5438, %v6606
  %v7227 = vmax.f32 %v6020, %v7188
  %v7228 = vmax.f32 %v6022, %v7190
  %v7229 = vmax.f32 %v5442, %v6610
  %v7230 = vmax.f32 %v5444, %v6612
  %v7231 = vmax.f32 %v6026, %v7194
  %v7232 = vmax.f32 %v6028, %v7196
  %v7233 = vmax.f32 %v5446, %v6614
  %v7234 = vmax.f32 %v5448, %v6616
  %v7235 = vmax.f32 %v6030, %v7198
  %v7236 = vmax.f32 %v6032, %v7200
  %v7237 = vmax.f32 %v5452, %v6620
  %v7238 = vmax.f32 %v5454, %v6622
  %v7239 = vmax.f32 %v6036, %v7204
  %v7240 = vmax.f32 %v6038, %v7206
  %v7241 = vmax.f32 %v5456, %v6624
  %v7242 = vmax.f32 %v5458, %v6626
  %v7243 = vmax.f32 %v6040, %v7208
  %v7244 = vmax.f32 %v6042, %v7210
  %v7245 = vmax.f32 %v7213, %v7215
  %v7246 = vmax.f32 %v7214, %v7216
  %v7247 = vmax.f32 %v7217, %v7219
  %v7248 = vmax.f32 %v7218, %v7220
  %v7249 = vmax.f32 %v7221, %v7223
  %v7250 = vmax.f32 %v7222, %v7224
  %v7251 = vmax.f32 %v7225, %v7227
  %v7252 = vmax.f32 %v7226, %v7228
  %v7253 = vmax.f32 %v7229, %v7231
  %v7254 = vmax.f32 %v7230, %v7232
  %v7255 = vmax.f32 %v7233, %v7235
  %v7256 = vmax.f32 %v7234, %v7236
  %v7257 = vmax.f32 %v7237, %v7239
  %v7258 = vmax.f32 %v7238, %v7240
  %v7259 = vmax.f32 %v7241, %v7243
  %v7260 = vmax.f32 %v7242, %v7244
  %v7262 = vlaneseq
  %v7263 = vshrl.u32 %v7262, 7
  %v7264 = vsub.s32 0, %v7263
  %v7265 = vrot.slane %v7212, %v7264
  %v7266 = vlaneseq
  %v7267 = vshrl.u32 %v7266, 7
  %v7268 = vsub.s32 1, %v7267
  %v7269 = vrot.slane %v7212, %v7268
  %v7272 = vadd.f32 %v7245, %v7265
  %v7273 = vadd.f32 %v7246, %v7269
  %v7274 = vadd.f32 %v7247, %v7265
  %v7275 = vadd.f32 %v7248, %v7269
  %v7276 = vadd.f32 %v7249, %v7265
  %v7277 = vadd.f32 %v7250, %v7269
  %v7278 = vadd.f32 %v7251, %v7265
  %v7279 = vadd.f32 %v7252, %v7269
  %v7280 = vadd.f32 %v7253, %v7265
  %v7281 = vadd.f32 %v7254, %v7269
  %v7282 = vadd.f32 %v7255, %v7265
  %v7283 = vadd.f32 %v7256, %v7269
  %v7284 = vadd.f32 %v7257, %v7265
  %v7285 = vadd.f32 %v7258, %v7269
  %v7286 = vadd.f32 %v7259, %v7265
  %v7287 = vadd.f32 %v7260, %v7269
  %v7288 = vmax.f32 %v7272, 0.0
  %v7289 = vmax.f32 %v7273, 0.0
  %v7290 = vmax.f32 %v7274, 0.0
  %v7291 = vmax.f32 %v7275, 0.0
  %v7292 = vmax.f32 %v7276, 0.0
  %v7293 = vmax.f32 %v7277, 0.0
  %v7294 = vmax.f32 %v7278, 0.0
  %v7295 = vmax.f32 %v7279, 0.0
  %v7296 = vmax.f32 %v7280, 0.0
  %v7297 = vmax.f32 %v7281, 0.0
  %v7298 = vmax.f32 %v7282, 0.0
  %v7299 = vmax.f32 %v7283, 0.0
  %v7300 = vmax.f32 %v7284, 0.0
  %v7301 = vmax.f32 %v7285, 0.0
  %v7302 = vmax.f32 %v7286, 0.0
  %v7303 = vmax.f32 %v7287, 0.0
  %v7304 = vpack.c.bf16 %v7290, %v7288
  %v7305 = vpack.c.bf16 %v7291, %v7289
  %v7306 = vpack.c.bf16 %v7294, %v7292
  %v7307 = vpack.c.bf16 %v7295, %v7293
  %v7308 = vpack.c.bf16 %v7298, %v7296
  %v7309 = vpack.c.bf16 %v7299, %v7297
  %v7310 = vpack.c.bf16 %v7302, %v7300
  %v7311 = vpack.c.bf16 %v7303, %v7301
  %v7312 = vld [vmem:[%s1] sm:$0xf]
  %vm7313 = vcmask 523264
  %v7315 = vsel %vm7313, %v7312, 0
  %7317 = vmatprep.subr.bf16.mxu0 %v7305
  %7318 = vmatpush1.bf16.msra.mxu0 %v7304
  %7319 = vmatprep.subr.bf16.mxu0 %v7307
  %7320 = vmatpush1.bf16.msra.mxu0 %v7306
  %7321 = vmatprep.subr.bf16.mxu0 %v7309
  %7322 = vmatpush1.bf16.msra.mxu0 %v7308
  %7323 = vmatprep.subr.bf16.mxu0 %v7311
  %7324 = vmatpush1.bf16.msra.mxu0 %v7310
  %7325 = vmatprep.subr.bf16.mxu0 0
  %7326 = vmatpush1.bf16.msra.mxu0 0
  %7327 = vmatprep.subr.bf16.mxu0 0
  %7328 = vmatpush1.bf16.msra.mxu0 0
  %7329 = vmatprep.subr.bf16.mxu0 0
  %7330 = vmatpush1.bf16.msra.mxu0 0
  %7331 = vmatprep.subr.bf16.mxu0 0
  %7332 = vmatpush1.bf16.msra.mxu0 0
  %7333 = vmatprep.subr.bf16.mxu0 0
  %7334 = vmatpush1.bf16.msra.mxu0 0
  %7335 = vmatprep.subr.bf16.mxu0 0
  %7336 = vmatpush1.bf16.msra.mxu0 0
  %7337 = vmatprep.subr.bf16.mxu0 0
  %7338 = vmatpush1.bf16.msra.mxu0 0
  %7339 = vmatprep.subr.bf16.mxu0 0
  %7340 = vmatpush1.bf16.msra.mxu0 0
  %7341 = vmatprep.subr.bf16.mxu0 0
  %7342 = vmatpush1.bf16.msra.mxu0 0
  %7343 = vmatprep.subr.bf16.mxu0 0
  %7344 = vmatpush1.bf16.msra.mxu0 0
  %7345 = vmatprep.subr.bf16.mxu0 0
  %7346 = vmatpush1.bf16.msra.mxu0 0
  %7347 = vmatprep.subr.bf16.mxu0 0
  %7348 = vmatpush1.bf16.msra.mxu0 0
  %7349 = vmatprep.mubr.bf16.mxu0 0
  %7350 = vmatmul.mubr.bf16.gmra.mrb[0].mxu0 %v7315
  %v7351 = vpop.f32.mrb[0].mxu0
  %v7352 = vadd.f32 0.0, %v7351
  %v7353 = vpop.f32.mrb[0].mxu0
  %v7354 = vadd.f32 0.0, %v7353
  %v7355 = vpop.f32.mrb[0].mxu0
  %v7356 = vpop.f32.mrb[0].mxu0
  %7357 = vdwg.mxu0
  %v7358 = vpack.c.bf16 %v7352, %v7352
  %v7359 = vpack.c.bf16 %v7354, %v7354
  %s7360 = scalar_lea.vmem %s1, 4
  %v7361 = vld [vmem:[%s7360] sm:$0xf]
  %v7363 = vsel %vm7313, %v7361, 0
  %7365 = vmatprep.subr.bf16.mxu0 %v7305
  %7366 = vmatpush1.bf16.msra.mxu0 %v7304
  %7367 = vmatprep.subr.bf16.mxu0 %v7307
  %7368 = vmatpush1.bf16.msra.mxu0 %v7306
  %7369 = vmatprep.subr.bf16.mxu0 %v7309
  %7370 = vmatpush1.bf16.msra.mxu0 %v7308
  %7371 = vmatprep.subr.bf16.mxu0 %v7311
  %7372 = vmatpush1.bf16.msra.mxu0 %v7310
  %7373 = vmatprep.subr.bf16.mxu0 0
  %7374 = vmatpush1.bf16.msra.mxu0 0
  %7375 = vmatprep.subr.bf16.mxu0 0
  %7376 = vmatpush1.bf16.msra.mxu0 0
  %7377 = vmatprep.subr.bf16.mxu0 0
  %7378 = vmatpush1.bf16.msra.mxu0 0
  %7379 = vmatprep.subr.bf16.mxu0 0
  %7380 = vmatpush1.bf16.msra.mxu0 0
  %7381 = vmatprep.subr.bf16.mxu0 0
  %7382 = vmatpush1.bf16.msra.mxu0 0
  %7383 = vmatprep.subr.bf16.mxu0 0
  %7384 = vmatpush1.bf16.msra.mxu0 0
  %7385 = vmatprep.subr.bf16.mxu0 0
  %7386 = vmatpush1.bf16.msra.mxu0 0
  %7387 = vmatprep.subr.bf16.mxu0 0
  %7388 = vmatpush1.bf16.msra.mxu0 0
  %7389 = vmatprep.subr.bf16.mxu0 0
  %7390 = vmatpush1.bf16.msra.mxu0 0
  %7391 = vmatprep.subr.bf16.mxu0 0
  %7392 = vmatpush1.bf16.msra.mxu0 0
  %7393 = vmatprep.subr.bf16.mxu0 0
  %7394 = vmatpush1.bf16.msra.mxu0 0
  %7395 = vmatprep.subr.bf16.mxu0 0
  %7396 = vmatpush1.bf16.msra.mxu0 0
  %7397 = vmatprep.mubr.bf16.mxu0 0
  %7398 = vmatmul.mubr.bf16.gmra.mrb[0].mxu0 %v7363
  %v7399 = vpop.f32.mrb[0].mxu0
  %v7400 = vadd.f32 0.0, %v7399
  %v7401 = vpop.f32.mrb[0].mxu0
  %v7402 = vadd.f32 0.0, %v7401
  %v7403 = vpop.f32.mrb[0].mxu0
  %v7404 = vpop.f32.mrb[0].mxu0
  %7405 = vdwg.mxu0
  %v7406 = vpack.c.bf16 %v7400, %v7400
  %v7407 = vpack.c.bf16 %v7402, %v7402
  %s7408 = scalar_lea.vmem %s1, 8
  %v7409 = vld [vmem:[%s7408] sm:$0xf]
  %v7411 = vsel %vm7313, %v7409, 0
  %7413 = vmatprep.subr.bf16.mxu0 %v7305
  %7414 = vmatpush1.bf16.msra.mxu0 %v7304
  %7415 = vmatprep.subr.bf16.mxu0 %v7307
  %7416 = vmatpush1.bf16.msra.mxu0 %v7306
  %7417 = vmatprep.subr.bf16.mxu0 %v7309
  %7418 = vmatpush1.bf16.msra.mxu0 %v7308
  %7419 = vmatprep.subr.bf16.mxu0 %v7311
  %7420 = vmatpush1.bf16.msra.mxu0 %v7310
  %7421 = vmatprep.subr.bf16.mxu0 0
  %7422 = vmatpush1.bf16.msra.mxu0 0
  %7423 = vmatprep.subr.bf16.mxu0 0
  %7424 = vmatpush1.bf16.msra.mxu0 0
  %7425 = vmatprep.subr.bf16.mxu0 0
  %7426 = vmatpush1.bf16.msra.mxu0 0
  %7427 = vmatprep.subr.bf16.mxu0 0
  %7428 = vmatpush1.bf16.msra.mxu0 0
  %7429 = vmatprep.subr.bf16.mxu0 0
  %7430 = vmatpush1.bf16.msra.mxu0 0
  %7431 = vmatprep.subr.bf16.mxu0 0
  %7432 = vmatpush1.bf16.msra.mxu0 0
  %7433 = vmatprep.subr.bf16.mxu0 0
  %7434 = vmatpush1.bf16.msra.mxu0 0
  %7435 = vmatprep.subr.bf16.mxu0 0
  %7436 = vmatpush1.bf16.msra.mxu0 0
  %7437 = vmatprep.subr.bf16.mxu0 0
  %7438 = vmatpush1.bf16.msra.mxu0 0
  %7439 = vmatprep.subr.bf16.mxu0 0
  %7440 = vmatpush1.bf16.msra.mxu0 0
  %7441 = vmatprep.subr.bf16.mxu0 0
  %7442 = vmatpush1.bf16.msra.mxu0 0
  %7443 = vmatprep.subr.bf16.mxu0 0
  %7444 = vmatpush1.bf16.msra.mxu0 0
  %7445 = vmatprep.mubr.bf16.mxu0 0
  %7446 = vmatmul.mubr.bf16.gmra.mrb[0].mxu0 %v7411
  %v7447 = vpop.f32.mrb[0].mxu0
  %v7448 = vadd.f32 0.0, %v7447
  %v7449 = vpop.f32.mrb[0].mxu0
  %v7450 = vadd.f32 0.0, %v7449
  %v7451 = vpop.f32.mrb[0].mxu0
  %v7452 = vpop.f32.mrb[0].mxu0
  %7453 = vdwg.mxu0
  %v7454 = vpack.c.bf16 %v7448, %v7448
  %v7455 = vpack.c.bf16 %v7450, %v7450
  %s7456 = scalar_lea.vmem %s1, 12
  %v7457 = vld [vmem:[%s7456] sm:$0xf]
  %v7459 = vsel %vm7313, %v7457, 0
  %7461 = vmatprep.subr.bf16.mxu0 %v7305
  %7462 = vmatpush1.bf16.msra.mxu0 %v7304
  %7463 = vmatprep.subr.bf16.mxu0 %v7307
  %7464 = vmatpush1.bf16.msra.mxu0 %v7306
  %7465 = vmatprep.subr.bf16.mxu0 %v7309
  %7466 = vmatpush1.bf16.msra.mxu0 %v7308
  %7467 = vmatprep.subr.bf16.mxu0 %v7311
  %7468 = vmatpush1.bf16.msra.mxu0 %v7310
  %7469 = vmatprep.subr.bf16.mxu0 0
  %7470 = vmatpush1.bf16.msra.mxu0 0
  %7471 = vmatprep.subr.bf16.mxu0 0
  %7472 = vmatpush1.bf16.msra.mxu0 0
  %7473 = vmatprep.subr.bf16.mxu0 0
  %7474 = vmatpush1.bf16.msra.mxu0 0
  %7475 = vmatprep.subr.bf16.mxu0 0
  %7476 = vmatpush1.bf16.msra.mxu0 0
  %7477 = vmatprep.subr.bf16.mxu0 0
  %7478 = vmatpush1.bf16.msra.mxu0 0
  %7479 = vmatprep.subr.bf16.mxu0 0
  %7480 = vmatpush1.bf16.msra.mxu0 0
  %7481 = vmatprep.subr.bf16.mxu0 0
  %7482 = vmatpush1.bf16.msra.mxu0 0
  %7483 = vmatprep.subr.bf16.mxu0 0
  %7484 = vmatpush1.bf16.msra.mxu0 0
  %7485 = vmatprep.subr.bf16.mxu0 0
  %7486 = vmatpush1.bf16.msra.mxu0 0
  %7487 = vmatprep.subr.bf16.mxu0 0
  %7488 = vmatpush1.bf16.msra.mxu0 0
  %7489 = vmatprep.subr.bf16.mxu0 0
  %7490 = vmatpush1.bf16.msra.mxu0 0
  %7491 = vmatprep.subr.bf16.mxu0 0
  %7492 = vmatpush1.bf16.msra.mxu0 0
  %7493 = vmatprep.mubr.bf16.mxu0 0
  %7494 = vmatmul.mubr.bf16.gmra.mrb[0].mxu0 %v7459
  %v7495 = vpop.f32.mrb[0].mxu0
  %v7496 = vadd.f32 0.0, %v7495
  %v7497 = vpop.f32.mrb[0].mxu0
  %v7498 = vadd.f32 0.0, %v7497
  %v7499 = vpop.f32.mrb[0].mxu0
  %v7500 = vpop.f32.mrb[0].mxu0
  %7501 = vdwg.mxu0
  %v7502 = vpack.c.bf16 %v7496, %v7496
  %v7503 = vpack.c.bf16 %v7498, %v7498
  %v7504 = vld [vmem:[%s6] sm:$0xf]
  %v7505 = vld [vmem:[%s6 + $0x4] sm:$0xf]
  %v7506 = vld [vmem:[%s6 + $0x8] sm:$0xf]
  %v7507 = vld [vmem:[%s6 + $0xc] sm:$0xf]
  %v7508 = vld [vmem:[%s6 + $0x10] sm:$0xf]
  %v7509 = vld [vmem:[%s6 + $0x14] sm:$0xf]
  %v7510 = vld [vmem:[%s6 + $0x18] sm:$0xf]
  %v7511 = vld [vmem:[%s6 + $0x1c] sm:$0xf]
  %v7512 = vld [vmem:[%s6 + $0x20] sm:$0xf]
  %v7513 = vld [vmem:[%s6 + $0x24] sm:$0xf]
  %v7514 = vld [vmem:[%s6 + $0x28] sm:$0xf]
  %v7515 = vld [vmem:[%s6 + $0x2c] sm:$0xf]
  %v7516 = vld [vmem:[%s6 + $0x30] sm:$0xf]
  %v7517 = vld [vmem:[%s6 + $0x34] sm:$0xf]
  %v7518 = vld [vmem:[%s6 + $0x38] sm:$0xf]
  %v7519 = vld [vmem:[%s6 + $0x3c] sm:$0xf]
  %v7520 = vld [vmem:[%s6 + $0x40] sm:$0xf]
  %v7521 = vld [vmem:[%s6 + $0x44] sm:$0xf]
  %v7522 = vld [vmem:[%s6 + $0x48] sm:$0xf]
  %v7523 = vld [vmem:[%s6 + $0x4c] sm:$0xf]
  %v7524 = vld [vmem:[%s6 + $0x50] sm:$0xf]
  %v7525 = vld [vmem:[%s6 + $0x54] sm:$0xf]
  %v7526 = vld [vmem:[%s6 + $0x58] sm:$0xf]
  %v7527 = vld [vmem:[%s6 + $0x5c] sm:$0xf]
  %v7528 = vld [vmem:[%s6 + $0x60] sm:$0xf]
  %v7529 = vld [vmem:[%s6 + $0x64] sm:$0xf]
  %v7530 = vld [vmem:[%s6 + $0x68] sm:$0xf]
  %v7531 = vld [vmem:[%s6 + $0x6c] sm:$0xf]
  %v7532 = vld [vmem:[%s6 + $0x70] sm:$0xf]
  %v7533 = vld [vmem:[%s6 + $0x74] sm:$0xf]
  %v7534 = vld [vmem:[%s6 + $0x78] sm:$0xf]
  %v7535 = vld [vmem:[%s6 + $0x7c] sm:$0xf]
  %v7536 = vld [vmem:[%s6 + $0x80] sm:$0xf]
  %v7537 = vld [vmem:[%s6 + $0x84] sm:$0xf]
  %v7538 = vld [vmem:[%s6 + $0x88] sm:$0xf]
  %v7539 = vld [vmem:[%s6 + $0x8c] sm:$0xf]
  %v7540 = vld [vmem:[%s6 + $0x90] sm:$0xf]
  %v7541 = vld [vmem:[%s6 + $0x94] sm:$0xf]
  %v7542 = vld [vmem:[%s6 + $0x98] sm:$0xf]
  %v7543 = vld [vmem:[%s6 + $0x9c] sm:$0xf]
  %v7544 = vld [vmem:[%s6 + $0xa0] sm:$0xf]
  %v7545 = vld [vmem:[%s6 + $0xa4] sm:$0xf]
  %v7546 = vld [vmem:[%s6 + $0xa8] sm:$0xf]
  %v7547 = vld [vmem:[%s6 + $0xac] sm:$0xf]
  %v7548 = vld [vmem:[%s6 + $0xb0] sm:$0xf]
  %v7549 = vld [vmem:[%s6 + $0xb4] sm:$0xf]
  %v7550 = vld [vmem:[%s6 + $0xb8] sm:$0xf]
  %v7551 = vld [vmem:[%s6 + $0xbc] sm:$0xf]
  %v7552 = vld [vmem:[%s6 + $0xc0] sm:$0xf]
  %v7553 = vld [vmem:[%s6 + $0xc4] sm:$0xf]
  %v7554 = vld [vmem:[%s6 + $0xc8] sm:$0xf]
  %v7555 = vld [vmem:[%s6 + $0xcc] sm:$0xf]
  %v7556 = vld [vmem:[%s6 + $0xd0] sm:$0xf]
  %v7557 = vld [vmem:[%s6 + $0xd4] sm:$0xf]
  %v7558 = vld [vmem:[%s6 + $0xd8] sm:$0xf]
  %v7559 = vld [vmem:[%s6 + $0xdc] sm:$0xf]
  %v7560 = vld [vmem:[%s6 + $0xe0] sm:$0xf]
  %v7561 = vld [vmem:[%s6 + $0xe4] sm:$0xf]
  %v7562 = vld [vmem:[%s6 + $0xe8] sm:$0xf]
  %v7563 = vld [vmem:[%s6 + $0xec] sm:$0xf]
  %v7564 = vld [vmem:[%s6 + $0xf0] sm:$0xf]
  %v7565 = vld [vmem:[%s6 + $0xf4] sm:$0xf]
  %v7566 = vld [vmem:[%s6 + $0xf8] sm:$0xf]
  %v7567 = vld [vmem:[%s6 + $0xfc] sm:$0xf]
  %v7568 = vld [vmem:[%s6 + $0x100] sm:$0xf]
  %v7569 = vld [vmem:[%s6 + $0x104] sm:$0xf]
  %v7570 = vld [vmem:[%s6 + $0x108] sm:$0xf]
  %v7571 = vld [vmem:[%s6 + $0x10c] sm:$0xf]
  %v7572 = vld [vmem:[%s6 + $0x110] sm:$0xf]
  %v7573 = vld [vmem:[%s6 + $0x114] sm:$0xf]
  %v7574 = vld [vmem:[%s6 + $0x118] sm:$0xf]
  %v7575 = vld [vmem:[%s6 + $0x11c] sm:$0xf]
  %v7576 = vld [vmem:[%s6 + $0x120] sm:$0xf]
  %v7577 = vld [vmem:[%s6 + $0x124] sm:$0xf]
  %v7578 = vld [vmem:[%s6 + $0x128] sm:$0xf]
  %v7579 = vld [vmem:[%s6 + $0x12c] sm:$0xf]
  %v7580 = vld [vmem:[%s6 + $0x130] sm:$0xf]
  %v7581 = vld [vmem:[%s6 + $0x134] sm:$0xf]
  %v7582 = vld [vmem:[%s6 + $0x138] sm:$0xf]
  %v7583 = vld [vmem:[%s6 + $0x13c] sm:$0xf]
  %v7584 = vld [vmem:[%s6 + $0x140] sm:$0xf]
  %v7585 = vld [vmem:[%s6 + $0x144] sm:$0xf]
  %v7586 = vld [vmem:[%s6 + $0x148] sm:$0xf]
  %v7587 = vld [vmem:[%s6 + $0x14c] sm:$0xf]
  %v7588 = vld [vmem:[%s6 + $0x150] sm:$0xf]
  %v7589 = vld [vmem:[%s6 + $0x154] sm:$0xf]
  %v7590 = vld [vmem:[%s6 + $0x158] sm:$0xf]
  %v7591 = vld [vmem:[%s6 + $0x15c] sm:$0xf]
  %v7592 = vld [vmem:[%s6 + $0x160] sm:$0xf]
  %v7593 = vld [vmem:[%s6 + $0x164] sm:$0xf]
  %v7594 = vld [vmem:[%s6 + $0x168] sm:$0xf]
  %v7595 = vld [vmem:[%s6 + $0x16c] sm:$0xf]
  %v7596 = vld [vmem:[%s6 + $0x170] sm:$0xf]
  %v7597 = vld [vmem:[%s6 + $0x174] sm:$0xf]
  %v7598 = vld [vmem:[%s6 + $0x178] sm:$0xf]
  %v7599 = vld [vmem:[%s6 + $0x17c] sm:$0xf]
  %v7600 = vld [vmem:[%s6 + $0x180] sm:$0xf]
  %v7601 = vld [vmem:[%s6 + $0x184] sm:$0xf]
  %v7602 = vld [vmem:[%s6 + $0x188] sm:$0xf]
  %v7603 = vld [vmem:[%s6 + $0x18c] sm:$0xf]
  %v7604 = vld [vmem:[%s6 + $0x190] sm:$0xf]
  %v7605 = vld [vmem:[%s6 + $0x194] sm:$0xf]
  %v7606 = vld [vmem:[%s6 + $0x198] sm:$0xf]
  %v7607 = vld [vmem:[%s6 + $0x19c] sm:$0xf]
  %v7608 = vld [vmem:[%s6 + $0x1a0] sm:$0xf]
  %v7609 = vld [vmem:[%s6 + $0x1a4] sm:$0xf]
  %v7610 = vld [vmem:[%s6 + $0x1a8] sm:$0xf]
  %v7611 = vld [vmem:[%s6 + $0x1ac] sm:$0xf]
  %v7612 = vld [vmem:[%s6 + $0x1b0] sm:$0xf]
  %v7613 = vld [vmem:[%s6 + $0x1b4] sm:$0xf]
  %v7614 = vld [vmem:[%s6 + $0x1b8] sm:$0xf]
  %v7615 = vld [vmem:[%s6 + $0x1bc] sm:$0xf]
  %v7616 = vld [vmem:[%s6 + $0x1c0] sm:$0xf]
  %v7617 = vld [vmem:[%s6 + $0x1c4] sm:$0xf]
  %v7618 = vld [vmem:[%s6 + $0x1c8] sm:$0xf]
  %v7619 = vld [vmem:[%s6 + $0x1cc] sm:$0xf]
  %v7620 = vld [vmem:[%s6 + $0x1d0] sm:$0xf]
  %v7621 = vld [vmem:[%s6 + $0x1d4] sm:$0xf]
  %v7622 = vld [vmem:[%s6 + $0x1d8] sm:$0xf]
  %v7623 = vld [vmem:[%s6 + $0x1dc] sm:$0xf]
  %v7624 = vld [vmem:[%s6 + $0x1e0] sm:$0xf]
  %v7625 = vld [vmem:[%s6 + $0x1e4] sm:$0xf]
  %v7626 = vld [vmem:[%s6 + $0x1e8] sm:$0xf]
  %v7627 = vld [vmem:[%s6 + $0x1ec] sm:$0xf]
  %v7628 = vld [vmem:[%s6 + $0x1f0] sm:$0xf]
  %v7629 = vld [vmem:[%s6 + $0x1f4] sm:$0xf]
  %v7630 = vld [vmem:[%s6 + $0x1f8] sm:$0xf]
  %v7631 = vld [vmem:[%s6 + $0x1fc] sm:$0xf]
  %v7632 = vld [vmem:[%s7] sm:$0x1]
  %v7634 = vlaneseq
  %v7635 = vshrl.u32 %v7634, 7
  %v7636 = vsub.s32 0, %v7635
  %v7637 = vrot.slane %v7632, %v7636
  %v7767 = vunpack.c.l.b16 %v7504
  %v7768 = vunpack.c.l.b16 %v7505
  %v7769 = vunpack.c.l.b16 %v7506
  %v7770 = vunpack.c.l.b16 %v7507
  %v7771 = vunpack.c.l.b16 %v7508
  %v7772 = vunpack.c.l.b16 %v7509
  %v7773 = vunpack.c.l.b16 %v7510
  %v7774 = vunpack.c.l.b16 %v7511
  %v7775 = vunpack.c.l.b16 %v7512
  %v7776 = vunpack.c.l.b16 %v7513
  %v7777 = vunpack.c.l.b16 %v7514
  %v7778 = vunpack.c.l.b16 %v7515
  %v7779 = vunpack.c.l.b16 %v7516
  %v7780 = vunpack.c.l.b16 %v7517
  %v7781 = vunpack.c.l.b16 %v7518
  %v7782 = vunpack.c.l.b16 %v7519
  %v7783 = vunpack.c.l.b16 %v7520
  %v7784 = vunpack.c.l.b16 %v7521
  %v7785 = vunpack.c.l.b16 %v7522
  %v7786 = vunpack.c.l.b16 %v7523
  %v7787 = vunpack.c.l.b16 %v7524
  %v7788 = vunpack.c.l.b16 %v7525
  %v7789 = vunpack.c.l.b16 %v7526
  %v7790 = vunpack.c.l.b16 %v7527
  %v7791 = vunpack.c.l.b16 %v7528
  %v7792 = vunpack.c.l.b16 %v7529
  %v7793 = vunpack.c.l.b16 %v7530
  %v7794 = vunpack.c.l.b16 %v7531
  %v7795 = vunpack.c.l.b16 %v7532
  %v7796 = vunpack.c.l.b16 %v7533
  %v7797 = vunpack.c.l.b16 %v7534
  %v7798 = vunpack.c.l.b16 %v7535
  %v7799 = vunpack.c.l.b16 %v7536
  %v7800 = vunpack.c.l.b16 %v7537
  %v7801 = vunpack.c.l.b16 %v7538
  %v7802 = vunpack.c.l.b16 %v7539
  %v7803 = vunpack.c.l.b16 %v7540
  %v7804 = vunpack.c.l.b16 %v7541
  %v7805 = vunpack.c.l.b16 %v7542
  %v7806 = vunpack.c.l.b16 %v7543
  %v7807 = vunpack.c.l.b16 %v7544
  %v7808 = vunpack.c.l.b16 %v7545
  %v7809 = vunpack.c.l.b16 %v7546
  %v7810 = vunpack.c.l.b16 %v7547
  %v7811 = vunpack.c.l.b16 %v7548
  %v7812 = vunpack.c.l.b16 %v7549
  %v7813 = vunpack.c.l.b16 %v7550
  %v7814 = vunpack.c.l.b16 %v7551
  %v7815 = vunpack.c.l.b16 %v7552
  %v7816 = vunpack.c.l.b16 %v7553
  %v7817 = vunpack.c.l.b16 %v7554
  %v7818 = vunpack.c.l.b16 %v7555
  %v7819 = vunpack.c.l.b16 %v7556
  %v7820 = vunpack.c.l.b16 %v7557
  %v7821 = vunpack.c.l.b16 %v7558
  %v7822 = vunpack.c.l.b16 %v7559
  %v7823 = vunpack.c.l.b16 %v7560
  %v7824 = vunpack.c.l.b16 %v7561
  %v7825 = vunpack.c.l.b16 %v7562
  %v7826 = vunpack.c.l.b16 %v7563
  %v7827 = vunpack.c.l.b16 %v7564
  %v7828 = vunpack.c.l.b16 %v7565
  %v7829 = vunpack.c.l.b16 %v7566
  %v7830 = vunpack.c.l.b16 %v7567
  %v7831 = vunpack.c.l.b16 %v7568
  %v7832 = vunpack.c.l.b16 %v7569
  %v7833 = vunpack.c.l.b16 %v7570
  %v7834 = vunpack.c.l.b16 %v7571
  %v7835 = vunpack.c.l.b16 %v7572
  %v7836 = vunpack.c.l.b16 %v7573
  %v7837 = vunpack.c.l.b16 %v7574
  %v7838 = vunpack.c.l.b16 %v7575
  %v7839 = vunpack.c.l.b16 %v7576
  %v7840 = vunpack.c.l.b16 %v7577
  %v7841 = vunpack.c.l.b16 %v7578
  %v7842 = vunpack.c.l.b16 %v7579
  %v7843 = vunpack.c.l.b16 %v7580
  %v7844 = vunpack.c.l.b16 %v7581
  %v7845 = vunpack.c.l.b16 %v7582
  %v7846 = vunpack.c.l.b16 %v7583
  %v7847 = vunpack.c.l.b16 %v7584
  %v7848 = vunpack.c.l.b16 %v7585
  %v7849 = vunpack.c.l.b16 %v7586
  %v7850 = vunpack.c.l.b16 %v7587
  %v7851 = vunpack.c.l.b16 %v7588
  %v7852 = vunpack.c.l.b16 %v7589
  %v7853 = vunpack.c.l.b16 %v7590
  %v7854 = vunpack.c.l.b16 %v7591
  %v7855 = vunpack.c.l.b16 %v7592
  %v7856 = vunpack.c.l.b16 %v7593
  %v7857 = vunpack.c.l.b16 %v7594
  %v7858 = vunpack.c.l.b16 %v7595
  %v7859 = vunpack.c.l.b16 %v7596
  %v7860 = vunpack.c.l.b16 %v7597
  %v7861 = vunpack.c.l.b16 %v7598
  %v7862 = vunpack.c.l.b16 %v7599
  %v7863 = vunpack.c.l.b16 %v7600
  %v7864 = vunpack.c.l.b16 %v7601
  %v7865 = vunpack.c.l.b16 %v7602
  %v7866 = vunpack.c.l.b16 %v7603
  %v7867 = vunpack.c.l.b16 %v7604
  %v7868 = vunpack.c.l.b16 %v7605
  %v7869 = vunpack.c.l.b16 %v7606
  %v7870 = vunpack.c.l.b16 %v7607
  %v7871 = vunpack.c.l.b16 %v7608
  %v7872 = vunpack.c.l.b16 %v7609
  %v7873 = vunpack.c.l.b16 %v7610
  %v7874 = vunpack.c.l.b16 %v7611
  %v7875 = vunpack.c.l.b16 %v7612
  %v7876 = vunpack.c.l.b16 %v7613
  %v7877 = vunpack.c.l.b16 %v7614
  %v7878 = vunpack.c.l.b16 %v7615
  %v7879 = vunpack.c.l.b16 %v7616
  %v7880 = vunpack.c.l.b16 %v7617
  %v7881 = vunpack.c.l.b16 %v7618
  %v7882 = vunpack.c.l.b16 %v7619
  %v7883 = vunpack.c.l.b16 %v7620
  %v7884 = vunpack.c.l.b16 %v7621
  %v7885 = vunpack.c.l.b16 %v7622
  %v7886 = vunpack.c.l.b16 %v7623
  %v7887 = vunpack.c.l.b16 %v7624
  %v7888 = vunpack.c.l.b16 %v7625
  %v7889 = vunpack.c.l.b16 %v7626
  %v7890 = vunpack.c.l.b16 %v7627
  %v7891 = vunpack.c.l.b16 %v7628
  %v7892 = vunpack.c.l.b16 %v7629
  %v7893 = vunpack.c.l.b16 %v7630
  %v7894 = vunpack.c.l.b16 %v7631
  %v7895 = vpack.c.b16 %v7768, %v7767
  %v7896 = vpack.c.b16 %v7770, %v7769
  %v7897 = vpack.c.b16 %v7772, %v7771
  %v7898 = vpack.c.b16 %v7774, %v7773
  %v7899 = vpack.c.b16 %v7776, %v7775
  %v7900 = vpack.c.b16 %v7778, %v7777
  %v7901 = vpack.c.b16 %v7780, %v7779
  %v7902 = vpack.c.b16 %v7782, %v7781
  %v7903 = vpack.c.b16 %v7784, %v7783
  %v7904 = vpack.c.b16 %v7786, %v7785
  %v7905 = vpack.c.b16 %v7788, %v7787
  %v7906 = vpack.c.b16 %v7790, %v7789
  %v7907 = vpack.c.b16 %v7792, %v7791
  %v7908 = vpack.c.b16 %v7794, %v7793
  %v7909 = vpack.c.b16 %v7796, %v7795
  %v7910 = vpack.c.b16 %v7798, %v7797
  %v7911 = vpack.c.b16 %v7800, %v7799
  %v7912 = vpack.c.b16 %v7802, %v7801
  %v7913 = vpack.c.b16 %v7804, %v7803
  %v7914 = vpack.c.b16 %v7806, %v7805
  %v7915 = vpack.c.b16 %v7808, %v7807
  %v7916 = vpack.c.b16 %v7810, %v7809
  %v7917 = vpack.c.b16 %v7812, %v7811
  %v7918 = vpack.c.b16 %v7814, %v7813
  %v7919 = vpack.c.b16 %v7816, %v7815
  %v7920 = vpack.c.b16 %v7818, %v7817
  %v7921 = vpack.c.b16 %v7820, %v7819
  %v7922 = vpack.c.b16 %v7822, %v7821
  %v7923 = vpack.c.b16 %v7824, %v7823
  %v7924 = vpack.c.b16 %v7826, %v7825
  %v7925 = vpack.c.b16 %v7828, %v7827
  %v7926 = vpack.c.b16 %v7830, %v7829
  %v7927 = vpack.c.b16 %v7832, %v7831
  %v7928 = vpack.c.b16 %v7834, %v7833
  %v7929 = vpack.c.b16 %v7836, %v7835
  %v7930 = vpack.c.b16 %v7838, %v7837
  %v7931 = vpack.c.b16 %v7840, %v7839
  %v7932 = vpack.c.b16 %v7842, %v7841
  %v7933 = vpack.c.b16 %v7844, %v7843
  %v7934 = vpack.c.b16 %v7846, %v7845
  %v7935 = vpack.c.b16 %v7848, %v7847
  %v7936 = vpack.c.b16 %v7850, %v7849
  %v7937 = vpack.c.b16 %v7852, %v7851
  %v7938 = vpack.c.b16 %v7854, %v7853
  %v7939 = vpack.c.b16 %v7856, %v7855
  %v7940 = vpack.c.b16 %v7858, %v7857
  %v7941 = vpack.c.b16 %v7860, %v7859
  %v7942 = vpack.c.b16 %v7862, %v7861
  %v7943 = vpack.c.b16 %v7864, %v7863
  %v7944 = vpack.c.b16 %v7866, %v7865
  %v7945 = vpack.c.b16 %v7868, %v7867
  %v7946 = vpack.c.b16 %v7870, %v7869
  %v7947 = vpack.c.b16 %v7872, %v7871
  %v7948 = vpack.c.b16 %v7874, %v7873
  %v7949 = vpack.c.b16 %v7876, %v7875
  %v7950 = vpack.c.b16 %v7878, %v7877
  %v7951 = vpack.c.b16 %v7880, %v7879
  %v7952 = vpack.c.b16 %v7882, %v7881
  %v7953 = vpack.c.b16 %v7884, %v7883
  %v7954 = vpack.c.b16 %v7886, %v7885
  %v7955 = vpack.c.b16 %v7888, %v7887
  %v7956 = vpack.c.b16 %v7890, %v7889
  %v7957 = vpack.c.b16 %v7892, %v7891
  %v7958 = vpack.c.b16 %v7894, %v7893
  %8023 = vmatprep.subr.bf16.mxu0 0
  %8024 = vmatpush1.bf16.msra.mxu0 %v7895
  %8025 = vmatprep.subr.bf16.mxu0 0
  %8026 = vmatpush1.bf16.msra.mxu0 %v7896
  %8027 = vmatprep.subr.bf16.mxu0 0
  %8028 = vmatpush1.bf16.msra.mxu0 %v7897
  %8029 = vmatprep.subr.bf16.mxu0 0
  %8030 = vmatpush1.bf16.msra.mxu0 %v7898
  %8031 = vmatprep.subr.bf16.mxu0 0
  %8032 = vmatpush1.bf16.msra.mxu0 %v7899
  %8033 = vmatprep.subr.bf16.mxu0 0
  %8034 = vmatpush1.bf16.msra.mxu0 %v7900
  %8035 = vmatprep.subr.bf16.mxu0 0
  %8036 = vmatpush1.bf16.msra.mxu0 %v7901
  %8037 = vmatprep.subr.bf16.mxu0 0
  %8038 = vmatpush1.bf16.msra.mxu0 %v7902
  %8039 = vmatprep.subr.bf16.mxu0 0
  %8040 = vmatpush1.bf16.msra.mxu0 %v7903
  %8041 = vmatprep.subr.bf16.mxu0 0
  %8042 = vmatpush1.bf16.msra.mxu0 %v7904
  %8043 = vmatprep.subr.bf16.mxu0 0
  %8044 = vmatpush1.bf16.msra.mxu0 %v7905
  %8045 = vmatprep.subr.bf16.mxu0 0
  %8046 = vmatpush1.bf16.msra.mxu0 %v7906
  %8047 = vmatprep.subr.bf16.mxu0 0
  %8048 = vmatpush1.bf16.msra.mxu0 %v7907
  %8049 = vmatprep.subr.bf16.mxu0 0
  %8050 = vmatpush1.bf16.msra.mxu0 %v7908
  %8051 = vmatprep.subr.bf16.mxu0 0
  %8052 = vmatpush1.bf16.msra.mxu0 %v7909
  %8053 = vmatprep.subr.bf16.mxu0 0
  %8054 = vmatpush1.bf16.msra.mxu0 %v7910
  %8055 = vmatprep.mubr.bf16.mxu0 %v7359
  %8056 = vmatmul.mubr.bf16.gmra.mrb[0].mxu0 %v7358
  %v8057 = vpop.f32.mrb[0].mxu0
  %v8058 = vadd.f32 %v7637, %v8057
  %v8059 = vpop.f32.mrb[0].mxu0
  %v8060 = vpop.f32.mrb[0].mxu0
  %v8061 = vpop.f32.mrb[0].mxu0
  %8062 = vdwg.mxu0
  %8063 = vmatprep.subr.bf16.mxu0 0
  %8064 = vmatpush1.bf16.msra.mxu0 %v7911
  %8065 = vmatprep.subr.bf16.mxu0 0
  %8066 = vmatpush1.bf16.msra.mxu0 %v7912
  %8067 = vmatprep.subr.bf16.mxu0 0
  %8068 = vmatpush1.bf16.msra.mxu0 %v7913
  %8069 = vmatprep.subr.bf16.mxu0 0
  %8070 = vmatpush1.bf16.msra.mxu0 %v7914
  %8071 = vmatprep.subr.bf16.mxu0 0
  %8072 = vmatpush1.bf16.msra.mxu0 %v7915
  %8073 = vmatprep.subr.bf16.mxu0 0
  %8074 = vmatpush1.bf16.msra.mxu0 %v7916
  %8075 = vmatprep.subr.bf16.mxu0 0
  %8076 = vmatpush1.bf16.msra.mxu0 %v7917
  %8077 = vmatprep.subr.bf16.mxu0 0
  %8078 = vmatpush1.bf16.msra.mxu0 %v7918
  %8079 = vmatprep.subr.bf16.mxu0 0
  %8080 = vmatpush1.bf16.msra.mxu0 %v7919
  %8081 = vmatprep.subr.bf16.mxu0 0
  %8082 = vmatpush1.bf16.msra.mxu0 %v7920
  %8083 = vmatprep.subr.bf16.mxu0 0
  %8084 = vmatpush1.bf16.msra.mxu0 %v7921
  %8085 = vmatprep.subr.bf16.mxu0 0
  %8086 = vmatpush1.bf16.msra.mxu0 %v7922
  %8087 = vmatprep.subr.bf16.mxu0 0
  %8088 = vmatpush1.bf16.msra.mxu0 %v7923
  %8089 = vmatprep.subr.bf16.mxu0 0
  %8090 = vmatpush1.bf16.msra.mxu0 %v7924
  %8091 = vmatprep.subr.bf16.mxu0 0
  %8092 = vmatpush1.bf16.msra.mxu0 %v7925
  %8093 = vmatprep.subr.bf16.mxu0 0
  %8094 = vmatpush1.bf16.msra.mxu0 %v7926
  %8095 = vmatprep.mubr.bf16.mxu0 %v7407
  %8096 = vmatmul.mubr.bf16.gmra.mrb[0].mxu0 %v7406
  %v8097 = vpop.f32.mrb[0].mxu0
  %v8098 = vadd.f32 %v8058, %v8097
  %v8099 = vpop.f32.mrb[0].mxu0
  %v8100 = vpop.f32.mrb[0].mxu0
  %v8101 = vpop.f32.mrb[0].mxu0
  %8102 = vdwg.mxu0
  %8103 = vmatprep.subr.bf16.mxu0 0
  %8104 = vmatpush1.bf16.msra.mxu0 %v7927
  %8105 = vmatprep.subr.bf16.mxu0 0
  %8106 = vmatpush1.bf16.msra.mxu0 %v7928
  %8107 = vmatprep.subr.bf16.mxu0 0
  %8108 = vmatpush1.bf16.msra.mxu0 %v7929
  %8109 = vmatprep.subr.bf16.mxu0 0
  %8110 = vmatpush1.bf16.msra.mxu0 %v7930
  %8111 = vmatprep.subr.bf16.mxu0 0
  %8112 = vmatpush1.bf16.msra.mxu0 %v7931
  %8113 = vmatprep.subr.bf16.mxu0 0
  %8114 = vmatpush1.bf16.msra.mxu0 %v7932
  %8115 = vmatprep.subr.bf16.mxu0 0
  %8116 = vmatpush1.bf16.msra.mxu0 %v7933
  %8117 = vmatprep.subr.bf16.mxu0 0
  %8118 = vmatpush1.bf16.msra.mxu0 %v7934
  %8119 = vmatprep.subr.bf16.mxu0 0
  %8120 = vmatpush1.bf16.msra.mxu0 %v7935
  %8121 = vmatprep.subr.bf16.mxu0 0
  %8122 = vmatpush1.bf16.msra.mxu0 %v7936
  %8123 = vmatprep.subr.bf16.mxu0 0
  %8124 = vmatpush1.bf16.msra.mxu0 %v7937
  %8125 = vmatprep.subr.bf16.mxu0 0
  %8126 = vmatpush1.bf16.msra.mxu0 %v7938
  %8127 = vmatprep.subr.bf16.mxu0 0
  %8128 = vmatpush1.bf16.msra.mxu0 %v7939
  %8129 = vmatprep.subr.bf16.mxu0 0
  %8130 = vmatpush1.bf16.msra.mxu0 %v7940
  %8131 = vmatprep.subr.bf16.mxu0 0
  %8132 = vmatpush1.bf16.msra.mxu0 %v7941
  %8133 = vmatprep.subr.bf16.mxu0 0
  %8134 = vmatpush1.bf16.msra.mxu0 %v7942
  %8135 = vmatprep.mubr.bf16.mxu0 %v7455
  %8136 = vmatmul.mubr.bf16.gmra.mrb[0].mxu0 %v7454
  %v8137 = vpop.f32.mrb[0].mxu0
  %v8138 = vadd.f32 %v8098, %v8137
  %v8139 = vpop.f32.mrb[0].mxu0
  %v8140 = vpop.f32.mrb[0].mxu0
  %v8141 = vpop.f32.mrb[0].mxu0
  %8142 = vdwg.mxu0
  %8143 = vmatprep.subr.bf16.mxu0 0
  %8144 = vmatpush1.bf16.msra.mxu0 %v7943
  %8145 = vmatprep.subr.bf16.mxu0 0
  %8146 = vmatpush1.bf16.msra.mxu0 %v7944
  %8147 = vmatprep.subr.bf16.mxu0 0
  %8148 = vmatpush1.bf16.msra.mxu0 %v7945
  %8149 = vmatprep.subr.bf16.mxu0 0
  %8150 = vmatpush1.bf16.msra.mxu0 %v7946
  %8151 = vmatprep.subr.bf16.mxu0 0
  %8152 = vmatpush1.bf16.msra.mxu0 %v7947
  %8153 = vmatprep.subr.bf16.mxu0 0
  %8154 = vmatpush1.bf16.msra.mxu0 %v7948
  %8155 = vmatprep.subr.bf16.mxu0 0
  %8156 = vmatpush1.bf16.msra.mxu0 %v7949
  %8157 = vmatprep.subr.bf16.mxu0 0
  %8158 = vmatpush1.bf16.msra.mxu0 %v7950
  %8159 = vmatprep.subr.bf16.mxu0 0
  %8160 = vmatpush1.bf16.msra.mxu0 %v7951
  %8161 = vmatprep.subr.bf16.mxu0 0
  %8162 = vmatpush1.bf16.msra.mxu0 %v7952
  %8163 = vmatprep.subr.bf16.mxu0 0
  %8164 = vmatpush1.bf16.msra.mxu0 %v7953
  %8165 = vmatprep.subr.bf16.mxu0 0
  %8166 = vmatpush1.bf16.msra.mxu0 %v7954
  %8167 = vmatprep.subr.bf16.mxu0 0
  %8168 = vmatpush1.bf16.msra.mxu0 %v7955
  %8169 = vmatprep.subr.bf16.mxu0 0
  %8170 = vmatpush1.bf16.msra.mxu0 %v7956
  %8171 = vmatprep.subr.bf16.mxu0 0
  %8172 = vmatpush1.bf16.msra.mxu0 %v7957
  %8173 = vmatprep.subr.bf16.mxu0 0
  %8174 = vmatpush1.bf16.msra.mxu0 %v7958
  %8175 = vmatprep.mubr.bf16.mxu0 %v7503
  %8176 = vmatmul.mubr.bf16.gmra.mrb[0].mxu0 %v7502
  %v8177 = vpop.f32.mrb[0].mxu0
  %v8178 = vadd.f32 %v8138, %v8177
  %v8179 = vpop.f32.mrb[0].mxu0
  %v8180 = vpop.f32.mrb[0].mxu0
  %v8181 = vpop.f32.mrb[0].mxu0
  %8182 = vdwg.mxu0
  %8183 = vst [vmem:[%s8] sm:$0xff] %v8178
  // Predicated region
  $region34: #{fashionnet_forward.1} parent=0 // pred_check
    _
  $region35: #{fashionnet_forward.1} parent=0 // pred_check_branch
    %8185 = sbr.rel (0) target = $region37
  $region36: #{fashionnet_forward.1} parent=0 // pred_region
    _
  $region37: #{fashionnet_forward.1} parent=0 // pred_fallthru
    _
  // Predicated region
  $region38: #{fashionnet_forward.1} parent=0 // pred_check
    _
  $region39: #{fashionnet_forward.1} parent=0 // pred_check_branch
    %8187 = sbr.rel (0) target = $region41
  $region40: #{fashionnet_forward.1} parent=0 // pred_region
    _
  $region41: #{fashionnet_forward.1} parent=0 // pred_fallthru
    _

</llo_original>
